<compile_context>
chip_gen: v7x
topology: tpu7x:2x2x1
jax: 0.10.0
libtpu: 0.0.40
codegen_flags: <defaults>
</compile_context>

<pallas_src>
import functools

import jax
import jax.numpy as jnp
from jax.experimental import pallas as pl
from jax.experimental.pallas import tpu as pltpu

_BN_EPS = 1e-5


# ---------------------------------------------------------------------------
# Kernel 1: fused conv stack (blocks 1-3 of all three branches + epilogues)
# ---------------------------------------------------------------------------
def _conv_stack_kernel(
    xp_ref, fp_ref,
    w1x_ref, w1f_ref, w1t_ref, s1x_ref, s1f_ref, s1t_ref,
    w2x_ref, w2f_ref, w2t_ref, s2x_ref, s2f_ref, s2t_ref,
    w3xe_ref, w3xo_ref, w3fe_ref, w3fo_ref, w3te_ref, w3to_ref,
    s3x_ref, s3f_ref, s3t_ref,
    x3_ref, t3_ref,
):
    def cbr(a_bf16, w_ref, s_ref):
        # conv (as grouped matmul, BN scale pre-folded into w) + shift + ReLU
        y = jnp.dot(a_bf16, w_ref[...], preferred_element_type=jnp.float32)
        return jnp.maximum(y + s_ref[...], 0.0)

    xb = xp_ref[...].astype(jnp.bfloat16)
    fb = fp_ref[...].astype(jnp.bfloat16)

    # ---- stage 1: block1_1 / block1_2 / block1_3 (resize folded into w1t)
    x1 = cbr(xb, w1x_ref, s1x_ref)                     # (Mt, 32*num_T)
    f1 = cbr(fb, w1f_ref, s1f_ref)
    t1 = cbr(xb, w1t_ref, s1t_ref)
    t1 = t1 + f1
    x1 = x1 + f1

    # ---- stage 2: block2_*
    f1b = f1.astype(jnp.bfloat16)
    x2 = cbr(x1.astype(jnp.bfloat16), w2x_ref, s2x_ref)   # (Mt, 8*2*num_T)
    f2 = cbr(f1b, w2f_ref, s2f_ref)
    t2 = cbr(t1.astype(jnp.bfloat16), w2t_ref, s2t_ref)
    t2 = t2 * f2
    x2 = x2 * f2

    # ---- stage 3: block3_* with MaxPool2d((1,2)) fused as max over the
    #      even-window / odd-window convolutions.
    def cbr_pool(a, we_ref, wo_ref, s_ref):
        ab = a.astype(jnp.bfloat16)
        return jnp.maximum(cbr(ab, we_ref, s_ref), cbr(ab, wo_ref, s_ref))

    x3 = cbr_pool(x2, w3xe_ref, w3xo_ref, s3x_ref)     # (Mt, 3*num_T)
    f3 = cbr_pool(f2, w3fe_ref, w3fo_ref, s3f_ref)
    t3 = cbr_pool(t2, w3te_ref, w3to_ref, s3t_ref)

    x3_ref[...] = (x3 + f3).astype(x3_ref.dtype)
    t3_ref[...] = (t3 + f3).astype(t3_ref.dtype)


def conv_stack(kp, xp, fp):
    """xp/fp: (M, 256) rows of 32 stage-1 windows, channels-last."""
    M, k_in = xp.shape
    c3 = kp["S3x"].shape[1]                      # 3 * num_T
    n_tiles = 2                                  # parallel row tiles (v7x: 2 TCs)
    mt = M // n_tiles
    weights = [kp[k] for k in (
        "W1x", "W1f", "W1t", "S1x", "S1f", "S1t",
        "W2x", "W2f", "W2t", "S2x", "S2f", "S2t",
        "W3xe", "W3xo", "W3fe", "W3fo", "W3te", "W3to",
        "S3x", "S3f", "S3t")]
    in_specs = ([pl.BlockSpec((mt, k_in), lambda i: (i, 0)),
                 pl.BlockSpec((mt, k_in), lambda i: (i, 0))]
                + [pl.BlockSpec(w.shape, lambda i: (0, 0)) for w in weights])
    out_spec = pl.BlockSpec((mt, c3), lambda i: (i, 0))
    return pl.pallas_call(
        _conv_stack_kernel,
        grid=(n_tiles,),
        out_shape=(jax.ShapeDtypeStruct((M, c3), jnp.float32),
                   jax.ShapeDtypeStruct((M, c3), jnp.float32)),
        in_specs=in_specs,
        out_specs=(out_spec, out_spec),
        compiler_params=pltpu.CompilerParams(
            dimension_semantics=("parallel",)),
    )(xp, fp, *weights)


# ---------------------------------------------------------------------------
# Kernel 2: tail (blocks 4 & 5 of x/T, LSTM1, LSTM2, FC head)
# ---------------------------------------------------------------------------
def _tail_kernel(
    x3_ref, t3_ref,
    w4x_ref, s4x_ref, w4t_ref, s4t_ref,
    w5x_ref, s5x_ref, w5t_ref, s5t_ref,
    wl1x_ref, wl1t_ref, bl1_ref, wl2_ref, bl2_ref,
    wf1_ref, bf1_ref, wf2_ref, bf2_ref,
    out_ref, *, h1_dim, h2_dim,
):
    def cbr(a, w_ref, s_ref):
        y = jnp.dot(a.astype(jnp.bfloat16), w_ref[...],
                    preferred_element_type=jnp.float32)
        return jnp.maximum(y + s_ref[...], 0.0)

    def lstm_step(gates, h):
        # seq_len == 1, (h0, c0) == 0: c = sigmoid(i)*tanh(g); h = sigmoid(o)*tanh(c)
        # (forget gate multiplies c0 == 0 and was removed at weight-prep time)
        i_g = jax.nn.sigmoid(gates[:, :h])
        g_g = jnp.tanh(gates[:, h:2 * h])
        o_g = jax.nn.sigmoid(gates[:, 2 * h:])
        return o_g * jnp.tanh(i_g * g_g)

    # block4_1 -> block5_1 (x branch), block4_3 -> block5_2 (T branch)
    x5 = cbr(cbr(x3_ref[...], w4x_ref, s4x_ref), w5x_ref, s5x_ref)   # (B, 128)
    t5 = cbr(cbr(t3_ref[...], w4t_ref, s4t_ref), w5t_ref, s5t_ref)   # (B, 128)

    # LSTM 1: gates = [x_feat | T_feat] @ W_ih^T + b_ih + b_hh  (W_hh @ h0 == 0)
    g1 = (jnp.dot(x5.astype(jnp.bfloat16), wl1x_ref[...],
                  preferred_element_type=jnp.float32)
          + jnp.dot(t5.astype(jnp.bfloat16), wl1t_ref[...],
                    preferred_element_type=jnp.float32)
          + bl1_ref[...])
    h1 = lstm_step(g1, h1_dim)                                       # (B, 256)

    # LSTM 2
    g2 = jnp.dot(h1.astype(jnp.bfloat16), wl2_ref[...],
                 preferred_element_type=jnp.float32) + bl2_ref[...]
    h2 = lstm_step(g2, h2_dim)                                       # (B, 512)

    # FC head: Linear -> ReLU -> (Dropout: identity) -> Linear
    h = jnp.maximum(
        jnp.dot(h2.astype(jnp.bfloat16), wf1_ref[...],
                preferred_element_type=jnp.float32) + bf1_ref[...], 0.0)
    out = jnp.dot(h.astype(jnp.bfloat16), wf2_ref[...],
                  preferred_element_type=jnp.float32) + bf2_ref[...]
    out_ref[...] = out.astype(out_ref.dtype)


def tail(kp, x3f, t3f):
    B = x3f.shape[0]
    n_cls = kp["Bf2"].shape[1]
    h1_dim = kp["bl1"].shape[1] // 3
    h2_dim = kp["bl2"].shape[1] // 3
    args = [x3f, t3f,
            kp["W4x"], kp["S4x"], kp["W4t"], kp["S4t"],
            kp["W5x"], kp["S5x"], kp["W5t"], kp["S5t"],
            kp["Wl1x"], kp["Wl1t"], kp["bl1"], kp["Wl2"], kp["bl2"],
            kp["Wf1"], kp["Bf1"], kp["Wf2"], kp["Bf2"]]
    vmem = pl.BlockSpec(memory_space=pltpu.MemorySpace.VMEM)
    return pl.pallas_call(
        functools.partial(_tail_kernel, h1_dim=h1_dim, h2_dim=h2_dim),
        out_shape=jax.ShapeDtypeStruct((B, n_cls), jnp.float32),
        in_specs=[vmem] * len(args),
        out_specs=vmem,
    )(*args)


# ---------------------------------------------------------------------------
# Parameter preparation (one-time, outside the hot path)
# ---------------------------------------------------------------------------
def _fold_conv_bn(p):
    """Conv2d + BatchNorm2d(eval) -> (kh*kw*Cin, Cout) weight + (Cout,) shift.

    Weight rows are ordered tap-major / cin-minor, matching channels-last
    non-overlapping-window patches."""
    scale = p["gamma"] / jnp.sqrt(p["var"] + _BN_EPS)
    cout, cin, kh, kw = p["w"].shape
    wm = jnp.transpose(p["w"], (2, 3, 1, 0)).reshape(kh * kw * cin, cout)
    wm = wm * scale[None, :]
    shift = p["beta"] + (p["b"] - p["mean"]) * scale
    return wm, shift


def _group(wm, g):
    """Block-diagonal replication: one matmul row handles g adjacent windows."""
    return jnp.kron(jnp.eye(g, dtype=wm.dtype), wm)


def _bilinear_matrix(in_size, out_size):
    """(in,out) matrix of 1-D bilinear resize, align_corners=False (exact)."""
    scale = in_size / out_size
    src = jnp.clip((jnp.arange(out_size, dtype=jnp.float32) + 0.5) * scale - 0.5,
                   0.0, in_size - 1)
    lo = jnp.floor(src).astype(jnp.int32)
    hi = jnp.minimum(lo + 1, in_size - 1)
    frac = src - lo.astype(jnp.float32)
    cols = jnp.arange(out_size)
    r = jnp.zeros((in_size, out_size), jnp.float32)
    r = r.at[lo, cols].add(1.0 - frac)
    r = r.at[hi, cols].add(frac)
    return r


def prepare_params(raw, num_T):
    g1 = 32          # stage-1 windows per matmul row (=> 8 stage-2, 2 stage-3)
    g2 = g1 // 4     # stage-2 windows per row
    bf = jnp.bfloat16
    f32 = jnp.float32
    kp = {}

    def conv(name, group):
        wm, shift = _fold_conv_bn(raw[name])
        return (_group(wm, group).astype(bf),
                jnp.tile(shift, group)[None, :].astype(f32))

    # stage 1
    kp["W1x"], kp["S1x"] = conv("b1_1", g1)
    kp["W1f"], kp["S1f"] = conv("b1_2", g1)
    # T branch: fold interpolate(x, (4, 256), 'bilinear', align_corners=False)
    # into the grouped stage-1 T weight.  The resize is a fixed linear map; a
    # group of 64 resized samples only reads the matching 256 input samples, so
    # composing the per-group resize block with the grouped conv is exact.
    w1t, s1t = _fold_conv_bn(raw["b1_3"])                 # (2, num_T)
    rblk = _bilinear_matrix(g1 * 8, g1 * 2)               # (256, 64)
    kp["W1t"] = (rblk @ _group(w1t, g1)).astype(bf)       # (256, 32*num_T)
    kp["S1t"] = jnp.tile(s1t, g1)[None, :].astype(f32)

    # stage 2
    kp["W2x"], kp["S2x"] = conv("b2_1", g2)
    kp["W2f"], kp["S2f"] = conv("b2_2", g2)
    kp["W2t"], kp["S2t"] = conv("b2_3", g2)

    # stage 3: separate even-window / odd-window weights -> MaxPool2d((1,2))
    # becomes an elementwise max in the kernel (no in-kernel relayout).
    def conv3(name):
        wm, shift = _fold_conv_bn(raw[name])              # (128, 3*num_T)
        z = jnp.zeros_like(wm)
        we = jnp.concatenate([wm, z], axis=0).astype(bf)
        wo = jnp.concatenate([z, wm], axis=0).astype(bf)
        return we, wo, shift[None, :].astype(f32)

    kp["W3xe"], kp["W3xo"], kp["S3x"] = conv3("b3_1")
    kp["W3fe"], kp["W3fo"], kp["S3f"] = conv3("b3_2")
    kp["W3te"], kp["W3to"], kp["S3t"] = conv3("b3_3")

    # stage 4 + 5 (block4_2 / the F branch is unused by the PyTorch forward)
    kp["W4x"], kp["S4x"] = conv("b4_1", 4)
    kp["W4t"], kp["S4t"] = conv("b4_3", 4)
    kp["W5x"], kp["S5x"] = conv("b5_1", 2)
    kp["W5t"], kp["S5t"] = conv("b5_2", 2)

    # LSTM 1: keep only the i / g / o gate columns (forget gate multiplies
    # c0 == 0), split the input rows into the x / T feature halves, and permute
    # rows so the kernel's channels-last (h, c) feature order matches PyTorch's
    # NCHW (c, h) flatten order.
    cf = 4 * num_T                      # channels after stage 5
    nfeat = 2 * cf                      # per-branch flattened feature length
    w_ih1, b_ih1, b_hh1 = raw["lstm1"]
    hd1 = w_ih1.shape[0] // 4
    keep1 = jnp.concatenate([jnp.arange(hd1), jnp.arange(2 * hd1, 4 * hd1)])
    wt1 = w_ih1.T[:, keep1]                              # (2*nfeat, 3*hd1)
    j = jnp.arange(nfeat)
    perm = (j % cf) * 2 + j // cf                        # (h, c) -> (c, h)
    kp["Wl1x"] = wt1[perm, :].astype(bf)
    kp["Wl1t"] = wt1[nfeat + perm, :].astype(bf)
    kp["bl1"] = (b_ih1 + b_hh1)[keep1][None, :].astype(f32)

    w_ih2, b_ih2, b_hh2 = raw["lstm2"]
    hd2 = w_ih2.shape[0] // 4
    keep2 = jnp.concatenate([jnp.arange(hd2), jnp.arange(2 * hd2, 4 * hd2)])
    kp["Wl2"] = w_ih2.T[:, keep2].astype(bf)
    kp["bl2"] = (b_ih2 + b_hh2)[keep2][None, :].astype(f32)

    fc1_w, fc1_b = raw["fc1"]
    fc2_w, fc2_b = raw["fc2"]
    kp["Wf1"] = fc1_w.T.astype(bf)
    kp["Bf1"] = fc1_b[None, :].astype(f32)
    kp["Wf2"] = fc2_w.T.astype(bf)
    kp["Bf2"] = fc2_b[None, :].astype(f32)
    return kp


# ---------------------------------------------------------------------------
# Deterministic raw-parameter init (mirrors State_Detection.__init__ shapes)
# ---------------------------------------------------------------------------
def init_params(key, num_T, hidden, num_classes):
    keys = iter(jax.random.split(key, 96))

    def nk():
        return next(keys)

    def conv_bn(cin, cout, kh, kw):
        fan_in = cin * kh * kw
        bnd = 1.0 / jnp.sqrt(jnp.float32(fan_in))
        return dict(
            w=jax.random.uniform(nk(), (cout, cin, kh, kw), jnp.float32, -bnd, bnd),
            b=jax.random.uniform(nk(), (cout,), jnp.float32, -bnd, bnd),
            gamma=jax.random.uniform(nk(), (cout,), jnp.float32, 0.8, 1.2),
            beta=jax.random.uniform(nk(), (cout,), jnp.float32, -0.1, 0.1),
            mean=jax.random.uniform(nk(), (cout,), jnp.float32, -0.1, 0.1),
            var=jax.random.uniform(nk(), (cout,), jnp.float32, 0.9, 1.1),
        )

    def lstm(inp, hid):
        bnd = 1.0 / jnp.sqrt(jnp.float32(hid))
        w_ih = jax.random.uniform(nk(), (4 * hid, inp), jnp.float32, -bnd, bnd)
        b_ih = jax.random.uniform(nk(), (4 * hid,), jnp.float32, -bnd, bnd)
        b_hh = jax.random.uniform(nk(), (4 * hid,), jnp.float32, -bnd, bnd)
        return (w_ih, b_ih, b_hh)   # W_hh unused: h0 == 0 and seq_len == 1

    def linear(inp, out):
        bnd = 1.0 / jnp.sqrt(jnp.float32(inp))
        w = jax.random.uniform(nk(), (out, inp), jnp.float32, -bnd, bnd)
        b = jax.random.uniform(nk(), (out,), jnp.float32, -bnd, bnd)
        return (w, b)

    p = {}
    p["b1_1"] = conv_bn(1, num_T, 1, 8)
    p["b1_2"] = conv_bn(1, num_T, 1, 8)
    p["b1_3"] = conv_bn(1, num_T, 1, 2)
    p["b2_1"] = conv_bn(num_T, num_T * 2, 1, 4)
    p["b2_2"] = conv_bn(num_T, num_T * 2, 1, 4)
    p["b2_3"] = conv_bn(num_T, num_T * 2, 1, 4)
    p["b3_1"] = conv_bn(num_T * 2, num_T * 3, 1, 4)
    p["b3_2"] = conv_bn(num_T * 2, num_T * 3, 1, 4)
    p["b3_3"] = conv_bn(num_T * 2, num_T * 3, 1, 4)
    p["b4_1"] = conv_bn(num_T * 3, num_T * 4, 1, 4)
    p["b4_2"] = conv_bn(num_T * 3, num_T * 4, 1, 4)   # dead in forward, kept for fidelity
    p["b4_3"] = conv_bn(num_T * 3, num_T * 4, 1, 4)
    p["b5_1"] = conv_bn(num_T * 4, num_T * 4, 2, 1)
    p["b5_2"] = conv_bn(num_T * 4, num_T * 4, 2, 1)
    p["lstm1"] = lstm(256, 256)
    p["lstm2"] = lstm(256, 512)
    p["fc1"] = linear(num_T * 32, hidden * 16)
    p["fc2"] = linear(hidden * 16, num_classes)
    return p


# ---------------------------------------------------------------------------
# Forward pass (inference mode: Dropout / Dropout2d are identity)
# ---------------------------------------------------------------------------
def state_detection_forward(kp, F_in, x_batch):
    B, C, H, W = x_batch.shape
    # Architectural constraints of the module (width must collapse to 1 and the
    # flattened features must be 256-wide to feed LSTM(256, ...)).
    assert C == 1 and H == 4 and W == 1024

    samples_per_row = 32 * 8                    # 32 stage-1 windows of width 8
    M = B * H * (W // samples_per_row)          # = 16 * B matmul rows
    xp = x_batch.reshape(M, samples_per_row)    # channels-last (Cin == 1): pure reshape
    fp = F_in.reshape(M, samples_per_row)

    x3, t3 = conv_stack(kp, xp, fp)             # each (M, 3*num_T), channels-last
    x3 = x3.reshape(B, -1)                      # (B, 4*4*3*num_T) -- stage-4 patch rows
    t3 = t3.reshape(B, -1)
    return tail(kp, x3, t3)                     # (B, num_classes)


# ---------------------------------------------------------------------------
if __name__ == "__main__":
    # num_T is architecturally constrained to 16 (flattened features must be
    # 256 to feed LSTM(256, ...)); inputs must be (B, 1, 4, 1024) so the width
    # collapses to 1 after the conv stack (1024 / (8*4*4*2*4) == 1).
    num_T, hidden, num_classes = 16, 32, 4
    B = 2

    key = jax.random.PRNGKey(0)
    k_params, k_x, k_f = jax.random.split(key, 3)
    raw_params = init_params(k_params, num_T, hidden, num_classes)
    kernel_params = prepare_params(raw_params, num_T)

    x_batch = jax.random.normal(k_x, (B, 1, 4, 1024), dtype=jnp.float32)
    F_in = jax.random.normal(k_f, (B, 1, 4, 1024), dtype=jnp.float32)

    fwd = jax.jit(state_detection_forward)
    out = jax.block_until_ready(fwd(kernel_params, F_in, x_batch))
    assert out.shape == (B, num_classes), out.shape
    print("KERNEL_OK")
</pallas_src>

<mosaic_0001>
module attributes {stable_mosaic.version = 11 : i64} {
  func.func @_conv_stack_kernel(%arg0: i32, %arg1: memref<16x256xf32, #tpu.memory_space<vmem>>, %arg2: memref<16x256xf32, #tpu.memory_space<vmem>>, %arg3: memref<256x512xbf16, #tpu.memory_space<vmem>>, %arg4: memref<256x512xbf16, #tpu.memory_space<vmem>>, %arg5: memref<256x512xbf16, #tpu.memory_space<vmem>>, %arg6: memref<1x512xf32, #tpu.memory_space<vmem>>, %arg7: memref<1x512xf32, #tpu.memory_space<vmem>>, %arg8: memref<1x512xf32, #tpu.memory_space<vmem>>, %arg9: memref<512x256xbf16, #tpu.memory_space<vmem>>, %arg10: memref<512x256xbf16, #tpu.memory_space<vmem>>, %arg11: memref<512x256xbf16, #tpu.memory_space<vmem>>, %arg12: memref<1x256xf32, #tpu.memory_space<vmem>>, %arg13: memref<1x256xf32, #tpu.memory_space<vmem>>, %arg14: memref<1x256xf32, #tpu.memory_space<vmem>>, %arg15: memref<256x48xbf16, #tpu.memory_space<vmem>>, %arg16: memref<256x48xbf16, #tpu.memory_space<vmem>>, %arg17: memref<256x48xbf16, #tpu.memory_space<vmem>>, %arg18: memref<256x48xbf16, #tpu.memory_space<vmem>>, %arg19: memref<256x48xbf16, #tpu.memory_space<vmem>>, %arg20: memref<256x48xbf16, #tpu.memory_space<vmem>>, %arg21: memref<1x48xf32, #tpu.memory_space<vmem>>, %arg22: memref<1x48xf32, #tpu.memory_space<vmem>>, %arg23: memref<1x48xf32, #tpu.memory_space<vmem>>, %arg24: memref<16x48xf32, #tpu.memory_space<vmem>>, %arg25: memref<16x48xf32, #tpu.memory_space<vmem>>) attributes {dimension_semantics = [#tpu.dimension_semantics<parallel>], iteration_bounds = array<i64: 2>, scalar_prefetch = 0 : i64, scratch_operands = 0 : i64, tpu.core_type = #tpu.core_type<tc>, window_params = [{transform_indices = @transform_0, window_bounds = array<i64: 16, 256>}, {transform_indices = @transform_1, window_bounds = array<i64: 16, 256>}, {pipeline_mode = #tpu.pipeline_mode<synchronous>, transform_indices = @transform_2, window_bounds = array<i64: 256, 512>}, {pipeline_mode = #tpu.pipeline_mode<synchronous>, transform_indices = @transform_3, window_bounds = array<i64: 256, 512>}, {pipeline_mode = #tpu.pipeline_mode<synchronous>, transform_indices = @transform_4, window_bounds = array<i64: 256, 512>}, {pipeline_mode = #tpu.pipeline_mode<synchronous>, transform_indices = @transform_5, window_bounds = array<i64: 1, 512>}, {pipeline_mode = #tpu.pipeline_mode<synchronous>, transform_indices = @transform_6, window_bounds = array<i64: 1, 512>}, {pipeline_mode = #tpu.pipeline_mode<synchronous>, transform_indices = @transform_7, window_bounds = array<i64: 1, 512>}, {pipeline_mode = #tpu.pipeline_mode<synchronous>, transform_indices = @transform_8, window_bounds = array<i64: 512, 256>}, {pipeline_mode = #tpu.pipeline_mode<synchronous>, transform_indices = @transform_9, window_bounds = array<i64: 512, 256>}, {pipeline_mode = #tpu.pipeline_mode<synchronous>, transform_indices = @transform_10, window_bounds = array<i64: 512, 256>}, {pipeline_mode = #tpu.pipeline_mode<synchronous>, transform_indices = @transform_11, window_bounds = array<i64: 1, 256>}, {pipeline_mode = #tpu.pipeline_mode<synchronous>, transform_indices = @transform_12, window_bounds = array<i64: 1, 256>}, {pipeline_mode = #tpu.pipeline_mode<synchronous>, transform_indices = @transform_13, window_bounds = array<i64: 1, 256>}, {pipeline_mode = #tpu.pipeline_mode<synchronous>, transform_indices = @transform_14, window_bounds = array<i64: 256, 48>}, {pipeline_mode = #tpu.pipeline_mode<synchronous>, transform_indices = @transform_15, window_bounds = array<i64: 256, 48>}, {pipeline_mode = #tpu.pipeline_mode<synchronous>, transform_indices = @transform_16, window_bounds = array<i64: 256, 48>}, {pipeline_mode = #tpu.pipeline_mode<synchronous>, transform_indices = @transform_17, window_bounds = array<i64: 256, 48>}, {pipeline_mode = #tpu.pipeline_mode<synchronous>, transform_indices = @transform_18, window_bounds = array<i64: 256, 48>}, {pipeline_mode = #tpu.pipeline_mode<synchronous>, transform_indices = @transform_19, window_bounds = array<i64: 256, 48>}, {pipeline_mode = #tpu.pipeline_mode<synchronous>, transform_indices = @transform_20, window_bounds = array<i64: 1, 48>}, {pipeline_mode = #tpu.pipeline_mode<synchronous>, transform_indices = @transform_21, window_bounds = array<i64: 1, 48>}, {pipeline_mode = #tpu.pipeline_mode<synchronous>, transform_indices = @transform_22, window_bounds = array<i64: 1, 48>}, {transform_indices = @transform_23, window_bounds = array<i64: 16, 48>}, {transform_indices = @transform_24, window_bounds = array<i64: 16, 48>}]} {
    %c0 = arith.constant 0 : index
    %c0_0 = arith.constant 0 : index
    %0 = vector.load %arg1[%c0, %c0_0] : memref<16x256xf32, #tpu.memory_space<vmem>>, vector<16x256xf32>
    %1 = arith.truncf %0 : vector<16x256xf32> to vector<16x256xbf16>
    %c0_1 = arith.constant 0 : index
    %c0_2 = arith.constant 0 : index
    %2 = vector.load %arg2[%c0_1, %c0_2] : memref<16x256xf32, #tpu.memory_space<vmem>>, vector<16x256xf32>
    %3 = arith.truncf %2 : vector<16x256xf32> to vector<16x256xbf16>
    %c0_3 = arith.constant 0 : index
    %c0_4 = arith.constant 0 : index
    %4 = vector.load %arg3[%c0_3, %c0_4] : memref<256x512xbf16, #tpu.memory_space<vmem>>, vector<256x512xbf16>
    %cst = arith.constant dense<0.000000e+00> : vector<16x512xf32>
    %5 = tpu.matmul %1, %4, %cst {dimension_numbers = #tpu.dot_dimension_numbers<[1], [0], [0], [1], [0, 0, 1, 1], [], []>} : vector<16x256xbf16>, vector<256x512xbf16>, vector<16x512xf32> -> vector<16x512xf32>
    %c0_5 = arith.constant 0 : index
    %c0_6 = arith.constant 0 : index
    %6 = vector.load %arg6[%c0_5, %c0_6] : memref<1x512xf32, #tpu.memory_space<vmem>>, vector<1x512xf32>
    %7 = vector.broadcast %6 : vector<1x512xf32> to vector<16x512xf32>
    %8 = arith.addf %5, %7 : vector<16x512xf32>
    %cst_7 = arith.constant 0.000000e+00 : f32
    %9 = vector.broadcast %cst_7 : f32 to vector<16x512xf32>
    %10 = arith.maximumf %8, %9 : vector<16x512xf32>
    %c0_8 = arith.constant 0 : index
    %c0_9 = arith.constant 0 : index
    %11 = vector.load %arg4[%c0_8, %c0_9] : memref<256x512xbf16, #tpu.memory_space<vmem>>, vector<256x512xbf16>
    %cst_10 = arith.constant dense<0.000000e+00> : vector<16x512xf32>
    %12 = tpu.matmul %3, %11, %cst_10 {dimension_numbers = #tpu.dot_dimension_numbers<[1], [0], [0], [1], [0, 0, 1, 1], [], []>} : vector<16x256xbf16>, vector<256x512xbf16>, vector<16x512xf32> -> vector<16x512xf32>
    %c0_11 = arith.constant 0 : index
    %c0_12 = arith.constant 0 : index
    %13 = vector.load %arg7[%c0_11, %c0_12] : memref<1x512xf32, #tpu.memory_space<vmem>>, vector<1x512xf32>
    %14 = vector.broadcast %13 : vector<1x512xf32> to vector<16x512xf32>
    %15 = arith.addf %12, %14 : vector<16x512xf32>
    %cst_13 = arith.constant 0.000000e+00 : f32
    %16 = vector.broadcast %cst_13 : f32 to vector<16x512xf32>
    %17 = arith.maximumf %15, %16 : vector<16x512xf32>
    %c0_14 = arith.constant 0 : index
    %c0_15 = arith.constant 0 : index
    %18 = vector.load %arg5[%c0_14, %c0_15] : memref<256x512xbf16, #tpu.memory_space<vmem>>, vector<256x512xbf16>
    %cst_16 = arith.constant dense<0.000000e+00> : vector<16x512xf32>
    %19 = tpu.matmul %1, %18, %cst_16 {dimension_numbers = #tpu.dot_dimension_numbers<[1], [0], [0], [1], [0, 0, 1, 1], [], []>} : vector<16x256xbf16>, vector<256x512xbf16>, vector<16x512xf32> -> vector<16x512xf32>
    %c0_17 = arith.constant 0 : index
    %c0_18 = arith.constant 0 : index
    %20 = vector.load %arg8[%c0_17, %c0_18] : memref<1x512xf32, #tpu.memory_space<vmem>>, vector<1x512xf32>
    %21 = vector.broadcast %20 : vector<1x512xf32> to vector<16x512xf32>
    %22 = arith.addf %19, %21 : vector<16x512xf32>
    %cst_19 = arith.constant 0.000000e+00 : f32
    %23 = vector.broadcast %cst_19 : f32 to vector<16x512xf32>
    %24 = arith.maximumf %22, %23 : vector<16x512xf32>
    %25 = arith.addf %24, %17 : vector<16x512xf32>
    %26 = arith.addf %10, %17 : vector<16x512xf32>
    %27 = arith.truncf %17 : vector<16x512xf32> to vector<16x512xbf16>
    %28 = arith.truncf %26 : vector<16x512xf32> to vector<16x512xbf16>
    %c0_20 = arith.constant 0 : index
    %c0_21 = arith.constant 0 : index
    %29 = vector.load %arg9[%c0_20, %c0_21] : memref<512x256xbf16, #tpu.memory_space<vmem>>, vector<512x256xbf16>
    %cst_22 = arith.constant dense<0.000000e+00> : vector<16x256xf32>
    %30 = tpu.matmul %28, %29, %cst_22 {dimension_numbers = #tpu.dot_dimension_numbers<[1], [0], [0], [1], [0, 0, 1, 1], [], []>} : vector<16x512xbf16>, vector<512x256xbf16>, vector<16x256xf32> -> vector<16x256xf32>
    %c0_23 = arith.constant 0 : index
    %c0_24 = arith.constant 0 : index
    %31 = vector.load %arg12[%c0_23, %c0_24] : memref<1x256xf32, #tpu.memory_space<vmem>>, vector<1x256xf32>
    %32 = vector.broadcast %31 : vector<1x256xf32> to vector<16x256xf32>
    %33 = arith.addf %30, %32 : vector<16x256xf32>
    %cst_25 = arith.constant 0.000000e+00 : f32
    %34 = vector.broadcast %cst_25 : f32 to vector<16x256xf32>
    %35 = arith.maximumf %33, %34 : vector<16x256xf32>
    %c0_26 = arith.constant 0 : index
    %c0_27 = arith.constant 0 : index
    %36 = vector.load %arg10[%c0_26, %c0_27] : memref<512x256xbf16, #tpu.memory_space<vmem>>, vector<512x256xbf16>
    %cst_28 = arith.constant dense<0.000000e+00> : vector<16x256xf32>
    %37 = tpu.matmul %27, %36, %cst_28 {dimension_numbers = #tpu.dot_dimension_numbers<[1], [0], [0], [1], [0, 0, 1, 1], [], []>} : vector<16x512xbf16>, vector<512x256xbf16>, vector<16x256xf32> -> vector<16x256xf32>
    %c0_29 = arith.constant 0 : index
    %c0_30 = arith.constant 0 : index
    %38 = vector.load %arg13[%c0_29, %c0_30] : memref<1x256xf32, #tpu.memory_space<vmem>>, vector<1x256xf32>
    %39 = vector.broadcast %38 : vector<1x256xf32> to vector<16x256xf32>
    %40 = arith.addf %37, %39 : vector<16x256xf32>
    %cst_31 = arith.constant 0.000000e+00 : f32
    %41 = vector.broadcast %cst_31 : f32 to vector<16x256xf32>
    %42 = arith.maximumf %40, %41 : vector<16x256xf32>
    %43 = arith.truncf %25 : vector<16x512xf32> to vector<16x512xbf16>
    %c0_32 = arith.constant 0 : index
    %c0_33 = arith.constant 0 : index
    %44 = vector.load %arg11[%c0_32, %c0_33] : memref<512x256xbf16, #tpu.memory_space<vmem>>, vector<512x256xbf16>
    %cst_34 = arith.constant dense<0.000000e+00> : vector<16x256xf32>
    %45 = tpu.matmul %43, %44, %cst_34 {dimension_numbers = #tpu.dot_dimension_numbers<[1], [0], [0], [1], [0, 0, 1, 1], [], []>} : vector<16x512xbf16>, vector<512x256xbf16>, vector<16x256xf32> -> vector<16x256xf32>
    %c0_35 = arith.constant 0 : index
    %c0_36 = arith.constant 0 : index
    %46 = vector.load %arg14[%c0_35, %c0_36] : memref<1x256xf32, #tpu.memory_space<vmem>>, vector<1x256xf32>
    %47 = vector.broadcast %46 : vector<1x256xf32> to vector<16x256xf32>
    %48 = arith.addf %45, %47 : vector<16x256xf32>
    %cst_37 = arith.constant 0.000000e+00 : f32
    %49 = vector.broadcast %cst_37 : f32 to vector<16x256xf32>
    %50 = arith.maximumf %48, %49 : vector<16x256xf32>
    %51 = arith.mulf %50, %42 : vector<16x256xf32>
    %52 = arith.mulf %35, %42 : vector<16x256xf32>
    %53 = arith.truncf %52 : vector<16x256xf32> to vector<16x256xbf16>
    %c0_38 = arith.constant 0 : index
    %c0_39 = arith.constant 0 : index
    %54 = vector.load %arg15[%c0_38, %c0_39] : memref<256x48xbf16, #tpu.memory_space<vmem>>, vector<256x48xbf16>
    %cst_40 = arith.constant dense<0.000000e+00> : vector<16x48xf32>
    %55 = tpu.matmul %53, %54, %cst_40 {dimension_numbers = #tpu.dot_dimension_numbers<[1], [0], [0], [1], [0, 0, 1, 1], [], []>} : vector<16x256xbf16>, vector<256x48xbf16>, vector<16x48xf32> -> vector<16x48xf32>
    %c0_41 = arith.constant 0 : index
    %c0_42 = arith.constant 0 : index
    %56 = vector.load %arg21[%c0_41, %c0_42] : memref<1x48xf32, #tpu.memory_space<vmem>>, vector<1x48xf32>
    %57 = vector.broadcast %56 : vector<1x48xf32> to vector<16x48xf32>
    %58 = arith.addf %55, %57 : vector<16x48xf32>
    %cst_43 = arith.constant 0.000000e+00 : f32
    %59 = vector.broadcast %cst_43 : f32 to vector<16x48xf32>
    %60 = arith.maximumf %58, %59 : vector<16x48xf32>
    %c0_44 = arith.constant 0 : index
    %c0_45 = arith.constant 0 : index
    %61 = vector.load %arg16[%c0_44, %c0_45] : memref<256x48xbf16, #tpu.memory_space<vmem>>, vector<256x48xbf16>
    %cst_46 = arith.constant dense<0.000000e+00> : vector<16x48xf32>
    %62 = tpu.matmul %53, %61, %cst_46 {dimension_numbers = #tpu.dot_dimension_numbers<[1], [0], [0], [1], [0, 0, 1, 1], [], []>} : vector<16x256xbf16>, vector<256x48xbf16>, vector<16x48xf32> -> vector<16x48xf32>
    %c0_47 = arith.constant 0 : index
    %c0_48 = arith.constant 0 : index
    %63 = vector.load %arg21[%c0_47, %c0_48] : memref<1x48xf32, #tpu.memory_space<vmem>>, vector<1x48xf32>
    %64 = vector.broadcast %63 : vector<1x48xf32> to vector<16x48xf32>
    %65 = arith.addf %62, %64 : vector<16x48xf32>
    %cst_49 = arith.constant 0.000000e+00 : f32
    %66 = vector.broadcast %cst_49 : f32 to vector<16x48xf32>
    %67 = arith.maximumf %65, %66 : vector<16x48xf32>
    %68 = arith.maximumf %60, %67 : vector<16x48xf32>
    %69 = arith.truncf %42 : vector<16x256xf32> to vector<16x256xbf16>
    %c0_50 = arith.constant 0 : index
    %c0_51 = arith.constant 0 : index
    %70 = vector.load %arg17[%c0_50, %c0_51] : memref<256x48xbf16, #tpu.memory_space<vmem>>, vector<256x48xbf16>
    %cst_52 = arith.constant dense<0.000000e+00> : vector<16x48xf32>
    %71 = tpu.matmul %69, %70, %cst_52 {dimension_numbers = #tpu.dot_dimension_numbers<[1], [0], [0], [1], [0, 0, 1, 1], [], []>} : vector<16x256xbf16>, vector<256x48xbf16>, vector<16x48xf32> -> vector<16x48xf32>
    %c0_53 = arith.constant 0 : index
    %c0_54 = arith.constant 0 : index
    %72 = vector.load %arg22[%c0_53, %c0_54] : memref<1x48xf32, #tpu.memory_space<vmem>>, vector<1x48xf32>
    %73 = vector.broadcast %72 : vector<1x48xf32> to vector<16x48xf32>
    %74 = arith.addf %71, %73 : vector<16x48xf32>
    %cst_55 = arith.constant 0.000000e+00 : f32
    %75 = vector.broadcast %cst_55 : f32 to vector<16x48xf32>
    %76 = arith.maximumf %74, %75 : vector<16x48xf32>
    %c0_56 = arith.constant 0 : index
    %c0_57 = arith.constant 0 : index
    %77 = vector.load %arg18[%c0_56, %c0_57] : memref<256x48xbf16, #tpu.memory_space<vmem>>, vector<256x48xbf16>
    %cst_58 = arith.constant dense<0.000000e+00> : vector<16x48xf32>
    %78 = tpu.matmul %69, %77, %cst_58 {dimension_numbers = #tpu.dot_dimension_numbers<[1], [0], [0], [1], [0, 0, 1, 1], [], []>} : vector<16x256xbf16>, vector<256x48xbf16>, vector<16x48xf32> -> vector<16x48xf32>
    %c0_59 = arith.constant 0 : index
    %c0_60 = arith.constant 0 : index
    %79 = vector.load %arg22[%c0_59, %c0_60] : memref<1x48xf32, #tpu.memory_space<vmem>>, vector<1x48xf32>
    %80 = vector.broadcast %79 : vector<1x48xf32> to vector<16x48xf32>
    %81 = arith.addf %78, %80 : vector<16x48xf32>
    %cst_61 = arith.constant 0.000000e+00 : f32
    %82 = vector.broadcast %cst_61 : f32 to vector<16x48xf32>
    %83 = arith.maximumf %81, %82 : vector<16x48xf32>
    %84 = arith.maximumf %76, %83 : vector<16x48xf32>
    %85 = arith.truncf %51 : vector<16x256xf32> to vector<16x256xbf16>
    %c0_62 = arith.constant 0 : index
    %c0_63 = arith.constant 0 : index
    %86 = vector.load %arg19[%c0_62, %c0_63] : memref<256x48xbf16, #tpu.memory_space<vmem>>, vector<256x48xbf16>
    %cst_64 = arith.constant dense<0.000000e+00> : vector<16x48xf32>
    %87 = tpu.matmul %85, %86, %cst_64 {dimension_numbers = #tpu.dot_dimension_numbers<[1], [0], [0], [1], [0, 0, 1, 1], [], []>} : vector<16x256xbf16>, vector<256x48xbf16>, vector<16x48xf32> -> vector<16x48xf32>
    %c0_65 = arith.constant 0 : index
    %c0_66 = arith.constant 0 : index
    %88 = vector.load %arg23[%c0_65, %c0_66] : memref<1x48xf32, #tpu.memory_space<vmem>>, vector<1x48xf32>
    %89 = vector.broadcast %88 : vector<1x48xf32> to vector<16x48xf32>
    %90 = arith.addf %87, %89 : vector<16x48xf32>
    %cst_67 = arith.constant 0.000000e+00 : f32
    %91 = vector.broadcast %cst_67 : f32 to vector<16x48xf32>
    %92 = arith.maximumf %90, %91 : vector<16x48xf32>
    %c0_68 = arith.constant 0 : index
    %c0_69 = arith.constant 0 : index
    %93 = vector.load %arg20[%c0_68, %c0_69] : memref<256x48xbf16, #tpu.memory_space<vmem>>, vector<256x48xbf16>
    %cst_70 = arith.constant dense<0.000000e+00> : vector<16x48xf32>
    %94 = tpu.matmul %85, %93, %cst_70 {dimension_numbers = #tpu.dot_dimension_numbers<[1], [0], [0], [1], [0, 0, 1, 1], [], []>} : vector<16x256xbf16>, vector<256x48xbf16>, vector<16x48xf32> -> vector<16x48xf32>
    %c0_71 = arith.constant 0 : index
    %c0_72 = arith.constant 0 : index
    %95 = vector.load %arg23[%c0_71, %c0_72] : memref<1x48xf32, #tpu.memory_space<vmem>>, vector<1x48xf32>
    %96 = vector.broadcast %95 : vector<1x48xf32> to vector<16x48xf32>
    %97 = arith.addf %94, %96 : vector<16x48xf32>
    %cst_73 = arith.constant 0.000000e+00 : f32
    %98 = vector.broadcast %cst_73 : f32 to vector<16x48xf32>
    %99 = arith.maximumf %97, %98 : vector<16x48xf32>
    %100 = arith.maximumf %92, %99 : vector<16x48xf32>
    %101 = arith.addf %68, %84 : vector<16x48xf32>
    %c0_74 = arith.constant 0 : index
    %c0_75 = arith.constant 0 : index
    %102 = vector.load %arg24[%c0_74, %c0_75] : memref<16x48xf32, #tpu.memory_space<vmem>>, vector<16x48xf32>
    tpu.vector_store %arg24[%c0_74, %c0_75], %101 {strides = array<i32>} : memref<16x48xf32, #tpu.memory_space<vmem>>, vector<16x48xf32>,
    %103 = arith.addf %100, %84 : vector<16x48xf32>
    %c0_76 = arith.constant 0 : index
    %c0_77 = arith.constant 0 : index
    %104 = vector.load %arg25[%c0_76, %c0_77] : memref<16x48xf32, #tpu.memory_space<vmem>>, vector<16x48xf32>
    tpu.vector_store %arg25[%c0_76, %c0_77], %103 {strides = array<i32>} : memref<16x48xf32, #tpu.memory_space<vmem>>, vector<16x48xf32>,
    return
  }
  func.func @transform_0(%arg0: i32) -> (i32, i32) {
    %c0_i32 = arith.constant 0 : i32
    %c0_i32_0 = arith.constant 0 : i32
    return %arg0, %c0_i32 : i32, i32
  }
  func.func @transform_1(%arg0: i32) -> (i32, i32) {
    %c0_i32 = arith.constant 0 : i32
    %c0_i32_0 = arith.constant 0 : i32
    return %arg0, %c0_i32 : i32, i32
  }
  func.func @transform_2(%arg0: i32) -> (i32, i32) {
    %c0_i32 = arith.constant 0 : i32
    %c0_i32_0 = arith.constant 0 : i32
    %c0_i32_1 = arith.constant 0 : i32
    return %c0_i32, %c0_i32_0 : i32, i32
  }
  func.func @transform_3(%arg0: i32) -> (i32, i32) {
    %c0_i32 = arith.constant 0 : i32
    %c0_i32_0 = arith.constant 0 : i32
    %c0_i32_1 = arith.constant 0 : i32
    return %c0_i32, %c0_i32_0 : i32, i32
  }
  func.func @transform_4(%arg0: i32) -> (i32, i32) {
    %c0_i32 = arith.constant 0 : i32
    %c0_i32_0 = arith.constant 0 : i32
    %c0_i32_1 = arith.constant 0 : i32
    return %c0_i32, %c0_i32_0 : i32, i32
  }
  func.func @transform_5(%arg0: i32) -> (i32, i32) {
    %c0_i32 = arith.constant 0 : i32
    %c0_i32_0 = arith.constant 0 : i32
    %c0_i32_1 = arith.constant 0 : i32
    return %c0_i32, %c0_i32_0 : i32, i32
  }
  func.func @transform_6(%arg0: i32) -> (i32, i32) {
    %c0_i32 = arith.constant 0 : i32
    %c0_i32_0 = arith.constant 0 : i32
    %c0_i32_1 = arith.constant 0 : i32
    return %c0_i32, %c0_i32_0 : i32, i32
  }
  func.func @transform_7(%arg0: i32) -> (i32, i32) {
    %c0_i32 = arith.constant 0 : i32
    %c0_i32_0 = arith.constant 0 : i32
    %c0_i32_1 = arith.constant 0 : i32
    return %c0_i32, %c0_i32_0 : i32, i32
  }
  func.func @transform_8(%arg0: i32) -> (i32, i32) {
    %c0_i32 = arith.constant 0 : i32
    %c0_i32_0 = arith.constant 0 : i32
    %c0_i32_1 = arith.constant 0 : i32
    return %c0_i32, %c0_i32_0 : i32, i32
  }
  func.func @transform_9(%arg0: i32) -> (i32, i32) {
    %c0_i32 = arith.constant 0 : i32
    %c0_i32_0 = arith.constant 0 : i32
    %c0_i32_1 = arith.constant 0 : i32
    return %c0_i32, %c0_i32_0 : i32, i32
  }
  func.func @transform_10(%arg0: i32) -> (i32, i32) {
    %c0_i32 = arith.constant 0 : i32
    %c0_i32_0 = arith.constant 0 : i32
    %c0_i32_1 = arith.constant 0 : i32
    return %c0_i32, %c0_i32_0 : i32, i32
  }
  func.func @transform_11(%arg0: i32) -> (i32, i32) {
    %c0_i32 = arith.constant 0 : i32
    %c0_i32_0 = arith.constant 0 : i32
    %c0_i32_1 = arith.constant 0 : i32
    return %c0_i32, %c0_i32_0 : i32, i32
  }
  func.func @transform_12(%arg0: i32) -> (i32, i32) {
    %c0_i32 = arith.constant 0 : i32
    %c0_i32_0 = arith.constant 0 : i32
    %c0_i32_1 = arith.constant 0 : i32
    return %c0_i32, %c0_i32_0 : i32, i32
  }
  func.func @transform_13(%arg0: i32) -> (i32, i32) {
    %c0_i32 = arith.constant 0 : i32
    %c0_i32_0 = arith.constant 0 : i32
    %c0_i32_1 = arith.constant 0 : i32
    return %c0_i32, %c0_i32_0 : i32, i32
  }
  func.func @transform_14(%arg0: i32) -> (i32, i32) {
    %c0_i32 = arith.constant 0 : i32
    %c0_i32_0 = arith.constant 0 : i32
    %c0_i32_1 = arith.constant 0 : i32
    return %c0_i32, %c0_i32_0 : i32, i32
  }
  func.func @transform_15(%arg0: i32) -> (i32, i32) {
    %c0_i32 = arith.constant 0 : i32
    %c0_i32_0 = arith.constant 0 : i32
    %c0_i32_1 = arith.constant 0 : i32
    return %c0_i32, %c0_i32_0 : i32, i32
  }
  func.func @transform_16(%arg0: i32) -> (i32, i32) {
    %c0_i32 = arith.constant 0 : i32
    %c0_i32_0 = arith.constant 0 : i32
    %c0_i32_1 = arith.constant 0 : i32
    return %c0_i32, %c0_i32_0 : i32, i32
  }
  func.func @transform_17(%arg0: i32) -> (i32, i32) {
    %c0_i32 = arith.constant 0 : i32
    %c0_i32_0 = arith.constant 0 : i32
    %c0_i32_1 = arith.constant 0 : i32
    return %c0_i32, %c0_i32_0 : i32, i32
  }
  func.func @transform_18(%arg0: i32) -> (i32, i32) {
    %c0_i32 = arith.constant 0 : i32
    %c0_i32_0 = arith.constant 0 : i32
    %c0_i32_1 = arith.constant 0 : i32
    return %c0_i32, %c0_i32_0 : i32, i32
  }
  func.func @transform_19(%arg0: i32) -> (i32, i32) {
    %c0_i32 = arith.constant 0 : i32
    %c0_i32_0 = arith.constant 0 : i32
    %c0_i32_1 = arith.constant 0 : i32
    return %c0_i32, %c0_i32_0 : i32, i32
  }
  func.func @transform_20(%arg0: i32) -> (i32, i32) {
    %c0_i32 = arith.constant 0 : i32
    %c0_i32_0 = arith.constant 0 : i32
    %c0_i32_1 = arith.constant 0 : i32
    return %c0_i32, %c0_i32_0 : i32, i32
  }
  func.func @transform_21(%arg0: i32) -> (i32, i32) {
    %c0_i32 = arith.constant 0 : i32
    %c0_i32_0 = arith.constant 0 : i32
    %c0_i32_1 = arith.constant 0 : i32
    return %c0_i32, %c0_i32_0 : i32, i32
  }
  func.func @transform_22(%arg0: i32) -> (i32, i32) {
    %c0_i32 = arith.constant 0 : i32
    %c0_i32_0 = arith.constant 0 : i32
    %c0_i32_1 = arith.constant 0 : i32
    return %c0_i32, %c0_i32_0 : i32, i32
  }
  func.func @transform_23(%arg0: i32) -> (i32, i32) {
    %c0_i32 = arith.constant 0 : i32
    %c0_i32_0 = arith.constant 0 : i32
    return %arg0, %c0_i32 : i32, i32
  }
  func.func @transform_24(%arg0: i32) -> (i32, i32) {
    %c0_i32 = arith.constant 0 : i32
    %c0_i32_0 = arith.constant 0 : i32
    return %arg0, %c0_i32 : i32, i32
  }
}

module attributes {stable_mosaic.version = 11 : i64} {
  func.func @_tail_kernel(%arg0: memref<2x768xf32, #tpu.memory_space<vmem>>, %arg1: memref<2x768xf32, #tpu.memory_space<vmem>>, %arg2: memref<768x256xbf16, #tpu.memory_space<vmem>>, %arg3: memref<1x256xf32, #tpu.memory_space<vmem>>, %arg4: memref<768x256xbf16, #tpu.memory_space<vmem>>, %arg5: memref<1x256xf32, #tpu.memory_space<vmem>>, %arg6: memref<256x128xbf16, #tpu.memory_space<vmem>>, %arg7: memref<1x128xf32, #tpu.memory_space<vmem>>, %arg8: memref<256x128xbf16, #tpu.memory_space<vmem>>, %arg9: memref<1x128xf32, #tpu.memory_space<vmem>>, %arg10: memref<128x768xbf16, #tpu.memory_space<vmem>>, %arg11: memref<128x768xbf16, #tpu.memory_space<vmem>>, %arg12: memref<1x768xf32, #tpu.memory_space<vmem>>, %arg13: memref<256x1536xbf16, #tpu.memory_space<vmem>>, %arg14: memref<1x1536xf32, #tpu.memory_space<vmem>>, %arg15: memref<512x512xbf16, #tpu.memory_space<vmem>>, %arg16: memref<1x512xf32, #tpu.memory_space<vmem>>, %arg17: memref<512x4xbf16, #tpu.memory_space<vmem>>, %arg18: memref<1x4xf32, #tpu.memory_space<vmem>>, %arg19: memref<2x4xf32, #tpu.memory_space<vmem>>) attributes {dimension_semantics = [], scalar_prefetch = 0 : i64, scratch_operands = 0 : i64, tpu.core_type = #tpu.core_type<tc>} {
    %c0 = arith.constant 0 : index
    %c0_0 = arith.constant 0 : index
    %0 = vector.load %arg0[%c0, %c0_0] : memref<2x768xf32, #tpu.memory_space<vmem>>, vector<2x768xf32>
    %1 = arith.truncf %0 : vector<2x768xf32> to vector<2x768xbf16>
    %c0_1 = arith.constant 0 : index
    %c0_2 = arith.constant 0 : index
    %2 = vector.load %arg2[%c0_1, %c0_2] : memref<768x256xbf16, #tpu.memory_space<vmem>>, vector<768x256xbf16>
    %cst = arith.constant dense<0.000000e+00> : vector<2x256xf32>
    %3 = tpu.matmul %1, %2, %cst {dimension_numbers = #tpu.dot_dimension_numbers<[1], [0], [0], [1], [0, 0, 1, 1], [], []>} : vector<2x768xbf16>, vector<768x256xbf16>, vector<2x256xf32> -> vector<2x256xf32>
    %c0_3 = arith.constant 0 : index
    %c0_4 = arith.constant 0 : index
    %4 = vector.load %arg3[%c0_3, %c0_4] : memref<1x256xf32, #tpu.memory_space<vmem>>, vector<1x256xf32>
    %5 = vector.broadcast %4 : vector<1x256xf32> to vector<2x256xf32>
    %6 = arith.addf %3, %5 : vector<2x256xf32>
    %cst_5 = arith.constant 0.000000e+00 : f32
    %7 = vector.broadcast %cst_5 : f32 to vector<2x256xf32>
    %8 = arith.maximumf %6, %7 : vector<2x256xf32>
    %9 = arith.truncf %8 : vector<2x256xf32> to vector<2x256xbf16>
    %c0_6 = arith.constant 0 : index
    %c0_7 = arith.constant 0 : index
    %10 = vector.load %arg6[%c0_6, %c0_7] : memref<256x128xbf16, #tpu.memory_space<vmem>>, vector<256x128xbf16>
    %cst_8 = arith.constant dense<0.000000e+00> : vector<2x128xf32>
    %11 = tpu.matmul %9, %10, %cst_8 {dimension_numbers = #tpu.dot_dimension_numbers<[1], [0], [0], [1], [0, 0, 1, 1], [], []>} : vector<2x256xbf16>, vector<256x128xbf16>, vector<2x128xf32> -> vector<2x128xf32>
    %c0_9 = arith.constant 0 : index
    %c0_10 = arith.constant 0 : index
    %12 = vector.load %arg7[%c0_9, %c0_10] : memref<1x128xf32, #tpu.memory_space<vmem>>, vector<1x128xf32>
    %13 = vector.broadcast %12 : vector<1x128xf32> to vector<2x128xf32>
    %14 = arith.addf %11, %13 : vector<2x128xf32>
    %cst_11 = arith.constant 0.000000e+00 : f32
    %15 = vector.broadcast %cst_11 : f32 to vector<2x128xf32>
    %16 = arith.maximumf %14, %15 : vector<2x128xf32>
    %c0_12 = arith.constant 0 : index
    %c0_13 = arith.constant 0 : index
    %17 = vector.load %arg1[%c0_12, %c0_13] : memref<2x768xf32, #tpu.memory_space<vmem>>, vector<2x768xf32>
    %18 = arith.truncf %17 : vector<2x768xf32> to vector<2x768xbf16>
    %c0_14 = arith.constant 0 : index
    %c0_15 = arith.constant 0 : index
    %19 = vector.load %arg4[%c0_14, %c0_15] : memref<768x256xbf16, #tpu.memory_space<vmem>>, vector<768x256xbf16>
    %cst_16 = arith.constant dense<0.000000e+00> : vector<2x256xf32>
    %20 = tpu.matmul %18, %19, %cst_16 {dimension_numbers = #tpu.dot_dimension_numbers<[1], [0], [0], [1], [0, 0, 1, 1], [], []>} : vector<2x768xbf16>, vector<768x256xbf16>, vector<2x256xf32> -> vector<2x256xf32>
    %c0_17 = arith.constant 0 : index
    %c0_18 = arith.constant 0 : index
    %21 = vector.load %arg5[%c0_17, %c0_18] : memref<1x256xf32, #tpu.memory_space<vmem>>, vector<1x256xf32>
    %22 = vector.broadcast %21 : vector<1x256xf32> to vector<2x256xf32>
    %23 = arith.addf %20, %22 : vector<2x256xf32>
    %cst_19 = arith.constant 0.000000e+00 : f32
    %24 = vector.broadcast %cst_19 : f32 to vector<2x256xf32>
    %25 = arith.maximumf %23, %24 : vector<2x256xf32>
    %26 = arith.truncf %25 : vector<2x256xf32> to vector<2x256xbf16>
    %c0_20 = arith.constant 0 : index
    %c0_21 = arith.constant 0 : index
    %27 = vector.load %arg8[%c0_20, %c0_21] : memref<256x128xbf16, #tpu.memory_space<vmem>>, vector<256x128xbf16>
    %cst_22 = arith.constant dense<0.000000e+00> : vector<2x128xf32>
    %28 = tpu.matmul %26, %27, %cst_22 {dimension_numbers = #tpu.dot_dimension_numbers<[1], [0], [0], [1], [0, 0, 1, 1], [], []>} : vector<2x256xbf16>, vector<256x128xbf16>, vector<2x128xf32> -> vector<2x128xf32>
    %c0_23 = arith.constant 0 : index
    %c0_24 = arith.constant 0 : index
    %29 = vector.load %arg9[%c0_23, %c0_24] : memref<1x128xf32, #tpu.memory_space<vmem>>, vector<1x128xf32>
    %30 = vector.broadcast %29 : vector<1x128xf32> to vector<2x128xf32>
    %31 = arith.addf %28, %30 : vector<2x128xf32>
    %cst_25 = arith.constant 0.000000e+00 : f32
    %32 = vector.broadcast %cst_25 : f32 to vector<2x128xf32>
    %33 = arith.maximumf %31, %32 : vector<2x128xf32>
    %34 = arith.truncf %16 : vector<2x128xf32> to vector<2x128xbf16>
    %c0_26 = arith.constant 0 : index
    %c0_27 = arith.constant 0 : index
    %35 = vector.load %arg10[%c0_26, %c0_27] : memref<128x768xbf16, #tpu.memory_space<vmem>>, vector<128x768xbf16>
    %cst_28 = arith.constant dense<0.000000e+00> : vector<2x768xf32>
    %36 = tpu.matmul %34, %35, %cst_28 {dimension_numbers = #tpu.dot_dimension_numbers<[1], [0], [0], [1], [0, 0, 1, 1], [], []>} : vector<2x128xbf16>, vector<128x768xbf16>, vector<2x768xf32> -> vector<2x768xf32>
    %37 = arith.truncf %33 : vector<2x128xf32> to vector<2x128xbf16>
    %c0_29 = arith.constant 0 : index
    %c0_30 = arith.constant 0 : index
    %38 = vector.load %arg11[%c0_29, %c0_30] : memref<128x768xbf16, #tpu.memory_space<vmem>>, vector<128x768xbf16>
    %cst_31 = arith.constant dense<0.000000e+00> : vector<2x768xf32>
    %39 = tpu.matmul %37, %38, %cst_31 {dimension_numbers = #tpu.dot_dimension_numbers<[1], [0], [0], [1], [0, 0, 1, 1], [], []>} : vector<2x128xbf16>, vector<128x768xbf16>, vector<2x768xf32> -> vector<2x768xf32>
    %40 = arith.addf %36, %39 : vector<2x768xf32>
    %c0_32 = arith.constant 0 : index
    %c0_33 = arith.constant 0 : index
    %41 = vector.load %arg12[%c0_32, %c0_33] : memref<1x768xf32, #tpu.memory_space<vmem>>, vector<1x768xf32>
    %42 = vector.broadcast %41 : vector<1x768xf32> to vector<2x768xf32>
    %43 = arith.addf %40, %42 : vector<2x768xf32>
    %44 = vector.extract_strided_slice %43 {offsets = [0, 0], sizes = [2, 256], strides = [1, 1]} : vector<2x768xf32> to vector<2x256xf32>
    %45 = arith.negf %44 : vector<2x256xf32>
    %46 = math.exp %45 : vector<2x256xf32>
    %cst_34 = arith.constant 1.000000e+00 : f32
    %47 = vector.broadcast %cst_34 : f32 to vector<2x256xf32>
    %48 = arith.addf %47, %46 : vector<2x256xf32>
    %49 = arith.divf %47, %48 : vector<2x256xf32>
    %50 = vector.extract_strided_slice %43 {offsets = [0, 256], sizes = [2, 256], strides = [1, 1]} : vector<2x768xf32> to vector<2x256xf32>
    %51 = math.tanh %50 : vector<2x256xf32>
    %52 = vector.extract_strided_slice %43 {offsets = [0, 512], sizes = [2, 256], strides = [1, 1]} : vector<2x768xf32> to vector<2x256xf32>
    %53 = arith.negf %52 : vector<2x256xf32>
    %54 = math.exp %53 : vector<2x256xf32>
    %cst_35 = arith.constant 1.000000e+00 : f32
    %55 = vector.broadcast %cst_35 : f32 to vector<2x256xf32>
    %56 = arith.addf %55, %54 : vector<2x256xf32>
    %57 = arith.divf %55, %56 : vector<2x256xf32>
    %58 = arith.mulf %49, %51 : vector<2x256xf32>
    %59 = math.tanh %58 : vector<2x256xf32>
    %60 = arith.mulf %57, %59 : vector<2x256xf32>
    %61 = arith.truncf %60 : vector<2x256xf32> to vector<2x256xbf16>
    %c0_36 = arith.constant 0 : index
    %c0_37 = arith.constant 0 : index
    %62 = vector.load %arg13[%c0_36, %c0_37] : memref<256x1536xbf16, #tpu.memory_space<vmem>>, vector<256x1536xbf16>
    %cst_38 = arith.constant dense<0.000000e+00> : vector<2x1536xf32>
    %63 = tpu.matmul %61, %62, %cst_38 {dimension_numbers = #tpu.dot_dimension_numbers<[1], [0], [0], [1], [0, 0, 1, 1], [], []>} : vector<2x256xbf16>, vector<256x1536xbf16>, vector<2x1536xf32> -> vector<2x1536xf32>
    %c0_39 = arith.constant 0 : index
    %c0_40 = arith.constant 0 : index
    %64 = vector.load %arg14[%c0_39, %c0_40] : memref<1x1536xf32, #tpu.memory_space<vmem>>, vector<1x1536xf32>
    %65 = vector.broadcast %64 : vector<1x1536xf32> to vector<2x1536xf32>
    %66 = arith.addf %63, %65 : vector<2x1536xf32>
    %67 = vector.extract_strided_slice %66 {offsets = [0, 0], sizes = [2, 512], strides = [1, 1]} : vector<2x1536xf32> to vector<2x512xf32>
    %68 = arith.negf %67 : vector<2x512xf32>
    %69 = math.exp %68 : vector<2x512xf32>
    %cst_41 = arith.constant 1.000000e+00 : f32
    %70 = vector.broadcast %cst_41 : f32 to vector<2x512xf32>
    %71 = arith.addf %70, %69 : vector<2x512xf32>
    %72 = arith.divf %70, %71 : vector<2x512xf32>
    %73 = vector.extract_strided_slice %66 {offsets = [0, 512], sizes = [2, 512], strides = [1, 1]} : vector<2x1536xf32> to vector<2x512xf32>
    %74 = math.tanh %73 : vector<2x512xf32>
    %75 = vector.extract_strided_slice %66 {offsets = [0, 1024], sizes = [2, 512], strides = [1, 1]} : vector<2x1536xf32> to vector<2x512xf32>
    %76 = arith.negf %75 : vector<2x512xf32>
    %77 = math.exp %76 : vector<2x512xf32>
    %cst_42 = arith.constant 1.000000e+00 : f32
    %78 = vector.broadcast %cst_42 : f32 to vector<2x512xf32>
    %79 = arith.addf %78, %77 : vector<2x512xf32>
    %80 = arith.divf %78, %79 : vector<2x512xf32>
    %81 = arith.mulf %72, %74 : vector<2x512xf32>
    %82 = math.tanh %81 : vector<2x512xf32>
    %83 = arith.mulf %80, %82 : vector<2x512xf32>
    %84 = arith.truncf %83 : vector<2x512xf32> to vector<2x512xbf16>
    %c0_43 = arith.constant 0 : index
    %c0_44 = arith.constant 0 : index
    %85 = vector.load %arg15[%c0_43, %c0_44] : memref<512x512xbf16, #tpu.memory_space<vmem>>, vector<512x512xbf16>
    %cst_45 = arith.constant dense<0.000000e+00> : vector<2x512xf32>
    %86 = tpu.matmul %84, %85, %cst_45 {dimension_numbers = #tpu.dot_dimension_numbers<[1], [0], [0], [1], [0, 0, 1, 1], [], []>} : vector<2x512xbf16>, vector<512x512xbf16>, vector<2x512xf32> -> vector<2x512xf32>
    %c0_46 = arith.constant 0 : index
    %c0_47 = arith.constant 0 : index
    %87 = vector.load %arg16[%c0_46, %c0_47] : memref<1x512xf32, #tpu.memory_space<vmem>>, vector<1x512xf32>
    %88 = vector.broadcast %87 : vector<1x512xf32> to vector<2x512xf32>
    %89 = arith.addf %86, %88 : vector<2x512xf32>
    %cst_48 = arith.constant 0.000000e+00 : f32
    %90 = vector.broadcast %cst_48 : f32 to vector<2x512xf32>
    %91 = arith.maximumf %89, %90 : vector<2x512xf32>
    %92 = arith.truncf %91 : vector<2x512xf32> to vector<2x512xbf16>
    %c0_49 = arith.constant 0 : index
    %c0_50 = arith.constant 0 : index
    %93 = vector.load %arg17[%c0_49, %c0_50] : memref<512x4xbf16, #tpu.memory_space<vmem>>, vector<512x4xbf16>
    %cst_51 = arith.constant dense<0.000000e+00> : vector<2x4xf32>
    %94 = tpu.matmul %92, %93, %cst_51 {dimension_numbers = #tpu.dot_dimension_numbers<[1], [0], [0], [1], [0, 0, 1, 1], [], []>} : vector<2x512xbf16>, vector<512x4xbf16>, vector<2x4xf32> -> vector<2x4xf32>
    %c0_52 = arith.constant 0 : index
    %c0_53 = arith.constant 0 : index
    %95 = vector.load %arg18[%c0_52, %c0_53] : memref<1x4xf32, #tpu.memory_space<vmem>>, vector<1x4xf32>
    %96 = vector.broadcast %95 : vector<1x4xf32> to vector<2x4xf32>
    %97 = arith.addf %94, %96 : vector<2x4xf32>
    %c0_54 = arith.constant 0 : index
    %c0_55 = arith.constant 0 : index
    %98 = vector.load %arg19[%c0_54, %c0_55] : memref<2x4xf32, #tpu.memory_space<vmem>>, vector<2x4xf32>
    tpu.vector_store %arg19[%c0_54, %c0_55], %97 {strides = array<i32>} : memref<2x4xf32, #tpu.memory_space<vmem>>, vector<2x4xf32>,
    return
  }
}

</mosaic_0001>

<llo_original>
// kernel: state_detection_forward.2
$region0: #{state_detection_forward.2}
  #allocation0 [shape = 'u32[]', space=smem, size = 0x4, offset = 0x4, fixed_abs, tag = 'smem constant byte address 0x4 - core index']
  #allocation1 [shape = 'u32[144,128]{1,0:T(1,128)}', space=vmem, size = 0x12000, scoped, tag = 'internal scratch']
  %s0 = inlined_call_operand.vmem [shape: f32[32,256], index: 0, kind: input, shape index: {}]
  %s1 = inlined_call_operand.vmem [shape: f32[32,256], index: 1, kind: input, shape index: {}]
  %s2 = inlined_call_operand.vmem [shape: bf16[256,512], index: 2, kind: input, shape index: {}]
  %s3 = inlined_call_operand.vmem [shape: bf16[256,512], index: 3, kind: input, shape index: {}]
  %s4 = inlined_call_operand.hbm [shape: bf16[256,512], index: 4, kind: input, shape index: {}]
  %s5 = inlined_call_operand.hbm [shape: f32[1,512], index: 5, kind: input, shape index: {}]
  %s6 = inlined_call_operand.hbm [shape: f32[1,512], index: 6, kind: input, shape index: {}]
  %s7 = inlined_call_operand.hbm [shape: f32[1,512], index: 7, kind: input, shape index: {}]
  %s8 = inlined_call_operand.hbm [shape: bf16[512,256], index: 8, kind: input, shape index: {}]
  %s9 = inlined_call_operand.hbm [shape: bf16[512,256], index: 9, kind: input, shape index: {}]
  %s10 = inlined_call_operand.hbm [shape: bf16[512,256], index: 10, kind: input, shape index: {}]
  %s11 = inlined_call_operand.hbm [shape: f32[1,256], index: 11, kind: input, shape index: {}]
  %s12 = inlined_call_operand.hbm [shape: f32[1,256], index: 12, kind: input, shape index: {}]
  %s13 = inlined_call_operand.hbm [shape: f32[1,256], index: 13, kind: input, shape index: {}]
  %s14 = inlined_call_operand.vmem [shape: bf16[256,48], index: 14, kind: input, shape index: {}]
  %s15 = inlined_call_operand.vmem [shape: bf16[256,48], index: 15, kind: input, shape index: {}]
  %s16 = inlined_call_operand.vmem [shape: bf16[256,48], index: 16, kind: input, shape index: {}]
  %s17 = inlined_call_operand.vmem [shape: bf16[256,48], index: 17, kind: input, shape index: {}]
  %s18 = inlined_call_operand.vmem [shape: bf16[256,48], index: 18, kind: input, shape index: {}]
  %s19 = inlined_call_operand.vmem [shape: bf16[256,48], index: 19, kind: input, shape index: {}]
  %s20 = inlined_call_operand.hbm [shape: f32[1,48], index: 20, kind: input, shape index: {}]
  %s21 = inlined_call_operand.hbm [shape: f32[1,48], index: 21, kind: input, shape index: {}]
  %s22 = inlined_call_operand.hbm [shape: f32[1,48], index: 22, kind: input, shape index: {}]
  %s23 = inlined_call_operand.vmem [shape: f32[32,48], index: 23, kind: output, shape index: {0}]
  %s24 = inlined_call_operand.vmem [shape: f32[32,48], index: 24, kind: output, shape index: {1}]
  %25 = xla_tuple %s23, %s24
  %s26 = sld [smem:[#allocation0]]
  $region185: #{state_detection_forward.2} parent=0
    _
  %s28 = ssub.s32 1, %s26
  %s29 = scalar_select 0, %s28, %s26
  $region1: #{state_detection_forward.2} parent=0
    #allocation2 [shape = 'u8[262144]{0}', space=vmem, size = 0x40000, scoped, tag = 'input window, operand 4, single buffered']
    #allocation3 [shape = 's32[2]{0}', space=sflag, size = 0x8, scoped, tag = 'scoped memory for state_detection_forward.2']
    #allocation4 [shape = 'u8[2048]{0}', space=vmem, size = 0x800, scoped, tag = 'input window, operand 5, single buffered']
    #allocation5 [shape = 's32[1]{0}', space=sflag, size = 0x4, scoped, tag = 'scoped memory for state_detection_forward.2']
    #allocation6 [shape = 'u8[2048]{0}', space=vmem, size = 0x800, scoped, tag = 'input window, operand 6, single buffered']
    #allocation7 [shape = 'u8[2048]{0}', space=vmem, size = 0x800, scoped, tag = 'input window, operand 7, single buffered']
    #allocation8 [shape = 's32[1]{0}', space=sflag, size = 0x4, scoped, tag = 'scoped memory for state_detection_forward.2']
    #allocation9 [shape = 'u8[262144]{0}', space=vmem, size = 0x40000, scoped, tag = 'input window, operand 8, single buffered']
    #allocation10 [shape = 'u8[262144]{0}', space=vmem, size = 0x40000, scoped, tag = 'input window, operand 9, single buffered']
    #allocation11 [shape = 's32[1]{0}', space=sflag, size = 0x4, scoped, tag = 'scoped memory for state_detection_forward.2']
    #allocation12 [shape = 'u8[262144]{0}', space=vmem, size = 0x40000, scoped, tag = 'input window, operand 10, single buffered']
    #allocation13 [shape = 'u8[1024]{0}', space=vmem, size = 0x400, scoped, tag = 'input window, operand 11, single buffered']
    #allocation14 [shape = 's32[1]{0}', space=sflag, size = 0x4, scoped, tag = 'scoped memory for state_detection_forward.2']
    #allocation15 [shape = 'u8[1024]{0}', space=vmem, size = 0x400, scoped, tag = 'input window, operand 12, single buffered']
    #allocation16 [shape = 'u8[1024]{0}', space=vmem, size = 0x400, scoped, tag = 'input window, operand 13, single buffered']
    #allocation17 [shape = 's32[1]{0}', space=sflag, size = 0x4, scoped, tag = 'scoped memory for state_detection_forward.2']
    #allocation18 [shape = 'u8[512]{0}', space=vmem, size = 0x400, scoped, tag = 'input window, operand 20, single buffered']
    #allocation19 [shape = 'u8[512]{0}', space=vmem, size = 0x400, scoped, tag = 'input window, operand 21, single buffered']
    #allocation20 [shape = 's32[1]{0}', space=sflag, size = 0x4, scoped, tag = 'scoped memory for state_detection_forward.2']
    #allocation21 [shape = 'u8[512]{0}', space=vmem, size = 0x400, scoped, tag = 'input window, operand 22, single buffered']
    %30 = vsyncpa [#allocation3], 0
    %31 = vsyncpa [#allocation5], 0
    %32 = vsyncpa [#allocation8], 0
    %33 = vsyncpa [#allocation11], 0
    %34 = vsyncpa [#allocation14], 0
    %35 = vsyncpa [#allocation17], 0
    %36 = vsyncpa [#allocation20], 0
    loop: start=0, step=1, limit=4
    $region2: #{state_detection_forward.2} parent=1 // loop_pre_header
      _
    $region3: #{state_detection_forward.2} parent=1 // loop_header
      %s38 = sphi 0, %s42
      %p39 = scmp.ge.s32.totalorder %s38, 4
      %s48 = sphi 0, %s50
      %s51 = sphi 0, %s48
      %s52 = sphi 0, %s51
      %s68 = sphi 0, %s52
      %s74 = sphi 0, %s76
      %s77 = sphi 0, %s74
      %s78 = sphi 0, %s77
      %s94 = sphi 0, %s78
      %s98 = sphi 0, %s98
      %s100 = sphi 0, %s98
      %s101 = sphi 0, %s100
      %s115 = sphi 0, %s101
      %s119 = sphi 0, %s119
      %s121 = sphi 0, %s119
      %s122 = sphi 0, %s121
      %s136 = sphi 0, %s122
      %s140 = sphi 0, %s140
      %s142 = sphi 0, %s140
      %s143 = sphi 0, %s142
      %s157 = sphi 0, %s143
      %s161 = sphi 0, %s161
      %s163 = sphi 0, %s161
      %s164 = sphi 0, %s163
      %s178 = sphi 0, %s164
      %s182 = sphi 0, %s182
      %s184 = sphi 0, %s182
      %s185 = sphi 0, %s184
      %s199 = sphi 0, %s185
      %s203 = sphi 0, %s203
      %s205 = sphi 0, %s203
      %s206 = sphi 0, %s205
      %s220 = sphi 0, %s206
      %s224 = sphi 0, %s224
      %s226 = sphi 0, %s224
      %s227 = sphi 0, %s226
      %s241 = sphi 0, %s227
      %s245 = sphi 0, %s245
      %s247 = sphi 0, %s245
      %s248 = sphi 0, %s247
      %s262 = sphi 0, %s248
      %s266 = sphi 0, %s266
      %s268 = sphi 0, %s266
      %s269 = sphi 0, %s268
      %s283 = sphi 0, %s269
      %s287 = sphi 0, %s287
      %s289 = sphi 0, %s287
      %s290 = sphi 0, %s289
      %s304 = sphi 0, %s290
      %s308 = sphi 0, %s308
      %s310 = sphi 0, %s308
      %s311 = sphi 0, %s310
      %s325 = sphi 0, %s311
      %s329 = sphi 0, %s329
      %s331 = sphi 0, %s329
      %s332 = sphi 0, %s331
      %s346 = sphi 0, %s332
      %s350 = sphi 0, %s350
      %s352 = sphi 0, %s350
      %s353 = sphi 0, %s352
      %s367 = sphi 0, %s353
      %s371 = sphi 0, %s371
      %s373 = sphi 0, %s371
      %s374 = sphi 0, %s373
      %s388 = sphi 0, %s374
      %s392 = sphi 0, %s392
      %s394 = sphi 0, %s392
      %s395 = sphi 0, %s394
      %s409 = sphi 0, %s395
      %s413 = sphi 0, %s413
      %s415 = sphi 0, %s413
      %s416 = sphi 0, %s415
      %s430 = sphi 0, %s416
      %s434 = sphi 0, %s434
      %s436 = sphi 0, %s434
      %s437 = sphi 0, %s436
      %s451 = sphi 0, %s437
      %s455 = sphi 0, %s455
      %s457 = sphi 0, %s455
      %s458 = sphi 0, %s457
      %s472 = sphi 0, %s458
      %s476 = sphi 0, %s476
      %s478 = sphi 0, %s476
      %s479 = sphi 0, %s478
      %s493 = sphi 0, %s479
      %s497 = sphi 0, %s497
      %s499 = sphi 0, %s497
      %s500 = sphi 0, %s499
      %s514 = sphi 0, %s500
      %s518 = sphi 0, %s518
      %s520 = sphi 0, %s518
      %s521 = sphi 0, %s520
      %s535 = sphi 0, %s521
      %s541 = sphi 0, %s543
      %s544 = sphi 0, %s541
      %s545 = sphi 0, %s544
      %s561 = sphi 0, %s545
      %s567 = sphi 0, %s569
      %s570 = sphi 0, %s567
      %s571 = sphi 0, %s570
      %s587 = sphi 0, %s571
    $region4: #{state_detection_forward.2} parent=1 // loop_header_branch
      %41 = sbr.rel (%p39) target = $region8
    $region5: #{state_detection_forward.2} parent=1 // loop_body
      %s43 = ssub.s32 %s38, 1
      %s44 = ssub.s32 %s38, 2
      %s45 = sadd.s32 %s38, 1
      %s46 = ssub.s32 %s38, %s45
      %p47 = scmp.eq.s32.totalorder %s46, 0
      %s49 = sadd.s32 %s48, 1
      %s50 = scalar_select %p47, %s48, %s49
      %p53 = pneg %p47
      %p54 = scmp.eq.s32.totalorder %s38, 1
      %p55 = por %p53, %p54
      %p56 = scmp.ne.s32.totalorder %s48, %s51
      %p57 = scmp.eq.s32.totalorder %s38, 0
      %p58 = por %p56, %p57
      %p59 = scmp.ne.s32.totalorder %s48, %s51
      %p60 = scmp.eq.s32.totalorder %s43, 1
      %p61 = por %p59, %p60
      %p62 = scmp.ne.s32.totalorder %s51, %s52
      %p63 = scmp.eq.s32.totalorder %s43, 0
      %p64 = por %p62, %p63
      %p65 = scmp.ne.s32.totalorder %s51, %s52
      %p66 = scmp.eq.s32.totalorder %s44, 1
      %p67 = por %p65, %p66
      %p69 = scmp.ne.s32.totalorder %s52, %s68
      %p70 = scmp.eq.s32.totalorder %s44, 0
      %p71 = por %p69, %p70
      %s72 = ssub.s32 %s38, %s45
      %p73 = scmp.eq.s32.totalorder %s72, 0
      %s75 = sadd.s32 %s74, 1
      %s76 = scalar_select %p73, %s74, %s75
      %p79 = pneg %p73
      %p80 = scmp.eq.s32.totalorder %s38, 1
      %p81 = por %p79, %p80
      %p82 = scmp.ne.s32.totalorder %s74, %s77
      %p83 = scmp.eq.s32.totalorder %s38, 0
      %p84 = por %p82, %p83
      %p85 = scmp.ne.s32.totalorder %s74, %s77
      %p86 = scmp.eq.s32.totalorder %s43, 1
      %p87 = por %p85, %p86
      %p88 = scmp.ne.s32.totalorder %s77, %s78
      %p89 = scmp.eq.s32.totalorder %s43, 0
      %p90 = por %p88, %p89
      %p91 = scmp.ne.s32.totalorder %s77, %s78
      %p92 = scmp.eq.s32.totalorder %s44, 1
      %p93 = por %p91, %p92
      %p95 = scmp.ne.s32.totalorder %s78, %s94
      %p96 = scmp.eq.s32.totalorder %s44, 0
      %p97 = por %p95, %p96
      %s99 = sadd.s32 %s98, 1
      %p102 = scmp.eq.s32.totalorder %s38, 1
      %p103 = scmp.ne.s32.totalorder %s98, %s100
      %p104 = scmp.eq.s32.totalorder %s38, 0
      %p105 = por %p103, %p104
      %p106 = scmp.ne.s32.totalorder %s98, %s100
      %p107 = scmp.eq.s32.totalorder %s43, 1
      %p108 = por %p106, %p107
      %p109 = scmp.ne.s32.totalorder %s100, %s101
      %p110 = scmp.eq.s32.totalorder %s43, 0
      %p111 = por %p109, %p110
      %p112 = scmp.ne.s32.totalorder %s100, %s101
      %p113 = scmp.eq.s32.totalorder %s44, 1
      %p114 = por %p112, %p113
      %p116 = scmp.ne.s32.totalorder %s101, %s115
      %p117 = scmp.eq.s32.totalorder %s44, 0
      %p118 = por %p116, %p117
      %s120 = sadd.s32 %s119, 1
      %p123 = scmp.eq.s32.totalorder %s38, 1
      %p124 = scmp.ne.s32.totalorder %s119, %s121
      %p125 = scmp.eq.s32.totalorder %s38, 0
      %p126 = por %p124, %p125
      %p127 = scmp.ne.s32.totalorder %s119, %s121
      %p128 = scmp.eq.s32.totalorder %s43, 1
      %p129 = por %p127, %p128
      %p130 = scmp.ne.s32.totalorder %s121, %s122
      %p131 = scmp.eq.s32.totalorder %s43, 0
      %p132 = por %p130, %p131
      %p133 = scmp.ne.s32.totalorder %s121, %s122
      %p134 = scmp.eq.s32.totalorder %s44, 1
      %p135 = por %p133, %p134
      %p137 = scmp.ne.s32.totalorder %s122, %s136
      %p138 = scmp.eq.s32.totalorder %s44, 0
      %p139 = por %p137, %p138
      %s141 = sadd.s32 %s140, 1
      %p144 = scmp.eq.s32.totalorder %s38, 1
      %p145 = scmp.ne.s32.totalorder %s140, %s142
      %p146 = scmp.eq.s32.totalorder %s38, 0
      %p147 = por %p145, %p146
      %p148 = scmp.ne.s32.totalorder %s140, %s142
      %p149 = scmp.eq.s32.totalorder %s43, 1
      %p150 = por %p148, %p149
      %p151 = scmp.ne.s32.totalorder %s142, %s143
      %p152 = scmp.eq.s32.totalorder %s43, 0
      %p153 = por %p151, %p152
      %p154 = scmp.ne.s32.totalorder %s142, %s143
      %p155 = scmp.eq.s32.totalorder %s44, 1
      %p156 = por %p154, %p155
      %p158 = scmp.ne.s32.totalorder %s143, %s157
      %p159 = scmp.eq.s32.totalorder %s44, 0
      %p160 = por %p158, %p159
      %s162 = sadd.s32 %s161, 1
      %p165 = scmp.eq.s32.totalorder %s38, 1
      %p166 = scmp.ne.s32.totalorder %s161, %s163
      %p167 = scmp.eq.s32.totalorder %s38, 0
      %p168 = por %p166, %p167
      %p169 = scmp.ne.s32.totalorder %s161, %s163
      %p170 = scmp.eq.s32.totalorder %s43, 1
      %p171 = por %p169, %p170
      %p172 = scmp.ne.s32.totalorder %s163, %s164
      %p173 = scmp.eq.s32.totalorder %s43, 0
      %p174 = por %p172, %p173
      %p175 = scmp.ne.s32.totalorder %s163, %s164
      %p176 = scmp.eq.s32.totalorder %s44, 1
      %p177 = por %p175, %p176
      %p179 = scmp.ne.s32.totalorder %s164, %s178
      %p180 = scmp.eq.s32.totalorder %s44, 0
      %p181 = por %p179, %p180
      %s183 = sadd.s32 %s182, 1
      %p186 = scmp.eq.s32.totalorder %s38, 1
      %p187 = scmp.ne.s32.totalorder %s182, %s184
      %p188 = scmp.eq.s32.totalorder %s38, 0
      %p189 = por %p187, %p188
      %p190 = scmp.ne.s32.totalorder %s182, %s184
      %p191 = scmp.eq.s32.totalorder %s43, 1
      %p192 = por %p190, %p191
      %p193 = scmp.ne.s32.totalorder %s184, %s185
      %p194 = scmp.eq.s32.totalorder %s43, 0
      %p195 = por %p193, %p194
      %p196 = scmp.ne.s32.totalorder %s184, %s185
      %p197 = scmp.eq.s32.totalorder %s44, 1
      %p198 = por %p196, %p197
      %p200 = scmp.ne.s32.totalorder %s185, %s199
      %p201 = scmp.eq.s32.totalorder %s44, 0
      %p202 = por %p200, %p201
      %s204 = sadd.s32 %s203, 1
      %p207 = scmp.eq.s32.totalorder %s38, 1
      %p208 = scmp.ne.s32.totalorder %s203, %s205
      %p209 = scmp.eq.s32.totalorder %s38, 0
      %p210 = por %p208, %p209
      %p211 = scmp.ne.s32.totalorder %s203, %s205
      %p212 = scmp.eq.s32.totalorder %s43, 1
      %p213 = por %p211, %p212
      %p214 = scmp.ne.s32.totalorder %s205, %s206
      %p215 = scmp.eq.s32.totalorder %s43, 0
      %p216 = por %p214, %p215
      %p217 = scmp.ne.s32.totalorder %s205, %s206
      %p218 = scmp.eq.s32.totalorder %s44, 1
      %p219 = por %p217, %p218
      %p221 = scmp.ne.s32.totalorder %s206, %s220
      %p222 = scmp.eq.s32.totalorder %s44, 0
      %p223 = por %p221, %p222
      %s225 = sadd.s32 %s224, 1
      %p228 = scmp.eq.s32.totalorder %s38, 1
      %p229 = scmp.ne.s32.totalorder %s224, %s226
      %p230 = scmp.eq.s32.totalorder %s38, 0
      %p231 = por %p229, %p230
      %p232 = scmp.ne.s32.totalorder %s224, %s226
      %p233 = scmp.eq.s32.totalorder %s43, 1
      %p234 = por %p232, %p233
      %p235 = scmp.ne.s32.totalorder %s226, %s227
      %p236 = scmp.eq.s32.totalorder %s43, 0
      %p237 = por %p235, %p236
      %p238 = scmp.ne.s32.totalorder %s226, %s227
      %p239 = scmp.eq.s32.totalorder %s44, 1
      %p240 = por %p238, %p239
      %p242 = scmp.ne.s32.totalorder %s227, %s241
      %p243 = scmp.eq.s32.totalorder %s44, 0
      %p244 = por %p242, %p243
      %s246 = sadd.s32 %s245, 1
      %p249 = scmp.eq.s32.totalorder %s38, 1
      %p250 = scmp.ne.s32.totalorder %s245, %s247
      %p251 = scmp.eq.s32.totalorder %s38, 0
      %p252 = por %p250, %p251
      %p253 = scmp.ne.s32.totalorder %s245, %s247
      %p254 = scmp.eq.s32.totalorder %s43, 1
      %p255 = por %p253, %p254
      %p256 = scmp.ne.s32.totalorder %s247, %s248
      %p257 = scmp.eq.s32.totalorder %s43, 0
      %p258 = por %p256, %p257
      %p259 = scmp.ne.s32.totalorder %s247, %s248
      %p260 = scmp.eq.s32.totalorder %s44, 1
      %p261 = por %p259, %p260
      %p263 = scmp.ne.s32.totalorder %s248, %s262
      %p264 = scmp.eq.s32.totalorder %s44, 0
      %p265 = por %p263, %p264
      %s267 = sadd.s32 %s266, 1
      %p270 = scmp.eq.s32.totalorder %s38, 1
      %p271 = scmp.ne.s32.totalorder %s266, %s268
      %p272 = scmp.eq.s32.totalorder %s38, 0
      %p273 = por %p271, %p272
      %p274 = scmp.ne.s32.totalorder %s266, %s268
      %p275 = scmp.eq.s32.totalorder %s43, 1
      %p276 = por %p274, %p275
      %p277 = scmp.ne.s32.totalorder %s268, %s269
      %p278 = scmp.eq.s32.totalorder %s43, 0
      %p279 = por %p277, %p278
      %p280 = scmp.ne.s32.totalorder %s268, %s269
      %p281 = scmp.eq.s32.totalorder %s44, 1
      %p282 = por %p280, %p281
      %p284 = scmp.ne.s32.totalorder %s269, %s283
      %p285 = scmp.eq.s32.totalorder %s44, 0
      %p286 = por %p284, %p285
      %s288 = sadd.s32 %s287, 1
      %p291 = scmp.eq.s32.totalorder %s38, 1
      %p292 = scmp.ne.s32.totalorder %s287, %s289
      %p293 = scmp.eq.s32.totalorder %s38, 0
      %p294 = por %p292, %p293
      %p295 = scmp.ne.s32.totalorder %s287, %s289
      %p296 = scmp.eq.s32.totalorder %s43, 1
      %p297 = por %p295, %p296
      %p298 = scmp.ne.s32.totalorder %s289, %s290
      %p299 = scmp.eq.s32.totalorder %s43, 0
      %p300 = por %p298, %p299
      %p301 = scmp.ne.s32.totalorder %s289, %s290
      %p302 = scmp.eq.s32.totalorder %s44, 1
      %p303 = por %p301, %p302
      %p305 = scmp.ne.s32.totalorder %s290, %s304
      %p306 = scmp.eq.s32.totalorder %s44, 0
      %p307 = por %p305, %p306
      %s309 = sadd.s32 %s308, 1
      %p312 = scmp.eq.s32.totalorder %s38, 1
      %p313 = scmp.ne.s32.totalorder %s308, %s310
      %p314 = scmp.eq.s32.totalorder %s38, 0
      %p315 = por %p313, %p314
      %p316 = scmp.ne.s32.totalorder %s308, %s310
      %p317 = scmp.eq.s32.totalorder %s43, 1
      %p318 = por %p316, %p317
      %p319 = scmp.ne.s32.totalorder %s310, %s311
      %p320 = scmp.eq.s32.totalorder %s43, 0
      %p321 = por %p319, %p320
      %p322 = scmp.ne.s32.totalorder %s310, %s311
      %p323 = scmp.eq.s32.totalorder %s44, 1
      %p324 = por %p322, %p323
      %p326 = scmp.ne.s32.totalorder %s311, %s325
      %p327 = scmp.eq.s32.totalorder %s44, 0
      %p328 = por %p326, %p327
      %s330 = sadd.s32 %s329, 1
      %p333 = scmp.eq.s32.totalorder %s38, 1
      %p334 = scmp.ne.s32.totalorder %s329, %s331
      %p335 = scmp.eq.s32.totalorder %s38, 0
      %p336 = por %p334, %p335
      %p337 = scmp.ne.s32.totalorder %s329, %s331
      %p338 = scmp.eq.s32.totalorder %s43, 1
      %p339 = por %p337, %p338
      %p340 = scmp.ne.s32.totalorder %s331, %s332
      %p341 = scmp.eq.s32.totalorder %s43, 0
      %p342 = por %p340, %p341
      %p343 = scmp.ne.s32.totalorder %s331, %s332
      %p344 = scmp.eq.s32.totalorder %s44, 1
      %p345 = por %p343, %p344
      %p347 = scmp.ne.s32.totalorder %s332, %s346
      %p348 = scmp.eq.s32.totalorder %s44, 0
      %p349 = por %p347, %p348
      %s351 = sadd.s32 %s350, 1
      %p354 = scmp.eq.s32.totalorder %s38, 1
      %p355 = scmp.ne.s32.totalorder %s350, %s352
      %p356 = scmp.eq.s32.totalorder %s38, 0
      %p357 = por %p355, %p356
      %p358 = scmp.ne.s32.totalorder %s350, %s352
      %p359 = scmp.eq.s32.totalorder %s43, 1
      %p360 = por %p358, %p359
      %p361 = scmp.ne.s32.totalorder %s352, %s353
      %p362 = scmp.eq.s32.totalorder %s43, 0
      %p363 = por %p361, %p362
      %p364 = scmp.ne.s32.totalorder %s352, %s353
      %p365 = scmp.eq.s32.totalorder %s44, 1
      %p366 = por %p364, %p365
      %p368 = scmp.ne.s32.totalorder %s353, %s367
      %p369 = scmp.eq.s32.totalorder %s44, 0
      %p370 = por %p368, %p369
      %s372 = sadd.s32 %s371, 1
      %p375 = scmp.eq.s32.totalorder %s38, 1
      %p376 = scmp.ne.s32.totalorder %s371, %s373
      %p377 = scmp.eq.s32.totalorder %s38, 0
      %p378 = por %p376, %p377
      %p379 = scmp.ne.s32.totalorder %s371, %s373
      %p380 = scmp.eq.s32.totalorder %s43, 1
      %p381 = por %p379, %p380
      %p382 = scmp.ne.s32.totalorder %s373, %s374
      %p383 = scmp.eq.s32.totalorder %s43, 0
      %p384 = por %p382, %p383
      %p385 = scmp.ne.s32.totalorder %s373, %s374
      %p386 = scmp.eq.s32.totalorder %s44, 1
      %p387 = por %p385, %p386
      %p389 = scmp.ne.s32.totalorder %s374, %s388
      %p390 = scmp.eq.s32.totalorder %s44, 0
      %p391 = por %p389, %p390
      %s393 = sadd.s32 %s392, 1
      %p396 = scmp.eq.s32.totalorder %s38, 1
      %p397 = scmp.ne.s32.totalorder %s392, %s394
      %p398 = scmp.eq.s32.totalorder %s38, 0
      %p399 = por %p397, %p398
      %p400 = scmp.ne.s32.totalorder %s392, %s394
      %p401 = scmp.eq.s32.totalorder %s43, 1
      %p402 = por %p400, %p401
      %p403 = scmp.ne.s32.totalorder %s394, %s395
      %p404 = scmp.eq.s32.totalorder %s43, 0
      %p405 = por %p403, %p404
      %p406 = scmp.ne.s32.totalorder %s394, %s395
      %p407 = scmp.eq.s32.totalorder %s44, 1
      %p408 = por %p406, %p407
      %p410 = scmp.ne.s32.totalorder %s395, %s409
      %p411 = scmp.eq.s32.totalorder %s44, 0
      %p412 = por %p410, %p411
      %s414 = sadd.s32 %s413, 1
      %p417 = scmp.eq.s32.totalorder %s38, 1
      %p418 = scmp.ne.s32.totalorder %s413, %s415
      %p419 = scmp.eq.s32.totalorder %s38, 0
      %p420 = por %p418, %p419
      %p421 = scmp.ne.s32.totalorder %s413, %s415
      %p422 = scmp.eq.s32.totalorder %s43, 1
      %p423 = por %p421, %p422
      %p424 = scmp.ne.s32.totalorder %s415, %s416
      %p425 = scmp.eq.s32.totalorder %s43, 0
      %p426 = por %p424, %p425
      %p427 = scmp.ne.s32.totalorder %s415, %s416
      %p428 = scmp.eq.s32.totalorder %s44, 1
      %p429 = por %p427, %p428
      %p431 = scmp.ne.s32.totalorder %s416, %s430
      %p432 = scmp.eq.s32.totalorder %s44, 0
      %p433 = por %p431, %p432
      %s435 = sadd.s32 %s434, 1
      %p438 = scmp.eq.s32.totalorder %s38, 1
      %p439 = scmp.ne.s32.totalorder %s434, %s436
      %p440 = scmp.eq.s32.totalorder %s38, 0
      %p441 = por %p439, %p440
      %p442 = scmp.ne.s32.totalorder %s434, %s436
      %p443 = scmp.eq.s32.totalorder %s43, 1
      %p444 = por %p442, %p443
      %p445 = scmp.ne.s32.totalorder %s436, %s437
      %p446 = scmp.eq.s32.totalorder %s43, 0
      %p447 = por %p445, %p446
      %p448 = scmp.ne.s32.totalorder %s436, %s437
      %p449 = scmp.eq.s32.totalorder %s44, 1
      %p450 = por %p448, %p449
      %p452 = scmp.ne.s32.totalorder %s437, %s451
      %p453 = scmp.eq.s32.totalorder %s44, 0
      %p454 = por %p452, %p453
      %s456 = sadd.s32 %s455, 1
      %p459 = scmp.eq.s32.totalorder %s38, 1
      %p460 = scmp.ne.s32.totalorder %s455, %s457
      %p461 = scmp.eq.s32.totalorder %s38, 0
      %p462 = por %p460, %p461
      %p463 = scmp.ne.s32.totalorder %s455, %s457
      %p464 = scmp.eq.s32.totalorder %s43, 1
      %p465 = por %p463, %p464
      %p466 = scmp.ne.s32.totalorder %s457, %s458
      %p467 = scmp.eq.s32.totalorder %s43, 0
      %p468 = por %p466, %p467
      %p469 = scmp.ne.s32.totalorder %s457, %s458
      %p470 = scmp.eq.s32.totalorder %s44, 1
      %p471 = por %p469, %p470
      %p473 = scmp.ne.s32.totalorder %s458, %s472
      %p474 = scmp.eq.s32.totalorder %s44, 0
      %p475 = por %p473, %p474
      %s477 = sadd.s32 %s476, 1
      %p480 = scmp.eq.s32.totalorder %s38, 1
      %p481 = scmp.ne.s32.totalorder %s476, %s478
      %p482 = scmp.eq.s32.totalorder %s38, 0
      %p483 = por %p481, %p482
      %p484 = scmp.ne.s32.totalorder %s476, %s478
      %p485 = scmp.eq.s32.totalorder %s43, 1
      %p486 = por %p484, %p485
      %p487 = scmp.ne.s32.totalorder %s478, %s479
      %p488 = scmp.eq.s32.totalorder %s43, 0
      %p489 = por %p487, %p488
      %p490 = scmp.ne.s32.totalorder %s478, %s479
      %p491 = scmp.eq.s32.totalorder %s44, 1
      %p492 = por %p490, %p491
      %p494 = scmp.ne.s32.totalorder %s479, %s493
      %p495 = scmp.eq.s32.totalorder %s44, 0
      %p496 = por %p494, %p495
      %s498 = sadd.s32 %s497, 1
      %p501 = scmp.eq.s32.totalorder %s38, 1
      %p502 = scmp.ne.s32.totalorder %s497, %s499
      %p503 = scmp.eq.s32.totalorder %s38, 0
      %p504 = por %p502, %p503
      %p505 = scmp.ne.s32.totalorder %s497, %s499
      %p506 = scmp.eq.s32.totalorder %s43, 1
      %p507 = por %p505, %p506
      %p508 = scmp.ne.s32.totalorder %s499, %s500
      %p509 = scmp.eq.s32.totalorder %s43, 0
      %p510 = por %p508, %p509
      %p511 = scmp.ne.s32.totalorder %s499, %s500
      %p512 = scmp.eq.s32.totalorder %s44, 1
      %p513 = por %p511, %p512
      %p515 = scmp.ne.s32.totalorder %s500, %s514
      %p516 = scmp.eq.s32.totalorder %s44, 0
      %p517 = por %p515, %p516
      %s519 = sadd.s32 %s518, 1
      %p522 = scmp.eq.s32.totalorder %s38, 1
      %p523 = scmp.ne.s32.totalorder %s518, %s520
      %p524 = scmp.eq.s32.totalorder %s38, 0
      %p525 = por %p523, %p524
      %p526 = scmp.ne.s32.totalorder %s518, %s520
      %p527 = scmp.eq.s32.totalorder %s43, 1
      %p528 = por %p526, %p527
      %p529 = scmp.ne.s32.totalorder %s520, %s521
      %p530 = scmp.eq.s32.totalorder %s43, 0
      %p531 = por %p529, %p530
      %p532 = scmp.ne.s32.totalorder %s520, %s521
      %p533 = scmp.eq.s32.totalorder %s44, 1
      %p534 = por %p532, %p533
      %p536 = scmp.ne.s32.totalorder %s521, %s535
      %p537 = scmp.eq.s32.totalorder %s44, 0
      %p538 = por %p536, %p537
      %s539 = ssub.s32 %s38, %s45
      %p540 = scmp.eq.s32.totalorder %s539, 0
      %s542 = sadd.s32 %s541, 1
      %s543 = scalar_select %p540, %s541, %s542
      %p546 = pneg %p540
      %p547 = scmp.eq.s32.totalorder %s38, 1
      %p548 = por %p546, %p547
      %p549 = scmp.ne.s32.totalorder %s541, %s544
      %p550 = scmp.eq.s32.totalorder %s38, 0
      %p551 = por %p549, %p550
      %p552 = scmp.ne.s32.totalorder %s541, %s544
      %p553 = scmp.eq.s32.totalorder %s43, 1
      %p554 = por %p552, %p553
      %p555 = scmp.ne.s32.totalorder %s544, %s545
      %p556 = scmp.eq.s32.totalorder %s43, 0
      %p557 = por %p555, %p556
      %p558 = scmp.ne.s32.totalorder %s544, %s545
      %p559 = scmp.eq.s32.totalorder %s44, 1
      %p560 = por %p558, %p559
      %p562 = scmp.ne.s32.totalorder %s545, %s561
      %p563 = scmp.eq.s32.totalorder %s44, 0
      %p564 = por %p562, %p563
      %s565 = ssub.s32 %s38, %s45
      %p566 = scmp.eq.s32.totalorder %s565, 0
      %s568 = sadd.s32 %s567, 1
      %s569 = scalar_select %p566, %s567, %s568
      %p572 = pneg %p566
      %p573 = scmp.eq.s32.totalorder %s38, 1
      %p574 = por %p572, %p573
      %p575 = scmp.ne.s32.totalorder %s567, %s570
      %p576 = scmp.eq.s32.totalorder %s38, 0
      %p577 = por %p575, %p576
      %p578 = scmp.ne.s32.totalorder %s567, %s570
      %p579 = scmp.eq.s32.totalorder %s43, 1
      %p580 = por %p578, %p579
      %p581 = scmp.ne.s32.totalorder %s570, %s571
      %p582 = scmp.eq.s32.totalorder %s43, 0
      %p583 = por %p581, %p582
      %p584 = scmp.ne.s32.totalorder %s570, %s571
      %p585 = scmp.eq.s32.totalorder %s44, 1
      %p586 = por %p584, %p585
      %p588 = scmp.ne.s32.totalorder %s571, %s587
      %p589 = scmp.eq.s32.totalorder %s44, 0
      %p590 = por %p588, %p589
      %p591 = scmp.le.s32.totalorder 1, %s38
      %p592 = scmp.lt.s32.totalorder %s38, 3
      %p593 = pnand %p591, %p592
      %p594 = pneg %p593
      // Predicated region
      $region9: #{state_detection_forward.2} parent=5 // pred_check
        _
      $region10: #{state_detection_forward.2} parent=5 // pred_check_branch
        %596 = sbr.rel (%p593) target = $region12
      $region11: #{state_detection_forward.2} parent=5 // pred_region
        %s597 = ssub.s32 %s38, 1
        // Predicated region
        $region13: #{state_detection_forward.2} parent=11 // pred_check
          %p598 = pneg %p111
        $region14: #{state_detection_forward.2} parent=11 // pred_check_branch
          %600 = sbr.rel (%p598) target = $region16
        $region15: #{state_detection_forward.2} parent=11 // pred_region
          _
        $region16: #{state_detection_forward.2} parent=11 // pred_fallthru
          _
        // Predicated region
        $region17: #{state_detection_forward.2} parent=11 // pred_check
          %p601 = pneg %p132
        $region18: #{state_detection_forward.2} parent=11 // pred_check_branch
          %603 = sbr.rel (%p601) target = $region20
        $region19: #{state_detection_forward.2} parent=11 // pred_region
          _
        $region20: #{state_detection_forward.2} parent=11 // pred_fallthru
          _
        // Predicated region
        $region21: #{state_detection_forward.2} parent=11 // pred_check
          %p604 = pneg %p153
        $region22: #{state_detection_forward.2} parent=11 // pred_check_branch
          %606 = sbr.rel (%p604) target = $region24
        $region23: #{state_detection_forward.2} parent=11 // pred_region
          %s608 = ssub.s32 8192, 8192
          %609 = vsyncadd [#allocation3], %s608
          %s610 = sshll.u32 [#allocation2], 4
          %s611 = int_to_ptr.vmem [resolvable:$true] %s610
          %616 = dma.hbm_to_vmem [thread:$0]  %s4, 8192, %s611, [#allocation3], 256, 256, 16
        $region24: #{state_detection_forward.2} parent=11 // pred_fallthru
          _
        // Predicated region
        $region25: #{state_detection_forward.2} parent=11 // pred_check
          %p617 = pneg %p174
        $region26: #{state_detection_forward.2} parent=11 // pred_check_branch
          %619 = sbr.rel (%p617) target = $region28
        $region27: #{state_detection_forward.2} parent=11 // pred_region
          %s621 = ssub.s32 64, 64
          %622 = vsyncadd [#allocation5], %s621
          %s624 = sshll.u32 [#allocation4], 4
          %s625 = int_to_ptr.vmem [resolvable:$true] %s624
          %627 = dma.hbm_to_vmem [thread:$0]  %s5, 64, %s625, [#allocation5]
        $region28: #{state_detection_forward.2} parent=11 // pred_fallthru
          _
        // Predicated region
        $region29: #{state_detection_forward.2} parent=11 // pred_check
          %p628 = pneg %p195
        $region30: #{state_detection_forward.2} parent=11 // pred_check_branch
          %630 = sbr.rel (%p628) target = $region32
        $region31: #{state_detection_forward.2} parent=11 // pred_region
          %s632 = ssub.s32 64, 64
          %633 = vsyncadd [#allocation5], %s632
          %s635 = sshll.u32 [#allocation6], 4
          %s636 = int_to_ptr.vmem [resolvable:$true] %s635
          %638 = dma.hbm_to_vmem [thread:$0]  %s6, 64, %s636, [#allocation5]
        $region32: #{state_detection_forward.2} parent=11 // pred_fallthru
          _
        // Predicated region
        $region33: #{state_detection_forward.2} parent=11 // pred_check
          %p639 = pneg %p216
        $region34: #{state_detection_forward.2} parent=11 // pred_check_branch
          %641 = sbr.rel (%p639) target = $region36
        $region35: #{state_detection_forward.2} parent=11 // pred_region
          %s643 = ssub.s32 64, 64
          %644 = vsyncadd [#allocation8], %s643
          %s646 = sshll.u32 [#allocation7], 4
          %s647 = int_to_ptr.vmem [resolvable:$true] %s646
          %649 = dma.hbm_to_vmem [thread:$0]  %s7, 64, %s647, [#allocation8]
        $region36: #{state_detection_forward.2} parent=11 // pred_fallthru
          _
        // Predicated region
        $region37: #{state_detection_forward.2} parent=11 // pred_check
          %p650 = pneg %p237
        $region38: #{state_detection_forward.2} parent=11 // pred_check_branch
          %652 = sbr.rel (%p650) target = $region40
        $region39: #{state_detection_forward.2} parent=11 // pred_region
          %s654 = ssub.s32 8192, 8192
          %655 = vsyncadd [#allocation8], %s654
          %s656 = sshll.u32 [#allocation9], 4
          %s657 = int_to_ptr.vmem [resolvable:$true] %s656
          %662 = dma.hbm_to_vmem [thread:$0]  %s8, 8192, %s657, [#allocation8], 128, 128, 8
        $region40: #{state_detection_forward.2} parent=11 // pred_fallthru
          _
        // Predicated region
        $region41: #{state_detection_forward.2} parent=11 // pred_check
          %p663 = pneg %p258
        $region42: #{state_detection_forward.2} parent=11 // pred_check_branch
          %665 = sbr.rel (%p663) target = $region44
        $region43: #{state_detection_forward.2} parent=11 // pred_region
          %s667 = ssub.s32 8192, 8192
          %668 = vsyncadd [#allocation11], %s667
          %s669 = sshll.u32 [#allocation10], 4
          %s670 = int_to_ptr.vmem [resolvable:$true] %s669
          %675 = dma.hbm_to_vmem [thread:$0]  %s9, 8192, %s670, [#allocation11], 128, 128, 8
        $region44: #{state_detection_forward.2} parent=11 // pred_fallthru
          _
        // Predicated region
        $region45: #{state_detection_forward.2} parent=11 // pred_check
          %p676 = pneg %p279
        $region46: #{state_detection_forward.2} parent=11 // pred_check_branch
          %678 = sbr.rel (%p676) target = $region48
        $region47: #{state_detection_forward.2} parent=11 // pred_region
          %s680 = ssub.s32 8192, 8192
          %681 = vsyncadd [#allocation11], %s680
          %s682 = sshll.u32 [#allocation12], 4
          %s683 = int_to_ptr.vmem [resolvable:$true] %s682
          %688 = dma.hbm_to_vmem [thread:$0]  %s10, 8192, %s683, [#allocation11], 128, 128, 8
        $region48: #{state_detection_forward.2} parent=11 // pred_fallthru
          _
        // Predicated region
        $region49: #{state_detection_forward.2} parent=11 // pred_check
          %p689 = pneg %p300
        $region50: #{state_detection_forward.2} parent=11 // pred_check_branch
          %691 = sbr.rel (%p689) target = $region52
        $region51: #{state_detection_forward.2} parent=11 // pred_region
          %s693 = ssub.s32 32, 32
          %694 = vsyncadd [#allocation14], %s693
          %s696 = sshll.u32 [#allocation13], 4
          %s697 = int_to_ptr.vmem [resolvable:$true] %s696
          %699 = dma.hbm_to_vmem [thread:$0]  %s11, 32, %s697, [#allocation14]
        $region52: #{state_detection_forward.2} parent=11 // pred_fallthru
          _
        // Predicated region
        $region53: #{state_detection_forward.2} parent=11 // pred_check
          %p700 = pneg %p321
        $region54: #{state_detection_forward.2} parent=11 // pred_check_branch
          %702 = sbr.rel (%p700) target = $region56
        $region55: #{state_detection_forward.2} parent=11 // pred_region
          %s704 = ssub.s32 32, 32
          %705 = vsyncadd [#allocation14], %s704
          %s707 = sshll.u32 [#allocation15], 4
          %s708 = int_to_ptr.vmem [resolvable:$true] %s707
          %710 = dma.hbm_to_vmem [thread:$0]  %s12, 32, %s708, [#allocation14]
        $region56: #{state_detection_forward.2} parent=11 // pred_fallthru
          _
        // Predicated region
        $region57: #{state_detection_forward.2} parent=11 // pred_check
          %p711 = pneg %p342
        $region58: #{state_detection_forward.2} parent=11 // pred_check_branch
          %713 = sbr.rel (%p711) target = $region60
        $region59: #{state_detection_forward.2} parent=11 // pred_region
          %s715 = ssub.s32 32, 32
          %716 = vsyncadd [#allocation17], %s715
          %s718 = sshll.u32 [#allocation16], 4
          %s719 = int_to_ptr.vmem [resolvable:$true] %s718
          %721 = dma.hbm_to_vmem [thread:$0]  %s13, 32, %s719, [#allocation17]
        $region60: #{state_detection_forward.2} parent=11 // pred_fallthru
          _
        // Predicated region
        $region61: #{state_detection_forward.2} parent=11 // pred_check
          %p722 = pneg %p363
        $region62: #{state_detection_forward.2} parent=11 // pred_check_branch
          %724 = sbr.rel (%p722) target = $region64
        $region63: #{state_detection_forward.2} parent=11 // pred_region
          _
        $region64: #{state_detection_forward.2} parent=11 // pred_fallthru
          _
        // Predicated region
        $region65: #{state_detection_forward.2} parent=11 // pred_check
          %p725 = pneg %p384
        $region66: #{state_detection_forward.2} parent=11 // pred_check_branch
          %727 = sbr.rel (%p725) target = $region68
        $region67: #{state_detection_forward.2} parent=11 // pred_region
          _
        $region68: #{state_detection_forward.2} parent=11 // pred_fallthru
          _
        // Predicated region
        $region69: #{state_detection_forward.2} parent=11 // pred_check
          %p728 = pneg %p405
        $region70: #{state_detection_forward.2} parent=11 // pred_check_branch
          %730 = sbr.rel (%p728) target = $region72
        $region71: #{state_detection_forward.2} parent=11 // pred_region
          _
        $region72: #{state_detection_forward.2} parent=11 // pred_fallthru
          _
        // Predicated region
        $region73: #{state_detection_forward.2} parent=11 // pred_check
          %p731 = pneg %p426
        $region74: #{state_detection_forward.2} parent=11 // pred_check_branch
          %733 = sbr.rel (%p731) target = $region76
        $region75: #{state_detection_forward.2} parent=11 // pred_region
          _
        $region76: #{state_detection_forward.2} parent=11 // pred_fallthru
          _
        // Predicated region
        $region77: #{state_detection_forward.2} parent=11 // pred_check
          %p734 = pneg %p447
        $region78: #{state_detection_forward.2} parent=11 // pred_check_branch
          %736 = sbr.rel (%p734) target = $region80
        $region79: #{state_detection_forward.2} parent=11 // pred_region
          _
        $region80: #{state_detection_forward.2} parent=11 // pred_fallthru
          _
        // Predicated region
        $region81: #{state_detection_forward.2} parent=11 // pred_check
          %p737 = pneg %p468
        $region82: #{state_detection_forward.2} parent=11 // pred_check_branch
          %739 = sbr.rel (%p737) target = $region84
        $region83: #{state_detection_forward.2} parent=11 // pred_region
          _
        $region84: #{state_detection_forward.2} parent=11 // pred_fallthru
          _
        // Predicated region
        $region85: #{state_detection_forward.2} parent=11 // pred_check
          %p740 = pneg %p489
        $region86: #{state_detection_forward.2} parent=11 // pred_check_branch
          %742 = sbr.rel (%p740) target = $region88
        $region87: #{state_detection_forward.2} parent=11 // pred_region
          %s744 = ssub.s32 16, 16
          %745 = vsyncadd [#allocation17], %s744
          %s747 = sshll.u32 [#allocation18], 4
          %s748 = int_to_ptr.vmem [resolvable:$true] %s747
          %750 = dma.hbm_to_vmem [thread:$0]  %s20, 16, %s748, [#allocation17]
        $region88: #{state_detection_forward.2} parent=11 // pred_fallthru
          _
        // Predicated region
        $region89: #{state_detection_forward.2} parent=11 // pred_check
          %p751 = pneg %p510
        $region90: #{state_detection_forward.2} parent=11 // pred_check_branch
          %753 = sbr.rel (%p751) target = $region92
        $region91: #{state_detection_forward.2} parent=11 // pred_region
          %s755 = ssub.s32 16, 16
          %756 = vsyncadd [#allocation20], %s755
          %s758 = sshll.u32 [#allocation19], 4
          %s759 = int_to_ptr.vmem [resolvable:$true] %s758
          %761 = dma.hbm_to_vmem [thread:$0]  %s21, 16, %s759, [#allocation20]
        $region92: #{state_detection_forward.2} parent=11 // pred_fallthru
          _
        // Predicated region
        $region93: #{state_detection_forward.2} parent=11 // pred_check
          %p762 = pneg %p531
        $region94: #{state_detection_forward.2} parent=11 // pred_check_branch
          %764 = sbr.rel (%p762) target = $region96
        $region95: #{state_detection_forward.2} parent=11 // pred_region
          %s766 = ssub.s32 16, 16
          %767 = vsyncadd [#allocation20], %s766
          %s769 = sshll.u32 [#allocation21], 4
          %s770 = int_to_ptr.vmem [resolvable:$true] %s769
          %772 = dma.hbm_to_vmem [thread:$0]  %s22, 16, %s770, [#allocation20]
        $region96: #{state_detection_forward.2} parent=11 // pred_fallthru
          _
      $region12: #{state_detection_forward.2} parent=5 // pred_fallthru
        _
      %p773 = scmp.lt.s32.totalorder %s38, 2
      // Predicated region
      $region97: #{state_detection_forward.2} parent=5 // pred_check
        %p774 = pneg %p773
      $region98: #{state_detection_forward.2} parent=5 // pred_check_branch
        %776 = sbr.rel (%p774) target = $region100
      $region99: #{state_detection_forward.2} parent=5 // pred_region
        // Predicated region
        $region101: #{state_detection_forward.2} parent=99 // pred_check
          %p777 = pneg %p58
        $region102: #{state_detection_forward.2} parent=99 // pred_check_branch
          %779 = sbr.rel (%p777) target = $region104
        $region103: #{state_detection_forward.2} parent=99 // pred_region
          %s780 = smul.u32 2, %s38
          %p781 = scmp.lt.s32.totalorder %s780, 3
          %s782 = scalar_select %p781, %s780, 3
          %s783 = smul.addr %s782, 2
          %s784 = smul.addr %s783, 8
          %s785 = scalar_lea.vmem %s0, %s784
          %s786 = smul.u32 2, %s38
        $region104: #{state_detection_forward.2} parent=99 // pred_fallthru
          _
        // Predicated region
        $region105: #{state_detection_forward.2} parent=99 // pred_check
          %p787 = pneg %p84
        $region106: #{state_detection_forward.2} parent=99 // pred_check_branch
          %789 = sbr.rel (%p787) target = $region108
        $region107: #{state_detection_forward.2} parent=99 // pred_region
          %s790 = smul.u32 2, %s38
          %p791 = scmp.lt.s32.totalorder %s790, 3
          %s792 = scalar_select %p791, %s790, 3
          %s793 = smul.addr %s792, 2
          %s794 = smul.addr %s793, 8
          %s795 = scalar_lea.vmem %s1, %s794
          %s796 = smul.u32 2, %s38
        $region108: #{state_detection_forward.2} parent=99 // pred_fallthru
          _
      $region100: #{state_detection_forward.2} parent=5 // pred_fallthru
        _
      %p797 = scmp.le.s32.totalorder 1, %s38
      %p798 = scmp.lt.s32.totalorder %s38, 3
      %p799 = pnand %p797, %p798
      %p800 = pneg %p799
      // Predicated region
      $region109: #{state_detection_forward.2} parent=5 // pred_check
        _
      $region110: #{state_detection_forward.2} parent=5 // pred_check_branch
        %802 = sbr.rel (%p799) target = $region112
      $region111: #{state_detection_forward.2} parent=5 // pred_region
        %s803 = ssub.s32 %s38, 1
        // Predicated region
        $region113: #{state_detection_forward.2} parent=111 // pred_check
          %p804 = pneg %p153
        $region114: #{state_detection_forward.2} parent=111 // pred_check_branch
          %806 = sbr.rel (%p804) target = $region116
        $region115: #{state_detection_forward.2} parent=111 // pred_region
          %807 = dma.done [#allocation3], 8192
        $region116: #{state_detection_forward.2} parent=111 // pred_fallthru
          _
        // Predicated region
        $region117: #{state_detection_forward.2} parent=111 // pred_check
          %p808 = pneg %p174
        $region118: #{state_detection_forward.2} parent=111 // pred_check_branch
          %810 = sbr.rel (%p808) target = $region120
        $region119: #{state_detection_forward.2} parent=111 // pred_region
          %811 = dma.done [#allocation5], 64
        $region120: #{state_detection_forward.2} parent=111 // pred_fallthru
          _
        // Predicated region
        $region121: #{state_detection_forward.2} parent=111 // pred_check
          %p812 = pneg %p195
        $region122: #{state_detection_forward.2} parent=111 // pred_check_branch
          %814 = sbr.rel (%p812) target = $region124
        $region123: #{state_detection_forward.2} parent=111 // pred_region
          %815 = dma.done [#allocation5], 64
        $region124: #{state_detection_forward.2} parent=111 // pred_fallthru
          _
        // Predicated region
        $region125: #{state_detection_forward.2} parent=111 // pred_check
          %p816 = pneg %p216
        $region126: #{state_detection_forward.2} parent=111 // pred_check_branch
          %818 = sbr.rel (%p816) target = $region128
        $region127: #{state_detection_forward.2} parent=111 // pred_region
          %819 = dma.done [#allocation8], 64
        $region128: #{state_detection_forward.2} parent=111 // pred_fallthru
          _
        // Predicated region
        $region129: #{state_detection_forward.2} parent=111 // pred_check
          %p820 = pneg %p237
        $region130: #{state_detection_forward.2} parent=111 // pred_check_branch
          %822 = sbr.rel (%p820) target = $region132
        $region131: #{state_detection_forward.2} parent=111 // pred_region
          %823 = dma.done [#allocation8], 8192
        $region132: #{state_detection_forward.2} parent=111 // pred_fallthru
          _
        // Predicated region
        $region133: #{state_detection_forward.2} parent=111 // pred_check
          %p824 = pneg %p258
        $region134: #{state_detection_forward.2} parent=111 // pred_check_branch
          %826 = sbr.rel (%p824) target = $region136
        $region135: #{state_detection_forward.2} parent=111 // pred_region
          %827 = dma.done [#allocation11], 8192
        $region136: #{state_detection_forward.2} parent=111 // pred_fallthru
          _
        // Predicated region
        $region137: #{state_detection_forward.2} parent=111 // pred_check
          %p828 = pneg %p279
        $region138: #{state_detection_forward.2} parent=111 // pred_check_branch
          %830 = sbr.rel (%p828) target = $region140
        $region139: #{state_detection_forward.2} parent=111 // pred_region
          %831 = dma.done [#allocation11], 8192
        $region140: #{state_detection_forward.2} parent=111 // pred_fallthru
          _
        // Predicated region
        $region141: #{state_detection_forward.2} parent=111 // pred_check
          %p832 = pneg %p300
        $region142: #{state_detection_forward.2} parent=111 // pred_check_branch
          %834 = sbr.rel (%p832) target = $region144
        $region143: #{state_detection_forward.2} parent=111 // pred_region
          %835 = dma.done [#allocation14], 32
        $region144: #{state_detection_forward.2} parent=111 // pred_fallthru
          _
        // Predicated region
        $region145: #{state_detection_forward.2} parent=111 // pred_check
          %p836 = pneg %p321
        $region146: #{state_detection_forward.2} parent=111 // pred_check_branch
          %838 = sbr.rel (%p836) target = $region148
        $region147: #{state_detection_forward.2} parent=111 // pred_region
          %839 = dma.done [#allocation14], 32
        $region148: #{state_detection_forward.2} parent=111 // pred_fallthru
          _
        // Predicated region
        $region149: #{state_detection_forward.2} parent=111 // pred_check
          %p840 = pneg %p342
        $region150: #{state_detection_forward.2} parent=111 // pred_check_branch
          %842 = sbr.rel (%p840) target = $region152
        $region151: #{state_detection_forward.2} parent=111 // pred_region
          %843 = dma.done [#allocation17], 32
        $region152: #{state_detection_forward.2} parent=111 // pred_fallthru
          _
        // Predicated region
        $region153: #{state_detection_forward.2} parent=111 // pred_check
          %p844 = pneg %p489
        $region154: #{state_detection_forward.2} parent=111 // pred_check_branch
          %846 = sbr.rel (%p844) target = $region156
        $region155: #{state_detection_forward.2} parent=111 // pred_region
          %847 = dma.done [#allocation17], 16
        $region156: #{state_detection_forward.2} parent=111 // pred_fallthru
          _
        // Predicated region
        $region157: #{state_detection_forward.2} parent=111 // pred_check
          %p848 = pneg %p510
        $region158: #{state_detection_forward.2} parent=111 // pred_check_branch
          %850 = sbr.rel (%p848) target = $region160
        $region159: #{state_detection_forward.2} parent=111 // pred_region
          %851 = dma.done [#allocation20], 16
        $region160: #{state_detection_forward.2} parent=111 // pred_fallthru
          _
        // Predicated region
        $region161: #{state_detection_forward.2} parent=111 // pred_check
          %p852 = pneg %p531
        $region162: #{state_detection_forward.2} parent=111 // pred_check_branch
          %854 = sbr.rel (%p852) target = $region164
        $region163: #{state_detection_forward.2} parent=111 // pred_region
          %855 = dma.done [#allocation20], 16
        $region164: #{state_detection_forward.2} parent=111 // pred_fallthru
          _
        %s856 = smul.u32 2, %s43
        %p857 = scmp.lt.s32.totalorder %s856, 3
        %s858 = scalar_select %p857, %s856, 3
        %s859 = smul.addr %s858, 2
        %s860 = smul.addr %s859, 8
        %s861 = scalar_lea.vmem %s0, %s860
        %p862 = pneg %p64
        %p863 = pneg %p61
        %s864 = smul.u32 2, %s43
        %p865 = scmp.lt.s32.totalorder %s864, 3
        %s866 = scalar_select %p865, %s864, 3
        %s867 = smul.addr %s866, 2
        %s868 = smul.addr %s867, 8
        %s869 = scalar_lea.vmem %s1, %s868
        %p870 = pneg %p90
        %p871 = pneg %p87
        %p872 = pneg %p111
        %p873 = pneg %p108
        %p874 = pneg %p132
        %p875 = pneg %p129
        %p876 = pneg %p153
        %p877 = pneg %p150
        %p878 = pneg %p174
        %p879 = pneg %p171
        %p880 = pneg %p195
        %p881 = pneg %p192
        %p882 = pneg %p216
        %p883 = pneg %p213
        %p884 = pneg %p237
        %p885 = pneg %p234
        %p886 = pneg %p258
        %p887 = pneg %p255
        %p888 = pneg %p279
        %p889 = pneg %p276
        %p890 = pneg %p300
        %p891 = pneg %p297
        %p892 = pneg %p321
        %p893 = pneg %p318
        %p894 = pneg %p342
        %p895 = pneg %p339
        %p896 = pneg %p363
        %p897 = pneg %p360
        %p898 = pneg %p384
        %p899 = pneg %p381
        %p900 = pneg %p405
        %p901 = pneg %p402
        %p902 = pneg %p426
        %p903 = pneg %p423
        %p904 = pneg %p447
        %p905 = pneg %p444
        %p906 = pneg %p468
        %p907 = pneg %p465
        %p908 = pneg %p489
        %p909 = pneg %p486
        %p910 = pneg %p510
        %p911 = pneg %p507
        %p912 = pneg %p531
        %p913 = pneg %p528
        %p914 = pneg %p557
        %p915 = pneg %p554
        %s916 = smul.u32 2, %s43
        %p917 = scmp.lt.s32.totalorder %s916, 3
        %s918 = scalar_select %p917, %s916, 3
        %s919 = smul.addr %s918, 8
        %s920 = scalar_lea.vmem %s23, %s919
        %p921 = pneg %p583
        %p922 = pneg %p580
        %s923 = smul.u32 2, %s43
        %p924 = scmp.lt.s32.totalorder %s923, 3
        %s925 = scalar_select %p924, %s923, 3
        %s926 = smul.addr %s925, 8
        %s927 = scalar_lea.vmem %s24, %s926
        %s928 = smul.u32 2, %s43
        %p929 = scmp.lt.s32.totalorder %s928, 3
        %s930 = scalar_select %p929, %s928, 3
        %s931 = smul.addr %s930, 2
        %s932 = smul.addr %s931, 8
        %s933 = scalar_lea.vmem %s0, %s932
        %s934 = smul.u32 2, %s43
        %s935 = smul.u32 2, %s43
        %p936 = scmp.lt.s32.totalorder %s935, 3
        %s937 = scalar_select %p936, %s935, 3
        %s938 = smul.addr %s937, 2
        %s939 = smul.addr %s938, 8
        %s940 = scalar_lea.vmem %s1, %s939
        %s941 = smul.u32 2, %s43
        %s942 = smul.u32 2, %s43
        %p943 = scmp.lt.s32.totalorder %s942, 3
        %s944 = scalar_select %p943, %s942, 3
        %s945 = smul.addr %s944, 8
        %s946 = scalar_lea.vmem %s23, %s945
        %s947 = smul.u32 2, %s43
        %s948 = smul.u32 2, %s43
        %p949 = scmp.lt.s32.totalorder %s948, 3
        %s950 = scalar_select %p949, %s948, 3
        %s951 = smul.addr %s950, 8
        %s952 = scalar_lea.vmem %s24, %s951
        %s953 = smul.u32 2, %s43
        %v955 = vld [vmem:[%s933] sm:$0xff]
        %v956 = vld [vmem:[%s933 + $0x8] sm:$0xff]
        %v957 = vld [vmem:[%s933 + $0x10] sm:$0xff]
        %v958 = vld [vmem:[%s933 + $0x18] sm:$0xff]
        %v959 = vpack.c.bf16 %v957, %v955
        %v960 = vpack.c.bf16 %v958, %v956
        %v961 = vld [vmem:[%s940] sm:$0xff]
        %v962 = vld [vmem:[%s940 + $0x8] sm:$0xff]
        %v963 = vld [vmem:[%s940 + $0x10] sm:$0xff]
        %v964 = vld [vmem:[%s940 + $0x18] sm:$0xff]
        %v965 = vpack.c.bf16 %v963, %v961
        %v966 = vpack.c.bf16 %v964, %v962
        %v967 = vld [vmem:[%s2] sm:$0xff]
        %v968 = vld [vmem:[%s2 + $0x8] sm:$0xff]
        %v969 = vld [vmem:[%s2 + $0x10] sm:$0xff]
        %v970 = vld [vmem:[%s2 + $0x18] sm:$0xff]
        %v971 = vld [vmem:[%s2 + $0x20] sm:$0xff]
        %v972 = vld [vmem:[%s2 + $0x28] sm:$0xff]
        %v973 = vld [vmem:[%s2 + $0x30] sm:$0xff]
        %v974 = vld [vmem:[%s2 + $0x38] sm:$0xff]
        %v975 = vld [vmem:[%s2 + $0x40] sm:$0xff]
        %v976 = vld [vmem:[%s2 + $0x48] sm:$0xff]
        %v977 = vld [vmem:[%s2 + $0x50] sm:$0xff]
        %v978 = vld [vmem:[%s2 + $0x58] sm:$0xff]
        %v979 = vld [vmem:[%s2 + $0x60] sm:$0xff]
        %v980 = vld [vmem:[%s2 + $0x68] sm:$0xff]
        %v981 = vld [vmem:[%s2 + $0x70] sm:$0xff]
        %v982 = vld [vmem:[%s2 + $0x78] sm:$0xff]
        %v983 = vld [vmem:[%s2 + $0x80] sm:$0xff]
        %v984 = vld [vmem:[%s2 + $0x88] sm:$0xff]
        %v985 = vld [vmem:[%s2 + $0x90] sm:$0xff]
        %v986 = vld [vmem:[%s2 + $0x98] sm:$0xff]
        %v987 = vld [vmem:[%s2 + $0xa0] sm:$0xff]
        %v988 = vld [vmem:[%s2 + $0xa8] sm:$0xff]
        %v989 = vld [vmem:[%s2 + $0xb0] sm:$0xff]
        %v990 = vld [vmem:[%s2 + $0xb8] sm:$0xff]
        %v991 = vld [vmem:[%s2 + $0xc0] sm:$0xff]
        %v992 = vld [vmem:[%s2 + $0xc8] sm:$0xff]
        %v993 = vld [vmem:[%s2 + $0xd0] sm:$0xff]
        %v994 = vld [vmem:[%s2 + $0xd8] sm:$0xff]
        %v995 = vld [vmem:[%s2 + $0xe0] sm:$0xff]
        %v996 = vld [vmem:[%s2 + $0xe8] sm:$0xff]
        %v997 = vld [vmem:[%s2 + $0xf0] sm:$0xff]
        %v998 = vld [vmem:[%s2 + $0xf8] sm:$0xff]
        %v999 = vld [vmem:[%s2 + $0x100] sm:$0xff]
        %v1000 = vld [vmem:[%s2 + $0x108] sm:$0xff]
        %v1001 = vld [vmem:[%s2 + $0x110] sm:$0xff]
        %v1002 = vld [vmem:[%s2 + $0x118] sm:$0xff]
        %v1003 = vld [vmem:[%s2 + $0x120] sm:$0xff]
        %v1004 = vld [vmem:[%s2 + $0x128] sm:$0xff]
        %v1005 = vld [vmem:[%s2 + $0x130] sm:$0xff]
        %v1006 = vld [vmem:[%s2 + $0x138] sm:$0xff]
        %v1007 = vld [vmem:[%s2 + $0x140] sm:$0xff]
        %v1008 = vld [vmem:[%s2 + $0x148] sm:$0xff]
        %v1009 = vld [vmem:[%s2 + $0x150] sm:$0xff]
        %v1010 = vld [vmem:[%s2 + $0x158] sm:$0xff]
        %v1011 = vld [vmem:[%s2 + $0x160] sm:$0xff]
        %v1012 = vld [vmem:[%s2 + $0x168] sm:$0xff]
        %v1013 = vld [vmem:[%s2 + $0x170] sm:$0xff]
        %v1014 = vld [vmem:[%s2 + $0x178] sm:$0xff]
        %v1015 = vld [vmem:[%s2 + $0x180] sm:$0xff]
        %v1016 = vld [vmem:[%s2 + $0x188] sm:$0xff]
        %v1017 = vld [vmem:[%s2 + $0x190] sm:$0xff]
        %v1018 = vld [vmem:[%s2 + $0x198] sm:$0xff]
        %v1019 = vld [vmem:[%s2 + $0x1a0] sm:$0xff]
        %v1020 = vld [vmem:[%s2 + $0x1a8] sm:$0xff]
        %v1021 = vld [vmem:[%s2 + $0x1b0] sm:$0xff]
        %v1022 = vld [vmem:[%s2 + $0x1b8] sm:$0xff]
        %v1023 = vld [vmem:[%s2 + $0x1c0] sm:$0xff]
        %v1024 = vld [vmem:[%s2 + $0x1c8] sm:$0xff]
        %v1025 = vld [vmem:[%s2 + $0x1d0] sm:$0xff]
        %v1026 = vld [vmem:[%s2 + $0x1d8] sm:$0xff]
        %v1027 = vld [vmem:[%s2 + $0x1e0] sm:$0xff]
        %v1028 = vld [vmem:[%s2 + $0x1e8] sm:$0xff]
        %v1029 = vld [vmem:[%s2 + $0x1f0] sm:$0xff]
        %v1030 = vld [vmem:[%s2 + $0x1f8] sm:$0xff]
        %v1031 = vld [vmem:[#allocation4] sm:$0xf]
        %v1033 = vlaneseq
        %v1034 = vshrl.u32 %v1033, 7
        %v1035 = vsub.s32 0, %v1034
        %v1036 = vrot.slane %v1031, %v1035
        %v1037 = vlaneseq
        %v1038 = vshrl.u32 %v1037, 7
        %v1039 = vsub.s32 1, %v1038
        %v1040 = vrot.slane %v1031, %v1039
        %v1041 = vlaneseq
        %v1042 = vshrl.u32 %v1041, 7
        %v1043 = vsub.s32 2, %v1042
        %v1044 = vrot.slane %v1031, %v1043
        %v1045 = vlaneseq
        %v1046 = vshrl.u32 %v1045, 7
        %v1047 = vsub.s32 3, %v1046
        %v1048 = vrot.slane %v1031, %v1047
        %v1117 = vunpack.c.l.b16 %v967
        %v1118 = vunpack.c.h.b16 %v967
        %v1119 = vunpack.c.l.b16 %v968
        %v1120 = vunpack.c.h.b16 %v968
        %v1121 = vunpack.c.l.b16 %v969
        %v1122 = vunpack.c.h.b16 %v969
        %v1123 = vunpack.c.l.b16 %v970
        %v1124 = vunpack.c.h.b16 %v970
        %v1125 = vunpack.c.l.b16 %v971
        %v1126 = vunpack.c.h.b16 %v971
        %v1127 = vunpack.c.l.b16 %v972
        %v1128 = vunpack.c.h.b16 %v972
        %v1129 = vunpack.c.l.b16 %v973
        %v1130 = vunpack.c.h.b16 %v973
        %v1131 = vunpack.c.l.b16 %v974
        %v1132 = vunpack.c.h.b16 %v974
        %v1133 = vunpack.c.l.b16 %v975
        %v1134 = vunpack.c.h.b16 %v975
        %v1135 = vunpack.c.l.b16 %v976
        %v1136 = vunpack.c.h.b16 %v976
        %v1137 = vunpack.c.l.b16 %v977
        %v1138 = vunpack.c.h.b16 %v977
        %v1139 = vunpack.c.l.b16 %v978
        %v1140 = vunpack.c.h.b16 %v978
        %v1141 = vunpack.c.l.b16 %v979
        %v1142 = vunpack.c.h.b16 %v979
        %v1143 = vunpack.c.l.b16 %v980
        %v1144 = vunpack.c.h.b16 %v980
        %v1145 = vunpack.c.l.b16 %v981
        %v1146 = vunpack.c.h.b16 %v981
        %v1147 = vunpack.c.l.b16 %v982
        %v1148 = vunpack.c.h.b16 %v982
        %v1149 = vunpack.c.l.b16 %v983
        %v1150 = vunpack.c.h.b16 %v983
        %v1151 = vunpack.c.l.b16 %v984
        %v1152 = vunpack.c.h.b16 %v984
        %v1153 = vunpack.c.l.b16 %v985
        %v1154 = vunpack.c.h.b16 %v985
        %v1155 = vunpack.c.l.b16 %v986
        %v1156 = vunpack.c.h.b16 %v986
        %v1157 = vunpack.c.l.b16 %v987
        %v1158 = vunpack.c.h.b16 %v987
        %v1159 = vunpack.c.l.b16 %v988
        %v1160 = vunpack.c.h.b16 %v988
        %v1161 = vunpack.c.l.b16 %v989
        %v1162 = vunpack.c.h.b16 %v989
        %v1163 = vunpack.c.l.b16 %v990
        %v1164 = vunpack.c.h.b16 %v990
        %v1165 = vunpack.c.l.b16 %v991
        %v1166 = vunpack.c.h.b16 %v991
        %v1167 = vunpack.c.l.b16 %v992
        %v1168 = vunpack.c.h.b16 %v992
        %v1169 = vunpack.c.l.b16 %v993
        %v1170 = vunpack.c.h.b16 %v993
        %v1171 = vunpack.c.l.b16 %v994
        %v1172 = vunpack.c.h.b16 %v994
        %v1173 = vunpack.c.l.b16 %v995
        %v1174 = vunpack.c.h.b16 %v995
        %v1175 = vunpack.c.l.b16 %v996
        %v1176 = vunpack.c.h.b16 %v996
        %v1177 = vunpack.c.l.b16 %v997
        %v1178 = vunpack.c.h.b16 %v997
        %v1179 = vunpack.c.l.b16 %v998
        %v1180 = vunpack.c.h.b16 %v998
        %v1181 = vunpack.c.l.b16 %v999
        %v1182 = vunpack.c.h.b16 %v999
        %v1183 = vunpack.c.l.b16 %v1000
        %v1184 = vunpack.c.h.b16 %v1000
        %v1185 = vunpack.c.l.b16 %v1001
        %v1186 = vunpack.c.h.b16 %v1001
        %v1187 = vunpack.c.l.b16 %v1002
        %v1188 = vunpack.c.h.b16 %v1002
        %v1189 = vunpack.c.l.b16 %v1003
        %v1190 = vunpack.c.h.b16 %v1003
        %v1191 = vunpack.c.l.b16 %v1004
        %v1192 = vunpack.c.h.b16 %v1004
        %v1193 = vunpack.c.l.b16 %v1005
        %v1194 = vunpack.c.h.b16 %v1005
        %v1195 = vunpack.c.l.b16 %v1006
        %v1196 = vunpack.c.h.b16 %v1006
        %v1197 = vunpack.c.l.b16 %v1007
        %v1198 = vunpack.c.h.b16 %v1007
        %v1199 = vunpack.c.l.b16 %v1008
        %v1200 = vunpack.c.h.b16 %v1008
        %v1201 = vunpack.c.l.b16 %v1009
        %v1202 = vunpack.c.h.b16 %v1009
        %v1203 = vunpack.c.l.b16 %v1010
        %v1204 = vunpack.c.h.b16 %v1010
        %v1205 = vunpack.c.l.b16 %v1011
        %v1206 = vunpack.c.h.b16 %v1011
        %v1207 = vunpack.c.l.b16 %v1012
        %v1208 = vunpack.c.h.b16 %v1012
        %v1209 = vunpack.c.l.b16 %v1013
        %v1210 = vunpack.c.h.b16 %v1013
        %v1211 = vunpack.c.l.b16 %v1014
        %v1212 = vunpack.c.h.b16 %v1014
        %v1213 = vunpack.c.l.b16 %v1015
        %v1214 = vunpack.c.h.b16 %v1015
        %v1215 = vunpack.c.l.b16 %v1016
        %v1216 = vunpack.c.h.b16 %v1016
        %v1217 = vunpack.c.l.b16 %v1017
        %v1218 = vunpack.c.h.b16 %v1017
        %v1219 = vunpack.c.l.b16 %v1018
        %v1220 = vunpack.c.h.b16 %v1018
        %v1221 = vunpack.c.l.b16 %v1019
        %v1222 = vunpack.c.h.b16 %v1019
        %v1223 = vunpack.c.l.b16 %v1020
        %v1224 = vunpack.c.h.b16 %v1020
        %v1225 = vunpack.c.l.b16 %v1021
        %v1226 = vunpack.c.h.b16 %v1021
        %v1227 = vunpack.c.l.b16 %v1022
        %v1228 = vunpack.c.h.b16 %v1022
        %v1229 = vunpack.c.l.b16 %v1023
        %v1230 = vunpack.c.h.b16 %v1023
        %v1231 = vunpack.c.l.b16 %v1024
        %v1232 = vunpack.c.h.b16 %v1024
        %v1233 = vunpack.c.l.b16 %v1025
        %v1234 = vunpack.c.h.b16 %v1025
        %v1235 = vunpack.c.l.b16 %v1026
        %v1236 = vunpack.c.h.b16 %v1026
        %v1237 = vunpack.c.l.b16 %v1027
        %v1238 = vunpack.c.h.b16 %v1027
        %v1239 = vunpack.c.l.b16 %v1028
        %v1240 = vunpack.c.h.b16 %v1028
        %v1241 = vunpack.c.l.b16 %v1029
        %v1242 = vunpack.c.h.b16 %v1029
        %v1243 = vunpack.c.l.b16 %v1030
        %v1244 = vunpack.c.h.b16 %v1030
        %v1245 = vpack.c.b16 %v1121, %v1117
        %v1246 = vpack.c.b16 %v1122, %v1118
        %v1247 = vpack.c.b16 %v1123, %v1119
        %v1248 = vpack.c.b16 %v1124, %v1120
        %v1249 = vpack.c.b16 %v1129, %v1125
        %v1250 = vpack.c.b16 %v1130, %v1126
        %v1251 = vpack.c.b16 %v1131, %v1127
        %v1252 = vpack.c.b16 %v1132, %v1128
        %v1253 = vpack.c.b16 %v1137, %v1133
        %v1254 = vpack.c.b16 %v1138, %v1134
        %v1255 = vpack.c.b16 %v1139, %v1135
        %v1256 = vpack.c.b16 %v1140, %v1136
        %v1257 = vpack.c.b16 %v1145, %v1141
        %v1258 = vpack.c.b16 %v1146, %v1142
        %v1259 = vpack.c.b16 %v1147, %v1143
        %v1260 = vpack.c.b16 %v1148, %v1144
        %v1261 = vpack.c.b16 %v1153, %v1149
        %v1262 = vpack.c.b16 %v1154, %v1150
        %v1263 = vpack.c.b16 %v1155, %v1151
        %v1264 = vpack.c.b16 %v1156, %v1152
        %v1265 = vpack.c.b16 %v1161, %v1157
        %v1266 = vpack.c.b16 %v1162, %v1158
        %v1267 = vpack.c.b16 %v1163, %v1159
        %v1268 = vpack.c.b16 %v1164, %v1160
        %v1269 = vpack.c.b16 %v1169, %v1165
        %v1270 = vpack.c.b16 %v1170, %v1166
        %v1271 = vpack.c.b16 %v1171, %v1167
        %v1272 = vpack.c.b16 %v1172, %v1168
        %v1273 = vpack.c.b16 %v1177, %v1173
        %v1274 = vpack.c.b16 %v1178, %v1174
        %v1275 = vpack.c.b16 %v1179, %v1175
        %v1276 = vpack.c.b16 %v1180, %v1176
        %v1277 = vpack.c.b16 %v1185, %v1181
        %v1278 = vpack.c.b16 %v1186, %v1182
        %v1279 = vpack.c.b16 %v1187, %v1183
        %v1280 = vpack.c.b16 %v1188, %v1184
        %v1281 = vpack.c.b16 %v1193, %v1189
        %v1282 = vpack.c.b16 %v1194, %v1190
        %v1283 = vpack.c.b16 %v1195, %v1191
        %v1284 = vpack.c.b16 %v1196, %v1192
        %v1285 = vpack.c.b16 %v1201, %v1197
        %v1286 = vpack.c.b16 %v1202, %v1198
        %v1287 = vpack.c.b16 %v1203, %v1199
        %v1288 = vpack.c.b16 %v1204, %v1200
        %v1289 = vpack.c.b16 %v1209, %v1205
        %v1290 = vpack.c.b16 %v1210, %v1206
        %v1291 = vpack.c.b16 %v1211, %v1207
        %v1292 = vpack.c.b16 %v1212, %v1208
        %v1293 = vpack.c.b16 %v1217, %v1213
        %v1294 = vpack.c.b16 %v1218, %v1214
        %v1295 = vpack.c.b16 %v1219, %v1215
        %v1296 = vpack.c.b16 %v1220, %v1216
        %v1297 = vpack.c.b16 %v1225, %v1221
        %v1298 = vpack.c.b16 %v1226, %v1222
        %v1299 = vpack.c.b16 %v1227, %v1223
        %v1300 = vpack.c.b16 %v1228, %v1224
        %v1301 = vpack.c.b16 %v1233, %v1229
        %v1302 = vpack.c.b16 %v1234, %v1230
        %v1303 = vpack.c.b16 %v1235, %v1231
        %v1304 = vpack.c.b16 %v1236, %v1232
        %v1305 = vpack.c.b16 %v1241, %v1237
        %v1306 = vpack.c.b16 %v1242, %v1238
        %v1307 = vpack.c.b16 %v1243, %v1239
        %v1308 = vpack.c.b16 %v1244, %v1240
        %1373 = vmatprep.subr.bf16.mxu0 %v1246
        %1374 = vmatpush1.bf16.msra.mxu0 %v1245
        %1375 = vmatprep.subr.bf16.mxu0 %v1250
        %1376 = vmatpush1.bf16.msra.mxu0 %v1249
        %1377 = vmatprep.subr.bf16.mxu0 %v1254
        %1378 = vmatpush1.bf16.msra.mxu0 %v1253
        %1379 = vmatprep.subr.bf16.mxu0 %v1258
        %1380 = vmatpush1.bf16.msra.mxu0 %v1257
        %1381 = vmatprep.subr.bf16.mxu0 %v1262
        %1382 = vmatpush1.bf16.msra.mxu0 %v1261
        %1383 = vmatprep.subr.bf16.mxu0 %v1266
        %1384 = vmatpush1.bf16.msra.mxu0 %v1265
        %1385 = vmatprep.subr.bf16.mxu0 %v1270
        %1386 = vmatpush1.bf16.msra.mxu0 %v1269
        %1387 = vmatprep.subr.bf16.mxu0 %v1274
        %1388 = vmatpush1.bf16.msra.mxu0 %v1273
        %1389 = vmatprep.subr.bf16.mxu0 %v1278
        %1390 = vmatpush1.bf16.msra.mxu0 %v1277
        %1391 = vmatprep.subr.bf16.mxu0 %v1282
        %1392 = vmatpush1.bf16.msra.mxu0 %v1281
        %1393 = vmatprep.subr.bf16.mxu0 %v1286
        %1394 = vmatpush1.bf16.msra.mxu0 %v1285
        %1395 = vmatprep.subr.bf16.mxu0 %v1290
        %1396 = vmatpush1.bf16.msra.mxu0 %v1289
        %1397 = vmatprep.subr.bf16.mxu0 %v1294
        %1398 = vmatpush1.bf16.msra.mxu0 %v1293
        %1399 = vmatprep.subr.bf16.mxu0 %v1298
        %1400 = vmatpush1.bf16.msra.mxu0 %v1297
        %1401 = vmatprep.subr.bf16.mxu0 %v1302
        %1402 = vmatpush1.bf16.msra.mxu0 %v1301
        %1403 = vmatprep.subr.bf16.mxu0 %v1306
        %1404 = vmatpush1.bf16.msra.mxu0 %v1305
        %1405 = vmatprep.mubr.bf16.mxu0 %v960
        %1406 = vmatmul.mubr.bf16.gmra.mrb[0].mxu0 %v959
        %v1407 = vpop.f32.mrb[0].mxu0
        %v1408 = vadd.f32 %v1036, %v1407
        %v1409 = vpop.f32.mrb[0].mxu0
        %v1410 = vadd.f32 %v1040, %v1409
        %v1411 = vpop.f32.mrb[0].mxu0
        %v1412 = vadd.f32 %v1036, %v1411
        %v1413 = vpop.f32.mrb[0].mxu0
        %v1414 = vadd.f32 %v1040, %v1413
        %1415 = vdwg.mxu0
        %1416 = vmatprep.subr.bf16.mxu0 %v1248
        %1417 = vmatpush1.bf16.msra.mxu0 %v1247
        %1418 = vmatprep.subr.bf16.mxu0 %v1252
        %1419 = vmatpush1.bf16.msra.mxu0 %v1251
        %1420 = vmatprep.subr.bf16.mxu0 %v1256
        %1421 = vmatpush1.bf16.msra.mxu0 %v1255
        %1422 = vmatprep.subr.bf16.mxu0 %v1260
        %1423 = vmatpush1.bf16.msra.mxu0 %v1259
        %1424 = vmatprep.subr.bf16.mxu0 %v1264
        %1425 = vmatpush1.bf16.msra.mxu0 %v1263
        %1426 = vmatprep.subr.bf16.mxu0 %v1268
        %1427 = vmatpush1.bf16.msra.mxu0 %v1267
        %1428 = vmatprep.subr.bf16.mxu0 %v1272
        %1429 = vmatpush1.bf16.msra.mxu0 %v1271
        %1430 = vmatprep.subr.bf16.mxu0 %v1276
        %1431 = vmatpush1.bf16.msra.mxu0 %v1275
        %1432 = vmatprep.subr.bf16.mxu0 %v1280
        %1433 = vmatpush1.bf16.msra.mxu0 %v1279
        %1434 = vmatprep.subr.bf16.mxu0 %v1284
        %1435 = vmatpush1.bf16.msra.mxu0 %v1283
        %1436 = vmatprep.subr.bf16.mxu0 %v1288
        %1437 = vmatpush1.bf16.msra.mxu0 %v1287
        %1438 = vmatprep.subr.bf16.mxu0 %v1292
        %1439 = vmatpush1.bf16.msra.mxu0 %v1291
        %1440 = vmatprep.subr.bf16.mxu0 %v1296
        %1441 = vmatpush1.bf16.msra.mxu0 %v1295
        %1442 = vmatprep.subr.bf16.mxu0 %v1300
        %1443 = vmatpush1.bf16.msra.mxu0 %v1299
        %1444 = vmatprep.subr.bf16.mxu0 %v1304
        %1445 = vmatpush1.bf16.msra.mxu0 %v1303
        %1446 = vmatprep.subr.bf16.mxu0 %v1308
        %1447 = vmatpush1.bf16.msra.mxu0 %v1307
        %1448 = vmatprep.mubr.bf16.mxu0 %v960
        %1449 = vmatmul.mubr.bf16.gmra.mrb[0].mxu0 %v959
        %v1450 = vpop.f32.mrb[0].mxu0
        %v1451 = vadd.f32 %v1044, %v1450
        %v1452 = vpop.f32.mrb[0].mxu0
        %v1453 = vadd.f32 %v1048, %v1452
        %v1454 = vpop.f32.mrb[0].mxu0
        %v1455 = vadd.f32 %v1044, %v1454
        %v1456 = vpop.f32.mrb[0].mxu0
        %v1457 = vadd.f32 %v1048, %v1456
        %1458 = vdwg.mxu0
        %v1459 = vmax.f32 %v1408, 0.0
        %v1460 = vmax.f32 %v1410, 0.0
        %v1461 = vmax.f32 %v1451, 0.0
        %v1462 = vmax.f32 %v1453, 0.0
        %v1463 = vmax.f32 %v1412, 0.0
        %v1464 = vmax.f32 %v1414, 0.0
        %v1465 = vmax.f32 %v1455, 0.0
        %v1466 = vmax.f32 %v1457, 0.0
        %v1467 = vld [vmem:[%s3] sm:$0xff]
        %v1468 = vld [vmem:[%s3 + $0x8] sm:$0xff]
        %v1469 = vld [vmem:[%s3 + $0x10] sm:$0xff]
        %v1470 = vld [vmem:[%s3 + $0x18] sm:$0xff]
        %v1471 = vld [vmem:[%s3 + $0x20] sm:$0xff]
        %v1472 = vld [vmem:[%s3 + $0x28] sm:$0xff]
        %v1473 = vld [vmem:[%s3 + $0x30] sm:$0xff]
        %v1474 = vld [vmem:[%s3 + $0x38] sm:$0xff]
        %v1475 = vld [vmem:[%s3 + $0x40] sm:$0xff]
        %v1476 = vld [vmem:[%s3 + $0x48] sm:$0xff]
        %v1477 = vld [vmem:[%s3 + $0x50] sm:$0xff]
        %v1478 = vld [vmem:[%s3 + $0x58] sm:$0xff]
        %v1479 = vld [vmem:[%s3 + $0x60] sm:$0xff]
        %v1480 = vld [vmem:[%s3 + $0x68] sm:$0xff]
        %v1481 = vld [vmem:[%s3 + $0x70] sm:$0xff]
        %v1482 = vld [vmem:[%s3 + $0x78] sm:$0xff]
        %v1483 = vld [vmem:[%s3 + $0x80] sm:$0xff]
        %v1484 = vld [vmem:[%s3 + $0x88] sm:$0xff]
        %v1485 = vld [vmem:[%s3 + $0x90] sm:$0xff]
        %v1486 = vld [vmem:[%s3 + $0x98] sm:$0xff]
        %v1487 = vld [vmem:[%s3 + $0xa0] sm:$0xff]
        %v1488 = vld [vmem:[%s3 + $0xa8] sm:$0xff]
        %v1489 = vld [vmem:[%s3 + $0xb0] sm:$0xff]
        %v1490 = vld [vmem:[%s3 + $0xb8] sm:$0xff]
        %v1491 = vld [vmem:[%s3 + $0xc0] sm:$0xff]
        %v1492 = vld [vmem:[%s3 + $0xc8] sm:$0xff]
        %v1493 = vld [vmem:[%s3 + $0xd0] sm:$0xff]
        %v1494 = vld [vmem:[%s3 + $0xd8] sm:$0xff]
        %v1495 = vld [vmem:[%s3 + $0xe0] sm:$0xff]
        %v1496 = vld [vmem:[%s3 + $0xe8] sm:$0xff]
        %v1497 = vld [vmem:[%s3 + $0xf0] sm:$0xff]
        %v1498 = vld [vmem:[%s3 + $0xf8] sm:$0xff]
        %v1499 = vld [vmem:[%s3 + $0x100] sm:$0xff]
        %v1500 = vld [vmem:[%s3 + $0x108] sm:$0xff]
        %v1501 = vld [vmem:[%s3 + $0x110] sm:$0xff]
        %v1502 = vld [vmem:[%s3 + $0x118] sm:$0xff]
        %v1503 = vld [vmem:[%s3 + $0x120] sm:$0xff]
        %v1504 = vld [vmem:[%s3 + $0x128] sm:$0xff]
        %v1505 = vld [vmem:[%s3 + $0x130] sm:$0xff]
        %v1506 = vld [vmem:[%s3 + $0x138] sm:$0xff]
        %v1507 = vld [vmem:[%s3 + $0x140] sm:$0xff]
        %v1508 = vld [vmem:[%s3 + $0x148] sm:$0xff]
        %v1509 = vld [vmem:[%s3 + $0x150] sm:$0xff]
        %v1510 = vld [vmem:[%s3 + $0x158] sm:$0xff]
        %v1511 = vld [vmem:[%s3 + $0x160] sm:$0xff]
        %v1512 = vld [vmem:[%s3 + $0x168] sm:$0xff]
        %v1513 = vld [vmem:[%s3 + $0x170] sm:$0xff]
        %v1514 = vld [vmem:[%s3 + $0x178] sm:$0xff]
        %v1515 = vld [vmem:[%s3 + $0x180] sm:$0xff]
        %v1516 = vld [vmem:[%s3 + $0x188] sm:$0xff]
        %v1517 = vld [vmem:[%s3 + $0x190] sm:$0xff]
        %v1518 = vld [vmem:[%s3 + $0x198] sm:$0xff]
        %v1519 = vld [vmem:[%s3 + $0x1a0] sm:$0xff]
        %v1520 = vld [vmem:[%s3 + $0x1a8] sm:$0xff]
        %v1521 = vld [vmem:[%s3 + $0x1b0] sm:$0xff]
        %v1522 = vld [vmem:[%s3 + $0x1b8] sm:$0xff]
        %v1523 = vld [vmem:[%s3 + $0x1c0] sm:$0xff]
        %v1524 = vld [vmem:[%s3 + $0x1c8] sm:$0xff]
        %v1525 = vld [vmem:[%s3 + $0x1d0] sm:$0xff]
        %v1526 = vld [vmem:[%s3 + $0x1d8] sm:$0xff]
        %v1527 = vld [vmem:[%s3 + $0x1e0] sm:$0xff]
        %v1528 = vld [vmem:[%s3 + $0x1e8] sm:$0xff]
        %v1529 = vld [vmem:[%s3 + $0x1f0] sm:$0xff]
        %v1530 = vld [vmem:[%s3 + $0x1f8] sm:$0xff]
        %v1531 = vld [vmem:[#allocation6] sm:$0xf]
        %v1533 = vlaneseq
        %v1534 = vshrl.u32 %v1533, 7
        %v1535 = vsub.s32 0, %v1534
        %v1536 = vrot.slane %v1531, %v1535
        %v1537 = vlaneseq
        %v1538 = vshrl.u32 %v1537, 7
        %v1539 = vsub.s32 1, %v1538
        %v1540 = vrot.slane %v1531, %v1539
        %v1541 = vlaneseq
        %v1542 = vshrl.u32 %v1541, 7
        %v1543 = vsub.s32 2, %v1542
        %v1544 = vrot.slane %v1531, %v1543
        %v1545 = vlaneseq
        %v1546 = vshrl.u32 %v1545, 7
        %v1547 = vsub.s32 3, %v1546
        %v1548 = vrot.slane %v1531, %v1547
        %v1617 = vunpack.c.l.b16 %v1467
        %v1618 = vunpack.c.h.b16 %v1467
        %v1619 = vunpack.c.l.b16 %v1468
        %v1620 = vunpack.c.h.b16 %v1468
        %v1621 = vunpack.c.l.b16 %v1469
        %v1622 = vunpack.c.h.b16 %v1469
        %v1623 = vunpack.c.l.b16 %v1470
        %v1624 = vunpack.c.h.b16 %v1470
        %v1625 = vunpack.c.l.b16 %v1471
        %v1626 = vunpack.c.h.b16 %v1471
        %v1627 = vunpack.c.l.b16 %v1472
        %v1628 = vunpack.c.h.b16 %v1472
        %v1629 = vunpack.c.l.b16 %v1473
        %v1630 = vunpack.c.h.b16 %v1473
        %v1631 = vunpack.c.l.b16 %v1474
        %v1632 = vunpack.c.h.b16 %v1474
        %v1633 = vunpack.c.l.b16 %v1475
        %v1634 = vunpack.c.h.b16 %v1475
        %v1635 = vunpack.c.l.b16 %v1476
        %v1636 = vunpack.c.h.b16 %v1476
        %v1637 = vunpack.c.l.b16 %v1477
        %v1638 = vunpack.c.h.b16 %v1477
        %v1639 = vunpack.c.l.b16 %v1478
        %v1640 = vunpack.c.h.b16 %v1478
        %v1641 = vunpack.c.l.b16 %v1479
        %v1642 = vunpack.c.h.b16 %v1479
        %v1643 = vunpack.c.l.b16 %v1480
        %v1644 = vunpack.c.h.b16 %v1480
        %v1645 = vunpack.c.l.b16 %v1481
        %v1646 = vunpack.c.h.b16 %v1481
        %v1647 = vunpack.c.l.b16 %v1482
        %v1648 = vunpack.c.h.b16 %v1482
        %v1649 = vunpack.c.l.b16 %v1483
        %v1650 = vunpack.c.h.b16 %v1483
        %v1651 = vunpack.c.l.b16 %v1484
        %v1652 = vunpack.c.h.b16 %v1484
        %v1653 = vunpack.c.l.b16 %v1485
        %v1654 = vunpack.c.h.b16 %v1485
        %v1655 = vunpack.c.l.b16 %v1486
        %v1656 = vunpack.c.h.b16 %v1486
        %v1657 = vunpack.c.l.b16 %v1487
        %v1658 = vunpack.c.h.b16 %v1487
        %v1659 = vunpack.c.l.b16 %v1488
        %v1660 = vunpack.c.h.b16 %v1488
        %v1661 = vunpack.c.l.b16 %v1489
        %v1662 = vunpack.c.h.b16 %v1489
        %v1663 = vunpack.c.l.b16 %v1490
        %v1664 = vunpack.c.h.b16 %v1490
        %v1665 = vunpack.c.l.b16 %v1491
        %v1666 = vunpack.c.h.b16 %v1491
        %v1667 = vunpack.c.l.b16 %v1492
        %v1668 = vunpack.c.h.b16 %v1492
        %v1669 = vunpack.c.l.b16 %v1493
        %v1670 = vunpack.c.h.b16 %v1493
        %v1671 = vunpack.c.l.b16 %v1494
        %v1672 = vunpack.c.h.b16 %v1494
        %v1673 = vunpack.c.l.b16 %v1495
        %v1674 = vunpack.c.h.b16 %v1495
        %v1675 = vunpack.c.l.b16 %v1496
        %v1676 = vunpack.c.h.b16 %v1496
        %v1677 = vunpack.c.l.b16 %v1497
        %v1678 = vunpack.c.h.b16 %v1497
        %v1679 = vunpack.c.l.b16 %v1498
        %v1680 = vunpack.c.h.b16 %v1498
        %v1681 = vunpack.c.l.b16 %v1499
        %v1682 = vunpack.c.h.b16 %v1499
        %v1683 = vunpack.c.l.b16 %v1500
        %v1684 = vunpack.c.h.b16 %v1500
        %v1685 = vunpack.c.l.b16 %v1501
        %v1686 = vunpack.c.h.b16 %v1501
        %v1687 = vunpack.c.l.b16 %v1502
        %v1688 = vunpack.c.h.b16 %v1502
        %v1689 = vunpack.c.l.b16 %v1503
        %v1690 = vunpack.c.h.b16 %v1503
        %v1691 = vunpack.c.l.b16 %v1504
        %v1692 = vunpack.c.h.b16 %v1504
        %v1693 = vunpack.c.l.b16 %v1505
        %v1694 = vunpack.c.h.b16 %v1505
        %v1695 = vunpack.c.l.b16 %v1506
        %v1696 = vunpack.c.h.b16 %v1506
        %v1697 = vunpack.c.l.b16 %v1507
        %v1698 = vunpack.c.h.b16 %v1507
        %v1699 = vunpack.c.l.b16 %v1508
        %v1700 = vunpack.c.h.b16 %v1508
        %v1701 = vunpack.c.l.b16 %v1509
        %v1702 = vunpack.c.h.b16 %v1509
        %v1703 = vunpack.c.l.b16 %v1510
        %v1704 = vunpack.c.h.b16 %v1510
        %v1705 = vunpack.c.l.b16 %v1511
        %v1706 = vunpack.c.h.b16 %v1511
        %v1707 = vunpack.c.l.b16 %v1512
        %v1708 = vunpack.c.h.b16 %v1512
        %v1709 = vunpack.c.l.b16 %v1513
        %v1710 = vunpack.c.h.b16 %v1513
        %v1711 = vunpack.c.l.b16 %v1514
        %v1712 = vunpack.c.h.b16 %v1514
        %v1713 = vunpack.c.l.b16 %v1515
        %v1714 = vunpack.c.h.b16 %v1515
        %v1715 = vunpack.c.l.b16 %v1516
        %v1716 = vunpack.c.h.b16 %v1516
        %v1717 = vunpack.c.l.b16 %v1517
        %v1718 = vunpack.c.h.b16 %v1517
        %v1719 = vunpack.c.l.b16 %v1518
        %v1720 = vunpack.c.h.b16 %v1518
        %v1721 = vunpack.c.l.b16 %v1519
        %v1722 = vunpack.c.h.b16 %v1519
        %v1723 = vunpack.c.l.b16 %v1520
        %v1724 = vunpack.c.h.b16 %v1520
        %v1725 = vunpack.c.l.b16 %v1521
        %v1726 = vunpack.c.h.b16 %v1521
        %v1727 = vunpack.c.l.b16 %v1522
        %v1728 = vunpack.c.h.b16 %v1522
        %v1729 = vunpack.c.l.b16 %v1523
        %v1730 = vunpack.c.h.b16 %v1523
        %v1731 = vunpack.c.l.b16 %v1524
        %v1732 = vunpack.c.h.b16 %v1524
        %v1733 = vunpack.c.l.b16 %v1525
        %v1734 = vunpack.c.h.b16 %v1525
        %v1735 = vunpack.c.l.b16 %v1526
        %v1736 = vunpack.c.h.b16 %v1526
        %v1737 = vunpack.c.l.b16 %v1527
        %v1738 = vunpack.c.h.b16 %v1527
        %v1739 = vunpack.c.l.b16 %v1528
        %v1740 = vunpack.c.h.b16 %v1528
        %v1741 = vunpack.c.l.b16 %v1529
        %v1742 = vunpack.c.h.b16 %v1529
        %v1743 = vunpack.c.l.b16 %v1530
        %v1744 = vunpack.c.h.b16 %v1530
        %v1745 = vpack.c.b16 %v1621, %v1617
        %v1746 = vpack.c.b16 %v1622, %v1618
        %v1747 = vpack.c.b16 %v1623, %v1619
        %v1748 = vpack.c.b16 %v1624, %v1620
        %v1749 = vpack.c.b16 %v1629, %v1625
        %v1750 = vpack.c.b16 %v1630, %v1626
        %v1751 = vpack.c.b16 %v1631, %v1627
        %v1752 = vpack.c.b16 %v1632, %v1628
        %v1753 = vpack.c.b16 %v1637, %v1633
        %v1754 = vpack.c.b16 %v1638, %v1634
        %v1755 = vpack.c.b16 %v1639, %v1635
        %v1756 = vpack.c.b16 %v1640, %v1636
        %v1757 = vpack.c.b16 %v1645, %v1641
        %v1758 = vpack.c.b16 %v1646, %v1642
        %v1759 = vpack.c.b16 %v1647, %v1643
        %v1760 = vpack.c.b16 %v1648, %v1644
        %v1761 = vpack.c.b16 %v1653, %v1649
        %v1762 = vpack.c.b16 %v1654, %v1650
        %v1763 = vpack.c.b16 %v1655, %v1651
        %v1764 = vpack.c.b16 %v1656, %v1652
        %v1765 = vpack.c.b16 %v1661, %v1657
        %v1766 = vpack.c.b16 %v1662, %v1658
        %v1767 = vpack.c.b16 %v1663, %v1659
        %v1768 = vpack.c.b16 %v1664, %v1660
        %v1769 = vpack.c.b16 %v1669, %v1665
        %v1770 = vpack.c.b16 %v1670, %v1666
        %v1771 = vpack.c.b16 %v1671, %v1667
        %v1772 = vpack.c.b16 %v1672, %v1668
        %v1773 = vpack.c.b16 %v1677, %v1673
        %v1774 = vpack.c.b16 %v1678, %v1674
        %v1775 = vpack.c.b16 %v1679, %v1675
        %v1776 = vpack.c.b16 %v1680, %v1676
        %v1777 = vpack.c.b16 %v1685, %v1681
        %v1778 = vpack.c.b16 %v1686, %v1682
        %v1779 = vpack.c.b16 %v1687, %v1683
        %v1780 = vpack.c.b16 %v1688, %v1684
        %v1781 = vpack.c.b16 %v1693, %v1689
        %v1782 = vpack.c.b16 %v1694, %v1690
        %v1783 = vpack.c.b16 %v1695, %v1691
        %v1784 = vpack.c.b16 %v1696, %v1692
        %v1785 = vpack.c.b16 %v1701, %v1697
        %v1786 = vpack.c.b16 %v1702, %v1698
        %v1787 = vpack.c.b16 %v1703, %v1699
        %v1788 = vpack.c.b16 %v1704, %v1700
        %v1789 = vpack.c.b16 %v1709, %v1705
        %v1790 = vpack.c.b16 %v1710, %v1706
        %v1791 = vpack.c.b16 %v1711, %v1707
        %v1792 = vpack.c.b16 %v1712, %v1708
        %v1793 = vpack.c.b16 %v1717, %v1713
        %v1794 = vpack.c.b16 %v1718, %v1714
        %v1795 = vpack.c.b16 %v1719, %v1715
        %v1796 = vpack.c.b16 %v1720, %v1716
        %v1797 = vpack.c.b16 %v1725, %v1721
        %v1798 = vpack.c.b16 %v1726, %v1722
        %v1799 = vpack.c.b16 %v1727, %v1723
        %v1800 = vpack.c.b16 %v1728, %v1724
        %v1801 = vpack.c.b16 %v1733, %v1729
        %v1802 = vpack.c.b16 %v1734, %v1730
        %v1803 = vpack.c.b16 %v1735, %v1731
        %v1804 = vpack.c.b16 %v1736, %v1732
        %v1805 = vpack.c.b16 %v1741, %v1737
        %v1806 = vpack.c.b16 %v1742, %v1738
        %v1807 = vpack.c.b16 %v1743, %v1739
        %v1808 = vpack.c.b16 %v1744, %v1740
        %1873 = vmatprep.subr.bf16.mxu0 %v1746
        %1874 = vmatpush1.bf16.msra.mxu0 %v1745
        %1875 = vmatprep.subr.bf16.mxu0 %v1750
        %1876 = vmatpush1.bf16.msra.mxu0 %v1749
        %1877 = vmatprep.subr.bf16.mxu0 %v1754
        %1878 = vmatpush1.bf16.msra.mxu0 %v1753
        %1879 = vmatprep.subr.bf16.mxu0 %v1758
        %1880 = vmatpush1.bf16.msra.mxu0 %v1757
        %1881 = vmatprep.subr.bf16.mxu0 %v1762
        %1882 = vmatpush1.bf16.msra.mxu0 %v1761
        %1883 = vmatprep.subr.bf16.mxu0 %v1766
        %1884 = vmatpush1.bf16.msra.mxu0 %v1765
        %1885 = vmatprep.subr.bf16.mxu0 %v1770
        %1886 = vmatpush1.bf16.msra.mxu0 %v1769
        %1887 = vmatprep.subr.bf16.mxu0 %v1774
        %1888 = vmatpush1.bf16.msra.mxu0 %v1773
        %1889 = vmatprep.subr.bf16.mxu0 %v1778
        %1890 = vmatpush1.bf16.msra.mxu0 %v1777
        %1891 = vmatprep.subr.bf16.mxu0 %v1782
        %1892 = vmatpush1.bf16.msra.mxu0 %v1781
        %1893 = vmatprep.subr.bf16.mxu0 %v1786
        %1894 = vmatpush1.bf16.msra.mxu0 %v1785
        %1895 = vmatprep.subr.bf16.mxu0 %v1790
        %1896 = vmatpush1.bf16.msra.mxu0 %v1789
        %1897 = vmatprep.subr.bf16.mxu0 %v1794
        %1898 = vmatpush1.bf16.msra.mxu0 %v1793
        %1899 = vmatprep.subr.bf16.mxu0 %v1798
        %1900 = vmatpush1.bf16.msra.mxu0 %v1797
        %1901 = vmatprep.subr.bf16.mxu0 %v1802
        %1902 = vmatpush1.bf16.msra.mxu0 %v1801
        %1903 = vmatprep.subr.bf16.mxu0 %v1806
        %1904 = vmatpush1.bf16.msra.mxu0 %v1805
        %1905 = vmatprep.mubr.bf16.mxu0 %v966
        %1906 = vmatmul.mubr.bf16.gmra.mrb[0].mxu0 %v965
        %v1907 = vpop.f32.mrb[0].mxu0
        %v1908 = vadd.f32 %v1536, %v1907
        %v1909 = vpop.f32.mrb[0].mxu0
        %v1910 = vadd.f32 %v1540, %v1909
        %v1911 = vpop.f32.mrb[0].mxu0
        %v1912 = vadd.f32 %v1536, %v1911
        %v1913 = vpop.f32.mrb[0].mxu0
        %v1914 = vadd.f32 %v1540, %v1913
        %1915 = vdwg.mxu0
        %1916 = vmatprep.subr.bf16.mxu0 %v1748
        %1917 = vmatpush1.bf16.msra.mxu0 %v1747
        %1918 = vmatprep.subr.bf16.mxu0 %v1752
        %1919 = vmatpush1.bf16.msra.mxu0 %v1751
        %1920 = vmatprep.subr.bf16.mxu0 %v1756
        %1921 = vmatpush1.bf16.msra.mxu0 %v1755
        %1922 = vmatprep.subr.bf16.mxu0 %v1760
        %1923 = vmatpush1.bf16.msra.mxu0 %v1759
        %1924 = vmatprep.subr.bf16.mxu0 %v1764
        %1925 = vmatpush1.bf16.msra.mxu0 %v1763
        %1926 = vmatprep.subr.bf16.mxu0 %v1768
        %1927 = vmatpush1.bf16.msra.mxu0 %v1767
        %1928 = vmatprep.subr.bf16.mxu0 %v1772
        %1929 = vmatpush1.bf16.msra.mxu0 %v1771
        %1930 = vmatprep.subr.bf16.mxu0 %v1776
        %1931 = vmatpush1.bf16.msra.mxu0 %v1775
        %1932 = vmatprep.subr.bf16.mxu0 %v1780
        %1933 = vmatpush1.bf16.msra.mxu0 %v1779
        %1934 = vmatprep.subr.bf16.mxu0 %v1784
        %1935 = vmatpush1.bf16.msra.mxu0 %v1783
        %1936 = vmatprep.subr.bf16.mxu0 %v1788
        %1937 = vmatpush1.bf16.msra.mxu0 %v1787
        %1938 = vmatprep.subr.bf16.mxu0 %v1792
        %1939 = vmatpush1.bf16.msra.mxu0 %v1791
        %1940 = vmatprep.subr.bf16.mxu0 %v1796
        %1941 = vmatpush1.bf16.msra.mxu0 %v1795
        %1942 = vmatprep.subr.bf16.mxu0 %v1800
        %1943 = vmatpush1.bf16.msra.mxu0 %v1799
        %1944 = vmatprep.subr.bf16.mxu0 %v1804
        %1945 = vmatpush1.bf16.msra.mxu0 %v1803
        %1946 = vmatprep.subr.bf16.mxu0 %v1808
        %1947 = vmatpush1.bf16.msra.mxu0 %v1807
        %1948 = vmatprep.mubr.bf16.mxu0 %v966
        %1949 = vmatmul.mubr.bf16.gmra.mrb[0].mxu0 %v965
        %v1950 = vpop.f32.mrb[0].mxu0
        %v1951 = vadd.f32 %v1544, %v1950
        %v1952 = vpop.f32.mrb[0].mxu0
        %v1953 = vadd.f32 %v1548, %v1952
        %v1954 = vpop.f32.mrb[0].mxu0
        %v1955 = vadd.f32 %v1544, %v1954
        %v1956 = vpop.f32.mrb[0].mxu0
        %v1957 = vadd.f32 %v1548, %v1956
        %1958 = vdwg.mxu0
        %v1959 = vmax.f32 %v1908, 0.0
        %v1960 = vmax.f32 %v1910, 0.0
        %v1961 = vmax.f32 %v1951, 0.0
        %v1962 = vmax.f32 %v1953, 0.0
        %v1963 = vmax.f32 %v1912, 0.0
        %v1964 = vmax.f32 %v1914, 0.0
        %v1965 = vmax.f32 %v1955, 0.0
        %v1966 = vmax.f32 %v1957, 0.0
        %v1967 = vld [vmem:[#allocation2] sm:$0xff]
        %v1968 = vld [vmem:[#allocation2 + $0x8] sm:$0xff]
        %v1969 = vld [vmem:[#allocation2 + $0x10] sm:$0xff]
        %v1970 = vld [vmem:[#allocation2 + $0x18] sm:$0xff]
        %v1971 = vld [vmem:[#allocation2 + $0x20] sm:$0xff]
        %v1972 = vld [vmem:[#allocation2 + $0x28] sm:$0xff]
        %v1973 = vld [vmem:[#allocation2 + $0x30] sm:$0xff]
        %v1974 = vld [vmem:[#allocation2 + $0x38] sm:$0xff]
        %v1975 = vld [vmem:[#allocation2 + $0x40] sm:$0xff]
        %v1976 = vld [vmem:[#allocation2 + $0x48] sm:$0xff]
        %v1977 = vld [vmem:[#allocation2 + $0x50] sm:$0xff]
        %v1978 = vld [vmem:[#allocation2 + $0x58] sm:$0xff]
        %v1979 = vld [vmem:[#allocation2 + $0x60] sm:$0xff]
        %v1980 = vld [vmem:[#allocation2 + $0x68] sm:$0xff]
        %v1981 = vld [vmem:[#allocation2 + $0x70] sm:$0xff]
        %v1982 = vld [vmem:[#allocation2 + $0x78] sm:$0xff]
        %v1983 = vld [vmem:[#allocation2 + $0x80] sm:$0xff]
        %v1984 = vld [vmem:[#allocation2 + $0x88] sm:$0xff]
        %v1985 = vld [vmem:[#allocation2 + $0x90] sm:$0xff]
        %v1986 = vld [vmem:[#allocation2 + $0x98] sm:$0xff]
        %v1987 = vld [vmem:[#allocation2 + $0xa0] sm:$0xff]
        %v1988 = vld [vmem:[#allocation2 + $0xa8] sm:$0xff]
        %v1989 = vld [vmem:[#allocation2 + $0xb0] sm:$0xff]
        %v1990 = vld [vmem:[#allocation2 + $0xb8] sm:$0xff]
        %v1991 = vld [vmem:[#allocation2 + $0xc0] sm:$0xff]
        %v1992 = vld [vmem:[#allocation2 + $0xc8] sm:$0xff]
        %v1993 = vld [vmem:[#allocation2 + $0xd0] sm:$0xff]
        %v1994 = vld [vmem:[#allocation2 + $0xd8] sm:$0xff]
        %v1995 = vld [vmem:[#allocation2 + $0xe0] sm:$0xff]
        %v1996 = vld [vmem:[#allocation2 + $0xe8] sm:$0xff]
        %v1997 = vld [vmem:[#allocation2 + $0xf0] sm:$0xff]
        %v1998 = vld [vmem:[#allocation2 + $0xf8] sm:$0xff]
        %v1999 = vld [vmem:[#allocation2 + $0x100] sm:$0xff]
        %v2000 = vld [vmem:[#allocation2 + $0x108] sm:$0xff]
        %v2001 = vld [vmem:[#allocation2 + $0x110] sm:$0xff]
        %v2002 = vld [vmem:[#allocation2 + $0x118] sm:$0xff]
        %v2003 = vld [vmem:[#allocation2 + $0x120] sm:$0xff]
        %v2004 = vld [vmem:[#allocation2 + $0x128] sm:$0xff]
        %v2005 = vld [vmem:[#allocation2 + $0x130] sm:$0xff]
        %v2006 = vld [vmem:[#allocation2 + $0x138] sm:$0xff]
        %v2007 = vld [vmem:[#allocation2 + $0x140] sm:$0xff]
        %v2008 = vld [vmem:[#allocation2 + $0x148] sm:$0xff]
        %v2009 = vld [vmem:[#allocation2 + $0x150] sm:$0xff]
        %v2010 = vld [vmem:[#allocation2 + $0x158] sm:$0xff]
        %v2011 = vld [vmem:[#allocation2 + $0x160] sm:$0xff]
        %v2012 = vld [vmem:[#allocation2 + $0x168] sm:$0xff]
        %v2013 = vld [vmem:[#allocation2 + $0x170] sm:$0xff]
        %v2014 = vld [vmem:[#allocation2 + $0x178] sm:$0xff]
        %v2015 = vld [vmem:[#allocation2 + $0x180] sm:$0xff]
        %v2016 = vld [vmem:[#allocation2 + $0x188] sm:$0xff]
        %v2017 = vld [vmem:[#allocation2 + $0x190] sm:$0xff]
        %v2018 = vld [vmem:[#allocation2 + $0x198] sm:$0xff]
        %v2019 = vld [vmem:[#allocation2 + $0x1a0] sm:$0xff]
        %v2020 = vld [vmem:[#allocation2 + $0x1a8] sm:$0xff]
        %v2021 = vld [vmem:[#allocation2 + $0x1b0] sm:$0xff]
        %v2022 = vld [vmem:[#allocation2 + $0x1b8] sm:$0xff]
        %v2023 = vld [vmem:[#allocation2 + $0x1c0] sm:$0xff]
        %v2024 = vld [vmem:[#allocation2 + $0x1c8] sm:$0xff]
        %v2025 = vld [vmem:[#allocation2 + $0x1d0] sm:$0xff]
        %v2026 = vld [vmem:[#allocation2 + $0x1d8] sm:$0xff]
        %v2027 = vld [vmem:[#allocation2 + $0x1e0] sm:$0xff]
        %v2028 = vld [vmem:[#allocation2 + $0x1e8] sm:$0xff]
        %v2029 = vld [vmem:[#allocation2 + $0x1f0] sm:$0xff]
        %v2030 = vld [vmem:[#allocation2 + $0x1f8] sm:$0xff]
        %v2031 = vld [vmem:[#allocation7] sm:$0xf]
        %v2033 = vlaneseq
        %v2034 = vshrl.u32 %v2033, 7
        %v2035 = vsub.s32 0, %v2034
        %v2036 = vrot.slane %v2031, %v2035
        %v2037 = vlaneseq
        %v2038 = vshrl.u32 %v2037, 7
        %v2039 = vsub.s32 1, %v2038
        %v2040 = vrot.slane %v2031, %v2039
        %v2041 = vlaneseq
        %v2042 = vshrl.u32 %v2041, 7
        %v2043 = vsub.s32 2, %v2042
        %v2044 = vrot.slane %v2031, %v2043
        %v2045 = vlaneseq
        %v2046 = vshrl.u32 %v2045, 7
        %v2047 = vsub.s32 3, %v2046
        %v2048 = vrot.slane %v2031, %v2047
        %v2117 = vunpack.c.l.b16 %v1967
        %v2118 = vunpack.c.h.b16 %v1967
        %v2119 = vunpack.c.l.b16 %v1968
        %v2120 = vunpack.c.h.b16 %v1968
        %v2121 = vunpack.c.l.b16 %v1969
        %v2122 = vunpack.c.h.b16 %v1969
        %v2123 = vunpack.c.l.b16 %v1970
        %v2124 = vunpack.c.h.b16 %v1970
        %v2125 = vunpack.c.l.b16 %v1971
        %v2126 = vunpack.c.h.b16 %v1971
        %v2127 = vunpack.c.l.b16 %v1972
        %v2128 = vunpack.c.h.b16 %v1972
        %v2129 = vunpack.c.l.b16 %v1973
        %v2130 = vunpack.c.h.b16 %v1973
        %v2131 = vunpack.c.l.b16 %v1974
        %v2132 = vunpack.c.h.b16 %v1974
        %v2133 = vunpack.c.l.b16 %v1975
        %v2134 = vunpack.c.h.b16 %v1975
        %v2135 = vunpack.c.l.b16 %v1976
        %v2136 = vunpack.c.h.b16 %v1976
        %v2137 = vunpack.c.l.b16 %v1977
        %v2138 = vunpack.c.h.b16 %v1977
        %v2139 = vunpack.c.l.b16 %v1978
        %v2140 = vunpack.c.h.b16 %v1978
        %v2141 = vunpack.c.l.b16 %v1979
        %v2142 = vunpack.c.h.b16 %v1979
        %v2143 = vunpack.c.l.b16 %v1980
        %v2144 = vunpack.c.h.b16 %v1980
        %v2145 = vunpack.c.l.b16 %v1981
        %v2146 = vunpack.c.h.b16 %v1981
        %v2147 = vunpack.c.l.b16 %v1982
        %v2148 = vunpack.c.h.b16 %v1982
        %v2149 = vunpack.c.l.b16 %v1983
        %v2150 = vunpack.c.h.b16 %v1983
        %v2151 = vunpack.c.l.b16 %v1984
        %v2152 = vunpack.c.h.b16 %v1984
        %v2153 = vunpack.c.l.b16 %v1985
        %v2154 = vunpack.c.h.b16 %v1985
        %v2155 = vunpack.c.l.b16 %v1986
        %v2156 = vunpack.c.h.b16 %v1986
        %v2157 = vunpack.c.l.b16 %v1987
        %v2158 = vunpack.c.h.b16 %v1987
        %v2159 = vunpack.c.l.b16 %v1988
        %v2160 = vunpack.c.h.b16 %v1988
        %v2161 = vunpack.c.l.b16 %v1989
        %v2162 = vunpack.c.h.b16 %v1989
        %v2163 = vunpack.c.l.b16 %v1990
        %v2164 = vunpack.c.h.b16 %v1990
        %v2165 = vunpack.c.l.b16 %v1991
        %v2166 = vunpack.c.h.b16 %v1991
        %v2167 = vunpack.c.l.b16 %v1992
        %v2168 = vunpack.c.h.b16 %v1992
        %v2169 = vunpack.c.l.b16 %v1993
        %v2170 = vunpack.c.h.b16 %v1993
        %v2171 = vunpack.c.l.b16 %v1994
        %v2172 = vunpack.c.h.b16 %v1994
        %v2173 = vunpack.c.l.b16 %v1995
        %v2174 = vunpack.c.h.b16 %v1995
        %v2175 = vunpack.c.l.b16 %v1996
        %v2176 = vunpack.c.h.b16 %v1996
        %v2177 = vunpack.c.l.b16 %v1997
        %v2178 = vunpack.c.h.b16 %v1997
        %v2179 = vunpack.c.l.b16 %v1998
        %v2180 = vunpack.c.h.b16 %v1998
        %v2181 = vunpack.c.l.b16 %v1999
        %v2182 = vunpack.c.h.b16 %v1999
        %v2183 = vunpack.c.l.b16 %v2000
        %v2184 = vunpack.c.h.b16 %v2000
        %v2185 = vunpack.c.l.b16 %v2001
        %v2186 = vunpack.c.h.b16 %v2001
        %v2187 = vunpack.c.l.b16 %v2002
        %v2188 = vunpack.c.h.b16 %v2002
        %v2189 = vunpack.c.l.b16 %v2003
        %v2190 = vunpack.c.h.b16 %v2003
        %v2191 = vunpack.c.l.b16 %v2004
        %v2192 = vunpack.c.h.b16 %v2004
        %v2193 = vunpack.c.l.b16 %v2005
        %v2194 = vunpack.c.h.b16 %v2005
        %v2195 = vunpack.c.l.b16 %v2006
        %v2196 = vunpack.c.h.b16 %v2006
        %v2197 = vunpack.c.l.b16 %v2007
        %v2198 = vunpack.c.h.b16 %v2007
        %v2199 = vunpack.c.l.b16 %v2008
        %v2200 = vunpack.c.h.b16 %v2008
        %v2201 = vunpack.c.l.b16 %v2009
        %v2202 = vunpack.c.h.b16 %v2009
        %v2203 = vunpack.c.l.b16 %v2010
        %v2204 = vunpack.c.h.b16 %v2010
        %v2205 = vunpack.c.l.b16 %v2011
        %v2206 = vunpack.c.h.b16 %v2011
        %v2207 = vunpack.c.l.b16 %v2012
        %v2208 = vunpack.c.h.b16 %v2012
        %v2209 = vunpack.c.l.b16 %v2013
        %v2210 = vunpack.c.h.b16 %v2013
        %v2211 = vunpack.c.l.b16 %v2014
        %v2212 = vunpack.c.h.b16 %v2014
        %v2213 = vunpack.c.l.b16 %v2015
        %v2214 = vunpack.c.h.b16 %v2015
        %v2215 = vunpack.c.l.b16 %v2016
        %v2216 = vunpack.c.h.b16 %v2016
        %v2217 = vunpack.c.l.b16 %v2017
        %v2218 = vunpack.c.h.b16 %v2017
        %v2219 = vunpack.c.l.b16 %v2018
        %v2220 = vunpack.c.h.b16 %v2018
        %v2221 = vunpack.c.l.b16 %v2019
        %v2222 = vunpack.c.h.b16 %v2019
        %v2223 = vunpack.c.l.b16 %v2020
        %v2224 = vunpack.c.h.b16 %v2020
        %v2225 = vunpack.c.l.b16 %v2021
        %v2226 = vunpack.c.h.b16 %v2021
        %v2227 = vunpack.c.l.b16 %v2022
        %v2228 = vunpack.c.h.b16 %v2022
        %v2229 = vunpack.c.l.b16 %v2023
        %v2230 = vunpack.c.h.b16 %v2023
        %v2231 = vunpack.c.l.b16 %v2024
        %v2232 = vunpack.c.h.b16 %v2024
        %v2233 = vunpack.c.l.b16 %v2025
        %v2234 = vunpack.c.h.b16 %v2025
        %v2235 = vunpack.c.l.b16 %v2026
        %v2236 = vunpack.c.h.b16 %v2026
        %v2237 = vunpack.c.l.b16 %v2027
        %v2238 = vunpack.c.h.b16 %v2027
        %v2239 = vunpack.c.l.b16 %v2028
        %v2240 = vunpack.c.h.b16 %v2028
        %v2241 = vunpack.c.l.b16 %v2029
        %v2242 = vunpack.c.h.b16 %v2029
        %v2243 = vunpack.c.l.b16 %v2030
        %v2244 = vunpack.c.h.b16 %v2030
        %v2245 = vpack.c.b16 %v2121, %v2117
        %v2246 = vpack.c.b16 %v2122, %v2118
        %v2247 = vpack.c.b16 %v2123, %v2119
        %v2248 = vpack.c.b16 %v2124, %v2120
        %v2249 = vpack.c.b16 %v2129, %v2125
        %v2250 = vpack.c.b16 %v2130, %v2126
        %v2251 = vpack.c.b16 %v2131, %v2127
        %v2252 = vpack.c.b16 %v2132, %v2128
        %v2253 = vpack.c.b16 %v2137, %v2133
        %v2254 = vpack.c.b16 %v2138, %v2134
        %v2255 = vpack.c.b16 %v2139, %v2135
        %v2256 = vpack.c.b16 %v2140, %v2136
        %v2257 = vpack.c.b16 %v2145, %v2141
        %v2258 = vpack.c.b16 %v2146, %v2142
        %v2259 = vpack.c.b16 %v2147, %v2143
        %v2260 = vpack.c.b16 %v2148, %v2144
        %v2261 = vpack.c.b16 %v2153, %v2149
        %v2262 = vpack.c.b16 %v2154, %v2150
        %v2263 = vpack.c.b16 %v2155, %v2151
        %v2264 = vpack.c.b16 %v2156, %v2152
        %v2265 = vpack.c.b16 %v2161, %v2157
        %v2266 = vpack.c.b16 %v2162, %v2158
        %v2267 = vpack.c.b16 %v2163, %v2159
        %v2268 = vpack.c.b16 %v2164, %v2160
        %v2269 = vpack.c.b16 %v2169, %v2165
        %v2270 = vpack.c.b16 %v2170, %v2166
        %v2271 = vpack.c.b16 %v2171, %v2167
        %v2272 = vpack.c.b16 %v2172, %v2168
        %v2273 = vpack.c.b16 %v2177, %v2173
        %v2274 = vpack.c.b16 %v2178, %v2174
        %v2275 = vpack.c.b16 %v2179, %v2175
        %v2276 = vpack.c.b16 %v2180, %v2176
        %v2277 = vpack.c.b16 %v2185, %v2181
        %v2278 = vpack.c.b16 %v2186, %v2182
        %v2279 = vpack.c.b16 %v2187, %v2183
        %v2280 = vpack.c.b16 %v2188, %v2184
        %v2281 = vpack.c.b16 %v2193, %v2189
        %v2282 = vpack.c.b16 %v2194, %v2190
        %v2283 = vpack.c.b16 %v2195, %v2191
        %v2284 = vpack.c.b16 %v2196, %v2192
        %v2285 = vpack.c.b16 %v2201, %v2197
        %v2286 = vpack.c.b16 %v2202, %v2198
        %v2287 = vpack.c.b16 %v2203, %v2199
        %v2288 = vpack.c.b16 %v2204, %v2200
        %v2289 = vpack.c.b16 %v2209, %v2205
        %v2290 = vpack.c.b16 %v2210, %v2206
        %v2291 = vpack.c.b16 %v2211, %v2207
        %v2292 = vpack.c.b16 %v2212, %v2208
        %v2293 = vpack.c.b16 %v2217, %v2213
        %v2294 = vpack.c.b16 %v2218, %v2214
        %v2295 = vpack.c.b16 %v2219, %v2215
        %v2296 = vpack.c.b16 %v2220, %v2216
        %v2297 = vpack.c.b16 %v2225, %v2221
        %v2298 = vpack.c.b16 %v2226, %v2222
        %v2299 = vpack.c.b16 %v2227, %v2223
        %v2300 = vpack.c.b16 %v2228, %v2224
        %v2301 = vpack.c.b16 %v2233, %v2229
        %v2302 = vpack.c.b16 %v2234, %v2230
        %v2303 = vpack.c.b16 %v2235, %v2231
        %v2304 = vpack.c.b16 %v2236, %v2232
        %v2305 = vpack.c.b16 %v2241, %v2237
        %v2306 = vpack.c.b16 %v2242, %v2238
        %v2307 = vpack.c.b16 %v2243, %v2239
        %v2308 = vpack.c.b16 %v2244, %v2240
        %2373 = vmatprep.subr.bf16.mxu0 %v2246
        %2374 = vmatpush1.bf16.msra.mxu0 %v2245
        %2375 = vmatprep.subr.bf16.mxu0 %v2250
        %2376 = vmatpush1.bf16.msra.mxu0 %v2249
        %2377 = vmatprep.subr.bf16.mxu0 %v2254
        %2378 = vmatpush1.bf16.msra.mxu0 %v2253
        %2379 = vmatprep.subr.bf16.mxu0 %v2258
        %2380 = vmatpush1.bf16.msra.mxu0 %v2257
        %2381 = vmatprep.subr.bf16.mxu0 %v2262
        %2382 = vmatpush1.bf16.msra.mxu0 %v2261
        %2383 = vmatprep.subr.bf16.mxu0 %v2266
        %2384 = vmatpush1.bf16.msra.mxu0 %v2265
        %2385 = vmatprep.subr.bf16.mxu0 %v2270
        %2386 = vmatpush1.bf16.msra.mxu0 %v2269
        %2387 = vmatprep.subr.bf16.mxu0 %v2274
        %2388 = vmatpush1.bf16.msra.mxu0 %v2273
        %2389 = vmatprep.subr.bf16.mxu0 %v2278
        %2390 = vmatpush1.bf16.msra.mxu0 %v2277
        %2391 = vmatprep.subr.bf16.mxu0 %v2282
        %2392 = vmatpush1.bf16.msra.mxu0 %v2281
        %2393 = vmatprep.subr.bf16.mxu0 %v2286
        %2394 = vmatpush1.bf16.msra.mxu0 %v2285
        %2395 = vmatprep.subr.bf16.mxu0 %v2290
        %2396 = vmatpush1.bf16.msra.mxu0 %v2289
        %2397 = vmatprep.subr.bf16.mxu0 %v2294
        %2398 = vmatpush1.bf16.msra.mxu0 %v2293
        %2399 = vmatprep.subr.bf16.mxu0 %v2298
        %2400 = vmatpush1.bf16.msra.mxu0 %v2297
        %2401 = vmatprep.subr.bf16.mxu0 %v2302
        %2402 = vmatpush1.bf16.msra.mxu0 %v2301
        %2403 = vmatprep.subr.bf16.mxu0 %v2306
        %2404 = vmatpush1.bf16.msra.mxu0 %v2305
        %2405 = vmatprep.mubr.bf16.mxu0 %v960
        %2406 = vmatmul.mubr.bf16.gmra.mrb[0].mxu0 %v959
        %v2407 = vpop.f32.mrb[0].mxu0
        %v2408 = vadd.f32 %v2036, %v2407
        %v2409 = vpop.f32.mrb[0].mxu0
        %v2410 = vadd.f32 %v2040, %v2409
        %v2411 = vpop.f32.mrb[0].mxu0
        %v2412 = vadd.f32 %v2036, %v2411
        %v2413 = vpop.f32.mrb[0].mxu0
        %v2414 = vadd.f32 %v2040, %v2413
        %2415 = vdwg.mxu0
        %2416 = vmatprep.subr.bf16.mxu0 %v2248
        %2417 = vmatpush1.bf16.msra.mxu0 %v2247
        %2418 = vmatprep.subr.bf16.mxu0 %v2252
        %2419 = vmatpush1.bf16.msra.mxu0 %v2251
        %2420 = vmatprep.subr.bf16.mxu0 %v2256
        %2421 = vmatpush1.bf16.msra.mxu0 %v2255
        %2422 = vmatprep.subr.bf16.mxu0 %v2260
        %2423 = vmatpush1.bf16.msra.mxu0 %v2259
        %2424 = vmatprep.subr.bf16.mxu0 %v2264
        %2425 = vmatpush1.bf16.msra.mxu0 %v2263
        %2426 = vmatprep.subr.bf16.mxu0 %v2268
        %2427 = vmatpush1.bf16.msra.mxu0 %v2267
        %2428 = vmatprep.subr.bf16.mxu0 %v2272
        %2429 = vmatpush1.bf16.msra.mxu0 %v2271
        %2430 = vmatprep.subr.bf16.mxu0 %v2276
        %2431 = vmatpush1.bf16.msra.mxu0 %v2275
        %2432 = vmatprep.subr.bf16.mxu0 %v2280
        %2433 = vmatpush1.bf16.msra.mxu0 %v2279
        %2434 = vmatprep.subr.bf16.mxu0 %v2284
        %2435 = vmatpush1.bf16.msra.mxu0 %v2283
        %2436 = vmatprep.subr.bf16.mxu0 %v2288
        %2437 = vmatpush1.bf16.msra.mxu0 %v2287
        %2438 = vmatprep.subr.bf16.mxu0 %v2292
        %2439 = vmatpush1.bf16.msra.mxu0 %v2291
        %2440 = vmatprep.subr.bf16.mxu0 %v2296
        %2441 = vmatpush1.bf16.msra.mxu0 %v2295
        %2442 = vmatprep.subr.bf16.mxu0 %v2300
        %2443 = vmatpush1.bf16.msra.mxu0 %v2299
        %2444 = vmatprep.subr.bf16.mxu0 %v2304
        %2445 = vmatpush1.bf16.msra.mxu0 %v2303
        %2446 = vmatprep.subr.bf16.mxu0 %v2308
        %2447 = vmatpush1.bf16.msra.mxu0 %v2307
        %2448 = vmatprep.mubr.bf16.mxu0 %v960
        %2449 = vmatmul.mubr.bf16.gmra.mrb[0].mxu0 %v959
        %v2450 = vpop.f32.mrb[0].mxu0
        %v2451 = vadd.f32 %v2044, %v2450
        %v2452 = vpop.f32.mrb[0].mxu0
        %v2453 = vadd.f32 %v2048, %v2452
        %v2454 = vpop.f32.mrb[0].mxu0
        %v2455 = vadd.f32 %v2044, %v2454
        %v2456 = vpop.f32.mrb[0].mxu0
        %v2457 = vadd.f32 %v2048, %v2456
        %2458 = vdwg.mxu0
        %v2459 = vmax.f32 %v2408, 0.0
        %v2460 = vmax.f32 %v2410, 0.0
        %v2461 = vmax.f32 %v2451, 0.0
        %v2462 = vmax.f32 %v2453, 0.0
        %v2463 = vmax.f32 %v2412, 0.0
        %v2464 = vmax.f32 %v2414, 0.0
        %v2465 = vmax.f32 %v2455, 0.0
        %v2466 = vmax.f32 %v2457, 0.0
        %v2467 = vadd.f32 %v2459, %v1959
        %v2468 = vadd.f32 %v2460, %v1960
        %v2469 = vadd.f32 %v2461, %v1961
        %v2470 = vadd.f32 %v2462, %v1962
        %v2471 = vadd.f32 %v2463, %v1963
        %v2472 = vadd.f32 %v2464, %v1964
        %v2473 = vadd.f32 %v2465, %v1965
        %v2474 = vadd.f32 %v2466, %v1966
        %v2475 = vadd.f32 %v1459, %v1959
        %v2476 = vadd.f32 %v1460, %v1960
        %v2477 = vadd.f32 %v1461, %v1961
        %v2478 = vadd.f32 %v1462, %v1962
        %v2479 = vadd.f32 %v1463, %v1963
        %v2480 = vadd.f32 %v1464, %v1964
        %v2481 = vadd.f32 %v1465, %v1965
        %v2482 = vadd.f32 %v1466, %v1966
        %v2483 = vpack.c.bf16 %v1963, %v1959
        %v2484 = vpack.c.bf16 %v1964, %v1960
        %v2485 = vpack.c.bf16 %v1965, %v1961
        %v2486 = vpack.c.bf16 %v1966, %v1962
        %v2487 = vpack.c.bf16 %v2479, %v2475
        %v2488 = vpack.c.bf16 %v2480, %v2476
        %v2489 = vpack.c.bf16 %v2481, %v2477
        %v2490 = vpack.c.bf16 %v2482, %v2478
        %v2491 = vld [vmem:[#allocation9] sm:$0xff]
        %v2492 = vld [vmem:[#allocation9 + $0x8] sm:$0xff]
        %v2493 = vld [vmem:[#allocation9 + $0x10] sm:$0xff]
        %v2494 = vld [vmem:[#allocation9 + $0x18] sm:$0xff]
        %v2495 = vld [vmem:[#allocation9 + $0x20] sm:$0xff]
        %v2496 = vld [vmem:[#allocation9 + $0x28] sm:$0xff]
        %v2497 = vld [vmem:[#allocation9 + $0x30] sm:$0xff]
        %v2498 = vld [vmem:[#allocation9 + $0x38] sm:$0xff]
        %v2499 = vld [vmem:[#allocation9 + $0x40] sm:$0xff]
        %v2500 = vld [vmem:[#allocation9 + $0x48] sm:$0xff]
        %v2501 = vld [vmem:[#allocation9 + $0x50] sm:$0xff]
        %v2502 = vld [vmem:[#allocation9 + $0x58] sm:$0xff]
        %v2503 = vld [vmem:[#allocation9 + $0x60] sm:$0xff]
        %v2504 = vld [vmem:[#allocation9 + $0x68] sm:$0xff]
        %v2505 = vld [vmem:[#allocation9 + $0x70] sm:$0xff]
        %v2506 = vld [vmem:[#allocation9 + $0x78] sm:$0xff]
        %v2507 = vld [vmem:[#allocation9 + $0x80] sm:$0xff]
        %v2508 = vld [vmem:[#allocation9 + $0x88] sm:$0xff]
        %v2509 = vld [vmem:[#allocation9 + $0x90] sm:$0xff]
        %v2510 = vld [vmem:[#allocation9 + $0x98] sm:$0xff]
        %v2511 = vld [vmem:[#allocation9 + $0xa0] sm:$0xff]
        %v2512 = vld [vmem:[#allocation9 + $0xa8] sm:$0xff]
        %v2513 = vld [vmem:[#allocation9 + $0xb0] sm:$0xff]
        %v2514 = vld [vmem:[#allocation9 + $0xb8] sm:$0xff]
        %v2515 = vld [vmem:[#allocation9 + $0xc0] sm:$0xff]
        %v2516 = vld [vmem:[#allocation9 + $0xc8] sm:$0xff]
        %v2517 = vld [vmem:[#allocation9 + $0xd0] sm:$0xff]
        %v2518 = vld [vmem:[#allocation9 + $0xd8] sm:$0xff]
        %v2519 = vld [vmem:[#allocation9 + $0xe0] sm:$0xff]
        %v2520 = vld [vmem:[#allocation9 + $0xe8] sm:$0xff]
        %v2521 = vld [vmem:[#allocation9 + $0xf0] sm:$0xff]
        %v2522 = vld [vmem:[#allocation9 + $0xf8] sm:$0xff]
        %v2523 = vld [vmem:[#allocation9 + $0x100] sm:$0xff]
        %v2524 = vld [vmem:[#allocation9 + $0x108] sm:$0xff]
        %v2525 = vld [vmem:[#allocation9 + $0x110] sm:$0xff]
        %v2526 = vld [vmem:[#allocation9 + $0x118] sm:$0xff]
        %v2527 = vld [vmem:[#allocation9 + $0x120] sm:$0xff]
        %v2528 = vld [vmem:[#allocation9 + $0x128] sm:$0xff]
        %v2529 = vld [vmem:[#allocation9 + $0x130] sm:$0xff]
        %v2530 = vld [vmem:[#allocation9 + $0x138] sm:$0xff]
        %v2531 = vld [vmem:[#allocation9 + $0x140] sm:$0xff]
        %v2532 = vld [vmem:[#allocation9 + $0x148] sm:$0xff]
        %v2533 = vld [vmem:[#allocation9 + $0x150] sm:$0xff]
        %v2534 = vld [vmem:[#allocation9 + $0x158] sm:$0xff]
        %v2535 = vld [vmem:[#allocation9 + $0x160] sm:$0xff]
        %v2536 = vld [vmem:[#allocation9 + $0x168] sm:$0xff]
        %v2537 = vld [vmem:[#allocation9 + $0x170] sm:$0xff]
        %v2538 = vld [vmem:[#allocation9 + $0x178] sm:$0xff]
        %v2539 = vld [vmem:[#allocation9 + $0x180] sm:$0xff]
        %v2540 = vld [vmem:[#allocation9 + $0x188] sm:$0xff]
        %v2541 = vld [vmem:[#allocation9 + $0x190] sm:$0xff]
        %v2542 = vld [vmem:[#allocation9 + $0x198] sm:$0xff]
        %v2543 = vld [vmem:[#allocation9 + $0x1a0] sm:$0xff]
        %v2544 = vld [vmem:[#allocation9 + $0x1a8] sm:$0xff]
        %v2545 = vld [vmem:[#allocation9 + $0x1b0] sm:$0xff]
        %v2546 = vld [vmem:[#allocation9 + $0x1b8] sm:$0xff]
        %v2547 = vld [vmem:[#allocation9 + $0x1c0] sm:$0xff]
        %v2548 = vld [vmem:[#allocation9 + $0x1c8] sm:$0xff]
        %v2549 = vld [vmem:[#allocation9 + $0x1d0] sm:$0xff]
        %v2550 = vld [vmem:[#allocation9 + $0x1d8] sm:$0xff]
        %v2551 = vld [vmem:[#allocation9 + $0x1e0] sm:$0xff]
        %v2552 = vld [vmem:[#allocation9 + $0x1e8] sm:$0xff]
        %v2553 = vld [vmem:[#allocation9 + $0x1f0] sm:$0xff]
        %v2554 = vld [vmem:[#allocation9 + $0x1f8] sm:$0xff]
        %v2555 = vld [vmem:[#allocation13] sm:$0x3]
        %v2557 = vlaneseq
        %v2558 = vshrl.u32 %v2557, 7
        %v2559 = vsub.s32 0, %v2558
        %v2560 = vrot.slane %v2555, %v2559
        %v2561 = vlaneseq
        %v2562 = vshrl.u32 %v2561, 7
        %v2563 = vsub.s32 1, %v2562
        %v2564 = vrot.slane %v2555, %v2563
        %v2631 = vunpack.c.l.b16 %v2491
        %v2632 = vunpack.c.h.b16 %v2491
        %v2633 = vunpack.c.l.b16 %v2492
        %v2634 = vunpack.c.h.b16 %v2492
        %v2635 = vunpack.c.l.b16 %v2493
        %v2636 = vunpack.c.h.b16 %v2493
        %v2637 = vunpack.c.l.b16 %v2494
        %v2638 = vunpack.c.h.b16 %v2494
        %v2639 = vunpack.c.l.b16 %v2495
        %v2640 = vunpack.c.h.b16 %v2495
        %v2641 = vunpack.c.l.b16 %v2496
        %v2642 = vunpack.c.h.b16 %v2496
        %v2643 = vunpack.c.l.b16 %v2497
        %v2644 = vunpack.c.h.b16 %v2497
        %v2645 = vunpack.c.l.b16 %v2498
        %v2646 = vunpack.c.h.b16 %v2498
        %v2647 = vunpack.c.l.b16 %v2499
        %v2648 = vunpack.c.h.b16 %v2499
        %v2649 = vunpack.c.l.b16 %v2500
        %v2650 = vunpack.c.h.b16 %v2500
        %v2651 = vunpack.c.l.b16 %v2501
        %v2652 = vunpack.c.h.b16 %v2501
        %v2653 = vunpack.c.l.b16 %v2502
        %v2654 = vunpack.c.h.b16 %v2502
        %v2655 = vunpack.c.l.b16 %v2503
        %v2656 = vunpack.c.h.b16 %v2503
        %v2657 = vunpack.c.l.b16 %v2504
        %v2658 = vunpack.c.h.b16 %v2504
        %v2659 = vunpack.c.l.b16 %v2505
        %v2660 = vunpack.c.h.b16 %v2505
        %v2661 = vunpack.c.l.b16 %v2506
        %v2662 = vunpack.c.h.b16 %v2506
        %v2663 = vunpack.c.l.b16 %v2507
        %v2664 = vunpack.c.h.b16 %v2507
        %v2665 = vunpack.c.l.b16 %v2508
        %v2666 = vunpack.c.h.b16 %v2508
        %v2667 = vunpack.c.l.b16 %v2509
        %v2668 = vunpack.c.h.b16 %v2509
        %v2669 = vunpack.c.l.b16 %v2510
        %v2670 = vunpack.c.h.b16 %v2510
        %v2671 = vunpack.c.l.b16 %v2511
        %v2672 = vunpack.c.h.b16 %v2511
        %v2673 = vunpack.c.l.b16 %v2512
        %v2674 = vunpack.c.h.b16 %v2512
        %v2675 = vunpack.c.l.b16 %v2513
        %v2676 = vunpack.c.h.b16 %v2513
        %v2677 = vunpack.c.l.b16 %v2514
        %v2678 = vunpack.c.h.b16 %v2514
        %v2679 = vunpack.c.l.b16 %v2515
        %v2680 = vunpack.c.h.b16 %v2515
        %v2681 = vunpack.c.l.b16 %v2516
        %v2682 = vunpack.c.h.b16 %v2516
        %v2683 = vunpack.c.l.b16 %v2517
        %v2684 = vunpack.c.h.b16 %v2517
        %v2685 = vunpack.c.l.b16 %v2518
        %v2686 = vunpack.c.h.b16 %v2518
        %v2687 = vunpack.c.l.b16 %v2519
        %v2688 = vunpack.c.h.b16 %v2519
        %v2689 = vunpack.c.l.b16 %v2520
        %v2690 = vunpack.c.h.b16 %v2520
        %v2691 = vunpack.c.l.b16 %v2521
        %v2692 = vunpack.c.h.b16 %v2521
        %v2693 = vunpack.c.l.b16 %v2522
        %v2694 = vunpack.c.h.b16 %v2522
        %v2695 = vunpack.c.l.b16 %v2523
        %v2696 = vunpack.c.h.b16 %v2523
        %v2697 = vunpack.c.l.b16 %v2524
        %v2698 = vunpack.c.h.b16 %v2524
        %v2699 = vunpack.c.l.b16 %v2525
        %v2700 = vunpack.c.h.b16 %v2525
        %v2701 = vunpack.c.l.b16 %v2526
        %v2702 = vunpack.c.h.b16 %v2526
        %v2703 = vunpack.c.l.b16 %v2527
        %v2704 = vunpack.c.h.b16 %v2527
        %v2705 = vunpack.c.l.b16 %v2528
        %v2706 = vunpack.c.h.b16 %v2528
        %v2707 = vunpack.c.l.b16 %v2529
        %v2708 = vunpack.c.h.b16 %v2529
        %v2709 = vunpack.c.l.b16 %v2530
        %v2710 = vunpack.c.h.b16 %v2530
        %v2711 = vunpack.c.l.b16 %v2531
        %v2712 = vunpack.c.h.b16 %v2531
        %v2713 = vunpack.c.l.b16 %v2532
        %v2714 = vunpack.c.h.b16 %v2532
        %v2715 = vunpack.c.l.b16 %v2533
        %v2716 = vunpack.c.h.b16 %v2533
        %v2717 = vunpack.c.l.b16 %v2534
        %v2718 = vunpack.c.h.b16 %v2534
        %v2719 = vunpack.c.l.b16 %v2535
        %v2720 = vunpack.c.h.b16 %v2535
        %v2721 = vunpack.c.l.b16 %v2536
        %v2722 = vunpack.c.h.b16 %v2536
        %v2723 = vunpack.c.l.b16 %v2537
        %v2724 = vunpack.c.h.b16 %v2537
        %v2725 = vunpack.c.l.b16 %v2538
        %v2726 = vunpack.c.h.b16 %v2538
        %v2727 = vunpack.c.l.b16 %v2539
        %v2728 = vunpack.c.h.b16 %v2539
        %v2729 = vunpack.c.l.b16 %v2540
        %v2730 = vunpack.c.h.b16 %v2540
        %v2731 = vunpack.c.l.b16 %v2541
        %v2732 = vunpack.c.h.b16 %v2541
        %v2733 = vunpack.c.l.b16 %v2542
        %v2734 = vunpack.c.h.b16 %v2542
        %v2735 = vunpack.c.l.b16 %v2543
        %v2736 = vunpack.c.h.b16 %v2543
        %v2737 = vunpack.c.l.b16 %v2544
        %v2738 = vunpack.c.h.b16 %v2544
        %v2739 = vunpack.c.l.b16 %v2545
        %v2740 = vunpack.c.h.b16 %v2545
        %v2741 = vunpack.c.l.b16 %v2546
        %v2742 = vunpack.c.h.b16 %v2546
        %v2743 = vunpack.c.l.b16 %v2547
        %v2744 = vunpack.c.h.b16 %v2547
        %v2745 = vunpack.c.l.b16 %v2548
        %v2746 = vunpack.c.h.b16 %v2548
        %v2747 = vunpack.c.l.b16 %v2549
        %v2748 = vunpack.c.h.b16 %v2549
        %v2749 = vunpack.c.l.b16 %v2550
        %v2750 = vunpack.c.h.b16 %v2550
        %v2751 = vunpack.c.l.b16 %v2551
        %v2752 = vunpack.c.h.b16 %v2551
        %v2753 = vunpack.c.l.b16 %v2552
        %v2754 = vunpack.c.h.b16 %v2552
        %v2755 = vunpack.c.l.b16 %v2553
        %v2756 = vunpack.c.h.b16 %v2553
        %v2757 = vunpack.c.l.b16 %v2554
        %v2758 = vunpack.c.h.b16 %v2554
        %v2759 = vpack.c.b16 %v2633, %v2631
        %v2760 = vpack.c.b16 %v2634, %v2632
        %v2761 = vpack.c.b16 %v2637, %v2635
        %v2762 = vpack.c.b16 %v2638, %v2636
        %v2763 = vpack.c.b16 %v2641, %v2639
        %v2764 = vpack.c.b16 %v2642, %v2640
        %v2765 = vpack.c.b16 %v2645, %v2643
        %v2766 = vpack.c.b16 %v2646, %v2644
        %v2767 = vpack.c.b16 %v2649, %v2647
        %v2768 = vpack.c.b16 %v2650, %v2648
        %v2769 = vpack.c.b16 %v2653, %v2651
        %v2770 = vpack.c.b16 %v2654, %v2652
        %v2771 = vpack.c.b16 %v2657, %v2655
        %v2772 = vpack.c.b16 %v2658, %v2656
        %v2773 = vpack.c.b16 %v2661, %v2659
        %v2774 = vpack.c.b16 %v2662, %v2660
        %v2775 = vpack.c.b16 %v2665, %v2663
        %v2776 = vpack.c.b16 %v2666, %v2664
        %v2777 = vpack.c.b16 %v2669, %v2667
        %v2778 = vpack.c.b16 %v2670, %v2668
        %v2779 = vpack.c.b16 %v2673, %v2671
        %v2780 = vpack.c.b16 %v2674, %v2672
        %v2781 = vpack.c.b16 %v2677, %v2675
        %v2782 = vpack.c.b16 %v2678, %v2676
        %v2783 = vpack.c.b16 %v2681, %v2679
        %v2784 = vpack.c.b16 %v2682, %v2680
        %v2785 = vpack.c.b16 %v2685, %v2683
        %v2786 = vpack.c.b16 %v2686, %v2684
        %v2787 = vpack.c.b16 %v2689, %v2687
        %v2788 = vpack.c.b16 %v2690, %v2688
        %v2789 = vpack.c.b16 %v2693, %v2691
        %v2790 = vpack.c.b16 %v2694, %v2692
        %v2791 = vpack.c.b16 %v2697, %v2695
        %v2792 = vpack.c.b16 %v2698, %v2696
        %v2793 = vpack.c.b16 %v2701, %v2699
        %v2794 = vpack.c.b16 %v2702, %v2700
        %v2795 = vpack.c.b16 %v2705, %v2703
        %v2796 = vpack.c.b16 %v2706, %v2704
        %v2797 = vpack.c.b16 %v2709, %v2707
        %v2798 = vpack.c.b16 %v2710, %v2708
        %v2799 = vpack.c.b16 %v2713, %v2711
        %v2800 = vpack.c.b16 %v2714, %v2712
        %v2801 = vpack.c.b16 %v2717, %v2715
        %v2802 = vpack.c.b16 %v2718, %v2716
        %v2803 = vpack.c.b16 %v2721, %v2719
        %v2804 = vpack.c.b16 %v2722, %v2720
        %v2805 = vpack.c.b16 %v2725, %v2723
        %v2806 = vpack.c.b16 %v2726, %v2724
        %v2807 = vpack.c.b16 %v2729, %v2727
        %v2808 = vpack.c.b16 %v2730, %v2728
        %v2809 = vpack.c.b16 %v2733, %v2731
        %v2810 = vpack.c.b16 %v2734, %v2732
        %v2811 = vpack.c.b16 %v2737, %v2735
        %v2812 = vpack.c.b16 %v2738, %v2736
        %v2813 = vpack.c.b16 %v2741, %v2739
        %v2814 = vpack.c.b16 %v2742, %v2740
        %v2815 = vpack.c.b16 %v2745, %v2743
        %v2816 = vpack.c.b16 %v2746, %v2744
        %v2817 = vpack.c.b16 %v2749, %v2747
        %v2818 = vpack.c.b16 %v2750, %v2748
        %v2819 = vpack.c.b16 %v2753, %v2751
        %v2820 = vpack.c.b16 %v2754, %v2752
        %v2821 = vpack.c.b16 %v2757, %v2755
        %v2822 = vpack.c.b16 %v2758, %v2756
        %2887 = vmatprep.subr.bf16.mxu0 %v2760
        %2888 = vmatpush1.bf16.msra.mxu0 %v2759
        %2889 = vmatprep.subr.bf16.mxu0 %v2762
        %2890 = vmatpush1.bf16.msra.mxu0 %v2761
        %2891 = vmatprep.subr.bf16.mxu0 %v2764
        %2892 = vmatpush1.bf16.msra.mxu0 %v2763
        %2893 = vmatprep.subr.bf16.mxu0 %v2766
        %2894 = vmatpush1.bf16.msra.mxu0 %v2765
        %2895 = vmatprep.subr.bf16.mxu0 %v2768
        %2896 = vmatpush1.bf16.msra.mxu0 %v2767
        %2897 = vmatprep.subr.bf16.mxu0 %v2770
        %2898 = vmatpush1.bf16.msra.mxu0 %v2769
        %2899 = vmatprep.subr.bf16.mxu0 %v2772
        %2900 = vmatpush1.bf16.msra.mxu0 %v2771
        %2901 = vmatprep.subr.bf16.mxu0 %v2774
        %2902 = vmatpush1.bf16.msra.mxu0 %v2773
        %2903 = vmatprep.subr.bf16.mxu0 %v2776
        %2904 = vmatpush1.bf16.msra.mxu0 %v2775
        %2905 = vmatprep.subr.bf16.mxu0 %v2778
        %2906 = vmatpush1.bf16.msra.mxu0 %v2777
        %2907 = vmatprep.subr.bf16.mxu0 %v2780
        %2908 = vmatpush1.bf16.msra.mxu0 %v2779
        %2909 = vmatprep.subr.bf16.mxu0 %v2782
        %2910 = vmatpush1.bf16.msra.mxu0 %v2781
        %2911 = vmatprep.subr.bf16.mxu0 %v2784
        %2912 = vmatpush1.bf16.msra.mxu0 %v2783
        %2913 = vmatprep.subr.bf16.mxu0 %v2786
        %2914 = vmatpush1.bf16.msra.mxu0 %v2785
        %2915 = vmatprep.subr.bf16.mxu0 %v2788
        %2916 = vmatpush1.bf16.msra.mxu0 %v2787
        %2917 = vmatprep.subr.bf16.mxu0 %v2790
        %2918 = vmatpush1.bf16.msra.mxu0 %v2789
        %2919 = vmatprep.mubr.bf16.mxu0 %v2488
        %2920 = vmatmul.mubr.bf16.gmra.mrb[0].mxu0 %v2487
        %v2921 = vpop.f32.mrb[0].mxu0
        %v2922 = vadd.f32 %v2560, %v2921
        %v2923 = vpop.f32.mrb[0].mxu0
        %v2924 = vadd.f32 %v2564, %v2923
        %v2925 = vpop.f32.mrb[0].mxu0
        %v2926 = vadd.f32 %v2560, %v2925
        %v2927 = vpop.f32.mrb[0].mxu0
        %v2928 = vadd.f32 %v2564, %v2927
        %2929 = vdwg.mxu0
        %2930 = vmatprep.subr.bf16.mxu0 %v2792
        %2931 = vmatpush1.bf16.msra.mxu0 %v2791
        %2932 = vmatprep.subr.bf16.mxu0 %v2794
        %2933 = vmatpush1.bf16.msra.mxu0 %v2793
        %2934 = vmatprep.subr.bf16.mxu0 %v2796
        %2935 = vmatpush1.bf16.msra.mxu0 %v2795
        %2936 = vmatprep.subr.bf16.mxu0 %v2798
        %2937 = vmatpush1.bf16.msra.mxu0 %v2797
        %2938 = vmatprep.subr.bf16.mxu0 %v2800
        %2939 = vmatpush1.bf16.msra.mxu0 %v2799
        %2940 = vmatprep.subr.bf16.mxu0 %v2802
        %2941 = vmatpush1.bf16.msra.mxu0 %v2801
        %2942 = vmatprep.subr.bf16.mxu0 %v2804
        %2943 = vmatpush1.bf16.msra.mxu0 %v2803
        %2944 = vmatprep.subr.bf16.mxu0 %v2806
        %2945 = vmatpush1.bf16.msra.mxu0 %v2805
        %2946 = vmatprep.subr.bf16.mxu0 %v2808
        %2947 = vmatpush1.bf16.msra.mxu0 %v2807
        %2948 = vmatprep.subr.bf16.mxu0 %v2810
        %2949 = vmatpush1.bf16.msra.mxu0 %v2809
        %2950 = vmatprep.subr.bf16.mxu0 %v2812
        %2951 = vmatpush1.bf16.msra.mxu0 %v2811
        %2952 = vmatprep.subr.bf16.mxu0 %v2814
        %2953 = vmatpush1.bf16.msra.mxu0 %v2813
        %2954 = vmatprep.subr.bf16.mxu0 %v2816
        %2955 = vmatpush1.bf16.msra.mxu0 %v2815
        %2956 = vmatprep.subr.bf16.mxu0 %v2818
        %2957 = vmatpush1.bf16.msra.mxu0 %v2817
        %2958 = vmatprep.subr.bf16.mxu0 %v2820
        %2959 = vmatpush1.bf16.msra.mxu0 %v2819
        %2960 = vmatprep.subr.bf16.mxu0 %v2822
        %2961 = vmatpush1.bf16.msra.mxu0 %v2821
        %2962 = vmatprep.mubr.bf16.mxu0 %v2490
        %2963 = vmatmul.mubr.bf16.gmra.mrb[0].mxu0 %v2489
        %v2964 = vpop.f32.mrb[0].mxu0
        %v2965 = vadd.f32 %v2922, %v2964
        %v2966 = vpop.f32.mrb[0].mxu0
        %v2967 = vadd.f32 %v2924, %v2966
        %v2968 = vpop.f32.mrb[0].mxu0
        %v2969 = vadd.f32 %v2926, %v2968
        %v2970 = vpop.f32.mrb[0].mxu0
        %v2971 = vadd.f32 %v2928, %v2970
        %2972 = vdwg.mxu0
        %v2973 = vmax.f32 %v2965, 0.0
        %v2974 = vmax.f32 %v2967, 0.0
        %v2975 = vmax.f32 %v2969, 0.0
        %v2976 = vmax.f32 %v2971, 0.0
        %v2977 = vld [vmem:[#allocation10] sm:$0xff]
        %v2978 = vld [vmem:[#allocation10 + $0x8] sm:$0xff]
        %v2979 = vld [vmem:[#allocation10 + $0x10] sm:$0xff]
        %v2980 = vld [vmem:[#allocation10 + $0x18] sm:$0xff]
        %v2981 = vld [vmem:[#allocation10 + $0x20] sm:$0xff]
        %v2982 = vld [vmem:[#allocation10 + $0x28] sm:$0xff]
        %v2983 = vld [vmem:[#allocation10 + $0x30] sm:$0xff]
        %v2984 = vld [vmem:[#allocation10 + $0x38] sm:$0xff]
        %v2985 = vld [vmem:[#allocation10 + $0x40] sm:$0xff]
        %v2986 = vld [vmem:[#allocation10 + $0x48] sm:$0xff]
        %v2987 = vld [vmem:[#allocation10 + $0x50] sm:$0xff]
        %v2988 = vld [vmem:[#allocation10 + $0x58] sm:$0xff]
        %v2989 = vld [vmem:[#allocation10 + $0x60] sm:$0xff]
        %v2990 = vld [vmem:[#allocation10 + $0x68] sm:$0xff]
        %v2991 = vld [vmem:[#allocation10 + $0x70] sm:$0xff]
        %v2992 = vld [vmem:[#allocation10 + $0x78] sm:$0xff]
        %v2993 = vld [vmem:[#allocation10 + $0x80] sm:$0xff]
        %v2994 = vld [vmem:[#allocation10 + $0x88] sm:$0xff]
        %v2995 = vld [vmem:[#allocation10 + $0x90] sm:$0xff]
        %v2996 = vld [vmem:[#allocation10 + $0x98] sm:$0xff]
        %v2997 = vld [vmem:[#allocation10 + $0xa0] sm:$0xff]
        %v2998 = vld [vmem:[#allocation10 + $0xa8] sm:$0xff]
        %v2999 = vld [vmem:[#allocation10 + $0xb0] sm:$0xff]
        %v3000 = vld [vmem:[#allocation10 + $0xb8] sm:$0xff]
        %v3001 = vld [vmem:[#allocation10 + $0xc0] sm:$0xff]
        %v3002 = vld [vmem:[#allocation10 + $0xc8] sm:$0xff]
        %v3003 = vld [vmem:[#allocation10 + $0xd0] sm:$0xff]
        %v3004 = vld [vmem:[#allocation10 + $0xd8] sm:$0xff]
        %v3005 = vld [vmem:[#allocation10 + $0xe0] sm:$0xff]
        %v3006 = vld [vmem:[#allocation10 + $0xe8] sm:$0xff]
        %v3007 = vld [vmem:[#allocation10 + $0xf0] sm:$0xff]
        %v3008 = vld [vmem:[#allocation10 + $0xf8] sm:$0xff]
        %v3009 = vld [vmem:[#allocation10 + $0x100] sm:$0xff]
        %v3010 = vld [vmem:[#allocation10 + $0x108] sm:$0xff]
        %v3011 = vld [vmem:[#allocation10 + $0x110] sm:$0xff]
        %v3012 = vld [vmem:[#allocation10 + $0x118] sm:$0xff]
        %v3013 = vld [vmem:[#allocation10 + $0x120] sm:$0xff]
        %v3014 = vld [vmem:[#allocation10 + $0x128] sm:$0xff]
        %v3015 = vld [vmem:[#allocation10 + $0x130] sm:$0xff]
        %v3016 = vld [vmem:[#allocation10 + $0x138] sm:$0xff]
        %v3017 = vld [vmem:[#allocation10 + $0x140] sm:$0xff]
        %v3018 = vld [vmem:[#allocation10 + $0x148] sm:$0xff]
        %v3019 = vld [vmem:[#allocation10 + $0x150] sm:$0xff]
        %v3020 = vld [vmem:[#allocation10 + $0x158] sm:$0xff]
        %v3021 = vld [vmem:[#allocation10 + $0x160] sm:$0xff]
        %v3022 = vld [vmem:[#allocation10 + $0x168] sm:$0xff]
        %v3023 = vld [vmem:[#allocation10 + $0x170] sm:$0xff]
        %v3024 = vld [vmem:[#allocation10 + $0x178] sm:$0xff]
        %v3025 = vld [vmem:[#allocation10 + $0x180] sm:$0xff]
        %v3026 = vld [vmem:[#allocation10 + $0x188] sm:$0xff]
        %v3027 = vld [vmem:[#allocation10 + $0x190] sm:$0xff]
        %v3028 = vld [vmem:[#allocation10 + $0x198] sm:$0xff]
        %v3029 = vld [vmem:[#allocation10 + $0x1a0] sm:$0xff]
        %v3030 = vld [vmem:[#allocation10 + $0x1a8] sm:$0xff]
        %v3031 = vld [vmem:[#allocation10 + $0x1b0] sm:$0xff]
        %v3032 = vld [vmem:[#allocation10 + $0x1b8] sm:$0xff]
        %v3033 = vld [vmem:[#allocation10 + $0x1c0] sm:$0xff]
        %v3034 = vld [vmem:[#allocation10 + $0x1c8] sm:$0xff]
        %v3035 = vld [vmem:[#allocation10 + $0x1d0] sm:$0xff]
        %v3036 = vld [vmem:[#allocation10 + $0x1d8] sm:$0xff]
        %v3037 = vld [vmem:[#allocation10 + $0x1e0] sm:$0xff]
        %v3038 = vld [vmem:[#allocation10 + $0x1e8] sm:$0xff]
        %v3039 = vld [vmem:[#allocation10 + $0x1f0] sm:$0xff]
        %v3040 = vld [vmem:[#allocation10 + $0x1f8] sm:$0xff]
        %v3041 = vld [vmem:[#allocation15] sm:$0x3]
        %v3043 = vlaneseq
        %v3044 = vshrl.u32 %v3043, 7
        %v3045 = vsub.s32 0, %v3044
        %v3046 = vrot.slane %v3041, %v3045
        %v3047 = vlaneseq
        %v3048 = vshrl.u32 %v3047, 7
        %v3049 = vsub.s32 1, %v3048
        %v3050 = vrot.slane %v3041, %v3049
        %v3117 = vunpack.c.l.b16 %v2977
        %v3118 = vunpack.c.h.b16 %v2977
        %v3119 = vunpack.c.l.b16 %v2978
        %v3120 = vunpack.c.h.b16 %v2978
        %v3121 = vunpack.c.l.b16 %v2979
        %v3122 = vunpack.c.h.b16 %v2979
        %v3123 = vunpack.c.l.b16 %v2980
        %v3124 = vunpack.c.h.b16 %v2980
        %v3125 = vunpack.c.l.b16 %v2981
        %v3126 = vunpack.c.h.b16 %v2981
        %v3127 = vunpack.c.l.b16 %v2982
        %v3128 = vunpack.c.h.b16 %v2982
        %v3129 = vunpack.c.l.b16 %v2983
        %v3130 = vunpack.c.h.b16 %v2983
        %v3131 = vunpack.c.l.b16 %v2984
        %v3132 = vunpack.c.h.b16 %v2984
        %v3133 = vunpack.c.l.b16 %v2985
        %v3134 = vunpack.c.h.b16 %v2985
        %v3135 = vunpack.c.l.b16 %v2986
        %v3136 = vunpack.c.h.b16 %v2986
        %v3137 = vunpack.c.l.b16 %v2987
        %v3138 = vunpack.c.h.b16 %v2987
        %v3139 = vunpack.c.l.b16 %v2988
        %v3140 = vunpack.c.h.b16 %v2988
        %v3141 = vunpack.c.l.b16 %v2989
        %v3142 = vunpack.c.h.b16 %v2989
        %v3143 = vunpack.c.l.b16 %v2990
        %v3144 = vunpack.c.h.b16 %v2990
        %v3145 = vunpack.c.l.b16 %v2991
        %v3146 = vunpack.c.h.b16 %v2991
        %v3147 = vunpack.c.l.b16 %v2992
        %v3148 = vunpack.c.h.b16 %v2992
        %v3149 = vunpack.c.l.b16 %v2993
        %v3150 = vunpack.c.h.b16 %v2993
        %v3151 = vunpack.c.l.b16 %v2994
        %v3152 = vunpack.c.h.b16 %v2994
        %v3153 = vunpack.c.l.b16 %v2995
        %v3154 = vunpack.c.h.b16 %v2995
        %v3155 = vunpack.c.l.b16 %v2996
        %v3156 = vunpack.c.h.b16 %v2996
        %v3157 = vunpack.c.l.b16 %v2997
        %v3158 = vunpack.c.h.b16 %v2997
        %v3159 = vunpack.c.l.b16 %v2998
        %v3160 = vunpack.c.h.b16 %v2998
        %v3161 = vunpack.c.l.b16 %v2999
        %v3162 = vunpack.c.h.b16 %v2999
        %v3163 = vunpack.c.l.b16 %v3000
        %v3164 = vunpack.c.h.b16 %v3000
        %v3165 = vunpack.c.l.b16 %v3001
        %v3166 = vunpack.c.h.b16 %v3001
        %v3167 = vunpack.c.l.b16 %v3002
        %v3168 = vunpack.c.h.b16 %v3002
        %v3169 = vunpack.c.l.b16 %v3003
        %v3170 = vunpack.c.h.b16 %v3003
        %v3171 = vunpack.c.l.b16 %v3004
        %v3172 = vunpack.c.h.b16 %v3004
        %v3173 = vunpack.c.l.b16 %v3005
        %v3174 = vunpack.c.h.b16 %v3005
        %v3175 = vunpack.c.l.b16 %v3006
        %v3176 = vunpack.c.h.b16 %v3006
        %v3177 = vunpack.c.l.b16 %v3007
        %v3178 = vunpack.c.h.b16 %v3007
        %v3179 = vunpack.c.l.b16 %v3008
        %v3180 = vunpack.c.h.b16 %v3008
        %v3181 = vunpack.c.l.b16 %v3009
        %v3182 = vunpack.c.h.b16 %v3009
        %v3183 = vunpack.c.l.b16 %v3010
        %v3184 = vunpack.c.h.b16 %v3010
        %v3185 = vunpack.c.l.b16 %v3011
        %v3186 = vunpack.c.h.b16 %v3011
        %v3187 = vunpack.c.l.b16 %v3012
        %v3188 = vunpack.c.h.b16 %v3012
        %v3189 = vunpack.c.l.b16 %v3013
        %v3190 = vunpack.c.h.b16 %v3013
        %v3191 = vunpack.c.l.b16 %v3014
        %v3192 = vunpack.c.h.b16 %v3014
        %v3193 = vunpack.c.l.b16 %v3015
        %v3194 = vunpack.c.h.b16 %v3015
        %v3195 = vunpack.c.l.b16 %v3016
        %v3196 = vunpack.c.h.b16 %v3016
        %v3197 = vunpack.c.l.b16 %v3017
        %v3198 = vunpack.c.h.b16 %v3017
        %v3199 = vunpack.c.l.b16 %v3018
        %v3200 = vunpack.c.h.b16 %v3018
        %v3201 = vunpack.c.l.b16 %v3019
        %v3202 = vunpack.c.h.b16 %v3019
        %v3203 = vunpack.c.l.b16 %v3020
        %v3204 = vunpack.c.h.b16 %v3020
        %v3205 = vunpack.c.l.b16 %v3021
        %v3206 = vunpack.c.h.b16 %v3021
        %v3207 = vunpack.c.l.b16 %v3022
        %v3208 = vunpack.c.h.b16 %v3022
        %v3209 = vunpack.c.l.b16 %v3023
        %v3210 = vunpack.c.h.b16 %v3023
        %v3211 = vunpack.c.l.b16 %v3024
        %v3212 = vunpack.c.h.b16 %v3024
        %v3213 = vunpack.c.l.b16 %v3025
        %v3214 = vunpack.c.h.b16 %v3025
        %v3215 = vunpack.c.l.b16 %v3026
        %v3216 = vunpack.c.h.b16 %v3026
        %v3217 = vunpack.c.l.b16 %v3027
        %v3218 = vunpack.c.h.b16 %v3027
        %v3219 = vunpack.c.l.b16 %v3028
        %v3220 = vunpack.c.h.b16 %v3028
        %v3221 = vunpack.c.l.b16 %v3029
        %v3222 = vunpack.c.h.b16 %v3029
        %v3223 = vunpack.c.l.b16 %v3030
        %v3224 = vunpack.c.h.b16 %v3030
        %v3225 = vunpack.c.l.b16 %v3031
        %v3226 = vunpack.c.h.b16 %v3031
        %v3227 = vunpack.c.l.b16 %v3032
        %v3228 = vunpack.c.h.b16 %v3032
        %v3229 = vunpack.c.l.b16 %v3033
        %v3230 = vunpack.c.h.b16 %v3033
        %v3231 = vunpack.c.l.b16 %v3034
        %v3232 = vunpack.c.h.b16 %v3034
        %v3233 = vunpack.c.l.b16 %v3035
        %v3234 = vunpack.c.h.b16 %v3035
        %v3235 = vunpack.c.l.b16 %v3036
        %v3236 = vunpack.c.h.b16 %v3036
        %v3237 = vunpack.c.l.b16 %v3037
        %v3238 = vunpack.c.h.b16 %v3037
        %v3239 = vunpack.c.l.b16 %v3038
        %v3240 = vunpack.c.h.b16 %v3038
        %v3241 = vunpack.c.l.b16 %v3039
        %v3242 = vunpack.c.h.b16 %v3039
        %v3243 = vunpack.c.l.b16 %v3040
        %v3244 = vunpack.c.h.b16 %v3040
        %v3245 = vpack.c.b16 %v3119, %v3117
        %v3246 = vpack.c.b16 %v3120, %v3118
        %v3247 = vpack.c.b16 %v3123, %v3121
        %v3248 = vpack.c.b16 %v3124, %v3122
        %v3249 = vpack.c.b16 %v3127, %v3125
        %v3250 = vpack.c.b16 %v3128, %v3126
        %v3251 = vpack.c.b16 %v3131, %v3129
        %v3252 = vpack.c.b16 %v3132, %v3130
        %v3253 = vpack.c.b16 %v3135, %v3133
        %v3254 = vpack.c.b16 %v3136, %v3134
        %v3255 = vpack.c.b16 %v3139, %v3137
        %v3256 = vpack.c.b16 %v3140, %v3138
        %v3257 = vpack.c.b16 %v3143, %v3141
        %v3258 = vpack.c.b16 %v3144, %v3142
        %v3259 = vpack.c.b16 %v3147, %v3145
        %v3260 = vpack.c.b16 %v3148, %v3146
        %v3261 = vpack.c.b16 %v3151, %v3149
        %v3262 = vpack.c.b16 %v3152, %v3150
        %v3263 = vpack.c.b16 %v3155, %v3153
        %v3264 = vpack.c.b16 %v3156, %v3154
        %v3265 = vpack.c.b16 %v3159, %v3157
        %v3266 = vpack.c.b16 %v3160, %v3158
        %v3267 = vpack.c.b16 %v3163, %v3161
        %v3268 = vpack.c.b16 %v3164, %v3162
        %v3269 = vpack.c.b16 %v3167, %v3165
        %v3270 = vpack.c.b16 %v3168, %v3166
        %v3271 = vpack.c.b16 %v3171, %v3169
        %v3272 = vpack.c.b16 %v3172, %v3170
        %v3273 = vpack.c.b16 %v3175, %v3173
        %v3274 = vpack.c.b16 %v3176, %v3174
        %v3275 = vpack.c.b16 %v3179, %v3177
        %v3276 = vpack.c.b16 %v3180, %v3178
        %v3277 = vpack.c.b16 %v3183, %v3181
        %v3278 = vpack.c.b16 %v3184, %v3182
        %v3279 = vpack.c.b16 %v3187, %v3185
        %v3280 = vpack.c.b16 %v3188, %v3186
        %v3281 = vpack.c.b16 %v3191, %v3189
        %v3282 = vpack.c.b16 %v3192, %v3190
        %v3283 = vpack.c.b16 %v3195, %v3193
        %v3284 = vpack.c.b16 %v3196, %v3194
        %v3285 = vpack.c.b16 %v3199, %v3197
        %v3286 = vpack.c.b16 %v3200, %v3198
        %v3287 = vpack.c.b16 %v3203, %v3201
        %v3288 = vpack.c.b16 %v3204, %v3202
        %v3289 = vpack.c.b16 %v3207, %v3205
        %v3290 = vpack.c.b16 %v3208, %v3206
        %v3291 = vpack.c.b16 %v3211, %v3209
        %v3292 = vpack.c.b16 %v3212, %v3210
        %v3293 = vpack.c.b16 %v3215, %v3213
        %v3294 = vpack.c.b16 %v3216, %v3214
        %v3295 = vpack.c.b16 %v3219, %v3217
        %v3296 = vpack.c.b16 %v3220, %v3218
        %v3297 = vpack.c.b16 %v3223, %v3221
        %v3298 = vpack.c.b16 %v3224, %v3222
        %v3299 = vpack.c.b16 %v3227, %v3225
        %v3300 = vpack.c.b16 %v3228, %v3226
        %v3301 = vpack.c.b16 %v3231, %v3229
        %v3302 = vpack.c.b16 %v3232, %v3230
        %v3303 = vpack.c.b16 %v3235, %v3233
        %v3304 = vpack.c.b16 %v3236, %v3234
        %v3305 = vpack.c.b16 %v3239, %v3237
        %v3306 = vpack.c.b16 %v3240, %v3238
        %v3307 = vpack.c.b16 %v3243, %v3241
        %v3308 = vpack.c.b16 %v3244, %v3242
        %3373 = vmatprep.subr.bf16.mxu0 %v3246
        %3374 = vmatpush1.bf16.msra.mxu0 %v3245
        %3375 = vmatprep.subr.bf16.mxu0 %v3248
        %3376 = vmatpush1.bf16.msra.mxu0 %v3247
        %3377 = vmatprep.subr.bf16.mxu0 %v3250
        %3378 = vmatpush1.bf16.msra.mxu0 %v3249
        %3379 = vmatprep.subr.bf16.mxu0 %v3252
        %3380 = vmatpush1.bf16.msra.mxu0 %v3251
        %3381 = vmatprep.subr.bf16.mxu0 %v3254
        %3382 = vmatpush1.bf16.msra.mxu0 %v3253
        %3383 = vmatprep.subr.bf16.mxu0 %v3256
        %3384 = vmatpush1.bf16.msra.mxu0 %v3255
        %3385 = vmatprep.subr.bf16.mxu0 %v3258
        %3386 = vmatpush1.bf16.msra.mxu0 %v3257
        %3387 = vmatprep.subr.bf16.mxu0 %v3260
        %3388 = vmatpush1.bf16.msra.mxu0 %v3259
        %3389 = vmatprep.subr.bf16.mxu0 %v3262
        %3390 = vmatpush1.bf16.msra.mxu0 %v3261
        %3391 = vmatprep.subr.bf16.mxu0 %v3264
        %3392 = vmatpush1.bf16.msra.mxu0 %v3263
        %3393 = vmatprep.subr.bf16.mxu0 %v3266
        %3394 = vmatpush1.bf16.msra.mxu0 %v3265
        %3395 = vmatprep.subr.bf16.mxu0 %v3268
        %3396 = vmatpush1.bf16.msra.mxu0 %v3267
        %3397 = vmatprep.subr.bf16.mxu0 %v3270
        %3398 = vmatpush1.bf16.msra.mxu0 %v3269
        %3399 = vmatprep.subr.bf16.mxu0 %v3272
        %3400 = vmatpush1.bf16.msra.mxu0 %v3271
        %3401 = vmatprep.subr.bf16.mxu0 %v3274
        %3402 = vmatpush1.bf16.msra.mxu0 %v3273
        %3403 = vmatprep.subr.bf16.mxu0 %v3276
        %3404 = vmatpush1.bf16.msra.mxu0 %v3275
        %3405 = vmatprep.mubr.bf16.mxu0 %v2484
        %3406 = vmatmul.mubr.bf16.gmra.mrb[0].mxu0 %v2483
        %v3407 = vpop.f32.mrb[0].mxu0
        %v3408 = vadd.f32 %v3046, %v3407
        %v3409 = vpop.f32.mrb[0].mxu0
        %v3410 = vadd.f32 %v3050, %v3409
        %v3411 = vpop.f32.mrb[0].mxu0
        %v3412 = vadd.f32 %v3046, %v3411
        %v3413 = vpop.f32.mrb[0].mxu0
        %v3414 = vadd.f32 %v3050, %v3413
        %3415 = vdwg.mxu0
        %3416 = vmatprep.subr.bf16.mxu0 %v3278
        %3417 = vmatpush1.bf16.msra.mxu0 %v3277
        %3418 = vmatprep.subr.bf16.mxu0 %v3280
        %3419 = vmatpush1.bf16.msra.mxu0 %v3279
        %3420 = vmatprep.subr.bf16.mxu0 %v3282
        %3421 = vmatpush1.bf16.msra.mxu0 %v3281
        %3422 = vmatprep.subr.bf16.mxu0 %v3284
        %3423 = vmatpush1.bf16.msra.mxu0 %v3283
        %3424 = vmatprep.subr.bf16.mxu0 %v3286
        %3425 = vmatpush1.bf16.msra.mxu0 %v3285
        %3426 = vmatprep.subr.bf16.mxu0 %v3288
        %3427 = vmatpush1.bf16.msra.mxu0 %v3287
        %3428 = vmatprep.subr.bf16.mxu0 %v3290
        %3429 = vmatpush1.bf16.msra.mxu0 %v3289
        %3430 = vmatprep.subr.bf16.mxu0 %v3292
        %3431 = vmatpush1.bf16.msra.mxu0 %v3291
        %3432 = vmatprep.subr.bf16.mxu0 %v3294
        %3433 = vmatpush1.bf16.msra.mxu0 %v3293
        %3434 = vmatprep.subr.bf16.mxu0 %v3296
        %3435 = vmatpush1.bf16.msra.mxu0 %v3295
        %3436 = vmatprep.subr.bf16.mxu0 %v3298
        %3437 = vmatpush1.bf16.msra.mxu0 %v3297
        %3438 = vmatprep.subr.bf16.mxu0 %v3300
        %3439 = vmatpush1.bf16.msra.mxu0 %v3299
        %3440 = vmatprep.subr.bf16.mxu0 %v3302
        %3441 = vmatpush1.bf16.msra.mxu0 %v3301
        %3442 = vmatprep.subr.bf16.mxu0 %v3304
        %3443 = vmatpush1.bf16.msra.mxu0 %v3303
        %3444 = vmatprep.subr.bf16.mxu0 %v3306
        %3445 = vmatpush1.bf16.msra.mxu0 %v3305
        %3446 = vmatprep.subr.bf16.mxu0 %v3308
        %3447 = vmatpush1.bf16.msra.mxu0 %v3307
        %3448 = vmatprep.mubr.bf16.mxu0 %v2486
        %3449 = vmatmul.mubr.bf16.gmra.mrb[0].mxu0 %v2485
        %v3450 = vpop.f32.mrb[0].mxu0
        %v3451 = vadd.f32 %v3408, %v3450
        %v3452 = vpop.f32.mrb[0].mxu0
        %v3453 = vadd.f32 %v3410, %v3452
        %v3454 = vpop.f32.mrb[0].mxu0
        %v3455 = vadd.f32 %v3412, %v3454
        %v3456 = vpop.f32.mrb[0].mxu0
        %v3457 = vadd.f32 %v3414, %v3456
        %3458 = vdwg.mxu0
        %v3459 = vmax.f32 %v3451, 0.0
        %v3460 = vmax.f32 %v3453, 0.0
        %v3461 = vmax.f32 %v3455, 0.0
        %v3462 = vmax.f32 %v3457, 0.0
        %v3463 = vpack.c.bf16 %v2471, %v2467
        %v3464 = vpack.c.bf16 %v2472, %v2468
        %v3465 = vpack.c.bf16 %v2473, %v2469
        %v3466 = vpack.c.bf16 %v2474, %v2470
        %v3467 = vld [vmem:[#allocation12] sm:$0xff]
        %v3468 = vld [vmem:[#allocation12 + $0x8] sm:$0xff]
        %v3469 = vld [vmem:[#allocation12 + $0x10] sm:$0xff]
        %v3470 = vld [vmem:[#allocation12 + $0x18] sm:$0xff]
        %v3471 = vld [vmem:[#allocation12 + $0x20] sm:$0xff]
        %v3472 = vld [vmem:[#allocation12 + $0x28] sm:$0xff]
        %v3473 = vld [vmem:[#allocation12 + $0x30] sm:$0xff]
        %v3474 = vld [vmem:[#allocation12 + $0x38] sm:$0xff]
        %v3475 = vld [vmem:[#allocation12 + $0x40] sm:$0xff]
        %v3476 = vld [vmem:[#allocation12 + $0x48] sm:$0xff]
        %v3477 = vld [vmem:[#allocation12 + $0x50] sm:$0xff]
        %v3478 = vld [vmem:[#allocation12 + $0x58] sm:$0xff]
        %v3479 = vld [vmem:[#allocation12 + $0x60] sm:$0xff]
        %v3480 = vld [vmem:[#allocation12 + $0x68] sm:$0xff]
        %v3481 = vld [vmem:[#allocation12 + $0x70] sm:$0xff]
        %v3482 = vld [vmem:[#allocation12 + $0x78] sm:$0xff]
        %v3483 = vld [vmem:[#allocation12 + $0x80] sm:$0xff]
        %v3484 = vld [vmem:[#allocation12 + $0x88] sm:$0xff]
        %v3485 = vld [vmem:[#allocation12 + $0x90] sm:$0xff]
        %v3486 = vld [vmem:[#allocation12 + $0x98] sm:$0xff]
        %v3487 = vld [vmem:[#allocation12 + $0xa0] sm:$0xff]
        %v3488 = vld [vmem:[#allocation12 + $0xa8] sm:$0xff]
        %v3489 = vld [vmem:[#allocation12 + $0xb0] sm:$0xff]
        %v3490 = vld [vmem:[#allocation12 + $0xb8] sm:$0xff]
        %v3491 = vld [vmem:[#allocation12 + $0xc0] sm:$0xff]
        %v3492 = vld [vmem:[#allocation12 + $0xc8] sm:$0xff]
        %v3493 = vld [vmem:[#allocation12 + $0xd0] sm:$0xff]
        %v3494 = vld [vmem:[#allocation12 + $0xd8] sm:$0xff]
        %v3495 = vld [vmem:[#allocation12 + $0xe0] sm:$0xff]
        %v3496 = vld [vmem:[#allocation12 + $0xe8] sm:$0xff]
        %v3497 = vld [vmem:[#allocation12 + $0xf0] sm:$0xff]
        %v3498 = vld [vmem:[#allocation12 + $0xf8] sm:$0xff]
        %v3499 = vld [vmem:[#allocation12 + $0x100] sm:$0xff]
        %v3500 = vld [vmem:[#allocation12 + $0x108] sm:$0xff]
        %v3501 = vld [vmem:[#allocation12 + $0x110] sm:$0xff]
        %v3502 = vld [vmem:[#allocation12 + $0x118] sm:$0xff]
        %v3503 = vld [vmem:[#allocation12 + $0x120] sm:$0xff]
        %v3504 = vld [vmem:[#allocation12 + $0x128] sm:$0xff]
        %v3505 = vld [vmem:[#allocation12 + $0x130] sm:$0xff]
        %v3506 = vld [vmem:[#allocation12 + $0x138] sm:$0xff]
        %v3507 = vld [vmem:[#allocation12 + $0x140] sm:$0xff]
        %v3508 = vld [vmem:[#allocation12 + $0x148] sm:$0xff]
        %v3509 = vld [vmem:[#allocation12 + $0x150] sm:$0xff]
        %v3510 = vld [vmem:[#allocation12 + $0x158] sm:$0xff]
        %v3511 = vld [vmem:[#allocation12 + $0x160] sm:$0xff]
        %v3512 = vld [vmem:[#allocation12 + $0x168] sm:$0xff]
        %v3513 = vld [vmem:[#allocation12 + $0x170] sm:$0xff]
        %v3514 = vld [vmem:[#allocation12 + $0x178] sm:$0xff]
        %v3515 = vld [vmem:[#allocation12 + $0x180] sm:$0xff]
        %v3516 = vld [vmem:[#allocation12 + $0x188] sm:$0xff]
        %v3517 = vld [vmem:[#allocation12 + $0x190] sm:$0xff]
        %v3518 = vld [vmem:[#allocation12 + $0x198] sm:$0xff]
        %v3519 = vld [vmem:[#allocation12 + $0x1a0] sm:$0xff]
        %v3520 = vld [vmem:[#allocation12 + $0x1a8] sm:$0xff]
        %v3521 = vld [vmem:[#allocation12 + $0x1b0] sm:$0xff]
        %v3522 = vld [vmem:[#allocation12 + $0x1b8] sm:$0xff]
        %v3523 = vld [vmem:[#allocation12 + $0x1c0] sm:$0xff]
        %v3524 = vld [vmem:[#allocation12 + $0x1c8] sm:$0xff]
        %v3525 = vld [vmem:[#allocation12 + $0x1d0] sm:$0xff]
        %v3526 = vld [vmem:[#allocation12 + $0x1d8] sm:$0xff]
        %v3527 = vld [vmem:[#allocation12 + $0x1e0] sm:$0xff]
        %v3528 = vld [vmem:[#allocation12 + $0x1e8] sm:$0xff]
        %v3529 = vld [vmem:[#allocation12 + $0x1f0] sm:$0xff]
        %v3530 = vld [vmem:[#allocation12 + $0x1f8] sm:$0xff]
        %v3531 = vld [vmem:[#allocation16] sm:$0x3]
        %v3533 = vlaneseq
        %v3534 = vshrl.u32 %v3533, 7
        %v3535 = vsub.s32 0, %v3534
        %v3536 = vrot.slane %v3531, %v3535
        %v3537 = vlaneseq
        %v3538 = vshrl.u32 %v3537, 7
        %v3539 = vsub.s32 1, %v3538
        %v3540 = vrot.slane %v3531, %v3539
        %v3607 = vunpack.c.l.b16 %v3467
        %v3608 = vunpack.c.h.b16 %v3467
        %v3609 = vunpack.c.l.b16 %v3468
        %v3610 = vunpack.c.h.b16 %v3468
        %v3611 = vunpack.c.l.b16 %v3469
        %v3612 = vunpack.c.h.b16 %v3469
        %v3613 = vunpack.c.l.b16 %v3470
        %v3614 = vunpack.c.h.b16 %v3470
        %v3615 = vunpack.c.l.b16 %v3471
        %v3616 = vunpack.c.h.b16 %v3471
        %v3617 = vunpack.c.l.b16 %v3472
        %v3618 = vunpack.c.h.b16 %v3472
        %v3619 = vunpack.c.l.b16 %v3473
        %v3620 = vunpack.c.h.b16 %v3473
        %v3621 = vunpack.c.l.b16 %v3474
        %v3622 = vunpack.c.h.b16 %v3474
        %v3623 = vunpack.c.l.b16 %v3475
        %v3624 = vunpack.c.h.b16 %v3475
        %v3625 = vunpack.c.l.b16 %v3476
        %v3626 = vunpack.c.h.b16 %v3476
        %v3627 = vunpack.c.l.b16 %v3477
        %v3628 = vunpack.c.h.b16 %v3477
        %v3629 = vunpack.c.l.b16 %v3478
        %v3630 = vunpack.c.h.b16 %v3478
        %v3631 = vunpack.c.l.b16 %v3479
        %v3632 = vunpack.c.h.b16 %v3479
        %v3633 = vunpack.c.l.b16 %v3480
        %v3634 = vunpack.c.h.b16 %v3480
        %v3635 = vunpack.c.l.b16 %v3481
        %v3636 = vunpack.c.h.b16 %v3481
        %v3637 = vunpack.c.l.b16 %v3482
        %v3638 = vunpack.c.h.b16 %v3482
        %v3639 = vunpack.c.l.b16 %v3483
        %v3640 = vunpack.c.h.b16 %v3483
        %v3641 = vunpack.c.l.b16 %v3484
        %v3642 = vunpack.c.h.b16 %v3484
        %v3643 = vunpack.c.l.b16 %v3485
        %v3644 = vunpack.c.h.b16 %v3485
        %v3645 = vunpack.c.l.b16 %v3486
        %v3646 = vunpack.c.h.b16 %v3486
        %v3647 = vunpack.c.l.b16 %v3487
        %v3648 = vunpack.c.h.b16 %v3487
        %v3649 = vunpack.c.l.b16 %v3488
        %v3650 = vunpack.c.h.b16 %v3488
        %v3651 = vunpack.c.l.b16 %v3489
        %v3652 = vunpack.c.h.b16 %v3489
        %v3653 = vunpack.c.l.b16 %v3490
        %v3654 = vunpack.c.h.b16 %v3490
        %v3655 = vunpack.c.l.b16 %v3491
        %v3656 = vunpack.c.h.b16 %v3491
        %v3657 = vunpack.c.l.b16 %v3492
        %v3658 = vunpack.c.h.b16 %v3492
        %v3659 = vunpack.c.l.b16 %v3493
        %v3660 = vunpack.c.h.b16 %v3493
        %v3661 = vunpack.c.l.b16 %v3494
        %v3662 = vunpack.c.h.b16 %v3494
        %v3663 = vunpack.c.l.b16 %v3495
        %v3664 = vunpack.c.h.b16 %v3495
        %v3665 = vunpack.c.l.b16 %v3496
        %v3666 = vunpack.c.h.b16 %v3496
        %v3667 = vunpack.c.l.b16 %v3497
        %v3668 = vunpack.c.h.b16 %v3497
        %v3669 = vunpack.c.l.b16 %v3498
        %v3670 = vunpack.c.h.b16 %v3498
        %v3671 = vunpack.c.l.b16 %v3499
        %v3672 = vunpack.c.h.b16 %v3499
        %v3673 = vunpack.c.l.b16 %v3500
        %v3674 = vunpack.c.h.b16 %v3500
        %v3675 = vunpack.c.l.b16 %v3501
        %v3676 = vunpack.c.h.b16 %v3501
        %v3677 = vunpack.c.l.b16 %v3502
        %v3678 = vunpack.c.h.b16 %v3502
        %v3679 = vunpack.c.l.b16 %v3503
        %v3680 = vunpack.c.h.b16 %v3503
        %v3681 = vunpack.c.l.b16 %v3504
        %v3682 = vunpack.c.h.b16 %v3504
        %v3683 = vunpack.c.l.b16 %v3505
        %v3684 = vunpack.c.h.b16 %v3505
        %v3685 = vunpack.c.l.b16 %v3506
        %v3686 = vunpack.c.h.b16 %v3506
        %v3687 = vunpack.c.l.b16 %v3507
        %v3688 = vunpack.c.h.b16 %v3507
        %v3689 = vunpack.c.l.b16 %v3508
        %v3690 = vunpack.c.h.b16 %v3508
        %v3691 = vunpack.c.l.b16 %v3509
        %v3692 = vunpack.c.h.b16 %v3509
        %v3693 = vunpack.c.l.b16 %v3510
        %v3694 = vunpack.c.h.b16 %v3510
        %v3695 = vunpack.c.l.b16 %v3511
        %v3696 = vunpack.c.h.b16 %v3511
        %v3697 = vunpack.c.l.b16 %v3512
        %v3698 = vunpack.c.h.b16 %v3512
        %v3699 = vunpack.c.l.b16 %v3513
        %v3700 = vunpack.c.h.b16 %v3513
        %v3701 = vunpack.c.l.b16 %v3514
        %v3702 = vunpack.c.h.b16 %v3514
        %v3703 = vunpack.c.l.b16 %v3515
        %v3704 = vunpack.c.h.b16 %v3515
        %v3705 = vunpack.c.l.b16 %v3516
        %v3706 = vunpack.c.h.b16 %v3516
        %v3707 = vunpack.c.l.b16 %v3517
        %v3708 = vunpack.c.h.b16 %v3517
        %v3709 = vunpack.c.l.b16 %v3518
        %v3710 = vunpack.c.h.b16 %v3518
        %v3711 = vunpack.c.l.b16 %v3519
        %v3712 = vunpack.c.h.b16 %v3519
        %v3713 = vunpack.c.l.b16 %v3520
        %v3714 = vunpack.c.h.b16 %v3520
        %v3715 = vunpack.c.l.b16 %v3521
        %v3716 = vunpack.c.h.b16 %v3521
        %v3717 = vunpack.c.l.b16 %v3522
        %v3718 = vunpack.c.h.b16 %v3522
        %v3719 = vunpack.c.l.b16 %v3523
        %v3720 = vunpack.c.h.b16 %v3523
        %v3721 = vunpack.c.l.b16 %v3524
        %v3722 = vunpack.c.h.b16 %v3524
        %v3723 = vunpack.c.l.b16 %v3525
        %v3724 = vunpack.c.h.b16 %v3525
        %v3725 = vunpack.c.l.b16 %v3526
        %v3726 = vunpack.c.h.b16 %v3526
        %v3727 = vunpack.c.l.b16 %v3527
        %v3728 = vunpack.c.h.b16 %v3527
        %v3729 = vunpack.c.l.b16 %v3528
        %v3730 = vunpack.c.h.b16 %v3528
        %v3731 = vunpack.c.l.b16 %v3529
        %v3732 = vunpack.c.h.b16 %v3529
        %v3733 = vunpack.c.l.b16 %v3530
        %v3734 = vunpack.c.h.b16 %v3530
        %v3735 = vpack.c.b16 %v3609, %v3607
        %v3736 = vpack.c.b16 %v3610, %v3608
        %v3737 = vpack.c.b16 %v3613, %v3611
        %v3738 = vpack.c.b16 %v3614, %v3612
        %v3739 = vpack.c.b16 %v3617, %v3615
        %v3740 = vpack.c.b16 %v3618, %v3616
        %v3741 = vpack.c.b16 %v3621, %v3619
        %v3742 = vpack.c.b16 %v3622, %v3620
        %v3743 = vpack.c.b16 %v3625, %v3623
        %v3744 = vpack.c.b16 %v3626, %v3624
        %v3745 = vpack.c.b16 %v3629, %v3627
        %v3746 = vpack.c.b16 %v3630, %v3628
        %v3747 = vpack.c.b16 %v3633, %v3631
        %v3748 = vpack.c.b16 %v3634, %v3632
        %v3749 = vpack.c.b16 %v3637, %v3635
        %v3750 = vpack.c.b16 %v3638, %v3636
        %v3751 = vpack.c.b16 %v3641, %v3639
        %v3752 = vpack.c.b16 %v3642, %v3640
        %v3753 = vpack.c.b16 %v3645, %v3643
        %v3754 = vpack.c.b16 %v3646, %v3644
        %v3755 = vpack.c.b16 %v3649, %v3647
        %v3756 = vpack.c.b16 %v3650, %v3648
        %v3757 = vpack.c.b16 %v3653, %v3651
        %v3758 = vpack.c.b16 %v3654, %v3652
        %v3759 = vpack.c.b16 %v3657, %v3655
        %v3760 = vpack.c.b16 %v3658, %v3656
        %v3761 = vpack.c.b16 %v3661, %v3659
        %v3762 = vpack.c.b16 %v3662, %v3660
        %v3763 = vpack.c.b16 %v3665, %v3663
        %v3764 = vpack.c.b16 %v3666, %v3664
        %v3765 = vpack.c.b16 %v3669, %v3667
        %v3766 = vpack.c.b16 %v3670, %v3668
        %v3767 = vpack.c.b16 %v3673, %v3671
        %v3768 = vpack.c.b16 %v3674, %v3672
        %v3769 = vpack.c.b16 %v3677, %v3675
        %v3770 = vpack.c.b16 %v3678, %v3676
        %v3771 = vpack.c.b16 %v3681, %v3679
        %v3772 = vpack.c.b16 %v3682, %v3680
        %v3773 = vpack.c.b16 %v3685, %v3683
        %v3774 = vpack.c.b16 %v3686, %v3684
        %v3775 = vpack.c.b16 %v3689, %v3687
        %v3776 = vpack.c.b16 %v3690, %v3688
        %v3777 = vpack.c.b16 %v3693, %v3691
        %v3778 = vpack.c.b16 %v3694, %v3692
        %v3779 = vpack.c.b16 %v3697, %v3695
        %v3780 = vpack.c.b16 %v3698, %v3696
        %v3781 = vpack.c.b16 %v3701, %v3699
        %v3782 = vpack.c.b16 %v3702, %v3700
        %v3783 = vpack.c.b16 %v3705, %v3703
        %v3784 = vpack.c.b16 %v3706, %v3704
        %v3785 = vpack.c.b16 %v3709, %v3707
        %v3786 = vpack.c.b16 %v3710, %v3708
        %v3787 = vpack.c.b16 %v3713, %v3711
        %v3788 = vpack.c.b16 %v3714, %v3712
        %v3789 = vpack.c.b16 %v3717, %v3715
        %v3790 = vpack.c.b16 %v3718, %v3716
        %v3791 = vpack.c.b16 %v3721, %v3719
        %v3792 = vpack.c.b16 %v3722, %v3720
        %v3793 = vpack.c.b16 %v3725, %v3723
        %v3794 = vpack.c.b16 %v3726, %v3724
        %v3795 = vpack.c.b16 %v3729, %v3727
        %v3796 = vpack.c.b16 %v3730, %v3728
        %v3797 = vpack.c.b16 %v3733, %v3731
        %v3798 = vpack.c.b16 %v3734, %v3732
        %3863 = vmatprep.subr.bf16.mxu0 %v3736
        %3864 = vmatpush1.bf16.msra.mxu0 %v3735
        %3865 = vmatprep.subr.bf16.mxu0 %v3738
        %3866 = vmatpush1.bf16.msra.mxu0 %v3737
        %3867 = vmatprep.subr.bf16.mxu0 %v3740
        %3868 = vmatpush1.bf16.msra.mxu0 %v3739
        %3869 = vmatprep.subr.bf16.mxu0 %v3742
        %3870 = vmatpush1.bf16.msra.mxu0 %v3741
        %3871 = vmatprep.subr.bf16.mxu0 %v3744
        %3872 = vmatpush1.bf16.msra.mxu0 %v3743
        %3873 = vmatprep.subr.bf16.mxu0 %v3746
        %3874 = vmatpush1.bf16.msra.mxu0 %v3745
        %3875 = vmatprep.subr.bf16.mxu0 %v3748
        %3876 = vmatpush1.bf16.msra.mxu0 %v3747
        %3877 = vmatprep.subr.bf16.mxu0 %v3750
        %3878 = vmatpush1.bf16.msra.mxu0 %v3749
        %3879 = vmatprep.subr.bf16.mxu0 %v3752
        %3880 = vmatpush1.bf16.msra.mxu0 %v3751
        %3881 = vmatprep.subr.bf16.mxu0 %v3754
        %3882 = vmatpush1.bf16.msra.mxu0 %v3753
        %3883 = vmatprep.subr.bf16.mxu0 %v3756
        %3884 = vmatpush1.bf16.msra.mxu0 %v3755
        %3885 = vmatprep.subr.bf16.mxu0 %v3758
        %3886 = vmatpush1.bf16.msra.mxu0 %v3757
        %3887 = vmatprep.subr.bf16.mxu0 %v3760
        %3888 = vmatpush1.bf16.msra.mxu0 %v3759
        %3889 = vmatprep.subr.bf16.mxu0 %v3762
        %3890 = vmatpush1.bf16.msra.mxu0 %v3761
        %3891 = vmatprep.subr.bf16.mxu0 %v3764
        %3892 = vmatpush1.bf16.msra.mxu0 %v3763
        %3893 = vmatprep.subr.bf16.mxu0 %v3766
        %3894 = vmatpush1.bf16.msra.mxu0 %v3765
        %3895 = vmatprep.mubr.bf16.mxu0 %v3464
        %3896 = vmatmul.mubr.bf16.gmra.mrb[0].mxu0 %v3463
        %v3897 = vpop.f32.mrb[0].mxu0
        %v3898 = vadd.f32 %v3536, %v3897
        %v3899 = vpop.f32.mrb[0].mxu0
        %v3900 = vadd.f32 %v3540, %v3899
        %v3901 = vpop.f32.mrb[0].mxu0
        %v3902 = vadd.f32 %v3536, %v3901
        %v3903 = vpop.f32.mrb[0].mxu0
        %v3904 = vadd.f32 %v3540, %v3903
        %3905 = vdwg.mxu0
        %3906 = vmatprep.subr.bf16.mxu0 %v3768
        %3907 = vmatpush1.bf16.msra.mxu0 %v3767
        %3908 = vmatprep.subr.bf16.mxu0 %v3770
        %3909 = vmatpush1.bf16.msra.mxu0 %v3769
        %3910 = vmatprep.subr.bf16.mxu0 %v3772
        %3911 = vmatpush1.bf16.msra.mxu0 %v3771
        %3912 = vmatprep.subr.bf16.mxu0 %v3774
        %3913 = vmatpush1.bf16.msra.mxu0 %v3773
        %3914 = vmatprep.subr.bf16.mxu0 %v3776
        %3915 = vmatpush1.bf16.msra.mxu0 %v3775
        %3916 = vmatprep.subr.bf16.mxu0 %v3778
        %3917 = vmatpush1.bf16.msra.mxu0 %v3777
        %3918 = vmatprep.subr.bf16.mxu0 %v3780
        %3919 = vmatpush1.bf16.msra.mxu0 %v3779
        %3920 = vmatprep.subr.bf16.mxu0 %v3782
        %3921 = vmatpush1.bf16.msra.mxu0 %v3781
        %3922 = vmatprep.subr.bf16.mxu0 %v3784
        %3923 = vmatpush1.bf16.msra.mxu0 %v3783
        %3924 = vmatprep.subr.bf16.mxu0 %v3786
        %3925 = vmatpush1.bf16.msra.mxu0 %v3785
        %3926 = vmatprep.subr.bf16.mxu0 %v3788
        %3927 = vmatpush1.bf16.msra.mxu0 %v3787
        %3928 = vmatprep.subr.bf16.mxu0 %v3790
        %3929 = vmatpush1.bf16.msra.mxu0 %v3789
        %3930 = vmatprep.subr.bf16.mxu0 %v3792
        %3931 = vmatpush1.bf16.msra.mxu0 %v3791
        %3932 = vmatprep.subr.bf16.mxu0 %v3794
        %3933 = vmatpush1.bf16.msra.mxu0 %v3793
        %3934 = vmatprep.subr.bf16.mxu0 %v3796
        %3935 = vmatpush1.bf16.msra.mxu0 %v3795
        %3936 = vmatprep.subr.bf16.mxu0 %v3798
        %3937 = vmatpush1.bf16.msra.mxu0 %v3797
        %3938 = vmatprep.mubr.bf16.mxu0 %v3466
        %3939 = vmatmul.mubr.bf16.gmra.mrb[0].mxu0 %v3465
        %v3940 = vpop.f32.mrb[0].mxu0
        %v3941 = vadd.f32 %v3898, %v3940
        %v3942 = vpop.f32.mrb[0].mxu0
        %v3943 = vadd.f32 %v3900, %v3942
        %v3944 = vpop.f32.mrb[0].mxu0
        %v3945 = vadd.f32 %v3902, %v3944
        %v3946 = vpop.f32.mrb[0].mxu0
        %v3947 = vadd.f32 %v3904, %v3946
        %3948 = vdwg.mxu0
        %v3949 = vmax.f32 %v3941, 0.0
        %v3950 = vmax.f32 %v3943, 0.0
        %v3951 = vmax.f32 %v3945, 0.0
        %v3952 = vmax.f32 %v3947, 0.0
        %v3953 = vmul.f32 %v3949, %v3459
        %v3954 = vmul.f32 %v3950, %v3460
        %v3955 = vmul.f32 %v3951, %v3461
        %v3956 = vmul.f32 %v3952, %v3462
        %v3957 = vmul.f32 %v2973, %v3459
        %v3958 = vmul.f32 %v2974, %v3460
        %v3959 = vmul.f32 %v2975, %v3461
        %v3960 = vmul.f32 %v2976, %v3462
        %v3961 = vpack.c.bf16 %v3959, %v3957
        %v3962 = vpack.c.bf16 %v3960, %v3958
        %v3963 = vld [vmem:[%s14] sm:$0xf]
        %v3964 = vld [vmem:[%s14 + $0x4] sm:$0xf]
        %v3965 = vld [vmem:[%s14 + $0x8] sm:$0xf]
        %v3966 = vld [vmem:[%s14 + $0xc] sm:$0xf]
        %v3967 = vld [vmem:[%s14 + $0x10] sm:$0xf]
        %v3968 = vld [vmem:[%s14 + $0x14] sm:$0xf]
        %v3969 = vld [vmem:[%s14 + $0x18] sm:$0xf]
        %v3970 = vld [vmem:[%s14 + $0x1c] sm:$0xf]
        %v3971 = vld [vmem:[%s14 + $0x20] sm:$0xf]
        %v3972 = vld [vmem:[%s14 + $0x24] sm:$0xf]
        %v3973 = vld [vmem:[%s14 + $0x28] sm:$0xf]
        %v3974 = vld [vmem:[%s14 + $0x2c] sm:$0xf]
        %v3975 = vld [vmem:[%s14 + $0x30] sm:$0xf]
        %v3976 = vld [vmem:[%s14 + $0x34] sm:$0xf]
        %v3977 = vld [vmem:[%s14 + $0x38] sm:$0xf]
        %v3978 = vld [vmem:[%s14 + $0x3c] sm:$0xf]
        %v3979 = vld [vmem:[%s14 + $0x40] sm:$0xf]
        %v3980 = vld [vmem:[%s14 + $0x44] sm:$0xf]
        %v3981 = vld [vmem:[%s14 + $0x48] sm:$0xf]
        %v3982 = vld [vmem:[%s14 + $0x4c] sm:$0xf]
        %v3983 = vld [vmem:[%s14 + $0x50] sm:$0xf]
        %v3984 = vld [vmem:[%s14 + $0x54] sm:$0xf]
        %v3985 = vld [vmem:[%s14 + $0x58] sm:$0xf]
        %v3986 = vld [vmem:[%s14 + $0x5c] sm:$0xf]
        %v3987 = vld [vmem:[%s14 + $0x60] sm:$0xf]
        %v3988 = vld [vmem:[%s14 + $0x64] sm:$0xf]
        %v3989 = vld [vmem:[%s14 + $0x68] sm:$0xf]
        %v3990 = vld [vmem:[%s14 + $0x6c] sm:$0xf]
        %v3991 = vld [vmem:[%s14 + $0x70] sm:$0xf]
        %v3992 = vld [vmem:[%s14 + $0x74] sm:$0xf]
        %v3993 = vld [vmem:[%s14 + $0x78] sm:$0xf]
        %v3994 = vld [vmem:[%s14 + $0x7c] sm:$0xf]
        %v3995 = vld [vmem:[#allocation18] sm:$0x1]
        %v3997 = vlaneseq
        %v3998 = vshrl.u32 %v3997, 7
        %v3999 = vsub.s32 0, %v3998
        %v4000 = vrot.slane %v3995, %v3999
        %v4034 = vunpack.c.l.b16 %v3963
        %v4035 = vunpack.c.l.b16 %v3964
        %v4036 = vunpack.c.l.b16 %v3965
        %v4037 = vunpack.c.l.b16 %v3966
        %v4038 = vunpack.c.l.b16 %v3967
        %v4039 = vunpack.c.l.b16 %v3968
        %v4040 = vunpack.c.l.b16 %v3969
        %v4041 = vunpack.c.l.b16 %v3970
        %v4042 = vunpack.c.l.b16 %v3971
        %v4043 = vunpack.c.l.b16 %v3972
        %v4044 = vunpack.c.l.b16 %v3973
        %v4045 = vunpack.c.l.b16 %v3974
        %v4046 = vunpack.c.l.b16 %v3975
        %v4047 = vunpack.c.l.b16 %v3976
        %v4048 = vunpack.c.l.b16 %v3977
        %v4049 = vunpack.c.l.b16 %v3978
        %v4050 = vunpack.c.l.b16 %v3979
        %v4051 = vunpack.c.l.b16 %v3980
        %v4052 = vunpack.c.l.b16 %v3981
        %v4053 = vunpack.c.l.b16 %v3982
        %v4054 = vunpack.c.l.b16 %v3983
        %v4055 = vunpack.c.l.b16 %v3984
        %v4056 = vunpack.c.l.b16 %v3985
        %v4057 = vunpack.c.l.b16 %v3986
        %v4058 = vunpack.c.l.b16 %v3987
        %v4059 = vunpack.c.l.b16 %v3988
        %v4060 = vunpack.c.l.b16 %v3989
        %v4061 = vunpack.c.l.b16 %v3990
        %v4062 = vunpack.c.l.b16 %v3991
        %v4063 = vunpack.c.l.b16 %v3992
        %v4064 = vunpack.c.l.b16 %v3993
        %v4065 = vunpack.c.l.b16 %v3994
        %v4066 = vpack.c.b16 %v4035, %v4034
        %v4067 = vpack.c.b16 %v4037, %v4036
        %v4068 = vpack.c.b16 %v4039, %v4038
        %v4069 = vpack.c.b16 %v4041, %v4040
        %v4070 = vpack.c.b16 %v4043, %v4042
        %v4071 = vpack.c.b16 %v4045, %v4044
        %v4072 = vpack.c.b16 %v4047, %v4046
        %v4073 = vpack.c.b16 %v4049, %v4048
        %v4074 = vpack.c.b16 %v4051, %v4050
        %v4075 = vpack.c.b16 %v4053, %v4052
        %v4076 = vpack.c.b16 %v4055, %v4054
        %v4077 = vpack.c.b16 %v4057, %v4056
        %v4078 = vpack.c.b16 %v4059, %v4058
        %v4079 = vpack.c.b16 %v4061, %v4060
        %v4080 = vpack.c.b16 %v4063, %v4062
        %v4081 = vpack.c.b16 %v4065, %v4064
        %4098 = vmatprep.subr.bf16.mxu0 0
        %4099 = vmatpush1.bf16.msra.mxu0 %v4066
        %4100 = vmatprep.subr.bf16.mxu0 0
        %4101 = vmatpush1.bf16.msra.mxu0 %v4067
        %4102 = vmatprep.subr.bf16.mxu0 0
        %4103 = vmatpush1.bf16.msra.mxu0 %v4068
        %4104 = vmatprep.subr.bf16.mxu0 0
        %4105 = vmatpush1.bf16.msra.mxu0 %v4069
        %4106 = vmatprep.subr.bf16.mxu0 0
        %4107 = vmatpush1.bf16.msra.mxu0 %v4070
        %4108 = vmatprep.subr.bf16.mxu0 0
        %4109 = vmatpush1.bf16.msra.mxu0 %v4071
        %4110 = vmatprep.subr.bf16.mxu0 0
        %4111 = vmatpush1.bf16.msra.mxu0 %v4072
        %4112 = vmatprep.subr.bf16.mxu0 0
        %4113 = vmatpush1.bf16.msra.mxu0 %v4073
        %4114 = vmatprep.subr.bf16.mxu0 0
        %4115 = vmatpush1.bf16.msra.mxu0 %v4074
        %4116 = vmatprep.subr.bf16.mxu0 0
        %4117 = vmatpush1.bf16.msra.mxu0 %v4075
        %4118 = vmatprep.subr.bf16.mxu0 0
        %4119 = vmatpush1.bf16.msra.mxu0 %v4076
        %4120 = vmatprep.subr.bf16.mxu0 0
        %4121 = vmatpush1.bf16.msra.mxu0 %v4077
        %4122 = vmatprep.subr.bf16.mxu0 0
        %4123 = vmatpush1.bf16.msra.mxu0 %v4078
        %4124 = vmatprep.subr.bf16.mxu0 0
        %4125 = vmatpush1.bf16.msra.mxu0 %v4079
        %4126 = vmatprep.subr.bf16.mxu0 0
        %4127 = vmatpush1.bf16.msra.mxu0 %v4080
        %4128 = vmatprep.subr.bf16.mxu0 0
        %4129 = vmatpush1.bf16.msra.mxu0 %v4081
        %4130 = vmatprep.mubr.bf16.mxu0 %v3962
        %4131 = vmatmul.mubr.bf16.gmra.mrb[0].mxu0 %v3961
        %v4132 = vpop.f32.mrb[0].mxu0
        %v4133 = vadd.f32 %v4000, %v4132
        %v4134 = vpop.f32.mrb[0].mxu0
        %v4135 = vpop.f32.mrb[0].mxu0
        %v4136 = vadd.f32 %v4000, %v4135
        %v4137 = vpop.f32.mrb[0].mxu0
        %4138 = vdwg.mxu0
        %v4139 = vmax.f32 %v4133, 0.0
        %v4140 = vmax.f32 %v4136, 0.0
        %v4141 = vld [vmem:[%s15] sm:$0xf]
        %v4142 = vld [vmem:[%s15 + $0x4] sm:$0xf]
        %v4143 = vld [vmem:[%s15 + $0x8] sm:$0xf]
        %v4144 = vld [vmem:[%s15 + $0xc] sm:$0xf]
        %v4145 = vld [vmem:[%s15 + $0x10] sm:$0xf]
        %v4146 = vld [vmem:[%s15 + $0x14] sm:$0xf]
        %v4147 = vld [vmem:[%s15 + $0x18] sm:$0xf]
        %v4148 = vld [vmem:[%s15 + $0x1c] sm:$0xf]
        %v4149 = vld [vmem:[%s15 + $0x20] sm:$0xf]
        %v4150 = vld [vmem:[%s15 + $0x24] sm:$0xf]
        %v4151 = vld [vmem:[%s15 + $0x28] sm:$0xf]
        %v4152 = vld [vmem:[%s15 + $0x2c] sm:$0xf]
        %v4153 = vld [vmem:[%s15 + $0x30] sm:$0xf]
        %v4154 = vld [vmem:[%s15 + $0x34] sm:$0xf]
        %v4155 = vld [vmem:[%s15 + $0x38] sm:$0xf]
        %v4156 = vld [vmem:[%s15 + $0x3c] sm:$0xf]
        %v4157 = vld [vmem:[%s15 + $0x40] sm:$0xf]
        %v4158 = vld [vmem:[%s15 + $0x44] sm:$0xf]
        %v4159 = vld [vmem:[%s15 + $0x48] sm:$0xf]
        %v4160 = vld [vmem:[%s15 + $0x4c] sm:$0xf]
        %v4161 = vld [vmem:[%s15 + $0x50] sm:$0xf]
        %v4162 = vld [vmem:[%s15 + $0x54] sm:$0xf]
        %v4163 = vld [vmem:[%s15 + $0x58] sm:$0xf]
        %v4164 = vld [vmem:[%s15 + $0x5c] sm:$0xf]
        %v4165 = vld [vmem:[%s15 + $0x60] sm:$0xf]
        %v4166 = vld [vmem:[%s15 + $0x64] sm:$0xf]
        %v4167 = vld [vmem:[%s15 + $0x68] sm:$0xf]
        %v4168 = vld [vmem:[%s15 + $0x6c] sm:$0xf]
        %v4169 = vld [vmem:[%s15 + $0x70] sm:$0xf]
        %v4170 = vld [vmem:[%s15 + $0x74] sm:$0xf]
        %v4171 = vld [vmem:[%s15 + $0x78] sm:$0xf]
        %v4172 = vld [vmem:[%s15 + $0x7c] sm:$0xf]
        %v4205 = vunpack.c.l.b16 %v4141
        %v4206 = vunpack.c.l.b16 %v4142
        %v4207 = vunpack.c.l.b16 %v4143
        %v4208 = vunpack.c.l.b16 %v4144
        %v4209 = vunpack.c.l.b16 %v4145
        %v4210 = vunpack.c.l.b16 %v4146
        %v4211 = vunpack.c.l.b16 %v4147
        %v4212 = vunpack.c.l.b16 %v4148
        %v4213 = vunpack.c.l.b16 %v4149
        %v4214 = vunpack.c.l.b16 %v4150
        %v4215 = vunpack.c.l.b16 %v4151
        %v4216 = vunpack.c.l.b16 %v4152
        %v4217 = vunpack.c.l.b16 %v4153
        %v4218 = vunpack.c.l.b16 %v4154
        %v4219 = vunpack.c.l.b16 %v4155
        %v4220 = vunpack.c.l.b16 %v4156
        %v4221 = vunpack.c.l.b16 %v4157
        %v4222 = vunpack.c.l.b16 %v4158
        %v4223 = vunpack.c.l.b16 %v4159
        %v4224 = vunpack.c.l.b16 %v4160
        %v4225 = vunpack.c.l.b16 %v4161
        %v4226 = vunpack.c.l.b16 %v4162
        %v4227 = vunpack.c.l.b16 %v4163
        %v4228 = vunpack.c.l.b16 %v4164
        %v4229 = vunpack.c.l.b16 %v4165
        %v4230 = vunpack.c.l.b16 %v4166
        %v4231 = vunpack.c.l.b16 %v4167
        %v4232 = vunpack.c.l.b16 %v4168
        %v4233 = vunpack.c.l.b16 %v4169
        %v4234 = vunpack.c.l.b16 %v4170
        %v4235 = vunpack.c.l.b16 %v4171
        %v4236 = vunpack.c.l.b16 %v4172
        %v4237 = vpack.c.b16 %v4206, %v4205
        %v4238 = vpack.c.b16 %v4208, %v4207
        %v4239 = vpack.c.b16 %v4210, %v4209
        %v4240 = vpack.c.b16 %v4212, %v4211
        %v4241 = vpack.c.b16 %v4214, %v4213
        %v4242 = vpack.c.b16 %v4216, %v4215
        %v4243 = vpack.c.b16 %v4218, %v4217
        %v4244 = vpack.c.b16 %v4220, %v4219
        %v4245 = vpack.c.b16 %v4222, %v4221
        %v4246 = vpack.c.b16 %v4224, %v4223
        %v4247 = vpack.c.b16 %v4226, %v4225
        %v4248 = vpack.c.b16 %v4228, %v4227
        %v4249 = vpack.c.b16 %v4230, %v4229
        %v4250 = vpack.c.b16 %v4232, %v4231
        %v4251 = vpack.c.b16 %v4234, %v4233
        %v4252 = vpack.c.b16 %v4236, %v4235
        %4269 = vmatprep.subr.bf16.mxu0 0
        %4270 = vmatpush1.bf16.msra.mxu0 %v4237
        %4271 = vmatprep.subr.bf16.mxu0 0
        %4272 = vmatpush1.bf16.msra.mxu0 %v4238
        %4273 = vmatprep.subr.bf16.mxu0 0
        %4274 = vmatpush1.bf16.msra.mxu0 %v4239
        %4275 = vmatprep.subr.bf16.mxu0 0
        %4276 = vmatpush1.bf16.msra.mxu0 %v4240
        %4277 = vmatprep.subr.bf16.mxu0 0
        %4278 = vmatpush1.bf16.msra.mxu0 %v4241
        %4279 = vmatprep.subr.bf16.mxu0 0
        %4280 = vmatpush1.bf16.msra.mxu0 %v4242
        %4281 = vmatprep.subr.bf16.mxu0 0
        %4282 = vmatpush1.bf16.msra.mxu0 %v4243
        %4283 = vmatprep.subr.bf16.mxu0 0
        %4284 = vmatpush1.bf16.msra.mxu0 %v4244
        %4285 = vmatprep.subr.bf16.mxu0 0
        %4286 = vmatpush1.bf16.msra.mxu0 %v4245
        %4287 = vmatprep.subr.bf16.mxu0 0
        %4288 = vmatpush1.bf16.msra.mxu0 %v4246
        %4289 = vmatprep.subr.bf16.mxu0 0
        %4290 = vmatpush1.bf16.msra.mxu0 %v4247
        %4291 = vmatprep.subr.bf16.mxu0 0
        %4292 = vmatpush1.bf16.msra.mxu0 %v4248
        %4293 = vmatprep.subr.bf16.mxu0 0
        %4294 = vmatpush1.bf16.msra.mxu0 %v4249
        %4295 = vmatprep.subr.bf16.mxu0 0
        %4296 = vmatpush1.bf16.msra.mxu0 %v4250
        %4297 = vmatprep.subr.bf16.mxu0 0
        %4298 = vmatpush1.bf16.msra.mxu0 %v4251
        %4299 = vmatprep.subr.bf16.mxu0 0
        %4300 = vmatpush1.bf16.msra.mxu0 %v4252
        %4301 = vmatprep.mubr.bf16.mxu0 %v3962
        %4302 = vmatmul.mubr.bf16.gmra.mrb[0].mxu0 %v3961
        %v4303 = vpop.f32.mrb[0].mxu0
        %v4304 = vadd.f32 %v4000, %v4303
        %v4305 = vpop.f32.mrb[0].mxu0
        %v4306 = vpop.f32.mrb[0].mxu0
        %v4307 = vadd.f32 %v4000, %v4306
        %v4308 = vpop.f32.mrb[0].mxu0
        %4309 = vdwg.mxu0
        %v4310 = vmax.f32 %v4304, 0.0
        %v4311 = vmax.f32 %v4307, 0.0
        %v4312 = vmax.f32 %v4139, %v4310
        %v4313 = vmax.f32 %v4140, %v4311
        %v4314 = vpack.c.bf16 %v3461, %v3459
        %v4315 = vpack.c.bf16 %v3462, %v3460
        %v4316 = vld [vmem:[%s16] sm:$0xf]
        %v4317 = vld [vmem:[%s16 + $0x4] sm:$0xf]
        %v4318 = vld [vmem:[%s16 + $0x8] sm:$0xf]
        %v4319 = vld [vmem:[%s16 + $0xc] sm:$0xf]
        %v4320 = vld [vmem:[%s16 + $0x10] sm:$0xf]
        %v4321 = vld [vmem:[%s16 + $0x14] sm:$0xf]
        %v4322 = vld [vmem:[%s16 + $0x18] sm:$0xf]
        %v4323 = vld [vmem:[%s16 + $0x1c] sm:$0xf]
        %v4324 = vld [vmem:[%s16 + $0x20] sm:$0xf]
        %v4325 = vld [vmem:[%s16 + $0x24] sm:$0xf]
        %v4326 = vld [vmem:[%s16 + $0x28] sm:$0xf]
        %v4327 = vld [vmem:[%s16 + $0x2c] sm:$0xf]
        %v4328 = vld [vmem:[%s16 + $0x30] sm:$0xf]
        %v4329 = vld [vmem:[%s16 + $0x34] sm:$0xf]
        %v4330 = vld [vmem:[%s16 + $0x38] sm:$0xf]
        %v4331 = vld [vmem:[%s16 + $0x3c] sm:$0xf]
        %v4332 = vld [vmem:[%s16 + $0x40] sm:$0xf]
        %v4333 = vld [vmem:[%s16 + $0x44] sm:$0xf]
        %v4334 = vld [vmem:[%s16 + $0x48] sm:$0xf]
        %v4335 = vld [vmem:[%s16 + $0x4c] sm:$0xf]
        %v4336 = vld [vmem:[%s16 + $0x50] sm:$0xf]
        %v4337 = vld [vmem:[%s16 + $0x54] sm:$0xf]
        %v4338 = vld [vmem:[%s16 + $0x58] sm:$0xf]
        %v4339 = vld [vmem:[%s16 + $0x5c] sm:$0xf]
        %v4340 = vld [vmem:[%s16 + $0x60] sm:$0xf]
        %v4341 = vld [vmem:[%s16 + $0x64] sm:$0xf]
        %v4342 = vld [vmem:[%s16 + $0x68] sm:$0xf]
        %v4343 = vld [vmem:[%s16 + $0x6c] sm:$0xf]
        %v4344 = vld [vmem:[%s16 + $0x70] sm:$0xf]
        %v4345 = vld [vmem:[%s16 + $0x74] sm:$0xf]
        %v4346 = vld [vmem:[%s16 + $0x78] sm:$0xf]
        %v4347 = vld [vmem:[%s16 + $0x7c] sm:$0xf]
        %v4348 = vld [vmem:[#allocation19] sm:$0x1]
        %v4350 = vlaneseq
        %v4351 = vshrl.u32 %v4350, 7
        %v4352 = vsub.s32 0, %v4351
        %v4353 = vrot.slane %v4348, %v4352
        %v4387 = vunpack.c.l.b16 %v4316
        %v4388 = vunpack.c.l.b16 %v4317
        %v4389 = vunpack.c.l.b16 %v4318
        %v4390 = vunpack.c.l.b16 %v4319
        %v4391 = vunpack.c.l.b16 %v4320
        %v4392 = vunpack.c.l.b16 %v4321
        %v4393 = vunpack.c.l.b16 %v4322
        %v4394 = vunpack.c.l.b16 %v4323
        %v4395 = vunpack.c.l.b16 %v4324
        %v4396 = vunpack.c.l.b16 %v4325
        %v4397 = vunpack.c.l.b16 %v4326
        %v4398 = vunpack.c.l.b16 %v4327
        %v4399 = vunpack.c.l.b16 %v4328
        %v4400 = vunpack.c.l.b16 %v4329
        %v4401 = vunpack.c.l.b16 %v4330
        %v4402 = vunpack.c.l.b16 %v4331
        %v4403 = vunpack.c.l.b16 %v4332
        %v4404 = vunpack.c.l.b16 %v4333
        %v4405 = vunpack.c.l.b16 %v4334
        %v4406 = vunpack.c.l.b16 %v4335
        %v4407 = vunpack.c.l.b16 %v4336
        %v4408 = vunpack.c.l.b16 %v4337
        %v4409 = vunpack.c.l.b16 %v4338
        %v4410 = vunpack.c.l.b16 %v4339
        %v4411 = vunpack.c.l.b16 %v4340
        %v4412 = vunpack.c.l.b16 %v4341
        %v4413 = vunpack.c.l.b16 %v4342
        %v4414 = vunpack.c.l.b16 %v4343
        %v4415 = vunpack.c.l.b16 %v4344
        %v4416 = vunpack.c.l.b16 %v4345
        %v4417 = vunpack.c.l.b16 %v4346
        %v4418 = vunpack.c.l.b16 %v4347
        %v4419 = vpack.c.b16 %v4388, %v4387
        %v4420 = vpack.c.b16 %v4390, %v4389
        %v4421 = vpack.c.b16 %v4392, %v4391
        %v4422 = vpack.c.b16 %v4394, %v4393
        %v4423 = vpack.c.b16 %v4396, %v4395
        %v4424 = vpack.c.b16 %v4398, %v4397
        %v4425 = vpack.c.b16 %v4400, %v4399
        %v4426 = vpack.c.b16 %v4402, %v4401
        %v4427 = vpack.c.b16 %v4404, %v4403
        %v4428 = vpack.c.b16 %v4406, %v4405
        %v4429 = vpack.c.b16 %v4408, %v4407
        %v4430 = vpack.c.b16 %v4410, %v4409
        %v4431 = vpack.c.b16 %v4412, %v4411
        %v4432 = vpack.c.b16 %v4414, %v4413
        %v4433 = vpack.c.b16 %v4416, %v4415
        %v4434 = vpack.c.b16 %v4418, %v4417
        %4451 = vmatprep.subr.bf16.mxu0 0
        %4452 = vmatpush1.bf16.msra.mxu0 %v4419
        %4453 = vmatprep.subr.bf16.mxu0 0
        %4454 = vmatpush1.bf16.msra.mxu0 %v4420
        %4455 = vmatprep.subr.bf16.mxu0 0
        %4456 = vmatpush1.bf16.msra.mxu0 %v4421
        %4457 = vmatprep.subr.bf16.mxu0 0
        %4458 = vmatpush1.bf16.msra.mxu0 %v4422
        %4459 = vmatprep.subr.bf16.mxu0 0
        %4460 = vmatpush1.bf16.msra.mxu0 %v4423
        %4461 = vmatprep.subr.bf16.mxu0 0
        %4462 = vmatpush1.bf16.msra.mxu0 %v4424
        %4463 = vmatprep.subr.bf16.mxu0 0
        %4464 = vmatpush1.bf16.msra.mxu0 %v4425
        %4465 = vmatprep.subr.bf16.mxu0 0
        %4466 = vmatpush1.bf16.msra.mxu0 %v4426
        %4467 = vmatprep.subr.bf16.mxu0 0
        %4468 = vmatpush1.bf16.msra.mxu0 %v4427
        %4469 = vmatprep.subr.bf16.mxu0 0
        %4470 = vmatpush1.bf16.msra.mxu0 %v4428
        %4471 = vmatprep.subr.bf16.mxu0 0
        %4472 = vmatpush1.bf16.msra.mxu0 %v4429
        %4473 = vmatprep.subr.bf16.mxu0 0
        %4474 = vmatpush1.bf16.msra.mxu0 %v4430
        %4475 = vmatprep.subr.bf16.mxu0 0
        %4476 = vmatpush1.bf16.msra.mxu0 %v4431
        %4477 = vmatprep.subr.bf16.mxu0 0
        %4478 = vmatpush1.bf16.msra.mxu0 %v4432
        %4479 = vmatprep.subr.bf16.mxu0 0
        %4480 = vmatpush1.bf16.msra.mxu0 %v4433
        %4481 = vmatprep.subr.bf16.mxu0 0
        %4482 = vmatpush1.bf16.msra.mxu0 %v4434
        %4483 = vmatprep.mubr.bf16.mxu0 %v4315
        %4484 = vmatmul.mubr.bf16.gmra.mrb[0].mxu0 %v4314
        %v4485 = vpop.f32.mrb[0].mxu0
        %v4486 = vadd.f32 %v4353, %v4485
        %v4487 = vpop.f32.mrb[0].mxu0
        %v4488 = vpop.f32.mrb[0].mxu0
        %v4489 = vadd.f32 %v4353, %v4488
        %v4490 = vpop.f32.mrb[0].mxu0
        %4491 = vdwg.mxu0
        %v4492 = vmax.f32 %v4486, 0.0
        %v4493 = vmax.f32 %v4489, 0.0
        %v4494 = vld [vmem:[%s17] sm:$0xf]
        %v4495 = vld [vmem:[%s17 + $0x4] sm:$0xf]
        %v4496 = vld [vmem:[%s17 + $0x8] sm:$0xf]
        %v4497 = vld [vmem:[%s17 + $0xc] sm:$0xf]
        %v4498 = vld [vmem:[%s17 + $0x10] sm:$0xf]
        %v4499 = vld [vmem:[%s17 + $0x14] sm:$0xf]
        %v4500 = vld [vmem:[%s17 + $0x18] sm:$0xf]
        %v4501 = vld [vmem:[%s17 + $0x1c] sm:$0xf]
        %v4502 = vld [vmem:[%s17 + $0x20] sm:$0xf]
        %v4503 = vld [vmem:[%s17 + $0x24] sm:$0xf]
        %v4504 = vld [vmem:[%s17 + $0x28] sm:$0xf]
        %v4505 = vld [vmem:[%s17 + $0x2c] sm:$0xf]
        %v4506 = vld [vmem:[%s17 + $0x30] sm:$0xf]
        %v4507 = vld [vmem:[%s17 + $0x34] sm:$0xf]
        %v4508 = vld [vmem:[%s17 + $0x38] sm:$0xf]
        %v4509 = vld [vmem:[%s17 + $0x3c] sm:$0xf]
        %v4510 = vld [vmem:[%s17 + $0x40] sm:$0xf]
        %v4511 = vld [vmem:[%s17 + $0x44] sm:$0xf]
        %v4512 = vld [vmem:[%s17 + $0x48] sm:$0xf]
        %v4513 = vld [vmem:[%s17 + $0x4c] sm:$0xf]
        %v4514 = vld [vmem:[%s17 + $0x50] sm:$0xf]
        %v4515 = vld [vmem:[%s17 + $0x54] sm:$0xf]
        %v4516 = vld [vmem:[%s17 + $0x58] sm:$0xf]
        %v4517 = vld [vmem:[%s17 + $0x5c] sm:$0xf]
        %v4518 = vld [vmem:[%s17 + $0x60] sm:$0xf]
        %v4519 = vld [vmem:[%s17 + $0x64] sm:$0xf]
        %v4520 = vld [vmem:[%s17 + $0x68] sm:$0xf]
        %v4521 = vld [vmem:[%s17 + $0x6c] sm:$0xf]
        %v4522 = vld [vmem:[%s17 + $0x70] sm:$0xf]
        %v4523 = vld [vmem:[%s17 + $0x74] sm:$0xf]
        %v4524 = vld [vmem:[%s17 + $0x78] sm:$0xf]
        %v4525 = vld [vmem:[%s17 + $0x7c] sm:$0xf]
        %v4558 = vunpack.c.l.b16 %v4494
        %v4559 = vunpack.c.l.b16 %v4495
        %v4560 = vunpack.c.l.b16 %v4496
        %v4561 = vunpack.c.l.b16 %v4497
        %v4562 = vunpack.c.l.b16 %v4498
        %v4563 = vunpack.c.l.b16 %v4499
        %v4564 = vunpack.c.l.b16 %v4500
        %v4565 = vunpack.c.l.b16 %v4501
        %v4566 = vunpack.c.l.b16 %v4502
        %v4567 = vunpack.c.l.b16 %v4503
        %v4568 = vunpack.c.l.b16 %v4504
        %v4569 = vunpack.c.l.b16 %v4505
        %v4570 = vunpack.c.l.b16 %v4506
        %v4571 = vunpack.c.l.b16 %v4507
        %v4572 = vunpack.c.l.b16 %v4508
        %v4573 = vunpack.c.l.b16 %v4509
        %v4574 = vunpack.c.l.b16 %v4510
        %v4575 = vunpack.c.l.b16 %v4511
        %v4576 = vunpack.c.l.b16 %v4512
        %v4577 = vunpack.c.l.b16 %v4513
        %v4578 = vunpack.c.l.b16 %v4514
        %v4579 = vunpack.c.l.b16 %v4515
        %v4580 = vunpack.c.l.b16 %v4516
        %v4581 = vunpack.c.l.b16 %v4517
        %v4582 = vunpack.c.l.b16 %v4518
        %v4583 = vunpack.c.l.b16 %v4519
        %v4584 = vunpack.c.l.b16 %v4520
        %v4585 = vunpack.c.l.b16 %v4521
        %v4586 = vunpack.c.l.b16 %v4522
        %v4587 = vunpack.c.l.b16 %v4523
        %v4588 = vunpack.c.l.b16 %v4524
        %v4589 = vunpack.c.l.b16 %v4525
        %v4590 = vpack.c.b16 %v4559, %v4558
        %v4591 = vpack.c.b16 %v4561, %v4560
        %v4592 = vpack.c.b16 %v4563, %v4562
        %v4593 = vpack.c.b16 %v4565, %v4564
        %v4594 = vpack.c.b16 %v4567, %v4566
        %v4595 = vpack.c.b16 %v4569, %v4568
        %v4596 = vpack.c.b16 %v4571, %v4570
        %v4597 = vpack.c.b16 %v4573, %v4572
        %v4598 = vpack.c.b16 %v4575, %v4574
        %v4599 = vpack.c.b16 %v4577, %v4576
        %v4600 = vpack.c.b16 %v4579, %v4578
        %v4601 = vpack.c.b16 %v4581, %v4580
        %v4602 = vpack.c.b16 %v4583, %v4582
        %v4603 = vpack.c.b16 %v4585, %v4584
        %v4604 = vpack.c.b16 %v4587, %v4586
        %v4605 = vpack.c.b16 %v4589, %v4588
        %4622 = vmatprep.subr.bf16.mxu0 0
        %4623 = vmatpush1.bf16.msra.mxu0 %v4590
        %4624 = vmatprep.subr.bf16.mxu0 0
        %4625 = vmatpush1.bf16.msra.mxu0 %v4591
        %4626 = vmatprep.subr.bf16.mxu0 0
        %4627 = vmatpush1.bf16.msra.mxu0 %v4592
        %4628 = vmatprep.subr.bf16.mxu0 0
        %4629 = vmatpush1.bf16.msra.mxu0 %v4593
        %4630 = vmatprep.subr.bf16.mxu0 0
        %4631 = vmatpush1.bf16.msra.mxu0 %v4594
        %4632 = vmatprep.subr.bf16.mxu0 0
        %4633 = vmatpush1.bf16.msra.mxu0 %v4595
        %4634 = vmatprep.subr.bf16.mxu0 0
        %4635 = vmatpush1.bf16.msra.mxu0 %v4596
        %4636 = vmatprep.subr.bf16.mxu0 0
        %4637 = vmatpush1.bf16.msra.mxu0 %v4597
        %4638 = vmatprep.subr.bf16.mxu0 0
        %4639 = vmatpush1.bf16.msra.mxu0 %v4598
        %4640 = vmatprep.subr.bf16.mxu0 0
        %4641 = vmatpush1.bf16.msra.mxu0 %v4599
        %4642 = vmatprep.subr.bf16.mxu0 0
        %4643 = vmatpush1.bf16.msra.mxu0 %v4600
        %4644 = vmatprep.subr.bf16.mxu0 0
        %4645 = vmatpush1.bf16.msra.mxu0 %v4601
        %4646 = vmatprep.subr.bf16.mxu0 0
        %4647 = vmatpush1.bf16.msra.mxu0 %v4602
        %4648 = vmatprep.subr.bf16.mxu0 0
        %4649 = vmatpush1.bf16.msra.mxu0 %v4603
        %4650 = vmatprep.subr.bf16.mxu0 0
        %4651 = vmatpush1.bf16.msra.mxu0 %v4604
        %4652 = vmatprep.subr.bf16.mxu0 0
        %4653 = vmatpush1.bf16.msra.mxu0 %v4605
        %4654 = vmatprep.mubr.bf16.mxu0 %v4315
        %4655 = vmatmul.mubr.bf16.gmra.mrb[0].mxu0 %v4314
        %v4656 = vpop.f32.mrb[0].mxu0
        %v4657 = vadd.f32 %v4353, %v4656
        %v4658 = vpop.f32.mrb[0].mxu0
        %v4659 = vpop.f32.mrb[0].mxu0
        %v4660 = vadd.f32 %v4353, %v4659
        %v4661 = vpop.f32.mrb[0].mxu0
        %4662 = vdwg.mxu0
        %v4663 = vmax.f32 %v4657, 0.0
        %v4664 = vmax.f32 %v4660, 0.0
        %v4665 = vmax.f32 %v4492, %v4663
        %v4666 = vmax.f32 %v4493, %v4664
        %v4667 = vpack.c.bf16 %v3955, %v3953
        %v4668 = vpack.c.bf16 %v3956, %v3954
        %v4669 = vld [vmem:[%s18] sm:$0xf]
        %v4670 = vld [vmem:[%s18 + $0x4] sm:$0xf]
        %v4671 = vld [vmem:[%s18 + $0x8] sm:$0xf]
        %v4672 = vld [vmem:[%s18 + $0xc] sm:$0xf]
        %v4673 = vld [vmem:[%s18 + $0x10] sm:$0xf]
        %v4674 = vld [vmem:[%s18 + $0x14] sm:$0xf]
        %v4675 = vld [vmem:[%s18 + $0x18] sm:$0xf]
        %v4676 = vld [vmem:[%s18 + $0x1c] sm:$0xf]
        %v4677 = vld [vmem:[%s18 + $0x20] sm:$0xf]
        %v4678 = vld [vmem:[%s18 + $0x24] sm:$0xf]
        %v4679 = vld [vmem:[%s18 + $0x28] sm:$0xf]
        %v4680 = vld [vmem:[%s18 + $0x2c] sm:$0xf]
        %v4681 = vld [vmem:[%s18 + $0x30] sm:$0xf]
        %v4682 = vld [vmem:[%s18 + $0x34] sm:$0xf]
        %v4683 = vld [vmem:[%s18 + $0x38] sm:$0xf]
        %v4684 = vld [vmem:[%s18 + $0x3c] sm:$0xf]
        %v4685 = vld [vmem:[%s18 + $0x40] sm:$0xf]
        %v4686 = vld [vmem:[%s18 + $0x44] sm:$0xf]
        %v4687 = vld [vmem:[%s18 + $0x48] sm:$0xf]
        %v4688 = vld [vmem:[%s18 + $0x4c] sm:$0xf]
        %v4689 = vld [vmem:[%s18 + $0x50] sm:$0xf]
        %v4690 = vld [vmem:[%s18 + $0x54] sm:$0xf]
        %v4691 = vld [vmem:[%s18 + $0x58] sm:$0xf]
        %v4692 = vld [vmem:[%s18 + $0x5c] sm:$0xf]
        %v4693 = vld [vmem:[%s18 + $0x60] sm:$0xf]
        %v4694 = vld [vmem:[%s18 + $0x64] sm:$0xf]
        %v4695 = vld [vmem:[%s18 + $0x68] sm:$0xf]
        %v4696 = vld [vmem:[%s18 + $0x6c] sm:$0xf]
        %v4697 = vld [vmem:[%s18 + $0x70] sm:$0xf]
        %v4698 = vld [vmem:[%s18 + $0x74] sm:$0xf]
        %v4699 = vld [vmem:[%s18 + $0x78] sm:$0xf]
        %v4700 = vld [vmem:[%s18 + $0x7c] sm:$0xf]
        %v4701 = vld [vmem:[#allocation21] sm:$0x1]
        %v4703 = vlaneseq
        %v4704 = vshrl.u32 %v4703, 7
        %v4705 = vsub.s32 0, %v4704
        %v4706 = vrot.slane %v4701, %v4705
        %v4740 = vunpack.c.l.b16 %v4669
        %v4741 = vunpack.c.l.b16 %v4670
        %v4742 = vunpack.c.l.b16 %v4671
        %v4743 = vunpack.c.l.b16 %v4672
        %v4744 = vunpack.c.l.b16 %v4673
        %v4745 = vunpack.c.l.b16 %v4674
        %v4746 = vunpack.c.l.b16 %v4675
        %v4747 = vunpack.c.l.b16 %v4676
        %v4748 = vunpack.c.l.b16 %v4677
        %v4749 = vunpack.c.l.b16 %v4678
        %v4750 = vunpack.c.l.b16 %v4679
        %v4751 = vunpack.c.l.b16 %v4680
        %v4752 = vunpack.c.l.b16 %v4681
        %v4753 = vunpack.c.l.b16 %v4682
        %v4754 = vunpack.c.l.b16 %v4683
        %v4755 = vunpack.c.l.b16 %v4684
        %v4756 = vunpack.c.l.b16 %v4685
        %v4757 = vunpack.c.l.b16 %v4686
        %v4758 = vunpack.c.l.b16 %v4687
        %v4759 = vunpack.c.l.b16 %v4688
        %v4760 = vunpack.c.l.b16 %v4689
        %v4761 = vunpack.c.l.b16 %v4690
        %v4762 = vunpack.c.l.b16 %v4691
        %v4763 = vunpack.c.l.b16 %v4692
        %v4764 = vunpack.c.l.b16 %v4693
        %v4765 = vunpack.c.l.b16 %v4694
        %v4766 = vunpack.c.l.b16 %v4695
        %v4767 = vunpack.c.l.b16 %v4696
        %v4768 = vunpack.c.l.b16 %v4697
        %v4769 = vunpack.c.l.b16 %v4698
        %v4770 = vunpack.c.l.b16 %v4699
        %v4771 = vunpack.c.l.b16 %v4700
        %v4772 = vpack.c.b16 %v4741, %v4740
        %v4773 = vpack.c.b16 %v4743, %v4742
        %v4774 = vpack.c.b16 %v4745, %v4744
        %v4775 = vpack.c.b16 %v4747, %v4746
        %v4776 = vpack.c.b16 %v4749, %v4748
        %v4777 = vpack.c.b16 %v4751, %v4750
        %v4778 = vpack.c.b16 %v4753, %v4752
        %v4779 = vpack.c.b16 %v4755, %v4754
        %v4780 = vpack.c.b16 %v4757, %v4756
        %v4781 = vpack.c.b16 %v4759, %v4758
        %v4782 = vpack.c.b16 %v4761, %v4760
        %v4783 = vpack.c.b16 %v4763, %v4762
        %v4784 = vpack.c.b16 %v4765, %v4764
        %v4785 = vpack.c.b16 %v4767, %v4766
        %v4786 = vpack.c.b16 %v4769, %v4768
        %v4787 = vpack.c.b16 %v4771, %v4770
        %4804 = vmatprep.subr.bf16.mxu0 0
        %4805 = vmatpush1.bf16.msra.mxu0 %v4772
        %4806 = vmatprep.subr.bf16.mxu0 0
        %4807 = vmatpush1.bf16.msra.mxu0 %v4773
        %4808 = vmatprep.subr.bf16.mxu0 0
        %4809 = vmatpush1.bf16.msra.mxu0 %v4774
        %4810 = vmatprep.subr.bf16.mxu0 0
        %4811 = vmatpush1.bf16.msra.mxu0 %v4775
        %4812 = vmatprep.subr.bf16.mxu0 0
        %4813 = vmatpush1.bf16.msra.mxu0 %v4776
        %4814 = vmatprep.subr.bf16.mxu0 0
        %4815 = vmatpush1.bf16.msra.mxu0 %v4777
        %4816 = vmatprep.subr.bf16.mxu0 0
        %4817 = vmatpush1.bf16.msra.mxu0 %v4778
        %4818 = vmatprep.subr.bf16.mxu0 0
        %4819 = vmatpush1.bf16.msra.mxu0 %v4779
        %4820 = vmatprep.subr.bf16.mxu0 0
        %4821 = vmatpush1.bf16.msra.mxu0 %v4780
        %4822 = vmatprep.subr.bf16.mxu0 0
        %4823 = vmatpush1.bf16.msra.mxu0 %v4781
        %4824 = vmatprep.subr.bf16.mxu0 0
        %4825 = vmatpush1.bf16.msra.mxu0 %v4782
        %4826 = vmatprep.subr.bf16.mxu0 0
        %4827 = vmatpush1.bf16.msra.mxu0 %v4783
        %4828 = vmatprep.subr.bf16.mxu0 0
        %4829 = vmatpush1.bf16.msra.mxu0 %v4784
        %4830 = vmatprep.subr.bf16.mxu0 0
        %4831 = vmatpush1.bf16.msra.mxu0 %v4785
        %4832 = vmatprep.subr.bf16.mxu0 0
        %4833 = vmatpush1.bf16.msra.mxu0 %v4786
        %4834 = vmatprep.subr.bf16.mxu0 0
        %4835 = vmatpush1.bf16.msra.mxu0 %v4787
        %4836 = vmatprep.mubr.bf16.mxu0 %v4668
        %4837 = vmatmul.mubr.bf16.gmra.mrb[0].mxu0 %v4667
        %v4838 = vpop.f32.mrb[0].mxu0
        %v4839 = vadd.f32 %v4706, %v4838
        %v4840 = vpop.f32.mrb[0].mxu0
        %v4841 = vpop.f32.mrb[0].mxu0
        %v4842 = vadd.f32 %v4706, %v4841
        %v4843 = vpop.f32.mrb[0].mxu0
        %4844 = vdwg.mxu0
        %v4845 = vmax.f32 %v4839, 0.0
        %v4846 = vmax.f32 %v4842, 0.0
        %v4847 = vld [vmem:[%s19] sm:$0xf]
        %v4848 = vld [vmem:[%s19 + $0x4] sm:$0xf]
        %v4849 = vld [vmem:[%s19 + $0x8] sm:$0xf]
        %v4850 = vld [vmem:[%s19 + $0xc] sm:$0xf]
        %v4851 = vld [vmem:[%s19 + $0x10] sm:$0xf]
        %v4852 = vld [vmem:[%s19 + $0x14] sm:$0xf]
        %v4853 = vld [vmem:[%s19 + $0x18] sm:$0xf]
        %v4854 = vld [vmem:[%s19 + $0x1c] sm:$0xf]
        %v4855 = vld [vmem:[%s19 + $0x20] sm:$0xf]
        %v4856 = vld [vmem:[%s19 + $0x24] sm:$0xf]
        %v4857 = vld [vmem:[%s19 + $0x28] sm:$0xf]
        %v4858 = vld [vmem:[%s19 + $0x2c] sm:$0xf]
        %v4859 = vld [vmem:[%s19 + $0x30] sm:$0xf]
        %v4860 = vld [vmem:[%s19 + $0x34] sm:$0xf]
        %v4861 = vld [vmem:[%s19 + $0x38] sm:$0xf]
        %v4862 = vld [vmem:[%s19 + $0x3c] sm:$0xf]
        %v4863 = vld [vmem:[%s19 + $0x40] sm:$0xf]
        %v4864 = vld [vmem:[%s19 + $0x44] sm:$0xf]
        %v4865 = vld [vmem:[%s19 + $0x48] sm:$0xf]
        %v4866 = vld [vmem:[%s19 + $0x4c] sm:$0xf]
        %v4867 = vld [vmem:[%s19 + $0x50] sm:$0xf]
        %v4868 = vld [vmem:[%s19 + $0x54] sm:$0xf]
        %v4869 = vld [vmem:[%s19 + $0x58] sm:$0xf]
        %v4870 = vld [vmem:[%s19 + $0x5c] sm:$0xf]
        %v4871 = vld [vmem:[%s19 + $0x60] sm:$0xf]
        %v4872 = vld [vmem:[%s19 + $0x64] sm:$0xf]
        %v4873 = vld [vmem:[%s19 + $0x68] sm:$0xf]
        %v4874 = vld [vmem:[%s19 + $0x6c] sm:$0xf]
        %v4875 = vld [vmem:[%s19 + $0x70] sm:$0xf]
        %v4876 = vld [vmem:[%s19 + $0x74] sm:$0xf]
        %v4877 = vld [vmem:[%s19 + $0x78] sm:$0xf]
        %v4878 = vld [vmem:[%s19 + $0x7c] sm:$0xf]
        %v4911 = vunpack.c.l.b16 %v4847
        %v4912 = vunpack.c.l.b16 %v4848
        %v4913 = vunpack.c.l.b16 %v4849
        %v4914 = vunpack.c.l.b16 %v4850
        %v4915 = vunpack.c.l.b16 %v4851
        %v4916 = vunpack.c.l.b16 %v4852
        %v4917 = vunpack.c.l.b16 %v4853
        %v4918 = vunpack.c.l.b16 %v4854
        %v4919 = vunpack.c.l.b16 %v4855
        %v4920 = vunpack.c.l.b16 %v4856
        %v4921 = vunpack.c.l.b16 %v4857
        %v4922 = vunpack.c.l.b16 %v4858
        %v4923 = vunpack.c.l.b16 %v4859
        %v4924 = vunpack.c.l.b16 %v4860
        %v4925 = vunpack.c.l.b16 %v4861
        %v4926 = vunpack.c.l.b16 %v4862
        %v4927 = vunpack.c.l.b16 %v4863
        %v4928 = vunpack.c.l.b16 %v4864
        %v4929 = vunpack.c.l.b16 %v4865
        %v4930 = vunpack.c.l.b16 %v4866
        %v4931 = vunpack.c.l.b16 %v4867
        %v4932 = vunpack.c.l.b16 %v4868
        %v4933 = vunpack.c.l.b16 %v4869
        %v4934 = vunpack.c.l.b16 %v4870
        %v4935 = vunpack.c.l.b16 %v4871
        %v4936 = vunpack.c.l.b16 %v4872
        %v4937 = vunpack.c.l.b16 %v4873
        %v4938 = vunpack.c.l.b16 %v4874
        %v4939 = vunpack.c.l.b16 %v4875
        %v4940 = vunpack.c.l.b16 %v4876
        %v4941 = vunpack.c.l.b16 %v4877
        %v4942 = vunpack.c.l.b16 %v4878
        %v4943 = vpack.c.b16 %v4912, %v4911
        %v4944 = vpack.c.b16 %v4914, %v4913
        %v4945 = vpack.c.b16 %v4916, %v4915
        %v4946 = vpack.c.b16 %v4918, %v4917
        %v4947 = vpack.c.b16 %v4920, %v4919
        %v4948 = vpack.c.b16 %v4922, %v4921
        %v4949 = vpack.c.b16 %v4924, %v4923
        %v4950 = vpack.c.b16 %v4926, %v4925
        %v4951 = vpack.c.b16 %v4928, %v4927
        %v4952 = vpack.c.b16 %v4930, %v4929
        %v4953 = vpack.c.b16 %v4932, %v4931
        %v4954 = vpack.c.b16 %v4934, %v4933
        %v4955 = vpack.c.b16 %v4936, %v4935
        %v4956 = vpack.c.b16 %v4938, %v4937
        %v4957 = vpack.c.b16 %v4940, %v4939
        %v4958 = vpack.c.b16 %v4942, %v4941
        %4975 = vmatprep.subr.bf16.mxu0 0
        %4976 = vmatpush1.bf16.msra.mxu0 %v4943
        %4977 = vmatprep.subr.bf16.mxu0 0
        %4978 = vmatpush1.bf16.msra.mxu0 %v4944
        %4979 = vmatprep.subr.bf16.mxu0 0
        %4980 = vmatpush1.bf16.msra.mxu0 %v4945
        %4981 = vmatprep.subr.bf16.mxu0 0
        %4982 = vmatpush1.bf16.msra.mxu0 %v4946
        %4983 = vmatprep.subr.bf16.mxu0 0
        %4984 = vmatpush1.bf16.msra.mxu0 %v4947
        %4985 = vmatprep.subr.bf16.mxu0 0
        %4986 = vmatpush1.bf16.msra.mxu0 %v4948
        %4987 = vmatprep.subr.bf16.mxu0 0
        %4988 = vmatpush1.bf16.msra.mxu0 %v4949
        %4989 = vmatprep.subr.bf16.mxu0 0
        %4990 = vmatpush1.bf16.msra.mxu0 %v4950
        %4991 = vmatprep.subr.bf16.mxu0 0
        %4992 = vmatpush1.bf16.msra.mxu0 %v4951
        %4993 = vmatprep.subr.bf16.mxu0 0
        %4994 = vmatpush1.bf16.msra.mxu0 %v4952
        %4995 = vmatprep.subr.bf16.mxu0 0
        %4996 = vmatpush1.bf16.msra.mxu0 %v4953
        %4997 = vmatprep.subr.bf16.mxu0 0
        %4998 = vmatpush1.bf16.msra.mxu0 %v4954
        %4999 = vmatprep.subr.bf16.mxu0 0
        %5000 = vmatpush1.bf16.msra.mxu0 %v4955
        %5001 = vmatprep.subr.bf16.mxu0 0
        %5002 = vmatpush1.bf16.msra.mxu0 %v4956
        %5003 = vmatprep.subr.bf16.mxu0 0
        %5004 = vmatpush1.bf16.msra.mxu0 %v4957
        %5005 = vmatprep.subr.bf16.mxu0 0
        %5006 = vmatpush1.bf16.msra.mxu0 %v4958
        %5007 = vmatprep.mubr.bf16.mxu0 %v4668
        %5008 = vmatmul.mubr.bf16.gmra.mrb[0].mxu0 %v4667
        %v5009 = vpop.f32.mrb[0].mxu0
        %v5010 = vadd.f32 %v4706, %v5009
        %v5011 = vpop.f32.mrb[0].mxu0
        %v5012 = vpop.f32.mrb[0].mxu0
        %v5013 = vadd.f32 %v4706, %v5012
        %v5014 = vpop.f32.mrb[0].mxu0
        %5015 = vdwg.mxu0
        %v5016 = vmax.f32 %v5010, 0.0
        %v5017 = vmax.f32 %v5013, 0.0
        %v5018 = vmax.f32 %v4845, %v5016
        %v5019 = vmax.f32 %v4846, %v5017
        %v5020 = vadd.f32 %v4312, %v4665
        %v5021 = vadd.f32 %v4313, %v4666
        %vm5022 = vcmask 392192
        %5023 = vst.msk [vmem:[%s946] sm:$0xff] %vm5022, %v5020
        %5024 = vst.msk [vmem:[%s946 + $0x8] sm:$0xff] %vm5022, %v5021
        %v5025 = vadd.f32 %v5018, %v4665
        %v5026 = vadd.f32 %v5019, %v4666
        %5027 = vst.msk [vmem:[%s952] sm:$0xff] %vm5022, %v5025
        %5028 = vst.msk [vmem:[%s952 + $0x8] sm:$0xff] %vm5022, %v5026
        %s5029 = smul.u32 2, %s43
        %p5030 = scmp.lt.s32.totalorder %s5029, 3
        %s5031 = scalar_select %p5030, %s5029, 3
        %s5032 = smul.addr %s5031, 8
        %s5033 = scalar_lea.vmem %s23, %s5032
        %s5034 = smul.u32 2, %s43
        %p5035 = scmp.lt.s32.totalorder %s5034, 3
        %s5036 = scalar_select %p5035, %s5034, 3
        %s5037 = smul.addr %s5036, 8
        %s5038 = scalar_lea.vmem %s24, %s5037
        // Predicated region
        $region165: #{state_detection_forward.2} parent=111 // pred_check
          %p5039 = pneg %p554
        $region166: #{state_detection_forward.2} parent=111 // pred_check_branch
          %5041 = sbr.rel (%p5039) target = $region168
        $region167: #{state_detection_forward.2} parent=111 // pred_region
          %s5042 = smul.u32 2, %s43
        $region168: #{state_detection_forward.2} parent=111 // pred_fallthru
          _
        // Predicated region
        $region169: #{state_detection_forward.2} parent=111 // pred_check
          %p5043 = pneg %p580
        $region170: #{state_detection_forward.2} parent=111 // pred_check_branch
          %5045 = sbr.rel (%p5043) target = $region172
        $region171: #{state_detection_forward.2} parent=111 // pred_region
          %s5046 = smul.u32 2, %s43
        $region172: #{state_detection_forward.2} parent=111 // pred_fallthru
          _
      $region112: #{state_detection_forward.2} parent=5 // pred_fallthru
        _
      %p5047 = scmp.le.s32.totalorder 2, %s38
      // Predicated region
      $region173: #{state_detection_forward.2} parent=5 // pred_check
        %p5048 = pneg %p5047
      $region174: #{state_detection_forward.2} parent=5 // pred_check_branch
        %5050 = sbr.rel (%p5048) target = $region176
      $region175: #{state_detection_forward.2} parent=5 // pred_region
        %s5051 = ssub.s32 %s38, 2
        // Predicated region
        $region177: #{state_detection_forward.2} parent=175 // pred_check
          %p5052 = pneg %p560
        $region178: #{state_detection_forward.2} parent=175 // pred_check_branch
          %5054 = sbr.rel (%p5052) target = $region180
        $region179: #{state_detection_forward.2} parent=175 // pred_region
          %s5055 = smul.u32 2, %s44
          %p5056 = scmp.lt.s32.totalorder %s5055, 3
          %s5057 = scalar_select %p5056, %s5055, 3
          %s5058 = smul.addr %s5057, 8
          %s5059 = scalar_lea.vmem %s23, %s5058
        $region180: #{state_detection_forward.2} parent=175 // pred_fallthru
          _
        // Predicated region
        $region181: #{state_detection_forward.2} parent=175 // pred_check
          %p5060 = pneg %p586
        $region182: #{state_detection_forward.2} parent=175 // pred_check_branch
          %5062 = sbr.rel (%p5060) target = $region184
        $region183: #{state_detection_forward.2} parent=175 // pred_region
          %s5063 = smul.u32 2, %s44
          %p5064 = scmp.lt.s32.totalorder %s5063, 3
          %s5065 = scalar_select %p5064, %s5063, 3
          %s5066 = smul.addr %s5065, 8
          %s5067 = scalar_lea.vmem %s24, %s5066
        $region184: #{state_detection_forward.2} parent=175 // pred_fallthru
          _
      $region176: #{state_detection_forward.2} parent=5 // pred_fallthru
        _
    $region6: #{state_detection_forward.2} parent=1 // loop_footer
      %s42 = sadd.s32 1, %s38
    $region7: #{state_detection_forward.2} parent=1 // loop_footer_branch
      %37 = sbr.rel target = $region3
    $region8: #{state_detection_forward.2} parent=1 // loop_exit
      _
    %5068 = vsyncpa [#allocation3], 1
    %s5069 = scalar_lea.sflag [#allocation3], 1
    %5070 = vsyncpa %s5069, 1
    %5071 = vsyncpa [#allocation5], 1
    %5072 = vsyncpa [#allocation8], 1
    %5073 = vsyncpa [#allocation11], 1
    %5074 = vsyncpa [#allocation14], 1
    %5075 = vsyncpa [#allocation17], 1
    %5076 = vsyncpa [#allocation20], 1

// kernel: state_detection_forward.3
$region0: #{state_detection_forward.3}
  #allocation0 [shape = 'u32[]', space=smem, size = 0x4, offset = 0x4, fixed_abs, tag = 'smem constant byte address 0x4 - core index']
  #allocation1 [shape = 'u32[144,128]{1,0:T(1,128)}', space=vmem, size = 0x12000, scoped, tag = 'internal scratch']
  %s0 = inlined_call_operand.vmem [shape: f32[2,768], index: 0, kind: input, shape index: {}]
  %s1 = inlined_call_operand.vmem [shape: f32[2,768], index: 1, kind: input, shape index: {}]
  %s2 = inlined_call_operand.vmem [shape: bf16[768,256], index: 2, kind: input, shape index: {}]
  %s3 = inlined_call_operand.hbm [shape: f32[1,256], index: 3, kind: input, shape index: {}]
  %s4 = inlined_call_operand.vmem [shape: bf16[768,256], index: 4, kind: input, shape index: {}]
  %s5 = inlined_call_operand.hbm [shape: f32[1,256], index: 5, kind: input, shape index: {}]
  %s6 = inlined_call_operand.vmem [shape: bf16[256,128], index: 6, kind: input, shape index: {}]
  %s7 = inlined_call_operand.vmem [shape: f32[1,128], index: 7, kind: input, shape index: {}]
  %s8 = inlined_call_operand.vmem [shape: bf16[256,128], index: 8, kind: input, shape index: {}]
  %s9 = inlined_call_operand.hbm [shape: f32[1,128], index: 9, kind: input, shape index: {}]
  %s10 = inlined_call_operand.vmem [shape: bf16[128,768], index: 10, kind: input, shape index: {}]
  %s11 = inlined_call_operand.hbm [shape: bf16[128,768], index: 11, kind: input, shape index: {}]
  %s12 = inlined_call_operand.hbm [shape: f32[1,768], index: 12, kind: input, shape index: {}]
  %s13 = inlined_call_operand.vmem [shape: bf16[256,1536], index: 13, kind: input, shape index: {}]
  %s14 = inlined_call_operand.vmem [shape: f32[1,1536], index: 14, kind: input, shape index: {}]
  %s15 = inlined_call_operand.vmem [shape: bf16[512,512], index: 15, kind: input, shape index: {}]
  %s16 = inlined_call_operand.hbm [shape: f32[1,512], index: 16, kind: input, shape index: {}]
  %s17 = inlined_call_operand.vmem [shape: bf16[512,4], index: 17, kind: input, shape index: {}]
  %s18 = inlined_call_operand.hbm [shape: f32[1,4], index: 18, kind: input, shape index: {}]
  %s19 = inlined_call_operand.hbm [shape: f32[2,4], index: 19, kind: output, shape index: {}]
  %s20 = sld [smem:[#allocation0]]
  $region114: #{state_detection_forward.3} parent=0
    _
  %s22 = ssub.s32 1, %s20
  %s23 = scalar_select 0, %s22, %s20
  $region1: #{state_detection_forward.3} parent=0
    #allocation2 [shape = 'u8[1024]{0}', space=vmem, size = 0x400, scoped, tag = 'input window, operand 3, single buffered']
    #allocation3 [shape = 's32[1]{0}', space=sflag, size = 0x4, scoped, tag = 'scoped memory for state_detection_forward.3']
    #allocation4 [shape = 's32[1]{0}', space=sflag, size = 0x4, scoped, tag = 'scoped memory for state_detection_forward.3']
    #allocation5 [shape = 'u8[1024]{0}', space=vmem, size = 0x400, scoped, tag = 'input window, operand 5, single buffered']
    #allocation6 [shape = 's32[1]{0}', space=sflag, size = 0x4, scoped, tag = 'scoped memory for state_detection_forward.3']
    #allocation7 [shape = 'u8[512]{0}', space=vmem, size = 0x400, scoped, tag = 'input window, operand 9, single buffered']
    #allocation8 [shape = 'u8[196608]{0}', space=vmem, size = 0x30000, scoped, tag = 'input window, operand 11, single buffered']
    #allocation9 [shape = 's32[1]{0}', space=sflag, size = 0x4, scoped, tag = 'scoped memory for state_detection_forward.3']
    #allocation10 [shape = 'u8[3072]{0}', space=vmem, size = 0xc00, scoped, tag = 'input window, operand 12, single buffered']
    #allocation11 [shape = 'u8[2048]{0}', space=vmem, size = 0x800, scoped, tag = 'input window, operand 16, single buffered']
    #allocation12 [shape = 's32[1]{0}', space=sflag, size = 0x4, scoped, tag = 'scoped memory for state_detection_forward.3']
    #allocation13 [shape = 'u8[512]{0}', space=vmem, size = 0x400, scoped, tag = 'input window, operand 18, single buffered']
    #allocation14 [shape = 'u8[1024]{0}', space=vmem, size = 0x400, scoped, tag = 'output window, operand 0, single buffered']
    %24 = vsyncpa [#allocation3], 0
    %25 = vsyncpa [#allocation6], 0
    %26 = vsyncpa [#allocation9], 0
    %27 = vsyncpa [#allocation12], 0
    %28 = vsyncpa [#allocation4], 0
    // Predicated region
    $region2: #{state_detection_forward.3} parent=1 // pred_check
      _
    $region3: #{state_detection_forward.3} parent=1 // pred_check_branch
      %30 = sbr.rel (0) target = $region5
    $region4: #{state_detection_forward.3} parent=1 // pred_region
      _
    $region5: #{state_detection_forward.3} parent=1 // pred_fallthru
      _
    // Predicated region
    $region6: #{state_detection_forward.3} parent=1 // pred_check
      _
    $region7: #{state_detection_forward.3} parent=1 // pred_check_branch
      %32 = sbr.rel (0) target = $region9
    $region8: #{state_detection_forward.3} parent=1 // pred_region
      _
    $region9: #{state_detection_forward.3} parent=1 // pred_fallthru
      _
    // Predicated region
    $region10: #{state_detection_forward.3} parent=1 // pred_check
      _
    $region11: #{state_detection_forward.3} parent=1 // pred_check_branch
      %34 = sbr.rel (0) target = $region13
    $region12: #{state_detection_forward.3} parent=1 // pred_region
      _
    $region13: #{state_detection_forward.3} parent=1 // pred_fallthru
      _
    // Predicated region
    $region14: #{state_detection_forward.3} parent=1 // pred_check
      _
    $region15: #{state_detection_forward.3} parent=1 // pred_check_branch
      %36 = sbr.rel (0) target = $region17
    $region16: #{state_detection_forward.3} parent=1 // pred_region
      %s38 = ssub.s32 32, 32
      %39 = vsyncadd [#allocation3], %s38
      %s41 = sshll.u32 [#allocation2], 4
      %s42 = int_to_ptr.vmem [resolvable:$true] %s41
      %44 = dma.hbm_to_vmem [thread:$0]  %s3, 32, %s42, [#allocation3]
    $region17: #{state_detection_forward.3} parent=1 // pred_fallthru
      _
    // Predicated region
    $region18: #{state_detection_forward.3} parent=1 // pred_check
      _
    $region19: #{state_detection_forward.3} parent=1 // pred_check_branch
      %46 = sbr.rel (0) target = $region21
    $region20: #{state_detection_forward.3} parent=1 // pred_region
      _
    $region21: #{state_detection_forward.3} parent=1 // pred_fallthru
      _
    // Predicated region
    $region22: #{state_detection_forward.3} parent=1 // pred_check
      _
    $region23: #{state_detection_forward.3} parent=1 // pred_check_branch
      %48 = sbr.rel (0) target = $region25
    $region24: #{state_detection_forward.3} parent=1 // pred_region
      %s50 = ssub.s32 32, 32
      %51 = vsyncadd [#allocation6], %s50
      %s53 = sshll.u32 [#allocation5], 4
      %s54 = int_to_ptr.vmem [resolvable:$true] %s53
      %56 = dma.hbm_to_vmem [thread:$0]  %s5, 32, %s54, [#allocation6]
    $region25: #{state_detection_forward.3} parent=1 // pred_fallthru
      _
    // Predicated region
    $region26: #{state_detection_forward.3} parent=1 // pred_check
      _
    $region27: #{state_detection_forward.3} parent=1 // pred_check_branch
      %58 = sbr.rel (0) target = $region29
    $region28: #{state_detection_forward.3} parent=1 // pred_region
      _
    $region29: #{state_detection_forward.3} parent=1 // pred_fallthru
      _
    // Predicated region
    $region30: #{state_detection_forward.3} parent=1 // pred_check
      _
    $region31: #{state_detection_forward.3} parent=1 // pred_check_branch
      %60 = sbr.rel (0) target = $region33
    $region32: #{state_detection_forward.3} parent=1 // pred_region
      _
    $region33: #{state_detection_forward.3} parent=1 // pred_fallthru
      _
    // Predicated region
    $region34: #{state_detection_forward.3} parent=1 // pred_check
      _
    $region35: #{state_detection_forward.3} parent=1 // pred_check_branch
      %62 = sbr.rel (0) target = $region37
    $region36: #{state_detection_forward.3} parent=1 // pred_region
      _
    $region37: #{state_detection_forward.3} parent=1 // pred_fallthru
      _
    // Predicated region
    $region38: #{state_detection_forward.3} parent=1 // pred_check
      _
    $region39: #{state_detection_forward.3} parent=1 // pred_check_branch
      %64 = sbr.rel (0) target = $region41
    $region40: #{state_detection_forward.3} parent=1 // pred_region
      %s66 = ssub.s32 16, 16
      %67 = vsyncadd [#allocation6], %s66
      %s69 = sshll.u32 [#allocation7], 4
      %s70 = int_to_ptr.vmem [resolvable:$true] %s69
      %72 = dma.hbm_to_vmem [thread:$0]  %s9, 16, %s70, [#allocation6]
    $region41: #{state_detection_forward.3} parent=1 // pred_fallthru
      _
    // Predicated region
    $region42: #{state_detection_forward.3} parent=1 // pred_check
      _
    $region43: #{state_detection_forward.3} parent=1 // pred_check_branch
      %74 = sbr.rel (0) target = $region45
    $region44: #{state_detection_forward.3} parent=1 // pred_region
      _
    $region45: #{state_detection_forward.3} parent=1 // pred_fallthru
      _
    // Predicated region
    $region46: #{state_detection_forward.3} parent=1 // pred_check
      _
    $region47: #{state_detection_forward.3} parent=1 // pred_check_branch
      %76 = sbr.rel (0) target = $region49
    $region48: #{state_detection_forward.3} parent=1 // pred_region
      %s78 = ssub.s32 6144, 6144
      %79 = vsyncadd [#allocation9], %s78
      %s80 = sshll.u32 [#allocation8], 4
      %s81 = int_to_ptr.vmem [resolvable:$true] %s80
      %86 = dma.hbm_to_vmem [thread:$0]  %s11, 6144, %s81, [#allocation9], 384, 384, 24
    $region49: #{state_detection_forward.3} parent=1 // pred_fallthru
      _
    // Predicated region
    $region50: #{state_detection_forward.3} parent=1 // pred_check
      _
    $region51: #{state_detection_forward.3} parent=1 // pred_check_branch
      %88 = sbr.rel (0) target = $region53
    $region52: #{state_detection_forward.3} parent=1 // pred_region
      %s90 = ssub.s32 96, 96
      %91 = vsyncadd [#allocation9], %s90
      %s93 = sshll.u32 [#allocation10], 4
      %s94 = int_to_ptr.vmem [resolvable:$true] %s93
      %96 = dma.hbm_to_vmem [thread:$0]  %s12, 96, %s94, [#allocation9]
    $region53: #{state_detection_forward.3} parent=1 // pred_fallthru
      _
    // Predicated region
    $region54: #{state_detection_forward.3} parent=1 // pred_check
      _
    $region55: #{state_detection_forward.3} parent=1 // pred_check_branch
      %98 = sbr.rel (0) target = $region57
    $region56: #{state_detection_forward.3} parent=1 // pred_region
      _
    $region57: #{state_detection_forward.3} parent=1 // pred_fallthru
      _
    // Predicated region
    $region58: #{state_detection_forward.3} parent=1 // pred_check
      _
    $region59: #{state_detection_forward.3} parent=1 // pred_check_branch
      %100 = sbr.rel (0) target = $region61
    $region60: #{state_detection_forward.3} parent=1 // pred_region
      _
    $region61: #{state_detection_forward.3} parent=1 // pred_fallthru
      _
    // Predicated region
    $region62: #{state_detection_forward.3} parent=1 // pred_check
      _
    $region63: #{state_detection_forward.3} parent=1 // pred_check_branch
      %102 = sbr.rel (0) target = $region65
    $region64: #{state_detection_forward.3} parent=1 // pred_region
      _
    $region65: #{state_detection_forward.3} parent=1 // pred_fallthru
      _
    // Predicated region
    $region66: #{state_detection_forward.3} parent=1 // pred_check
      _
    $region67: #{state_detection_forward.3} parent=1 // pred_check_branch
      %104 = sbr.rel (0) target = $region69
    $region68: #{state_detection_forward.3} parent=1 // pred_region
      %s106 = ssub.s32 64, 64
      %107 = vsyncadd [#allocation12], %s106
      %s109 = sshll.u32 [#allocation11], 4
      %s110 = int_to_ptr.vmem [resolvable:$true] %s109
      %112 = dma.hbm_to_vmem [thread:$0]  %s16, 64, %s110, [#allocation12]
    $region69: #{state_detection_forward.3} parent=1 // pred_fallthru
      _
    // Predicated region
    $region70: #{state_detection_forward.3} parent=1 // pred_check
      _
    $region71: #{state_detection_forward.3} parent=1 // pred_check_branch
      %114 = sbr.rel (0) target = $region73
    $region72: #{state_detection_forward.3} parent=1 // pred_region
      _
    $region73: #{state_detection_forward.3} parent=1 // pred_fallthru
      _
    // Predicated region
    $region74: #{state_detection_forward.3} parent=1 // pred_check
      _
    $region75: #{state_detection_forward.3} parent=1 // pred_check_branch
      %116 = sbr.rel (0) target = $region77
    $region76: #{state_detection_forward.3} parent=1 // pred_region
      %s118 = ssub.s32 16, 16
      %119 = vsyncadd [#allocation12], %s118
      %s121 = sshll.u32 [#allocation13], 4
      %s122 = int_to_ptr.vmem [resolvable:$true] %s121
      %124 = dma.hbm_to_vmem [thread:$0]  %s18, 16, %s122, [#allocation12]
    $region77: #{state_detection_forward.3} parent=1 // pred_fallthru
      _
    // Predicated region
    $region78: #{state_detection_forward.3} parent=1 // pred_check
      _
    $region79: #{state_detection_forward.3} parent=1 // pred_check_branch
      %126 = sbr.rel (0) target = $region81
    $region80: #{state_detection_forward.3} parent=1 // pred_region
      %127 = dma.done [#allocation3], 32
    $region81: #{state_detection_forward.3} parent=1 // pred_fallthru
      _
    // Predicated region
    $region82: #{state_detection_forward.3} parent=1 // pred_check
      _
    $region83: #{state_detection_forward.3} parent=1 // pred_check_branch
      %129 = sbr.rel (0) target = $region85
    $region84: #{state_detection_forward.3} parent=1 // pred_region
      %130 = dma.done [#allocation6], 32
    $region85: #{state_detection_forward.3} parent=1 // pred_fallthru
      _
    // Predicated region
    $region86: #{state_detection_forward.3} parent=1 // pred_check
      _
    $region87: #{state_detection_forward.3} parent=1 // pred_check_branch
      %132 = sbr.rel (0) target = $region89
    $region88: #{state_detection_forward.3} parent=1 // pred_region
      %133 = dma.done [#allocation6], 16
    $region89: #{state_detection_forward.3} parent=1 // pred_fallthru
      _
    // Predicated region
    $region90: #{state_detection_forward.3} parent=1 // pred_check
      _
    $region91: #{state_detection_forward.3} parent=1 // pred_check_branch
      %135 = sbr.rel (0) target = $region93
    $region92: #{state_detection_forward.3} parent=1 // pred_region
      %136 = dma.done [#allocation9], 6144
    $region93: #{state_detection_forward.3} parent=1 // pred_fallthru
      _
    // Predicated region
    $region94: #{state_detection_forward.3} parent=1 // pred_check
      _
    $region95: #{state_detection_forward.3} parent=1 // pred_check_branch
      %138 = sbr.rel (0) target = $region97
    $region96: #{state_detection_forward.3} parent=1 // pred_region
      %139 = dma.done [#allocation9], 96
    $region97: #{state_detection_forward.3} parent=1 // pred_fallthru
      _
    // Predicated region
    $region98: #{state_detection_forward.3} parent=1 // pred_check
      _
    $region99: #{state_detection_forward.3} parent=1 // pred_check_branch
      %141 = sbr.rel (0) target = $region101
    $region100: #{state_detection_forward.3} parent=1 // pred_region
      %142 = dma.done [#allocation12], 64
    $region101: #{state_detection_forward.3} parent=1 // pred_fallthru
      _
    // Predicated region
    $region102: #{state_detection_forward.3} parent=1 // pred_check
      _
    $region103: #{state_detection_forward.3} parent=1 // pred_check_branch
      %144 = sbr.rel (0) target = $region105
    $region104: #{state_detection_forward.3} parent=1 // pred_region
      %145 = dma.done [#allocation12], 16
    $region105: #{state_detection_forward.3} parent=1 // pred_fallthru
      _
    %v147 = vld [vmem:[%s0] sm:$0xff]
    %v148 = vld [vmem:[%s0 + $0x8] sm:$0xf]
    %v151 = vcombine.high %v147, %v147
    %v153 = vunpack.c.l.s4 1983009808
    %v154 = vunpack.c.0.s8 %v153
    %v155 = vlaneseq
    %v156 = vshrl.u32 %v155, 7
    %v157 = vsub.s32 %v154, %v156
    %v158 = vrot.slane %v147, %v157
    %v160 = vunpack.c.l.s4 1983009808
    %v161 = vunpack.c.0.s8 %v160
    %v162 = vlaneseq
    %v163 = vshrl.u32 %v162, 7
    %v164 = vsub.s32 %v161, %v163
    %v165 = vrot.slane %v151, %v164
    %v166 = vcombine.high %v158, %v158
    %v167 = vcombine.high %v165, %v165
    %v169 = vunpack.c.l.s4 1983009808
    %v170 = vunpack.c.0.s8 %v169
    %v171 = vlaneseq
    %v172 = vshrl.u32 %v171, 7
    %v173 = vsub.s32 %v170, %v172
    %v174 = vrot.slane %v148, %v173
    %v175 = vcombine.high %v174, %v174
    %v182 = vpack.c.bf16 %v158, %v158
    %v183 = vpack.c.bf16 %v166, %v166
    %v184 = vpack.c.bf16 %v165, %v165
    %v185 = vpack.c.bf16 %v167, %v167
    %v186 = vpack.c.bf16 %v174, %v174
    %v187 = vpack.c.bf16 %v175, %v175
    %v188 = vld [vmem:[%s2] sm:$0xff]
    %v189 = vld [vmem:[%s2 + $0x8] sm:$0xff]
    %v190 = vld [vmem:[%s2 + $0x10] sm:$0xff]
    %v191 = vld [vmem:[%s2 + $0x18] sm:$0xff]
    %v192 = vld [vmem:[%s2 + $0x20] sm:$0xff]
    %v193 = vld [vmem:[%s2 + $0x28] sm:$0xff]
    %v194 = vld [vmem:[%s2 + $0x30] sm:$0xff]
    %v195 = vld [vmem:[%s2 + $0x38] sm:$0xff]
    %v196 = vld [vmem:[%s2 + $0x40] sm:$0xff]
    %v197 = vld [vmem:[%s2 + $0x48] sm:$0xff]
    %v198 = vld [vmem:[%s2 + $0x50] sm:$0xff]
    %v199 = vld [vmem:[%s2 + $0x58] sm:$0xff]
    %v200 = vld [vmem:[%s2 + $0x60] sm:$0xff]
    %v201 = vld [vmem:[%s2 + $0x68] sm:$0xff]
    %v202 = vld [vmem:[%s2 + $0x70] sm:$0xff]
    %v203 = vld [vmem:[%s2 + $0x78] sm:$0xff]
    %v204 = vld [vmem:[%s2 + $0x80] sm:$0xff]
    %v205 = vld [vmem:[%s2 + $0x88] sm:$0xff]
    %v206 = vld [vmem:[%s2 + $0x90] sm:$0xff]
    %v207 = vld [vmem:[%s2 + $0x98] sm:$0xff]
    %v208 = vld [vmem:[%s2 + $0xa0] sm:$0xff]
    %v209 = vld [vmem:[%s2 + $0xa8] sm:$0xff]
    %v210 = vld [vmem:[%s2 + $0xb0] sm:$0xff]
    %v211 = vld [vmem:[%s2 + $0xb8] sm:$0xff]
    %v212 = vld [vmem:[%s2 + $0xc0] sm:$0xff]
    %v213 = vld [vmem:[%s2 + $0xc8] sm:$0xff]
    %v214 = vld [vmem:[%s2 + $0xd0] sm:$0xff]
    %v215 = vld [vmem:[%s2 + $0xd8] sm:$0xff]
    %v216 = vld [vmem:[%s2 + $0xe0] sm:$0xff]
    %v217 = vld [vmem:[%s2 + $0xe8] sm:$0xff]
    %v218 = vld [vmem:[%s2 + $0xf0] sm:$0xff]
    %v219 = vld [vmem:[%s2 + $0xf8] sm:$0xff]
    %v220 = vld [vmem:[%s2 + $0x100] sm:$0xff]
    %v221 = vld [vmem:[%s2 + $0x108] sm:$0xff]
    %v222 = vld [vmem:[%s2 + $0x110] sm:$0xff]
    %v223 = vld [vmem:[%s2 + $0x118] sm:$0xff]
    %v224 = vld [vmem:[%s2 + $0x120] sm:$0xff]
    %v225 = vld [vmem:[%s2 + $0x128] sm:$0xff]
    %v226 = vld [vmem:[%s2 + $0x130] sm:$0xff]
    %v227 = vld [vmem:[%s2 + $0x138] sm:$0xff]
    %v228 = vld [vmem:[%s2 + $0x140] sm:$0xff]
    %v229 = vld [vmem:[%s2 + $0x148] sm:$0xff]
    %v230 = vld [vmem:[%s2 + $0x150] sm:$0xff]
    %v231 = vld [vmem:[%s2 + $0x158] sm:$0xff]
    %v232 = vld [vmem:[%s2 + $0x160] sm:$0xff]
    %v233 = vld [vmem:[%s2 + $0x168] sm:$0xff]
    %v234 = vld [vmem:[%s2 + $0x170] sm:$0xff]
    %v235 = vld [vmem:[%s2 + $0x178] sm:$0xff]
    %v236 = vld [vmem:[%s2 + $0x180] sm:$0xff]
    %v237 = vld [vmem:[%s2 + $0x188] sm:$0xff]
    %v238 = vld [vmem:[%s2 + $0x190] sm:$0xff]
    %v239 = vld [vmem:[%s2 + $0x198] sm:$0xff]
    %v240 = vld [vmem:[%s2 + $0x1a0] sm:$0xff]
    %v241 = vld [vmem:[%s2 + $0x1a8] sm:$0xff]
    %v242 = vld [vmem:[%s2 + $0x1b0] sm:$0xff]
    %v243 = vld [vmem:[%s2 + $0x1b8] sm:$0xff]
    %v244 = vld [vmem:[%s2 + $0x1c0] sm:$0xff]
    %v245 = vld [vmem:[%s2 + $0x1c8] sm:$0xff]
    %v246 = vld [vmem:[%s2 + $0x1d0] sm:$0xff]
    %v247 = vld [vmem:[%s2 + $0x1d8] sm:$0xff]
    %v248 = vld [vmem:[%s2 + $0x1e0] sm:$0xff]
    %v249 = vld [vmem:[%s2 + $0x1e8] sm:$0xff]
    %v250 = vld [vmem:[%s2 + $0x1f0] sm:$0xff]
    %v251 = vld [vmem:[%s2 + $0x1f8] sm:$0xff]
    %v252 = vld [vmem:[%s2 + $0x200] sm:$0xff]
    %v253 = vld [vmem:[%s2 + $0x208] sm:$0xff]
    %v254 = vld [vmem:[%s2 + $0x210] sm:$0xff]
    %v255 = vld [vmem:[%s2 + $0x218] sm:$0xff]
    %v256 = vld [vmem:[%s2 + $0x220] sm:$0xff]
    %v257 = vld [vmem:[%s2 + $0x228] sm:$0xff]
    %v258 = vld [vmem:[%s2 + $0x230] sm:$0xff]
    %v259 = vld [vmem:[%s2 + $0x238] sm:$0xff]
    %v260 = vld [vmem:[%s2 + $0x240] sm:$0xff]
    %v261 = vld [vmem:[%s2 + $0x248] sm:$0xff]
    %v262 = vld [vmem:[%s2 + $0x250] sm:$0xff]
    %v263 = vld [vmem:[%s2 + $0x258] sm:$0xff]
    %v264 = vld [vmem:[%s2 + $0x260] sm:$0xff]
    %v265 = vld [vmem:[%s2 + $0x268] sm:$0xff]
    %v266 = vld [vmem:[%s2 + $0x270] sm:$0xff]
    %v267 = vld [vmem:[%s2 + $0x278] sm:$0xff]
    %v268 = vld [vmem:[%s2 + $0x280] sm:$0xff]
    %v269 = vld [vmem:[%s2 + $0x288] sm:$0xff]
    %v270 = vld [vmem:[%s2 + $0x290] sm:$0xff]
    %v271 = vld [vmem:[%s2 + $0x298] sm:$0xff]
    %v272 = vld [vmem:[%s2 + $0x2a0] sm:$0xff]
    %v273 = vld [vmem:[%s2 + $0x2a8] sm:$0xff]
    %v274 = vld [vmem:[%s2 + $0x2b0] sm:$0xff]
    %v275 = vld [vmem:[%s2 + $0x2b8] sm:$0xff]
    %v276 = vld [vmem:[%s2 + $0x2c0] sm:$0xff]
    %v277 = vld [vmem:[%s2 + $0x2c8] sm:$0xff]
    %v278 = vld [vmem:[%s2 + $0x2d0] sm:$0xff]
    %v279 = vld [vmem:[%s2 + $0x2d8] sm:$0xff]
    %v280 = vld [vmem:[%s2 + $0x2e0] sm:$0xff]
    %v281 = vld [vmem:[%s2 + $0x2e8] sm:$0xff]
    %v282 = vld [vmem:[%s2 + $0x2f0] sm:$0xff]
    %v283 = vld [vmem:[%s2 + $0x2f8] sm:$0xff]
    %v284 = vld [vmem:[#allocation2] sm:$0x3]
    %v286 = vlaneseq
    %v287 = vshrl.u32 %v286, 7
    %v288 = vsub.s32 0, %v287
    %v289 = vrot.slane %v284, %v288
    %v290 = vlaneseq
    %v291 = vshrl.u32 %v290, 7
    %v292 = vsub.s32 1, %v291
    %v293 = vrot.slane %v284, %v292
    %v392 = vunpack.c.l.b16 %v188
    %v393 = vunpack.c.h.b16 %v188
    %v394 = vunpack.c.l.b16 %v189
    %v395 = vunpack.c.h.b16 %v189
    %v396 = vunpack.c.l.b16 %v190
    %v397 = vunpack.c.h.b16 %v190
    %v398 = vunpack.c.l.b16 %v191
    %v399 = vunpack.c.h.b16 %v191
    %v400 = vunpack.c.l.b16 %v192
    %v401 = vunpack.c.h.b16 %v192
    %v402 = vunpack.c.l.b16 %v193
    %v403 = vunpack.c.h.b16 %v193
    %v404 = vunpack.c.l.b16 %v194
    %v405 = vunpack.c.h.b16 %v194
    %v406 = vunpack.c.l.b16 %v195
    %v407 = vunpack.c.h.b16 %v195
    %v408 = vunpack.c.l.b16 %v196
    %v409 = vunpack.c.h.b16 %v196
    %v410 = vunpack.c.l.b16 %v197
    %v411 = vunpack.c.h.b16 %v197
    %v412 = vunpack.c.l.b16 %v198
    %v413 = vunpack.c.h.b16 %v198
    %v414 = vunpack.c.l.b16 %v199
    %v415 = vunpack.c.h.b16 %v199
    %v416 = vunpack.c.l.b16 %v200
    %v417 = vunpack.c.h.b16 %v200
    %v418 = vunpack.c.l.b16 %v201
    %v419 = vunpack.c.h.b16 %v201
    %v420 = vunpack.c.l.b16 %v202
    %v421 = vunpack.c.h.b16 %v202
    %v422 = vunpack.c.l.b16 %v203
    %v423 = vunpack.c.h.b16 %v203
    %v424 = vunpack.c.l.b16 %v204
    %v425 = vunpack.c.h.b16 %v204
    %v426 = vunpack.c.l.b16 %v205
    %v427 = vunpack.c.h.b16 %v205
    %v428 = vunpack.c.l.b16 %v206
    %v429 = vunpack.c.h.b16 %v206
    %v430 = vunpack.c.l.b16 %v207
    %v431 = vunpack.c.h.b16 %v207
    %v432 = vunpack.c.l.b16 %v208
    %v433 = vunpack.c.h.b16 %v208
    %v434 = vunpack.c.l.b16 %v209
    %v435 = vunpack.c.h.b16 %v209
    %v436 = vunpack.c.l.b16 %v210
    %v437 = vunpack.c.h.b16 %v210
    %v438 = vunpack.c.l.b16 %v211
    %v439 = vunpack.c.h.b16 %v211
    %v440 = vunpack.c.l.b16 %v212
    %v441 = vunpack.c.h.b16 %v212
    %v442 = vunpack.c.l.b16 %v213
    %v443 = vunpack.c.h.b16 %v213
    %v444 = vunpack.c.l.b16 %v214
    %v445 = vunpack.c.h.b16 %v214
    %v446 = vunpack.c.l.b16 %v215
    %v447 = vunpack.c.h.b16 %v215
    %v448 = vunpack.c.l.b16 %v216
    %v449 = vunpack.c.h.b16 %v216
    %v450 = vunpack.c.l.b16 %v217
    %v451 = vunpack.c.h.b16 %v217
    %v452 = vunpack.c.l.b16 %v218
    %v453 = vunpack.c.h.b16 %v218
    %v454 = vunpack.c.l.b16 %v219
    %v455 = vunpack.c.h.b16 %v219
    %v456 = vunpack.c.l.b16 %v220
    %v457 = vunpack.c.h.b16 %v220
    %v458 = vunpack.c.l.b16 %v221
    %v459 = vunpack.c.h.b16 %v221
    %v460 = vunpack.c.l.b16 %v222
    %v461 = vunpack.c.h.b16 %v222
    %v462 = vunpack.c.l.b16 %v223
    %v463 = vunpack.c.h.b16 %v223
    %v464 = vunpack.c.l.b16 %v224
    %v465 = vunpack.c.h.b16 %v224
    %v466 = vunpack.c.l.b16 %v225
    %v467 = vunpack.c.h.b16 %v225
    %v468 = vunpack.c.l.b16 %v226
    %v469 = vunpack.c.h.b16 %v226
    %v470 = vunpack.c.l.b16 %v227
    %v471 = vunpack.c.h.b16 %v227
    %v472 = vunpack.c.l.b16 %v228
    %v473 = vunpack.c.h.b16 %v228
    %v474 = vunpack.c.l.b16 %v229
    %v475 = vunpack.c.h.b16 %v229
    %v476 = vunpack.c.l.b16 %v230
    %v477 = vunpack.c.h.b16 %v230
    %v478 = vunpack.c.l.b16 %v231
    %v479 = vunpack.c.h.b16 %v231
    %v480 = vunpack.c.l.b16 %v232
    %v481 = vunpack.c.h.b16 %v232
    %v482 = vunpack.c.l.b16 %v233
    %v483 = vunpack.c.h.b16 %v233
    %v484 = vunpack.c.l.b16 %v234
    %v485 = vunpack.c.h.b16 %v234
    %v486 = vunpack.c.l.b16 %v235
    %v487 = vunpack.c.h.b16 %v235
    %v488 = vunpack.c.l.b16 %v236
    %v489 = vunpack.c.h.b16 %v236
    %v490 = vunpack.c.l.b16 %v237
    %v491 = vunpack.c.h.b16 %v237
    %v492 = vunpack.c.l.b16 %v238
    %v493 = vunpack.c.h.b16 %v238
    %v494 = vunpack.c.l.b16 %v239
    %v495 = vunpack.c.h.b16 %v239
    %v496 = vunpack.c.l.b16 %v240
    %v497 = vunpack.c.h.b16 %v240
    %v498 = vunpack.c.l.b16 %v241
    %v499 = vunpack.c.h.b16 %v241
    %v500 = vunpack.c.l.b16 %v242
    %v501 = vunpack.c.h.b16 %v242
    %v502 = vunpack.c.l.b16 %v243
    %v503 = vunpack.c.h.b16 %v243
    %v504 = vunpack.c.l.b16 %v244
    %v505 = vunpack.c.h.b16 %v244
    %v506 = vunpack.c.l.b16 %v245
    %v507 = vunpack.c.h.b16 %v245
    %v508 = vunpack.c.l.b16 %v246
    %v509 = vunpack.c.h.b16 %v246
    %v510 = vunpack.c.l.b16 %v247
    %v511 = vunpack.c.h.b16 %v247
    %v512 = vunpack.c.l.b16 %v248
    %v513 = vunpack.c.h.b16 %v248
    %v514 = vunpack.c.l.b16 %v249
    %v515 = vunpack.c.h.b16 %v249
    %v516 = vunpack.c.l.b16 %v250
    %v517 = vunpack.c.h.b16 %v250
    %v518 = vunpack.c.l.b16 %v251
    %v519 = vunpack.c.h.b16 %v251
    %v520 = vunpack.c.l.b16 %v252
    %v521 = vunpack.c.h.b16 %v252
    %v522 = vunpack.c.l.b16 %v253
    %v523 = vunpack.c.h.b16 %v253
    %v524 = vunpack.c.l.b16 %v254
    %v525 = vunpack.c.h.b16 %v254
    %v526 = vunpack.c.l.b16 %v255
    %v527 = vunpack.c.h.b16 %v255
    %v528 = vunpack.c.l.b16 %v256
    %v529 = vunpack.c.h.b16 %v256
    %v530 = vunpack.c.l.b16 %v257
    %v531 = vunpack.c.h.b16 %v257
    %v532 = vunpack.c.l.b16 %v258
    %v533 = vunpack.c.h.b16 %v258
    %v534 = vunpack.c.l.b16 %v259
    %v535 = vunpack.c.h.b16 %v259
    %v536 = vunpack.c.l.b16 %v260
    %v537 = vunpack.c.h.b16 %v260
    %v538 = vunpack.c.l.b16 %v261
    %v539 = vunpack.c.h.b16 %v261
    %v540 = vunpack.c.l.b16 %v262
    %v541 = vunpack.c.h.b16 %v262
    %v542 = vunpack.c.l.b16 %v263
    %v543 = vunpack.c.h.b16 %v263
    %v544 = vunpack.c.l.b16 %v264
    %v545 = vunpack.c.h.b16 %v264
    %v546 = vunpack.c.l.b16 %v265
    %v547 = vunpack.c.h.b16 %v265
    %v548 = vunpack.c.l.b16 %v266
    %v549 = vunpack.c.h.b16 %v266
    %v550 = vunpack.c.l.b16 %v267
    %v551 = vunpack.c.h.b16 %v267
    %v552 = vunpack.c.l.b16 %v268
    %v553 = vunpack.c.h.b16 %v268
    %v554 = vunpack.c.l.b16 %v269
    %v555 = vunpack.c.h.b16 %v269
    %v556 = vunpack.c.l.b16 %v270
    %v557 = vunpack.c.h.b16 %v270
    %v558 = vunpack.c.l.b16 %v271
    %v559 = vunpack.c.h.b16 %v271
    %v560 = vunpack.c.l.b16 %v272
    %v561 = vunpack.c.h.b16 %v272
    %v562 = vunpack.c.l.b16 %v273
    %v563 = vunpack.c.h.b16 %v273
    %v564 = vunpack.c.l.b16 %v274
    %v565 = vunpack.c.h.b16 %v274
    %v566 = vunpack.c.l.b16 %v275
    %v567 = vunpack.c.h.b16 %v275
    %v568 = vunpack.c.l.b16 %v276
    %v569 = vunpack.c.h.b16 %v276
    %v570 = vunpack.c.l.b16 %v277
    %v571 = vunpack.c.h.b16 %v277
    %v572 = vunpack.c.l.b16 %v278
    %v573 = vunpack.c.h.b16 %v278
    %v574 = vunpack.c.l.b16 %v279
    %v575 = vunpack.c.h.b16 %v279
    %v576 = vunpack.c.l.b16 %v280
    %v577 = vunpack.c.h.b16 %v280
    %v578 = vunpack.c.l.b16 %v281
    %v579 = vunpack.c.h.b16 %v281
    %v580 = vunpack.c.l.b16 %v282
    %v581 = vunpack.c.h.b16 %v282
    %v582 = vunpack.c.l.b16 %v283
    %v583 = vunpack.c.h.b16 %v283
    %v584 = vpack.c.b16 %v394, %v392
    %v585 = vpack.c.b16 %v395, %v393
    %v586 = vpack.c.b16 %v398, %v396
    %v587 = vpack.c.b16 %v399, %v397
    %v588 = vpack.c.b16 %v402, %v400
    %v589 = vpack.c.b16 %v403, %v401
    %v590 = vpack.c.b16 %v406, %v404
    %v591 = vpack.c.b16 %v407, %v405
    %v592 = vpack.c.b16 %v410, %v408
    %v593 = vpack.c.b16 %v411, %v409
    %v594 = vpack.c.b16 %v414, %v412
    %v595 = vpack.c.b16 %v415, %v413
    %v596 = vpack.c.b16 %v418, %v416
    %v597 = vpack.c.b16 %v419, %v417
    %v598 = vpack.c.b16 %v422, %v420
    %v599 = vpack.c.b16 %v423, %v421
    %v600 = vpack.c.b16 %v426, %v424
    %v601 = vpack.c.b16 %v427, %v425
    %v602 = vpack.c.b16 %v430, %v428
    %v603 = vpack.c.b16 %v431, %v429
    %v604 = vpack.c.b16 %v434, %v432
    %v605 = vpack.c.b16 %v435, %v433
    %v606 = vpack.c.b16 %v438, %v436
    %v607 = vpack.c.b16 %v439, %v437
    %v608 = vpack.c.b16 %v442, %v440
    %v609 = vpack.c.b16 %v443, %v441
    %v610 = vpack.c.b16 %v446, %v444
    %v611 = vpack.c.b16 %v447, %v445
    %v612 = vpack.c.b16 %v450, %v448
    %v613 = vpack.c.b16 %v451, %v449
    %v614 = vpack.c.b16 %v454, %v452
    %v615 = vpack.c.b16 %v455, %v453
    %v616 = vpack.c.b16 %v458, %v456
    %v617 = vpack.c.b16 %v459, %v457
    %v618 = vpack.c.b16 %v462, %v460
    %v619 = vpack.c.b16 %v463, %v461
    %v620 = vpack.c.b16 %v466, %v464
    %v621 = vpack.c.b16 %v467, %v465
    %v622 = vpack.c.b16 %v470, %v468
    %v623 = vpack.c.b16 %v471, %v469
    %v624 = vpack.c.b16 %v474, %v472
    %v625 = vpack.c.b16 %v475, %v473
    %v626 = vpack.c.b16 %v478, %v476
    %v627 = vpack.c.b16 %v479, %v477
    %v628 = vpack.c.b16 %v482, %v480
    %v629 = vpack.c.b16 %v483, %v481
    %v630 = vpack.c.b16 %v486, %v484
    %v631 = vpack.c.b16 %v487, %v485
    %v632 = vpack.c.b16 %v490, %v488
    %v633 = vpack.c.b16 %v491, %v489
    %v634 = vpack.c.b16 %v494, %v492
    %v635 = vpack.c.b16 %v495, %v493
    %v636 = vpack.c.b16 %v498, %v496
    %v637 = vpack.c.b16 %v499, %v497
    %v638 = vpack.c.b16 %v502, %v500
    %v639 = vpack.c.b16 %v503, %v501
    %v640 = vpack.c.b16 %v506, %v504
    %v641 = vpack.c.b16 %v507, %v505
    %v642 = vpack.c.b16 %v510, %v508
    %v643 = vpack.c.b16 %v511, %v509
    %v644 = vpack.c.b16 %v514, %v512
    %v645 = vpack.c.b16 %v515, %v513
    %v646 = vpack.c.b16 %v518, %v516
    %v647 = vpack.c.b16 %v519, %v517
    %v648 = vpack.c.b16 %v522, %v520
    %v649 = vpack.c.b16 %v523, %v521
    %v650 = vpack.c.b16 %v526, %v524
    %v651 = vpack.c.b16 %v527, %v525
    %v652 = vpack.c.b16 %v530, %v528
    %v653 = vpack.c.b16 %v531, %v529
    %v654 = vpack.c.b16 %v534, %v532
    %v655 = vpack.c.b16 %v535, %v533
    %v656 = vpack.c.b16 %v538, %v536
    %v657 = vpack.c.b16 %v539, %v537
    %v658 = vpack.c.b16 %v542, %v540
    %v659 = vpack.c.b16 %v543, %v541
    %v660 = vpack.c.b16 %v546, %v544
    %v661 = vpack.c.b16 %v547, %v545
    %v662 = vpack.c.b16 %v550, %v548
    %v663 = vpack.c.b16 %v551, %v549
    %v664 = vpack.c.b16 %v554, %v552
    %v665 = vpack.c.b16 %v555, %v553
    %v666 = vpack.c.b16 %v558, %v556
    %v667 = vpack.c.b16 %v559, %v557
    %v668 = vpack.c.b16 %v562, %v560
    %v669 = vpack.c.b16 %v563, %v561
    %v670 = vpack.c.b16 %v566, %v564
    %v671 = vpack.c.b16 %v567, %v565
    %v672 = vpack.c.b16 %v570, %v568
    %v673 = vpack.c.b16 %v571, %v569
    %v674 = vpack.c.b16 %v574, %v572
    %v675 = vpack.c.b16 %v575, %v573
    %v676 = vpack.c.b16 %v578, %v576
    %v677 = vpack.c.b16 %v579, %v577
    %v678 = vpack.c.b16 %v582, %v580
    %v679 = vpack.c.b16 %v583, %v581
    %776 = vmatprep.subr.bf16.mxu0 %v585
    %777 = vmatpush1.bf16.msra.mxu0 %v584
    %778 = vmatprep.subr.bf16.mxu0 %v587
    %779 = vmatpush1.bf16.msra.mxu0 %v586
    %780 = vmatprep.subr.bf16.mxu0 %v589
    %781 = vmatpush1.bf16.msra.mxu0 %v588
    %782 = vmatprep.subr.bf16.mxu0 %v591
    %783 = vmatpush1.bf16.msra.mxu0 %v590
    %784 = vmatprep.subr.bf16.mxu0 %v593
    %785 = vmatpush1.bf16.msra.mxu0 %v592
    %786 = vmatprep.subr.bf16.mxu0 %v595
    %787 = vmatpush1.bf16.msra.mxu0 %v594
    %788 = vmatprep.subr.bf16.mxu0 %v597
    %789 = vmatpush1.bf16.msra.mxu0 %v596
    %790 = vmatprep.subr.bf16.mxu0 %v599
    %791 = vmatpush1.bf16.msra.mxu0 %v598
    %792 = vmatprep.subr.bf16.mxu0 %v601
    %793 = vmatpush1.bf16.msra.mxu0 %v600
    %794 = vmatprep.subr.bf16.mxu0 %v603
    %795 = vmatpush1.bf16.msra.mxu0 %v602
    %796 = vmatprep.subr.bf16.mxu0 %v605
    %797 = vmatpush1.bf16.msra.mxu0 %v604
    %798 = vmatprep.subr.bf16.mxu0 %v607
    %799 = vmatpush1.bf16.msra.mxu0 %v606
    %800 = vmatprep.subr.bf16.mxu0 %v609
    %801 = vmatpush1.bf16.msra.mxu0 %v608
    %802 = vmatprep.subr.bf16.mxu0 %v611
    %803 = vmatpush1.bf16.msra.mxu0 %v610
    %804 = vmatprep.subr.bf16.mxu0 %v613
    %805 = vmatpush1.bf16.msra.mxu0 %v612
    %806 = vmatprep.subr.bf16.mxu0 %v615
    %807 = vmatpush1.bf16.msra.mxu0 %v614
    %808 = vmatprep.mubr.bf16.mxu0 %v183
    %809 = vmatmul.mubr.bf16.gmra.mrb[0].mxu0 %v182
    %v810 = vpop.f32.mrb[0].mxu0
    %v811 = vadd.f32 %v289, %v810
    %v812 = vpop.f32.mrb[0].mxu0
    %v813 = vadd.f32 %v293, %v812
    %v814 = vpop.f32.mrb[0].mxu0
    %v815 = vpop.f32.mrb[0].mxu0
    %816 = vdwg.mxu0
    %817 = vmatprep.subr.bf16.mxu0 %v617
    %818 = vmatpush1.bf16.msra.mxu0 %v616
    %819 = vmatprep.subr.bf16.mxu0 %v619
    %820 = vmatpush1.bf16.msra.mxu0 %v618
    %821 = vmatprep.subr.bf16.mxu0 %v621
    %822 = vmatpush1.bf16.msra.mxu0 %v620
    %823 = vmatprep.subr.bf16.mxu0 %v623
    %824 = vmatpush1.bf16.msra.mxu0 %v622
    %825 = vmatprep.subr.bf16.mxu0 %v625
    %826 = vmatpush1.bf16.msra.mxu0 %v624
    %827 = vmatprep.subr.bf16.mxu0 %v627
    %828 = vmatpush1.bf16.msra.mxu0 %v626
    %829 = vmatprep.subr.bf16.mxu0 %v629
    %830 = vmatpush1.bf16.msra.mxu0 %v628
    %831 = vmatprep.subr.bf16.mxu0 %v631
    %832 = vmatpush1.bf16.msra.mxu0 %v630
    %833 = vmatprep.subr.bf16.mxu0 %v633
    %834 = vmatpush1.bf16.msra.mxu0 %v632
    %835 = vmatprep.subr.bf16.mxu0 %v635
    %836 = vmatpush1.bf16.msra.mxu0 %v634
    %837 = vmatprep.subr.bf16.mxu0 %v637
    %838 = vmatpush1.bf16.msra.mxu0 %v636
    %839 = vmatprep.subr.bf16.mxu0 %v639
    %840 = vmatpush1.bf16.msra.mxu0 %v638
    %841 = vmatprep.subr.bf16.mxu0 %v641
    %842 = vmatpush1.bf16.msra.mxu0 %v640
    %843 = vmatprep.subr.bf16.mxu0 %v643
    %844 = vmatpush1.bf16.msra.mxu0 %v642
    %845 = vmatprep.subr.bf16.mxu0 %v645
    %846 = vmatpush1.bf16.msra.mxu0 %v644
    %847 = vmatprep.subr.bf16.mxu0 %v647
    %848 = vmatpush1.bf16.msra.mxu0 %v646
    %849 = vmatprep.mubr.bf16.mxu0 %v185
    %850 = vmatmul.mubr.bf16.gmra.mrb[0].mxu0 %v184
    %v851 = vpop.f32.mrb[0].mxu0
    %v852 = vadd.f32 %v811, %v851
    %v853 = vpop.f32.mrb[0].mxu0
    %v854 = vadd.f32 %v813, %v853
    %v855 = vpop.f32.mrb[0].mxu0
    %v856 = vpop.f32.mrb[0].mxu0
    %857 = vdwg.mxu0
    %858 = vmatprep.subr.bf16.mxu0 %v649
    %859 = vmatpush1.bf16.msra.mxu0 %v648
    %860 = vmatprep.subr.bf16.mxu0 %v651
    %861 = vmatpush1.bf16.msra.mxu0 %v650
    %862 = vmatprep.subr.bf16.mxu0 %v653
    %863 = vmatpush1.bf16.msra.mxu0 %v652
    %864 = vmatprep.subr.bf16.mxu0 %v655
    %865 = vmatpush1.bf16.msra.mxu0 %v654
    %866 = vmatprep.subr.bf16.mxu0 %v657
    %867 = vmatpush1.bf16.msra.mxu0 %v656
    %868 = vmatprep.subr.bf16.mxu0 %v659
    %869 = vmatpush1.bf16.msra.mxu0 %v658
    %870 = vmatprep.subr.bf16.mxu0 %v661
    %871 = vmatpush1.bf16.msra.mxu0 %v660
    %872 = vmatprep.subr.bf16.mxu0 %v663
    %873 = vmatpush1.bf16.msra.mxu0 %v662
    %874 = vmatprep.subr.bf16.mxu0 %v665
    %875 = vmatpush1.bf16.msra.mxu0 %v664
    %876 = vmatprep.subr.bf16.mxu0 %v667
    %877 = vmatpush1.bf16.msra.mxu0 %v666
    %878 = vmatprep.subr.bf16.mxu0 %v669
    %879 = vmatpush1.bf16.msra.mxu0 %v668
    %880 = vmatprep.subr.bf16.mxu0 %v671
    %881 = vmatpush1.bf16.msra.mxu0 %v670
    %882 = vmatprep.subr.bf16.mxu0 %v673
    %883 = vmatpush1.bf16.msra.mxu0 %v672
    %884 = vmatprep.subr.bf16.mxu0 %v675
    %885 = vmatpush1.bf16.msra.mxu0 %v674
    %886 = vmatprep.subr.bf16.mxu0 %v677
    %887 = vmatpush1.bf16.msra.mxu0 %v676
    %888 = vmatprep.subr.bf16.mxu0 %v679
    %889 = vmatpush1.bf16.msra.mxu0 %v678
    %890 = vmatprep.mubr.bf16.mxu0 %v187
    %891 = vmatmul.mubr.bf16.gmra.mrb[0].mxu0 %v186
    %v892 = vpop.f32.mrb[0].mxu0
    %v893 = vadd.f32 %v852, %v892
    %v894 = vpop.f32.mrb[0].mxu0
    %v895 = vadd.f32 %v854, %v894
    %v896 = vpop.f32.mrb[0].mxu0
    %v897 = vpop.f32.mrb[0].mxu0
    %898 = vdwg.mxu0
    %v899 = vmax.f32 %v893, 0.0
    %v900 = vmax.f32 %v895, 0.0
    %v901 = vpack.c.bf16 %v899, %v899
    %v902 = vpack.c.bf16 %v900, %v900
    %v903 = vld [vmem:[%s6] sm:$0xf]
    %v904 = vld [vmem:[%s6 + $0x4] sm:$0xf]
    %v905 = vld [vmem:[%s6 + $0x8] sm:$0xf]
    %v906 = vld [vmem:[%s6 + $0xc] sm:$0xf]
    %v907 = vld [vmem:[%s6 + $0x10] sm:$0xf]
    %v908 = vld [vmem:[%s6 + $0x14] sm:$0xf]
    %v909 = vld [vmem:[%s6 + $0x18] sm:$0xf]
    %v910 = vld [vmem:[%s6 + $0x1c] sm:$0xf]
    %v911 = vld [vmem:[%s6 + $0x20] sm:$0xf]
    %v912 = vld [vmem:[%s6 + $0x24] sm:$0xf]
    %v913 = vld [vmem:[%s6 + $0x28] sm:$0xf]
    %v914 = vld [vmem:[%s6 + $0x2c] sm:$0xf]
    %v915 = vld [vmem:[%s6 + $0x30] sm:$0xf]
    %v916 = vld [vmem:[%s6 + $0x34] sm:$0xf]
    %v917 = vld [vmem:[%s6 + $0x38] sm:$0xf]
    %v918 = vld [vmem:[%s6 + $0x3c] sm:$0xf]
    %v919 = vld [vmem:[%s6 + $0x40] sm:$0xf]
    %v920 = vld [vmem:[%s6 + $0x44] sm:$0xf]
    %v921 = vld [vmem:[%s6 + $0x48] sm:$0xf]
    %v922 = vld [vmem:[%s6 + $0x4c] sm:$0xf]
    %v923 = vld [vmem:[%s6 + $0x50] sm:$0xf]
    %v924 = vld [vmem:[%s6 + $0x54] sm:$0xf]
    %v925 = vld [vmem:[%s6 + $0x58] sm:$0xf]
    %v926 = vld [vmem:[%s6 + $0x5c] sm:$0xf]
    %v927 = vld [vmem:[%s6 + $0x60] sm:$0xf]
    %v928 = vld [vmem:[%s6 + $0x64] sm:$0xf]
    %v929 = vld [vmem:[%s6 + $0x68] sm:$0xf]
    %v930 = vld [vmem:[%s6 + $0x6c] sm:$0xf]
    %v931 = vld [vmem:[%s6 + $0x70] sm:$0xf]
    %v932 = vld [vmem:[%s6 + $0x74] sm:$0xf]
    %v933 = vld [vmem:[%s6 + $0x78] sm:$0xf]
    %v934 = vld [vmem:[%s6 + $0x7c] sm:$0xf]
    %v935 = vld [vmem:[%s7] sm:$0x1]
    %v937 = vlaneseq
    %v938 = vshrl.u32 %v937, 7
    %v939 = vsub.s32 0, %v938
    %v940 = vrot.slane %v935, %v939
    %v974 = vunpack.c.l.b16 %v903
    %v975 = vunpack.c.l.b16 %v904
    %v976 = vunpack.c.l.b16 %v905
    %v977 = vunpack.c.l.b16 %v906
    %v978 = vunpack.c.l.b16 %v907
    %v979 = vunpack.c.l.b16 %v908
    %v980 = vunpack.c.l.b16 %v909
    %v981 = vunpack.c.l.b16 %v910
    %v982 = vunpack.c.l.b16 %v911
    %v983 = vunpack.c.l.b16 %v912
    %v984 = vunpack.c.l.b16 %v913
    %v985 = vunpack.c.l.b16 %v914
    %v986 = vunpack.c.l.b16 %v915
    %v987 = vunpack.c.l.b16 %v916
    %v988 = vunpack.c.l.b16 %v917
    %v989 = vunpack.c.l.b16 %v918
    %v990 = vunpack.c.l.b16 %v919
    %v991 = vunpack.c.l.b16 %v920
    %v992 = vunpack.c.l.b16 %v921
    %v993 = vunpack.c.l.b16 %v922
    %v994 = vunpack.c.l.b16 %v923
    %v995 = vunpack.c.l.b16 %v924
    %v996 = vunpack.c.l.b16 %v925
    %v997 = vunpack.c.l.b16 %v926
    %v998 = vunpack.c.l.b16 %v927
    %v999 = vunpack.c.l.b16 %v928
    %v1000 = vunpack.c.l.b16 %v929
    %v1001 = vunpack.c.l.b16 %v930
    %v1002 = vunpack.c.l.b16 %v931
    %v1003 = vunpack.c.l.b16 %v932
    %v1004 = vunpack.c.l.b16 %v933
    %v1005 = vunpack.c.l.b16 %v934
    %v1006 = vpack.c.b16 %v975, %v974
    %v1007 = vpack.c.b16 %v977, %v976
    %v1008 = vpack.c.b16 %v979, %v978
    %v1009 = vpack.c.b16 %v981, %v980
    %v1010 = vpack.c.b16 %v983, %v982
    %v1011 = vpack.c.b16 %v985, %v984
    %v1012 = vpack.c.b16 %v987, %v986
    %v1013 = vpack.c.b16 %v989, %v988
    %v1014 = vpack.c.b16 %v991, %v990
    %v1015 = vpack.c.b16 %v993, %v992
    %v1016 = vpack.c.b16 %v995, %v994
    %v1017 = vpack.c.b16 %v997, %v996
    %v1018 = vpack.c.b16 %v999, %v998
    %v1019 = vpack.c.b16 %v1001, %v1000
    %v1020 = vpack.c.b16 %v1003, %v1002
    %v1021 = vpack.c.b16 %v1005, %v1004
    %1038 = vmatprep.subr.bf16.mxu0 0
    %1039 = vmatpush1.bf16.msra.mxu0 %v1006
    %1040 = vmatprep.subr.bf16.mxu0 0
    %1041 = vmatpush1.bf16.msra.mxu0 %v1007
    %1042 = vmatprep.subr.bf16.mxu0 0
    %1043 = vmatpush1.bf16.msra.mxu0 %v1008
    %1044 = vmatprep.subr.bf16.mxu0 0
    %1045 = vmatpush1.bf16.msra.mxu0 %v1009
    %1046 = vmatprep.subr.bf16.mxu0 0
    %1047 = vmatpush1.bf16.msra.mxu0 %v1010
    %1048 = vmatprep.subr.bf16.mxu0 0
    %1049 = vmatpush1.bf16.msra.mxu0 %v1011
    %1050 = vmatprep.subr.bf16.mxu0 0
    %1051 = vmatpush1.bf16.msra.mxu0 %v1012
    %1052 = vmatprep.subr.bf16.mxu0 0
    %1053 = vmatpush1.bf16.msra.mxu0 %v1013
    %1054 = vmatprep.subr.bf16.mxu0 0
    %1055 = vmatpush1.bf16.msra.mxu0 %v1014
    %1056 = vmatprep.subr.bf16.mxu0 0
    %1057 = vmatpush1.bf16.msra.mxu0 %v1015
    %1058 = vmatprep.subr.bf16.mxu0 0
    %1059 = vmatpush1.bf16.msra.mxu0 %v1016
    %1060 = vmatprep.subr.bf16.mxu0 0
    %1061 = vmatpush1.bf16.msra.mxu0 %v1017
    %1062 = vmatprep.subr.bf16.mxu0 0
    %1063 = vmatpush1.bf16.msra.mxu0 %v1018
    %1064 = vmatprep.subr.bf16.mxu0 0
    %1065 = vmatpush1.bf16.msra.mxu0 %v1019
    %1066 = vmatprep.subr.bf16.mxu0 0
    %1067 = vmatpush1.bf16.msra.mxu0 %v1020
    %1068 = vmatprep.subr.bf16.mxu0 0
    %1069 = vmatpush1.bf16.msra.mxu0 %v1021
    %1070 = vmatprep.mubr.bf16.mxu0 %v902
    %1071 = vmatmul.mubr.bf16.gmra.mrb[0].mxu0 %v901
    %v1072 = vpop.f32.mrb[0].mxu0
    %v1073 = vadd.f32 %v940, %v1072
    %v1074 = vpop.f32.mrb[0].mxu0
    %v1075 = vpop.f32.mrb[0].mxu0
    %v1076 = vpop.f32.mrb[0].mxu0
    %1077 = vdwg.mxu0
    %v1078 = vmax.f32 %v1073, 0.0
    %v1079 = vld [vmem:[%s1] sm:$0xff]
    %v1080 = vld [vmem:[%s1 + $0x8] sm:$0xf]
    %v1083 = vcombine.high %v1079, %v1079
    %v1085 = vunpack.c.l.s4 1983009808
    %v1086 = vunpack.c.0.s8 %v1085
    %v1087 = vlaneseq
    %v1088 = vshrl.u32 %v1087, 7
    %v1089 = vsub.s32 %v1086, %v1088
    %v1090 = vrot.slane %v1079, %v1089
    %v1092 = vunpack.c.l.s4 1983009808
    %v1093 = vunpack.c.0.s8 %v1092
    %v1094 = vlaneseq
    %v1095 = vshrl.u32 %v1094, 7
    %v1096 = vsub.s32 %v1093, %v1095
    %v1097 = vrot.slane %v1083, %v1096
    %v1098 = vcombine.high %v1090, %v1090
    %v1099 = vcombine.high %v1097, %v1097
    %v1101 = vunpack.c.l.s4 1983009808
    %v1102 = vunpack.c.0.s8 %v1101
    %v1103 = vlaneseq
    %v1104 = vshrl.u32 %v1103, 7
    %v1105 = vsub.s32 %v1102, %v1104
    %v1106 = vrot.slane %v1080, %v1105
    %v1107 = vcombine.high %v1106, %v1106
    %v1114 = vpack.c.bf16 %v1090, %v1090
    %v1115 = vpack.c.bf16 %v1098, %v1098
    %v1116 = vpack.c.bf16 %v1097, %v1097
    %v1117 = vpack.c.bf16 %v1099, %v1099
    %v1118 = vpack.c.bf16 %v1106, %v1106
    %v1119 = vpack.c.bf16 %v1107, %v1107
    %v1120 = vld [vmem:[%s4] sm:$0xff]
    %v1121 = vld [vmem:[%s4 + $0x8] sm:$0xff]
    %v1122 = vld [vmem:[%s4 + $0x10] sm:$0xff]
    %v1123 = vld [vmem:[%s4 + $0x18] sm:$0xff]
    %v1124 = vld [vmem:[%s4 + $0x20] sm:$0xff]
    %v1125 = vld [vmem:[%s4 + $0x28] sm:$0xff]
    %v1126 = vld [vmem:[%s4 + $0x30] sm:$0xff]
    %v1127 = vld [vmem:[%s4 + $0x38] sm:$0xff]
    %v1128 = vld [vmem:[%s4 + $0x40] sm:$0xff]
    %v1129 = vld [vmem:[%s4 + $0x48] sm:$0xff]
    %v1130 = vld [vmem:[%s4 + $0x50] sm:$0xff]
    %v1131 = vld [vmem:[%s4 + $0x58] sm:$0xff]
    %v1132 = vld [vmem:[%s4 + $0x60] sm:$0xff]
    %v1133 = vld [vmem:[%s4 + $0x68] sm:$0xff]
    %v1134 = vld [vmem:[%s4 + $0x70] sm:$0xff]
    %v1135 = vld [vmem:[%s4 + $0x78] sm:$0xff]
    %v1136 = vld [vmem:[%s4 + $0x80] sm:$0xff]
    %v1137 = vld [vmem:[%s4 + $0x88] sm:$0xff]
    %v1138 = vld [vmem:[%s4 + $0x90] sm:$0xff]
    %v1139 = vld [vmem:[%s4 + $0x98] sm:$0xff]
    %v1140 = vld [vmem:[%s4 + $0xa0] sm:$0xff]
    %v1141 = vld [vmem:[%s4 + $0xa8] sm:$0xff]
    %v1142 = vld [vmem:[%s4 + $0xb0] sm:$0xff]
    %v1143 = vld [vmem:[%s4 + $0xb8] sm:$0xff]
    %v1144 = vld [vmem:[%s4 + $0xc0] sm:$0xff]
    %v1145 = vld [vmem:[%s4 + $0xc8] sm:$0xff]
    %v1146 = vld [vmem:[%s4 + $0xd0] sm:$0xff]
    %v1147 = vld [vmem:[%s4 + $0xd8] sm:$0xff]
    %v1148 = vld [vmem:[%s4 + $0xe0] sm:$0xff]
    %v1149 = vld [vmem:[%s4 + $0xe8] sm:$0xff]
    %v1150 = vld [vmem:[%s4 + $0xf0] sm:$0xff]
    %v1151 = vld [vmem:[%s4 + $0xf8] sm:$0xff]
    %v1152 = vld [vmem:[%s4 + $0x100] sm:$0xff]
    %v1153 = vld [vmem:[%s4 + $0x108] sm:$0xff]
    %v1154 = vld [vmem:[%s4 + $0x110] sm:$0xff]
    %v1155 = vld [vmem:[%s4 + $0x118] sm:$0xff]
    %v1156 = vld [vmem:[%s4 + $0x120] sm:$0xff]
    %v1157 = vld [vmem:[%s4 + $0x128] sm:$0xff]
    %v1158 = vld [vmem:[%s4 + $0x130] sm:$0xff]
    %v1159 = vld [vmem:[%s4 + $0x138] sm:$0xff]
    %v1160 = vld [vmem:[%s4 + $0x140] sm:$0xff]
    %v1161 = vld [vmem:[%s4 + $0x148] sm:$0xff]
    %v1162 = vld [vmem:[%s4 + $0x150] sm:$0xff]
    %v1163 = vld [vmem:[%s4 + $0x158] sm:$0xff]
    %v1164 = vld [vmem:[%s4 + $0x160] sm:$0xff]
    %v1165 = vld [vmem:[%s4 + $0x168] sm:$0xff]
    %v1166 = vld [vmem:[%s4 + $0x170] sm:$0xff]
    %v1167 = vld [vmem:[%s4 + $0x178] sm:$0xff]
    %v1168 = vld [vmem:[%s4 + $0x180] sm:$0xff]
    %v1169 = vld [vmem:[%s4 + $0x188] sm:$0xff]
    %v1170 = vld [vmem:[%s4 + $0x190] sm:$0xff]
    %v1171 = vld [vmem:[%s4 + $0x198] sm:$0xff]
    %v1172 = vld [vmem:[%s4 + $0x1a0] sm:$0xff]
    %v1173 = vld [vmem:[%s4 + $0x1a8] sm:$0xff]
    %v1174 = vld [vmem:[%s4 + $0x1b0] sm:$0xff]
    %v1175 = vld [vmem:[%s4 + $0x1b8] sm:$0xff]
    %v1176 = vld [vmem:[%s4 + $0x1c0] sm:$0xff]
    %v1177 = vld [vmem:[%s4 + $0x1c8] sm:$0xff]
    %v1178 = vld [vmem:[%s4 + $0x1d0] sm:$0xff]
    %v1179 = vld [vmem:[%s4 + $0x1d8] sm:$0xff]
    %v1180 = vld [vmem:[%s4 + $0x1e0] sm:$0xff]
    %v1181 = vld [vmem:[%s4 + $0x1e8] sm:$0xff]
    %v1182 = vld [vmem:[%s4 + $0x1f0] sm:$0xff]
    %v1183 = vld [vmem:[%s4 + $0x1f8] sm:$0xff]
    %v1184 = vld [vmem:[%s4 + $0x200] sm:$0xff]
    %v1185 = vld [vmem:[%s4 + $0x208] sm:$0xff]
    %v1186 = vld [vmem:[%s4 + $0x210] sm:$0xff]
    %v1187 = vld [vmem:[%s4 + $0x218] sm:$0xff]
    %v1188 = vld [vmem:[%s4 + $0x220] sm:$0xff]
    %v1189 = vld [vmem:[%s4 + $0x228] sm:$0xff]
    %v1190 = vld [vmem:[%s4 + $0x230] sm:$0xff]
    %v1191 = vld [vmem:[%s4 + $0x238] sm:$0xff]
    %v1192 = vld [vmem:[%s4 + $0x240] sm:$0xff]
    %v1193 = vld [vmem:[%s4 + $0x248] sm:$0xff]
    %v1194 = vld [vmem:[%s4 + $0x250] sm:$0xff]
    %v1195 = vld [vmem:[%s4 + $0x258] sm:$0xff]
    %v1196 = vld [vmem:[%s4 + $0x260] sm:$0xff]
    %v1197 = vld [vmem:[%s4 + $0x268] sm:$0xff]
    %v1198 = vld [vmem:[%s4 + $0x270] sm:$0xff]
    %v1199 = vld [vmem:[%s4 + $0x278] sm:$0xff]
    %v1200 = vld [vmem:[%s4 + $0x280] sm:$0xff]
    %v1201 = vld [vmem:[%s4 + $0x288] sm:$0xff]
    %v1202 = vld [vmem:[%s4 + $0x290] sm:$0xff]
    %v1203 = vld [vmem:[%s4 + $0x298] sm:$0xff]
    %v1204 = vld [vmem:[%s4 + $0x2a0] sm:$0xff]
    %v1205 = vld [vmem:[%s4 + $0x2a8] sm:$0xff]
    %v1206 = vld [vmem:[%s4 + $0x2b0] sm:$0xff]
    %v1207 = vld [vmem:[%s4 + $0x2b8] sm:$0xff]
    %v1208 = vld [vmem:[%s4 + $0x2c0] sm:$0xff]
    %v1209 = vld [vmem:[%s4 + $0x2c8] sm:$0xff]
    %v1210 = vld [vmem:[%s4 + $0x2d0] sm:$0xff]
    %v1211 = vld [vmem:[%s4 + $0x2d8] sm:$0xff]
    %v1212 = vld [vmem:[%s4 + $0x2e0] sm:$0xff]
    %v1213 = vld [vmem:[%s4 + $0x2e8] sm:$0xff]
    %v1214 = vld [vmem:[%s4 + $0x2f0] sm:$0xff]
    %v1215 = vld [vmem:[%s4 + $0x2f8] sm:$0xff]
    %v1216 = vld [vmem:[#allocation5] sm:$0x3]
    %v1218 = vlaneseq
    %v1219 = vshrl.u32 %v1218, 7
    %v1220 = vsub.s32 0, %v1219
    %v1221 = vrot.slane %v1216, %v1220
    %v1222 = vlaneseq
    %v1223 = vshrl.u32 %v1222, 7
    %v1224 = vsub.s32 1, %v1223
    %v1225 = vrot.slane %v1216, %v1224
    %v1324 = vunpack.c.l.b16 %v1120
    %v1325 = vunpack.c.h.b16 %v1120
    %v1326 = vunpack.c.l.b16 %v1121
    %v1327 = vunpack.c.h.b16 %v1121
    %v1328 = vunpack.c.l.b16 %v1122
    %v1329 = vunpack.c.h.b16 %v1122
    %v1330 = vunpack.c.l.b16 %v1123
    %v1331 = vunpack.c.h.b16 %v1123
    %v1332 = vunpack.c.l.b16 %v1124
    %v1333 = vunpack.c.h.b16 %v1124
    %v1334 = vunpack.c.l.b16 %v1125
    %v1335 = vunpack.c.h.b16 %v1125
    %v1336 = vunpack.c.l.b16 %v1126
    %v1337 = vunpack.c.h.b16 %v1126
    %v1338 = vunpack.c.l.b16 %v1127
    %v1339 = vunpack.c.h.b16 %v1127
    %v1340 = vunpack.c.l.b16 %v1128
    %v1341 = vunpack.c.h.b16 %v1128
    %v1342 = vunpack.c.l.b16 %v1129
    %v1343 = vunpack.c.h.b16 %v1129
    %v1344 = vunpack.c.l.b16 %v1130
    %v1345 = vunpack.c.h.b16 %v1130
    %v1346 = vunpack.c.l.b16 %v1131
    %v1347 = vunpack.c.h.b16 %v1131
    %v1348 = vunpack.c.l.b16 %v1132
    %v1349 = vunpack.c.h.b16 %v1132
    %v1350 = vunpack.c.l.b16 %v1133
    %v1351 = vunpack.c.h.b16 %v1133
    %v1352 = vunpack.c.l.b16 %v1134
    %v1353 = vunpack.c.h.b16 %v1134
    %v1354 = vunpack.c.l.b16 %v1135
    %v1355 = vunpack.c.h.b16 %v1135
    %v1356 = vunpack.c.l.b16 %v1136
    %v1357 = vunpack.c.h.b16 %v1136
    %v1358 = vunpack.c.l.b16 %v1137
    %v1359 = vunpack.c.h.b16 %v1137
    %v1360 = vunpack.c.l.b16 %v1138
    %v1361 = vunpack.c.h.b16 %v1138
    %v1362 = vunpack.c.l.b16 %v1139
    %v1363 = vunpack.c.h.b16 %v1139
    %v1364 = vunpack.c.l.b16 %v1140
    %v1365 = vunpack.c.h.b16 %v1140
    %v1366 = vunpack.c.l.b16 %v1141
    %v1367 = vunpack.c.h.b16 %v1141
    %v1368 = vunpack.c.l.b16 %v1142
    %v1369 = vunpack.c.h.b16 %v1142
    %v1370 = vunpack.c.l.b16 %v1143
    %v1371 = vunpack.c.h.b16 %v1143
    %v1372 = vunpack.c.l.b16 %v1144
    %v1373 = vunpack.c.h.b16 %v1144
    %v1374 = vunpack.c.l.b16 %v1145
    %v1375 = vunpack.c.h.b16 %v1145
    %v1376 = vunpack.c.l.b16 %v1146
    %v1377 = vunpack.c.h.b16 %v1146
    %v1378 = vunpack.c.l.b16 %v1147
    %v1379 = vunpack.c.h.b16 %v1147
    %v1380 = vunpack.c.l.b16 %v1148
    %v1381 = vunpack.c.h.b16 %v1148
    %v1382 = vunpack.c.l.b16 %v1149
    %v1383 = vunpack.c.h.b16 %v1149
    %v1384 = vunpack.c.l.b16 %v1150
    %v1385 = vunpack.c.h.b16 %v1150
    %v1386 = vunpack.c.l.b16 %v1151
    %v1387 = vunpack.c.h.b16 %v1151
    %v1388 = vunpack.c.l.b16 %v1152
    %v1389 = vunpack.c.h.b16 %v1152
    %v1390 = vunpack.c.l.b16 %v1153
    %v1391 = vunpack.c.h.b16 %v1153
    %v1392 = vunpack.c.l.b16 %v1154
    %v1393 = vunpack.c.h.b16 %v1154
    %v1394 = vunpack.c.l.b16 %v1155
    %v1395 = vunpack.c.h.b16 %v1155
    %v1396 = vunpack.c.l.b16 %v1156
    %v1397 = vunpack.c.h.b16 %v1156
    %v1398 = vunpack.c.l.b16 %v1157
    %v1399 = vunpack.c.h.b16 %v1157
    %v1400 = vunpack.c.l.b16 %v1158
    %v1401 = vunpack.c.h.b16 %v1158
    %v1402 = vunpack.c.l.b16 %v1159
    %v1403 = vunpack.c.h.b16 %v1159
    %v1404 = vunpack.c.l.b16 %v1160
    %v1405 = vunpack.c.h.b16 %v1160
    %v1406 = vunpack.c.l.b16 %v1161
    %v1407 = vunpack.c.h.b16 %v1161
    %v1408 = vunpack.c.l.b16 %v1162
    %v1409 = vunpack.c.h.b16 %v1162
    %v1410 = vunpack.c.l.b16 %v1163
    %v1411 = vunpack.c.h.b16 %v1163
    %v1412 = vunpack.c.l.b16 %v1164
    %v1413 = vunpack.c.h.b16 %v1164
    %v1414 = vunpack.c.l.b16 %v1165
    %v1415 = vunpack.c.h.b16 %v1165
    %v1416 = vunpack.c.l.b16 %v1166
    %v1417 = vunpack.c.h.b16 %v1166
    %v1418 = vunpack.c.l.b16 %v1167
    %v1419 = vunpack.c.h.b16 %v1167
    %v1420 = vunpack.c.l.b16 %v1168
    %v1421 = vunpack.c.h.b16 %v1168
    %v1422 = vunpack.c.l.b16 %v1169
    %v1423 = vunpack.c.h.b16 %v1169
    %v1424 = vunpack.c.l.b16 %v1170
    %v1425 = vunpack.c.h.b16 %v1170
    %v1426 = vunpack.c.l.b16 %v1171
    %v1427 = vunpack.c.h.b16 %v1171
    %v1428 = vunpack.c.l.b16 %v1172
    %v1429 = vunpack.c.h.b16 %v1172
    %v1430 = vunpack.c.l.b16 %v1173
    %v1431 = vunpack.c.h.b16 %v1173
    %v1432 = vunpack.c.l.b16 %v1174
    %v1433 = vunpack.c.h.b16 %v1174
    %v1434 = vunpack.c.l.b16 %v1175
    %v1435 = vunpack.c.h.b16 %v1175
    %v1436 = vunpack.c.l.b16 %v1176
    %v1437 = vunpack.c.h.b16 %v1176
    %v1438 = vunpack.c.l.b16 %v1177
    %v1439 = vunpack.c.h.b16 %v1177
    %v1440 = vunpack.c.l.b16 %v1178
    %v1441 = vunpack.c.h.b16 %v1178
    %v1442 = vunpack.c.l.b16 %v1179
    %v1443 = vunpack.c.h.b16 %v1179
    %v1444 = vunpack.c.l.b16 %v1180
    %v1445 = vunpack.c.h.b16 %v1180
    %v1446 = vunpack.c.l.b16 %v1181
    %v1447 = vunpack.c.h.b16 %v1181
    %v1448 = vunpack.c.l.b16 %v1182
    %v1449 = vunpack.c.h.b16 %v1182
    %v1450 = vunpack.c.l.b16 %v1183
    %v1451 = vunpack.c.h.b16 %v1183
    %v1452 = vunpack.c.l.b16 %v1184
    %v1453 = vunpack.c.h.b16 %v1184
    %v1454 = vunpack.c.l.b16 %v1185
    %v1455 = vunpack.c.h.b16 %v1185
    %v1456 = vunpack.c.l.b16 %v1186
    %v1457 = vunpack.c.h.b16 %v1186
    %v1458 = vunpack.c.l.b16 %v1187
    %v1459 = vunpack.c.h.b16 %v1187
    %v1460 = vunpack.c.l.b16 %v1188
    %v1461 = vunpack.c.h.b16 %v1188
    %v1462 = vunpack.c.l.b16 %v1189
    %v1463 = vunpack.c.h.b16 %v1189
    %v1464 = vunpack.c.l.b16 %v1190
    %v1465 = vunpack.c.h.b16 %v1190
    %v1466 = vunpack.c.l.b16 %v1191
    %v1467 = vunpack.c.h.b16 %v1191
    %v1468 = vunpack.c.l.b16 %v1192
    %v1469 = vunpack.c.h.b16 %v1192
    %v1470 = vunpack.c.l.b16 %v1193
    %v1471 = vunpack.c.h.b16 %v1193
    %v1472 = vunpack.c.l.b16 %v1194
    %v1473 = vunpack.c.h.b16 %v1194
    %v1474 = vunpack.c.l.b16 %v1195
    %v1475 = vunpack.c.h.b16 %v1195
    %v1476 = vunpack.c.l.b16 %v1196
    %v1477 = vunpack.c.h.b16 %v1196
    %v1478 = vunpack.c.l.b16 %v1197
    %v1479 = vunpack.c.h.b16 %v1197
    %v1480 = vunpack.c.l.b16 %v1198
    %v1481 = vunpack.c.h.b16 %v1198
    %v1482 = vunpack.c.l.b16 %v1199
    %v1483 = vunpack.c.h.b16 %v1199
    %v1484 = vunpack.c.l.b16 %v1200
    %v1485 = vunpack.c.h.b16 %v1200
    %v1486 = vunpack.c.l.b16 %v1201
    %v1487 = vunpack.c.h.b16 %v1201
    %v1488 = vunpack.c.l.b16 %v1202
    %v1489 = vunpack.c.h.b16 %v1202
    %v1490 = vunpack.c.l.b16 %v1203
    %v1491 = vunpack.c.h.b16 %v1203
    %v1492 = vunpack.c.l.b16 %v1204
    %v1493 = vunpack.c.h.b16 %v1204
    %v1494 = vunpack.c.l.b16 %v1205
    %v1495 = vunpack.c.h.b16 %v1205
    %v1496 = vunpack.c.l.b16 %v1206
    %v1497 = vunpack.c.h.b16 %v1206
    %v1498 = vunpack.c.l.b16 %v1207
    %v1499 = vunpack.c.h.b16 %v1207
    %v1500 = vunpack.c.l.b16 %v1208
    %v1501 = vunpack.c.h.b16 %v1208
    %v1502 = vunpack.c.l.b16 %v1209
    %v1503 = vunpack.c.h.b16 %v1209
    %v1504 = vunpack.c.l.b16 %v1210
    %v1505 = vunpack.c.h.b16 %v1210
    %v1506 = vunpack.c.l.b16 %v1211
    %v1507 = vunpack.c.h.b16 %v1211
    %v1508 = vunpack.c.l.b16 %v1212
    %v1509 = vunpack.c.h.b16 %v1212
    %v1510 = vunpack.c.l.b16 %v1213
    %v1511 = vunpack.c.h.b16 %v1213
    %v1512 = vunpack.c.l.b16 %v1214
    %v1513 = vunpack.c.h.b16 %v1214
    %v1514 = vunpack.c.l.b16 %v1215
    %v1515 = vunpack.c.h.b16 %v1215
    %v1516 = vpack.c.b16 %v1326, %v1324
    %v1517 = vpack.c.b16 %v1327, %v1325
    %v1518 = vpack.c.b16 %v1330, %v1328
    %v1519 = vpack.c.b16 %v1331, %v1329
    %v1520 = vpack.c.b16 %v1334, %v1332
    %v1521 = vpack.c.b16 %v1335, %v1333
    %v1522 = vpack.c.b16 %v1338, %v1336
    %v1523 = vpack.c.b16 %v1339, %v1337
    %v1524 = vpack.c.b16 %v1342, %v1340
    %v1525 = vpack.c.b16 %v1343, %v1341
    %v1526 = vpack.c.b16 %v1346, %v1344
    %v1527 = vpack.c.b16 %v1347, %v1345
    %v1528 = vpack.c.b16 %v1350, %v1348
    %v1529 = vpack.c.b16 %v1351, %v1349
    %v1530 = vpack.c.b16 %v1354, %v1352
    %v1531 = vpack.c.b16 %v1355, %v1353
    %v1532 = vpack.c.b16 %v1358, %v1356
    %v1533 = vpack.c.b16 %v1359, %v1357
    %v1534 = vpack.c.b16 %v1362, %v1360
    %v1535 = vpack.c.b16 %v1363, %v1361
    %v1536 = vpack.c.b16 %v1366, %v1364
    %v1537 = vpack.c.b16 %v1367, %v1365
    %v1538 = vpack.c.b16 %v1370, %v1368
    %v1539 = vpack.c.b16 %v1371, %v1369
    %v1540 = vpack.c.b16 %v1374, %v1372
    %v1541 = vpack.c.b16 %v1375, %v1373
    %v1542 = vpack.c.b16 %v1378, %v1376
    %v1543 = vpack.c.b16 %v1379, %v1377
    %v1544 = vpack.c.b16 %v1382, %v1380
    %v1545 = vpack.c.b16 %v1383, %v1381
    %v1546 = vpack.c.b16 %v1386, %v1384
    %v1547 = vpack.c.b16 %v1387, %v1385
    %v1548 = vpack.c.b16 %v1390, %v1388
    %v1549 = vpack.c.b16 %v1391, %v1389
    %v1550 = vpack.c.b16 %v1394, %v1392
    %v1551 = vpack.c.b16 %v1395, %v1393
    %v1552 = vpack.c.b16 %v1398, %v1396
    %v1553 = vpack.c.b16 %v1399, %v1397
    %v1554 = vpack.c.b16 %v1402, %v1400
    %v1555 = vpack.c.b16 %v1403, %v1401
    %v1556 = vpack.c.b16 %v1406, %v1404
    %v1557 = vpack.c.b16 %v1407, %v1405
    %v1558 = vpack.c.b16 %v1410, %v1408
    %v1559 = vpack.c.b16 %v1411, %v1409
    %v1560 = vpack.c.b16 %v1414, %v1412
    %v1561 = vpack.c.b16 %v1415, %v1413
    %v1562 = vpack.c.b16 %v1418, %v1416
    %v1563 = vpack.c.b16 %v1419, %v1417
    %v1564 = vpack.c.b16 %v1422, %v1420
    %v1565 = vpack.c.b16 %v1423, %v1421
    %v1566 = vpack.c.b16 %v1426, %v1424
    %v1567 = vpack.c.b16 %v1427, %v1425
    %v1568 = vpack.c.b16 %v1430, %v1428
    %v1569 = vpack.c.b16 %v1431, %v1429
    %v1570 = vpack.c.b16 %v1434, %v1432
    %v1571 = vpack.c.b16 %v1435, %v1433
    %v1572 = vpack.c.b16 %v1438, %v1436
    %v1573 = vpack.c.b16 %v1439, %v1437
    %v1574 = vpack.c.b16 %v1442, %v1440
    %v1575 = vpack.c.b16 %v1443, %v1441
    %v1576 = vpack.c.b16 %v1446, %v1444
    %v1577 = vpack.c.b16 %v1447, %v1445
    %v1578 = vpack.c.b16 %v1450, %v1448
    %v1579 = vpack.c.b16 %v1451, %v1449
    %v1580 = vpack.c.b16 %v1454, %v1452
    %v1581 = vpack.c.b16 %v1455, %v1453
    %v1582 = vpack.c.b16 %v1458, %v1456
    %v1583 = vpack.c.b16 %v1459, %v1457
    %v1584 = vpack.c.b16 %v1462, %v1460
    %v1585 = vpack.c.b16 %v1463, %v1461
    %v1586 = vpack.c.b16 %v1466, %v1464
    %v1587 = vpack.c.b16 %v1467, %v1465
    %v1588 = vpack.c.b16 %v1470, %v1468
    %v1589 = vpack.c.b16 %v1471, %v1469
    %v1590 = vpack.c.b16 %v1474, %v1472
    %v1591 = vpack.c.b16 %v1475, %v1473
    %v1592 = vpack.c.b16 %v1478, %v1476
    %v1593 = vpack.c.b16 %v1479, %v1477
    %v1594 = vpack.c.b16 %v1482, %v1480
    %v1595 = vpack.c.b16 %v1483, %v1481
    %v1596 = vpack.c.b16 %v1486, %v1484
    %v1597 = vpack.c.b16 %v1487, %v1485
    %v1598 = vpack.c.b16 %v1490, %v1488
    %v1599 = vpack.c.b16 %v1491, %v1489
    %v1600 = vpack.c.b16 %v1494, %v1492
    %v1601 = vpack.c.b16 %v1495, %v1493
    %v1602 = vpack.c.b16 %v1498, %v1496
    %v1603 = vpack.c.b16 %v1499, %v1497
    %v1604 = vpack.c.b16 %v1502, %v1500
    %v1605 = vpack.c.b16 %v1503, %v1501
    %v1606 = vpack.c.b16 %v1506, %v1504
    %v1607 = vpack.c.b16 %v1507, %v1505
    %v1608 = vpack.c.b16 %v1510, %v1508
    %v1609 = vpack.c.b16 %v1511, %v1509
    %v1610 = vpack.c.b16 %v1514, %v1512
    %v1611 = vpack.c.b16 %v1515, %v1513
    %1708 = vmatprep.subr.bf16.mxu0 %v1517
    %1709 = vmatpush1.bf16.msra.mxu0 %v1516
    %1710 = vmatprep.subr.bf16.mxu0 %v1519
    %1711 = vmatpush1.bf16.msra.mxu0 %v1518
    %1712 = vmatprep.subr.bf16.mxu0 %v1521
    %1713 = vmatpush1.bf16.msra.mxu0 %v1520
    %1714 = vmatprep.subr.bf16.mxu0 %v1523
    %1715 = vmatpush1.bf16.msra.mxu0 %v1522
    %1716 = vmatprep.subr.bf16.mxu0 %v1525
    %1717 = vmatpush1.bf16.msra.mxu0 %v1524
    %1718 = vmatprep.subr.bf16.mxu0 %v1527
    %1719 = vmatpush1.bf16.msra.mxu0 %v1526
    %1720 = vmatprep.subr.bf16.mxu0 %v1529
    %1721 = vmatpush1.bf16.msra.mxu0 %v1528
    %1722 = vmatprep.subr.bf16.mxu0 %v1531
    %1723 = vmatpush1.bf16.msra.mxu0 %v1530
    %1724 = vmatprep.subr.bf16.mxu0 %v1533
    %1725 = vmatpush1.bf16.msra.mxu0 %v1532
    %1726 = vmatprep.subr.bf16.mxu0 %v1535
    %1727 = vmatpush1.bf16.msra.mxu0 %v1534
    %1728 = vmatprep.subr.bf16.mxu0 %v1537
    %1729 = vmatpush1.bf16.msra.mxu0 %v1536
    %1730 = vmatprep.subr.bf16.mxu0 %v1539
    %1731 = vmatpush1.bf16.msra.mxu0 %v1538
    %1732 = vmatprep.subr.bf16.mxu0 %v1541
    %1733 = vmatpush1.bf16.msra.mxu0 %v1540
    %1734 = vmatprep.subr.bf16.mxu0 %v1543
    %1735 = vmatpush1.bf16.msra.mxu0 %v1542
    %1736 = vmatprep.subr.bf16.mxu0 %v1545
    %1737 = vmatpush1.bf16.msra.mxu0 %v1544
    %1738 = vmatprep.subr.bf16.mxu0 %v1547
    %1739 = vmatpush1.bf16.msra.mxu0 %v1546
    %1740 = vmatprep.mubr.bf16.mxu0 %v1115
    %1741 = vmatmul.mubr.bf16.gmra.mrb[0].mxu0 %v1114
    %v1742 = vpop.f32.mrb[0].mxu0
    %v1743 = vadd.f32 %v1221, %v1742
    %v1744 = vpop.f32.mrb[0].mxu0
    %v1745 = vadd.f32 %v1225, %v1744
    %v1746 = vpop.f32.mrb[0].mxu0
    %v1747 = vpop.f32.mrb[0].mxu0
    %1748 = vdwg.mxu0
    %1749 = vmatprep.subr.bf16.mxu0 %v1549
    %1750 = vmatpush1.bf16.msra.mxu0 %v1548
    %1751 = vmatprep.subr.bf16.mxu0 %v1551
    %1752 = vmatpush1.bf16.msra.mxu0 %v1550
    %1753 = vmatprep.subr.bf16.mxu0 %v1553
    %1754 = vmatpush1.bf16.msra.mxu0 %v1552
    %1755 = vmatprep.subr.bf16.mxu0 %v1555
    %1756 = vmatpush1.bf16.msra.mxu0 %v1554
    %1757 = vmatprep.subr.bf16.mxu0 %v1557
    %1758 = vmatpush1.bf16.msra.mxu0 %v1556
    %1759 = vmatprep.subr.bf16.mxu0 %v1559
    %1760 = vmatpush1.bf16.msra.mxu0 %v1558
    %1761 = vmatprep.subr.bf16.mxu0 %v1561
    %1762 = vmatpush1.bf16.msra.mxu0 %v1560
    %1763 = vmatprep.subr.bf16.mxu0 %v1563
    %1764 = vmatpush1.bf16.msra.mxu0 %v1562
    %1765 = vmatprep.subr.bf16.mxu0 %v1565
    %1766 = vmatpush1.bf16.msra.mxu0 %v1564
    %1767 = vmatprep.subr.bf16.mxu0 %v1567
    %1768 = vmatpush1.bf16.msra.mxu0 %v1566
    %1769 = vmatprep.subr.bf16.mxu0 %v1569
    %1770 = vmatpush1.bf16.msra.mxu0 %v1568
    %1771 = vmatprep.subr.bf16.mxu0 %v1571
    %1772 = vmatpush1.bf16.msra.mxu0 %v1570
    %1773 = vmatprep.subr.bf16.mxu0 %v1573
    %1774 = vmatpush1.bf16.msra.mxu0 %v1572
    %1775 = vmatprep.subr.bf16.mxu0 %v1575
    %1776 = vmatpush1.bf16.msra.mxu0 %v1574
    %1777 = vmatprep.subr.bf16.mxu0 %v1577
    %1778 = vmatpush1.bf16.msra.mxu0 %v1576
    %1779 = vmatprep.subr.bf16.mxu0 %v1579
    %1780 = vmatpush1.bf16.msra.mxu0 %v1578
    %1781 = vmatprep.mubr.bf16.mxu0 %v1117
    %1782 = vmatmul.mubr.bf16.gmra.mrb[0].mxu0 %v1116
    %v1783 = vpop.f32.mrb[0].mxu0
    %v1784 = vadd.f32 %v1743, %v1783
    %v1785 = vpop.f32.mrb[0].mxu0
    %v1786 = vadd.f32 %v1745, %v1785
    %v1787 = vpop.f32.mrb[0].mxu0
    %v1788 = vpop.f32.mrb[0].mxu0
    %1789 = vdwg.mxu0
    %1790 = vmatprep.subr.bf16.mxu0 %v1581
    %1791 = vmatpush1.bf16.msra.mxu0 %v1580
    %1792 = vmatprep.subr.bf16.mxu0 %v1583
    %1793 = vmatpush1.bf16.msra.mxu0 %v1582
    %1794 = vmatprep.subr.bf16.mxu0 %v1585
    %1795 = vmatpush1.bf16.msra.mxu0 %v1584
    %1796 = vmatprep.subr.bf16.mxu0 %v1587
    %1797 = vmatpush1.bf16.msra.mxu0 %v1586
    %1798 = vmatprep.subr.bf16.mxu0 %v1589
    %1799 = vmatpush1.bf16.msra.mxu0 %v1588
    %1800 = vmatprep.subr.bf16.mxu0 %v1591
    %1801 = vmatpush1.bf16.msra.mxu0 %v1590
    %1802 = vmatprep.subr.bf16.mxu0 %v1593
    %1803 = vmatpush1.bf16.msra.mxu0 %v1592
    %1804 = vmatprep.subr.bf16.mxu0 %v1595
    %1805 = vmatpush1.bf16.msra.mxu0 %v1594
    %1806 = vmatprep.subr.bf16.mxu0 %v1597
    %1807 = vmatpush1.bf16.msra.mxu0 %v1596
    %1808 = vmatprep.subr.bf16.mxu0 %v1599
    %1809 = vmatpush1.bf16.msra.mxu0 %v1598
    %1810 = vmatprep.subr.bf16.mxu0 %v1601
    %1811 = vmatpush1.bf16.msra.mxu0 %v1600
    %1812 = vmatprep.subr.bf16.mxu0 %v1603
    %1813 = vmatpush1.bf16.msra.mxu0 %v1602
    %1814 = vmatprep.subr.bf16.mxu0 %v1605
    %1815 = vmatpush1.bf16.msra.mxu0 %v1604
    %1816 = vmatprep.subr.bf16.mxu0 %v1607
    %1817 = vmatpush1.bf16.msra.mxu0 %v1606
    %1818 = vmatprep.subr.bf16.mxu0 %v1609
    %1819 = vmatpush1.bf16.msra.mxu0 %v1608
    %1820 = vmatprep.subr.bf16.mxu0 %v1611
    %1821 = vmatpush1.bf16.msra.mxu0 %v1610
    %1822 = vmatprep.mubr.bf16.mxu0 %v1119
    %1823 = vmatmul.mubr.bf16.gmra.mrb[0].mxu0 %v1118
    %v1824 = vpop.f32.mrb[0].mxu0
    %v1825 = vadd.f32 %v1784, %v1824
    %v1826 = vpop.f32.mrb[0].mxu0
    %v1827 = vadd.f32 %v1786, %v1826
    %v1828 = vpop.f32.mrb[0].mxu0
    %v1829 = vpop.f32.mrb[0].mxu0
    %1830 = vdwg.mxu0
    %v1831 = vmax.f32 %v1825, 0.0
    %v1832 = vmax.f32 %v1827, 0.0
    %v1833 = vpack.c.bf16 %v1831, %v1831
    %v1834 = vpack.c.bf16 %v1832, %v1832
    %v1835 = vld [vmem:[%s8] sm:$0xf]
    %v1836 = vld [vmem:[%s8 + $0x4] sm:$0xf]
    %v1837 = vld [vmem:[%s8 + $0x8] sm:$0xf]
    %v1838 = vld [vmem:[%s8 + $0xc] sm:$0xf]
    %v1839 = vld [vmem:[%s8 + $0x10] sm:$0xf]
    %v1840 = vld [vmem:[%s8 + $0x14] sm:$0xf]
    %v1841 = vld [vmem:[%s8 + $0x18] sm:$0xf]
    %v1842 = vld [vmem:[%s8 + $0x1c] sm:$0xf]
    %v1843 = vld [vmem:[%s8 + $0x20] sm:$0xf]
    %v1844 = vld [vmem:[%s8 + $0x24] sm:$0xf]
    %v1845 = vld [vmem:[%s8 + $0x28] sm:$0xf]
    %v1846 = vld [vmem:[%s8 + $0x2c] sm:$0xf]
    %v1847 = vld [vmem:[%s8 + $0x30] sm:$0xf]
    %v1848 = vld [vmem:[%s8 + $0x34] sm:$0xf]
    %v1849 = vld [vmem:[%s8 + $0x38] sm:$0xf]
    %v1850 = vld [vmem:[%s8 + $0x3c] sm:$0xf]
    %v1851 = vld [vmem:[%s8 + $0x40] sm:$0xf]
    %v1852 = vld [vmem:[%s8 + $0x44] sm:$0xf]
    %v1853 = vld [vmem:[%s8 + $0x48] sm:$0xf]
    %v1854 = vld [vmem:[%s8 + $0x4c] sm:$0xf]
    %v1855 = vld [vmem:[%s8 + $0x50] sm:$0xf]
    %v1856 = vld [vmem:[%s8 + $0x54] sm:$0xf]
    %v1857 = vld [vmem:[%s8 + $0x58] sm:$0xf]
    %v1858 = vld [vmem:[%s8 + $0x5c] sm:$0xf]
    %v1859 = vld [vmem:[%s8 + $0x60] sm:$0xf]
    %v1860 = vld [vmem:[%s8 + $0x64] sm:$0xf]
    %v1861 = vld [vmem:[%s8 + $0x68] sm:$0xf]
    %v1862 = vld [vmem:[%s8 + $0x6c] sm:$0xf]
    %v1863 = vld [vmem:[%s8 + $0x70] sm:$0xf]
    %v1864 = vld [vmem:[%s8 + $0x74] sm:$0xf]
    %v1865 = vld [vmem:[%s8 + $0x78] sm:$0xf]
    %v1866 = vld [vmem:[%s8 + $0x7c] sm:$0xf]
    %v1867 = vld [vmem:[#allocation7] sm:$0x1]
    %v1869 = vlaneseq
    %v1870 = vshrl.u32 %v1869, 7
    %v1871 = vsub.s32 0, %v1870
    %v1872 = vrot.slane %v1867, %v1871
    %v1906 = vunpack.c.l.b16 %v1835
    %v1907 = vunpack.c.l.b16 %v1836
    %v1908 = vunpack.c.l.b16 %v1837
    %v1909 = vunpack.c.l.b16 %v1838
    %v1910 = vunpack.c.l.b16 %v1839
    %v1911 = vunpack.c.l.b16 %v1840
    %v1912 = vunpack.c.l.b16 %v1841
    %v1913 = vunpack.c.l.b16 %v1842
    %v1914 = vunpack.c.l.b16 %v1843
    %v1915 = vunpack.c.l.b16 %v1844
    %v1916 = vunpack.c.l.b16 %v1845
    %v1917 = vunpack.c.l.b16 %v1846
    %v1918 = vunpack.c.l.b16 %v1847
    %v1919 = vunpack.c.l.b16 %v1848
    %v1920 = vunpack.c.l.b16 %v1849
    %v1921 = vunpack.c.l.b16 %v1850
    %v1922 = vunpack.c.l.b16 %v1851
    %v1923 = vunpack.c.l.b16 %v1852
    %v1924 = vunpack.c.l.b16 %v1853
    %v1925 = vunpack.c.l.b16 %v1854
    %v1926 = vunpack.c.l.b16 %v1855
    %v1927 = vunpack.c.l.b16 %v1856
    %v1928 = vunpack.c.l.b16 %v1857
    %v1929 = vunpack.c.l.b16 %v1858
    %v1930 = vunpack.c.l.b16 %v1859
    %v1931 = vunpack.c.l.b16 %v1860
    %v1932 = vunpack.c.l.b16 %v1861
    %v1933 = vunpack.c.l.b16 %v1862
    %v1934 = vunpack.c.l.b16 %v1863
    %v1935 = vunpack.c.l.b16 %v1864
    %v1936 = vunpack.c.l.b16 %v1865
    %v1937 = vunpack.c.l.b16 %v1866
    %v1938 = vpack.c.b16 %v1907, %v1906
    %v1939 = vpack.c.b16 %v1909, %v1908
    %v1940 = vpack.c.b16 %v1911, %v1910
    %v1941 = vpack.c.b16 %v1913, %v1912
    %v1942 = vpack.c.b16 %v1915, %v1914
    %v1943 = vpack.c.b16 %v1917, %v1916
    %v1944 = vpack.c.b16 %v1919, %v1918
    %v1945 = vpack.c.b16 %v1921, %v1920
    %v1946 = vpack.c.b16 %v1923, %v1922
    %v1947 = vpack.c.b16 %v1925, %v1924
    %v1948 = vpack.c.b16 %v1927, %v1926
    %v1949 = vpack.c.b16 %v1929, %v1928
    %v1950 = vpack.c.b16 %v1931, %v1930
    %v1951 = vpack.c.b16 %v1933, %v1932
    %v1952 = vpack.c.b16 %v1935, %v1934
    %v1953 = vpack.c.b16 %v1937, %v1936
    %1970 = vmatprep.subr.bf16.mxu0 0
    %1971 = vmatpush1.bf16.msra.mxu0 %v1938
    %1972 = vmatprep.subr.bf16.mxu0 0
    %1973 = vmatpush1.bf16.msra.mxu0 %v1939
    %1974 = vmatprep.subr.bf16.mxu0 0
    %1975 = vmatpush1.bf16.msra.mxu0 %v1940
    %1976 = vmatprep.subr.bf16.mxu0 0
    %1977 = vmatpush1.bf16.msra.mxu0 %v1941
    %1978 = vmatprep.subr.bf16.mxu0 0
    %1979 = vmatpush1.bf16.msra.mxu0 %v1942
    %1980 = vmatprep.subr.bf16.mxu0 0
    %1981 = vmatpush1.bf16.msra.mxu0 %v1943
    %1982 = vmatprep.subr.bf16.mxu0 0
    %1983 = vmatpush1.bf16.msra.mxu0 %v1944
    %1984 = vmatprep.subr.bf16.mxu0 0
    %1985 = vmatpush1.bf16.msra.mxu0 %v1945
    %1986 = vmatprep.subr.bf16.mxu0 0
    %1987 = vmatpush1.bf16.msra.mxu0 %v1946
    %1988 = vmatprep.subr.bf16.mxu0 0
    %1989 = vmatpush1.bf16.msra.mxu0 %v1947
    %1990 = vmatprep.subr.bf16.mxu0 0
    %1991 = vmatpush1.bf16.msra.mxu0 %v1948
    %1992 = vmatprep.subr.bf16.mxu0 0
    %1993 = vmatpush1.bf16.msra.mxu0 %v1949
    %1994 = vmatprep.subr.bf16.mxu0 0
    %1995 = vmatpush1.bf16.msra.mxu0 %v1950
    %1996 = vmatprep.subr.bf16.mxu0 0
    %1997 = vmatpush1.bf16.msra.mxu0 %v1951
    %1998 = vmatprep.subr.bf16.mxu0 0
    %1999 = vmatpush1.bf16.msra.mxu0 %v1952
    %2000 = vmatprep.subr.bf16.mxu0 0
    %2001 = vmatpush1.bf16.msra.mxu0 %v1953
    %2002 = vmatprep.mubr.bf16.mxu0 %v1834
    %2003 = vmatmul.mubr.bf16.gmra.mrb[0].mxu0 %v1833
    %v2004 = vpop.f32.mrb[0].mxu0
    %v2005 = vadd.f32 %v1872, %v2004
    %v2006 = vpop.f32.mrb[0].mxu0
    %v2007 = vpop.f32.mrb[0].mxu0
    %v2008 = vpop.f32.mrb[0].mxu0
    %2009 = vdwg.mxu0
    %v2010 = vmax.f32 %v2005, 0.0
    %v2011 = vpack.c.bf16 %v1078, %v1078
    %v2012 = vld [vmem:[%s10] sm:$0xff]
    %v2013 = vld [vmem:[%s10 + $0x8] sm:$0xff]
    %v2014 = vld [vmem:[%s10 + $0x10] sm:$0xff]
    %v2015 = vld [vmem:[%s10 + $0x18] sm:$0xff]
    %v2016 = vld [vmem:[%s10 + $0x20] sm:$0xff]
    %v2017 = vld [vmem:[%s10 + $0x28] sm:$0xff]
    %v2018 = vld [vmem:[%s10 + $0x30] sm:$0xff]
    %v2019 = vld [vmem:[%s10 + $0x38] sm:$0xff]
    %v2020 = vld [vmem:[%s10 + $0x40] sm:$0xff]
    %v2021 = vld [vmem:[%s10 + $0x48] sm:$0xff]
    %v2022 = vld [vmem:[%s10 + $0x50] sm:$0xff]
    %v2023 = vld [vmem:[%s10 + $0x58] sm:$0xff]
    %v2024 = vld [vmem:[%s10 + $0x60] sm:$0xff]
    %v2025 = vld [vmem:[%s10 + $0x68] sm:$0xff]
    %v2026 = vld [vmem:[%s10 + $0x70] sm:$0xff]
    %v2027 = vld [vmem:[%s10 + $0x78] sm:$0xff]
    %v2028 = vld [vmem:[%s10 + $0x80] sm:$0xff]
    %v2029 = vld [vmem:[%s10 + $0x88] sm:$0xff]
    %v2030 = vld [vmem:[%s10 + $0x90] sm:$0xff]
    %v2031 = vld [vmem:[%s10 + $0x98] sm:$0xff]
    %v2032 = vld [vmem:[%s10 + $0xa0] sm:$0xff]
    %v2033 = vld [vmem:[%s10 + $0xa8] sm:$0xff]
    %v2034 = vld [vmem:[%s10 + $0xb0] sm:$0xff]
    %v2035 = vld [vmem:[%s10 + $0xb8] sm:$0xff]
    %v2036 = vld [vmem:[%s10 + $0xc0] sm:$0xff]
    %v2037 = vld [vmem:[%s10 + $0xc8] sm:$0xff]
    %v2038 = vld [vmem:[%s10 + $0xd0] sm:$0xff]
    %v2039 = vld [vmem:[%s10 + $0xd8] sm:$0xff]
    %v2040 = vld [vmem:[%s10 + $0xe0] sm:$0xff]
    %v2041 = vld [vmem:[%s10 + $0xe8] sm:$0xff]
    %v2042 = vld [vmem:[%s10 + $0xf0] sm:$0xff]
    %v2043 = vld [vmem:[%s10 + $0xf8] sm:$0xff]
    %v2044 = vld [vmem:[%s10 + $0x100] sm:$0xff]
    %v2045 = vld [vmem:[%s10 + $0x108] sm:$0xff]
    %v2046 = vld [vmem:[%s10 + $0x110] sm:$0xff]
    %v2047 = vld [vmem:[%s10 + $0x118] sm:$0xff]
    %v2048 = vld [vmem:[%s10 + $0x120] sm:$0xff]
    %v2049 = vld [vmem:[%s10 + $0x128] sm:$0xff]
    %v2050 = vld [vmem:[%s10 + $0x130] sm:$0xff]
    %v2051 = vld [vmem:[%s10 + $0x138] sm:$0xff]
    %v2052 = vld [vmem:[%s10 + $0x140] sm:$0xff]
    %v2053 = vld [vmem:[%s10 + $0x148] sm:$0xff]
    %v2054 = vld [vmem:[%s10 + $0x150] sm:$0xff]
    %v2055 = vld [vmem:[%s10 + $0x158] sm:$0xff]
    %v2056 = vld [vmem:[%s10 + $0x160] sm:$0xff]
    %v2057 = vld [vmem:[%s10 + $0x168] sm:$0xff]
    %v2058 = vld [vmem:[%s10 + $0x170] sm:$0xff]
    %v2059 = vld [vmem:[%s10 + $0x178] sm:$0xff]
    %v2060 = vpack.c.bf16 %v2010, %v2010
    %v2061 = vld [vmem:[#allocation8] sm:$0xff]
    %v2062 = vld [vmem:[#allocation8 + $0x8] sm:$0xff]
    %v2063 = vld [vmem:[#allocation8 + $0x10] sm:$0xff]
    %v2064 = vld [vmem:[#allocation8 + $0x18] sm:$0xff]
    %v2065 = vld [vmem:[#allocation8 + $0x20] sm:$0xff]
    %v2066 = vld [vmem:[#allocation8 + $0x28] sm:$0xff]
    %v2067 = vld [vmem:[#allocation8 + $0x30] sm:$0xff]
    %v2068 = vld [vmem:[#allocation8 + $0x38] sm:$0xff]
    %v2069 = vld [vmem:[#allocation8 + $0x40] sm:$0xff]
    %v2070 = vld [vmem:[#allocation8 + $0x48] sm:$0xff]
    %v2071 = vld [vmem:[#allocation8 + $0x50] sm:$0xff]
    %v2072 = vld [vmem:[#allocation8 + $0x58] sm:$0xff]
    %v2073 = vld [vmem:[#allocation8 + $0x60] sm:$0xff]
    %v2074 = vld [vmem:[#allocation8 + $0x68] sm:$0xff]
    %v2075 = vld [vmem:[#allocation8 + $0x70] sm:$0xff]
    %v2076 = vld [vmem:[#allocation8 + $0x78] sm:$0xff]
    %v2077 = vld [vmem:[#allocation8 + $0x80] sm:$0xff]
    %v2078 = vld [vmem:[#allocation8 + $0x88] sm:$0xff]
    %v2079 = vld [vmem:[#allocation8 + $0x90] sm:$0xff]
    %v2080 = vld [vmem:[#allocation8 + $0x98] sm:$0xff]
    %v2081 = vld [vmem:[#allocation8 + $0xa0] sm:$0xff]
    %v2082 = vld [vmem:[#allocation8 + $0xa8] sm:$0xff]
    %v2083 = vld [vmem:[#allocation8 + $0xb0] sm:$0xff]
    %v2084 = vld [vmem:[#allocation8 + $0xb8] sm:$0xff]
    %v2085 = vld [vmem:[#allocation8 + $0xc0] sm:$0xff]
    %v2086 = vld [vmem:[#allocation8 + $0xc8] sm:$0xff]
    %v2087 = vld [vmem:[#allocation8 + $0xd0] sm:$0xff]
    %v2088 = vld [vmem:[#allocation8 + $0xd8] sm:$0xff]
    %v2089 = vld [vmem:[#allocation8 + $0xe0] sm:$0xff]
    %v2090 = vld [vmem:[#allocation8 + $0xe8] sm:$0xff]
    %v2091 = vld [vmem:[#allocation8 + $0xf0] sm:$0xff]
    %v2092 = vld [vmem:[#allocation8 + $0xf8] sm:$0xff]
    %v2093 = vld [vmem:[#allocation8 + $0x100] sm:$0xff]
    %v2094 = vld [vmem:[#allocation8 + $0x108] sm:$0xff]
    %v2095 = vld [vmem:[#allocation8 + $0x110] sm:$0xff]
    %v2096 = vld [vmem:[#allocation8 + $0x118] sm:$0xff]
    %v2097 = vld [vmem:[#allocation8 + $0x120] sm:$0xff]
    %v2098 = vld [vmem:[#allocation8 + $0x128] sm:$0xff]
    %v2099 = vld [vmem:[#allocation8 + $0x130] sm:$0xff]
    %v2100 = vld [vmem:[#allocation8 + $0x138] sm:$0xff]
    %v2101 = vld [vmem:[#allocation8 + $0x140] sm:$0xff]
    %v2102 = vld [vmem:[#allocation8 + $0x148] sm:$0xff]
    %v2103 = vld [vmem:[#allocation8 + $0x150] sm:$0xff]
    %v2104 = vld [vmem:[#allocation8 + $0x158] sm:$0xff]
    %v2105 = vld [vmem:[#allocation8 + $0x160] sm:$0xff]
    %v2106 = vld [vmem:[#allocation8 + $0x168] sm:$0xff]
    %v2107 = vld [vmem:[#allocation8 + $0x170] sm:$0xff]
    %v2108 = vld [vmem:[#allocation8 + $0x178] sm:$0xff]
    %v2157 = vunpack.c.l.b16 %v2061
    %v2158 = vunpack.c.h.b16 %v2061
    %v2159 = vunpack.c.l.b16 %v2062
    %v2160 = vunpack.c.h.b16 %v2062
    %v2161 = vunpack.c.l.b16 %v2063
    %v2162 = vunpack.c.h.b16 %v2063
    %v2163 = vunpack.c.l.b16 %v2064
    %v2164 = vunpack.c.h.b16 %v2064
    %v2165 = vunpack.c.l.b16 %v2065
    %v2166 = vunpack.c.h.b16 %v2065
    %v2167 = vunpack.c.l.b16 %v2066
    %v2168 = vunpack.c.h.b16 %v2066
    %v2169 = vunpack.c.l.b16 %v2067
    %v2170 = vunpack.c.h.b16 %v2067
    %v2171 = vunpack.c.l.b16 %v2068
    %v2172 = vunpack.c.h.b16 %v2068
    %v2173 = vunpack.c.l.b16 %v2069
    %v2174 = vunpack.c.h.b16 %v2069
    %v2175 = vunpack.c.l.b16 %v2070
    %v2176 = vunpack.c.h.b16 %v2070
    %v2177 = vunpack.c.l.b16 %v2071
    %v2178 = vunpack.c.h.b16 %v2071
    %v2179 = vunpack.c.l.b16 %v2072
    %v2180 = vunpack.c.h.b16 %v2072
    %v2181 = vunpack.c.l.b16 %v2073
    %v2182 = vunpack.c.h.b16 %v2073
    %v2183 = vunpack.c.l.b16 %v2074
    %v2184 = vunpack.c.h.b16 %v2074
    %v2185 = vunpack.c.l.b16 %v2075
    %v2186 = vunpack.c.h.b16 %v2075
    %v2187 = vunpack.c.l.b16 %v2076
    %v2188 = vunpack.c.h.b16 %v2076
    %v2189 = vunpack.c.l.b16 %v2077
    %v2190 = vunpack.c.h.b16 %v2077
    %v2191 = vunpack.c.l.b16 %v2078
    %v2192 = vunpack.c.h.b16 %v2078
    %v2193 = vunpack.c.l.b16 %v2079
    %v2194 = vunpack.c.h.b16 %v2079
    %v2195 = vunpack.c.l.b16 %v2080
    %v2196 = vunpack.c.h.b16 %v2080
    %v2197 = vunpack.c.l.b16 %v2081
    %v2198 = vunpack.c.h.b16 %v2081
    %v2199 = vunpack.c.l.b16 %v2082
    %v2200 = vunpack.c.h.b16 %v2082
    %v2201 = vunpack.c.l.b16 %v2083
    %v2202 = vunpack.c.h.b16 %v2083
    %v2203 = vunpack.c.l.b16 %v2084
    %v2204 = vunpack.c.h.b16 %v2084
    %v2205 = vunpack.c.l.b16 %v2085
    %v2206 = vunpack.c.h.b16 %v2085
    %v2207 = vunpack.c.l.b16 %v2086
    %v2208 = vunpack.c.h.b16 %v2086
    %v2209 = vunpack.c.l.b16 %v2087
    %v2210 = vunpack.c.h.b16 %v2087
    %v2211 = vunpack.c.l.b16 %v2088
    %v2212 = vunpack.c.h.b16 %v2088
    %v2213 = vunpack.c.l.b16 %v2089
    %v2214 = vunpack.c.h.b16 %v2089
    %v2215 = vunpack.c.l.b16 %v2090
    %v2216 = vunpack.c.h.b16 %v2090
    %v2217 = vunpack.c.l.b16 %v2091
    %v2218 = vunpack.c.h.b16 %v2091
    %v2219 = vunpack.c.l.b16 %v2092
    %v2220 = vunpack.c.h.b16 %v2092
    %v2221 = vunpack.c.l.b16 %v2093
    %v2222 = vunpack.c.h.b16 %v2093
    %v2223 = vunpack.c.l.b16 %v2094
    %v2224 = vunpack.c.h.b16 %v2094
    %v2225 = vunpack.c.l.b16 %v2095
    %v2226 = vunpack.c.h.b16 %v2095
    %v2227 = vunpack.c.l.b16 %v2096
    %v2228 = vunpack.c.h.b16 %v2096
    %v2229 = vunpack.c.l.b16 %v2097
    %v2230 = vunpack.c.h.b16 %v2097
    %v2231 = vunpack.c.l.b16 %v2098
    %v2232 = vunpack.c.h.b16 %v2098
    %v2233 = vunpack.c.l.b16 %v2099
    %v2234 = vunpack.c.h.b16 %v2099
    %v2235 = vunpack.c.l.b16 %v2100
    %v2236 = vunpack.c.h.b16 %v2100
    %v2237 = vunpack.c.l.b16 %v2101
    %v2238 = vunpack.c.h.b16 %v2101
    %v2239 = vunpack.c.l.b16 %v2102
    %v2240 = vunpack.c.h.b16 %v2102
    %v2241 = vunpack.c.l.b16 %v2103
    %v2242 = vunpack.c.h.b16 %v2103
    %v2243 = vunpack.c.l.b16 %v2104
    %v2244 = vunpack.c.h.b16 %v2104
    %v2245 = vunpack.c.l.b16 %v2105
    %v2246 = vunpack.c.h.b16 %v2105
    %v2247 = vunpack.c.l.b16 %v2106
    %v2248 = vunpack.c.h.b16 %v2106
    %v2249 = vunpack.c.l.b16 %v2107
    %v2250 = vunpack.c.h.b16 %v2107
    %v2251 = vunpack.c.l.b16 %v2108
    %v2252 = vunpack.c.h.b16 %v2108
    %v2253 = vpack.c.b16 %v2163, %v2157
    %v2254 = vpack.c.b16 %v2164, %v2158
    %v2255 = vpack.c.b16 %v2165, %v2159
    %v2256 = vpack.c.b16 %v2166, %v2160
    %v2257 = vpack.c.b16 %v2167, %v2161
    %v2258 = vpack.c.b16 %v2168, %v2162
    %v2259 = vpack.c.b16 %v2175, %v2169
    %v2260 = vpack.c.b16 %v2176, %v2170
    %v2261 = vpack.c.b16 %v2177, %v2171
    %v2262 = vpack.c.b16 %v2178, %v2172
    %v2263 = vpack.c.b16 %v2179, %v2173
    %v2264 = vpack.c.b16 %v2180, %v2174
    %v2265 = vpack.c.b16 %v2187, %v2181
    %v2266 = vpack.c.b16 %v2188, %v2182
    %v2267 = vpack.c.b16 %v2189, %v2183
    %v2268 = vpack.c.b16 %v2190, %v2184
    %v2269 = vpack.c.b16 %v2191, %v2185
    %v2270 = vpack.c.b16 %v2192, %v2186
    %v2271 = vpack.c.b16 %v2199, %v2193
    %v2272 = vpack.c.b16 %v2200, %v2194
    %v2273 = vpack.c.b16 %v2201, %v2195
    %v2274 = vpack.c.b16 %v2202, %v2196
    %v2275 = vpack.c.b16 %v2203, %v2197
    %v2276 = vpack.c.b16 %v2204, %v2198
    %v2277 = vpack.c.b16 %v2211, %v2205
    %v2278 = vpack.c.b16 %v2212, %v2206
    %v2279 = vpack.c.b16 %v2213, %v2207
    %v2280 = vpack.c.b16 %v2214, %v2208
    %v2281 = vpack.c.b16 %v2215, %v2209
    %v2282 = vpack.c.b16 %v2216, %v2210
    %v2283 = vpack.c.b16 %v2223, %v2217
    %v2284 = vpack.c.b16 %v2224, %v2218
    %v2285 = vpack.c.b16 %v2225, %v2219
    %v2286 = vpack.c.b16 %v2226, %v2220
    %v2287 = vpack.c.b16 %v2227, %v2221
    %v2288 = vpack.c.b16 %v2228, %v2222
    %v2289 = vpack.c.b16 %v2235, %v2229
    %v2290 = vpack.c.b16 %v2236, %v2230
    %v2291 = vpack.c.b16 %v2237, %v2231
    %v2292 = vpack.c.b16 %v2238, %v2232
    %v2293 = vpack.c.b16 %v2239, %v2233
    %v2294 = vpack.c.b16 %v2240, %v2234
    %v2295 = vpack.c.b16 %v2247, %v2241
    %v2296 = vpack.c.b16 %v2248, %v2242
    %v2297 = vpack.c.b16 %v2249, %v2243
    %v2298 = vpack.c.b16 %v2250, %v2244
    %v2299 = vpack.c.b16 %v2251, %v2245
    %v2300 = vpack.c.b16 %v2252, %v2246
    %2349 = vmatprep.subr.bf16.mxu0 %v2254
    %2350 = vmatpush1.bf16.msra.mxu0 %v2253
    %2351 = vmatprep.subr.bf16.mxu0 %v2260
    %2352 = vmatpush1.bf16.msra.mxu0 %v2259
    %2353 = vmatprep.subr.bf16.mxu0 %v2266
    %2354 = vmatpush1.bf16.msra.mxu0 %v2265
    %2355 = vmatprep.subr.bf16.mxu0 %v2272
    %2356 = vmatpush1.bf16.msra.mxu0 %v2271
    %2357 = vmatprep.subr.bf16.mxu0 %v2278
    %2358 = vmatpush1.bf16.msra.mxu0 %v2277
    %2359 = vmatprep.subr.bf16.mxu0 %v2284
    %2360 = vmatpush1.bf16.msra.mxu0 %v2283
    %2361 = vmatprep.subr.bf16.mxu0 %v2290
    %2362 = vmatpush1.bf16.msra.mxu0 %v2289
    %2363 = vmatprep.subr.bf16.mxu0 %v2296
    %2364 = vmatpush1.bf16.msra.mxu0 %v2295
    %2365 = vmatprep.subr.bf16.mxu0 0
    %2366 = vmatpush1.bf16.msra.mxu0 0
    %2367 = vmatprep.subr.bf16.mxu0 0
    %2368 = vmatpush1.bf16.msra.mxu0 0
    %2369 = vmatprep.subr.bf16.mxu0 0
    %2370 = vmatpush1.bf16.msra.mxu0 0
    %2371 = vmatprep.subr.bf16.mxu0 0
    %2372 = vmatpush1.bf16.msra.mxu0 0
    %2373 = vmatprep.subr.bf16.mxu0 0
    %2374 = vmatpush1.bf16.msra.mxu0 0
    %2375 = vmatprep.subr.bf16.mxu0 0
    %2376 = vmatpush1.bf16.msra.mxu0 0
    %2377 = vmatprep.subr.bf16.mxu0 0
    %2378 = vmatpush1.bf16.msra.mxu0 0
    %2379 = vmatprep.subr.bf16.mxu0 0
    %2380 = vmatpush1.bf16.msra.mxu0 0
    %2381 = vmatprep.mubr.bf16.mxu0 0
    %2382 = vmatmul.mubr.bf16.gmra.mrb[0].mxu0 %v2060
    %v2383 = vpop.f32.mrb[0].mxu0
    %v2384 = vadd.f32 0.0, %v2383
    %v2385 = vpop.f32.mrb[0].mxu0
    %v2386 = vadd.f32 0.0, %v2385
    %v2387 = vpop.f32.mrb[0].mxu0
    %v2388 = vpop.f32.mrb[0].mxu0
    %2389 = vdwg.mxu0
    %2390 = vmatprep.subr.bf16.mxu0 %v2256
    %2391 = vmatpush1.bf16.msra.mxu0 %v2255
    %2392 = vmatprep.subr.bf16.mxu0 %v2262
    %2393 = vmatpush1.bf16.msra.mxu0 %v2261
    %2394 = vmatprep.subr.bf16.mxu0 %v2268
    %2395 = vmatpush1.bf16.msra.mxu0 %v2267
    %2396 = vmatprep.subr.bf16.mxu0 %v2274
    %2397 = vmatpush1.bf16.msra.mxu0 %v2273
    %2398 = vmatprep.subr.bf16.mxu0 %v2280
    %2399 = vmatpush1.bf16.msra.mxu0 %v2279
    %2400 = vmatprep.subr.bf16.mxu0 %v2286
    %2401 = vmatpush1.bf16.msra.mxu0 %v2285
    %2402 = vmatprep.subr.bf16.mxu0 %v2292
    %2403 = vmatpush1.bf16.msra.mxu0 %v2291
    %2404 = vmatprep.subr.bf16.mxu0 %v2298
    %2405 = vmatpush1.bf16.msra.mxu0 %v2297
    %2406 = vmatprep.subr.bf16.mxu0 0
    %2407 = vmatpush1.bf16.msra.mxu0 0
    %2408 = vmatprep.subr.bf16.mxu0 0
    %2409 = vmatpush1.bf16.msra.mxu0 0
    %2410 = vmatprep.subr.bf16.mxu0 0
    %2411 = vmatpush1.bf16.msra.mxu0 0
    %2412 = vmatprep.subr.bf16.mxu0 0
    %2413 = vmatpush1.bf16.msra.mxu0 0
    %2414 = vmatprep.subr.bf16.mxu0 0
    %2415 = vmatpush1.bf16.msra.mxu0 0
    %2416 = vmatprep.subr.bf16.mxu0 0
    %2417 = vmatpush1.bf16.msra.mxu0 0
    %2418 = vmatprep.subr.bf16.mxu0 0
    %2419 = vmatpush1.bf16.msra.mxu0 0
    %2420 = vmatprep.subr.bf16.mxu0 0
    %2421 = vmatpush1.bf16.msra.mxu0 0
    %2422 = vmatprep.mubr.bf16.mxu0 0
    %2423 = vmatmul.mubr.bf16.gmra.mrb[0].mxu0 %v2060
    %v2424 = vpop.f32.mrb[0].mxu0
    %v2425 = vadd.f32 0.0, %v2424
    %v2426 = vpop.f32.mrb[0].mxu0
    %v2427 = vadd.f32 0.0, %v2426
    %v2428 = vpop.f32.mrb[0].mxu0
    %v2429 = vpop.f32.mrb[0].mxu0
    %2430 = vdwg.mxu0
    %2431 = vmatprep.subr.bf16.mxu0 %v2258
    %2432 = vmatpush1.bf16.msra.mxu0 %v2257
    %2433 = vmatprep.subr.bf16.mxu0 %v2264
    %2434 = vmatpush1.bf16.msra.mxu0 %v2263
    %2435 = vmatprep.subr.bf16.mxu0 %v2270
    %2436 = vmatpush1.bf16.msra.mxu0 %v2269
    %2437 = vmatprep.subr.bf16.mxu0 %v2276
    %2438 = vmatpush1.bf16.msra.mxu0 %v2275
    %2439 = vmatprep.subr.bf16.mxu0 %v2282
    %2440 = vmatpush1.bf16.msra.mxu0 %v2281
    %2441 = vmatprep.subr.bf16.mxu0 %v2288
    %2442 = vmatpush1.bf16.msra.mxu0 %v2287
    %2443 = vmatprep.subr.bf16.mxu0 %v2294
    %2444 = vmatpush1.bf16.msra.mxu0 %v2293
    %2445 = vmatprep.subr.bf16.mxu0 %v2300
    %2446 = vmatpush1.bf16.msra.mxu0 %v2299
    %2447 = vmatprep.subr.bf16.mxu0 0
    %2448 = vmatpush1.bf16.msra.mxu0 0
    %2449 = vmatprep.subr.bf16.mxu0 0
    %2450 = vmatpush1.bf16.msra.mxu0 0
    %2451 = vmatprep.subr.bf16.mxu0 0
    %2452 = vmatpush1.bf16.msra.mxu0 0
    %2453 = vmatprep.subr.bf16.mxu0 0
    %2454 = vmatpush1.bf16.msra.mxu0 0
    %2455 = vmatprep.subr.bf16.mxu0 0
    %2456 = vmatpush1.bf16.msra.mxu0 0
    %2457 = vmatprep.subr.bf16.mxu0 0
    %2458 = vmatpush1.bf16.msra.mxu0 0
    %2459 = vmatprep.subr.bf16.mxu0 0
    %2460 = vmatpush1.bf16.msra.mxu0 0
    %2461 = vmatprep.subr.bf16.mxu0 0
    %2462 = vmatpush1.bf16.msra.mxu0 0
    %2463 = vmatprep.mubr.bf16.mxu0 0
    %2464 = vmatmul.mubr.bf16.gmra.mrb[0].mxu0 %v2060
    %v2465 = vpop.f32.mrb[0].mxu0
    %v2466 = vadd.f32 0.0, %v2465
    %v2467 = vpop.f32.mrb[0].mxu0
    %v2468 = vadd.f32 0.0, %v2467
    %v2469 = vpop.f32.mrb[0].mxu0
    %v2470 = vpop.f32.mrb[0].mxu0
    %2471 = vdwg.mxu0
    %v2520 = vunpack.c.l.b16 %v2012
    %v2521 = vunpack.c.h.b16 %v2012
    %v2522 = vunpack.c.l.b16 %v2013
    %v2523 = vunpack.c.h.b16 %v2013
    %v2524 = vunpack.c.l.b16 %v2014
    %v2525 = vunpack.c.h.b16 %v2014
    %v2526 = vunpack.c.l.b16 %v2015
    %v2527 = vunpack.c.h.b16 %v2015
    %v2528 = vunpack.c.l.b16 %v2016
    %v2529 = vunpack.c.h.b16 %v2016
    %v2530 = vunpack.c.l.b16 %v2017
    %v2531 = vunpack.c.h.b16 %v2017
    %v2532 = vunpack.c.l.b16 %v2018
    %v2533 = vunpack.c.h.b16 %v2018
    %v2534 = vunpack.c.l.b16 %v2019
    %v2535 = vunpack.c.h.b16 %v2019
    %v2536 = vunpack.c.l.b16 %v2020
    %v2537 = vunpack.c.h.b16 %v2020
    %v2538 = vunpack.c.l.b16 %v2021
    %v2539 = vunpack.c.h.b16 %v2021
    %v2540 = vunpack.c.l.b16 %v2022
    %v2541 = vunpack.c.h.b16 %v2022
    %v2542 = vunpack.c.l.b16 %v2023
    %v2543 = vunpack.c.h.b16 %v2023
    %v2544 = vunpack.c.l.b16 %v2024
    %v2545 = vunpack.c.h.b16 %v2024
    %v2546 = vunpack.c.l.b16 %v2025
    %v2547 = vunpack.c.h.b16 %v2025
    %v2548 = vunpack.c.l.b16 %v2026
    %v2549 = vunpack.c.h.b16 %v2026
    %v2550 = vunpack.c.l.b16 %v2027
    %v2551 = vunpack.c.h.b16 %v2027
    %v2552 = vunpack.c.l.b16 %v2028
    %v2553 = vunpack.c.h.b16 %v2028
    %v2554 = vunpack.c.l.b16 %v2029
    %v2555 = vunpack.c.h.b16 %v2029
    %v2556 = vunpack.c.l.b16 %v2030
    %v2557 = vunpack.c.h.b16 %v2030
    %v2558 = vunpack.c.l.b16 %v2031
    %v2559 = vunpack.c.h.b16 %v2031
    %v2560 = vunpack.c.l.b16 %v2032
    %v2561 = vunpack.c.h.b16 %v2032
    %v2562 = vunpack.c.l.b16 %v2033
    %v2563 = vunpack.c.h.b16 %v2033
    %v2564 = vunpack.c.l.b16 %v2034
    %v2565 = vunpack.c.h.b16 %v2034
    %v2566 = vunpack.c.l.b16 %v2035
    %v2567 = vunpack.c.h.b16 %v2035
    %v2568 = vunpack.c.l.b16 %v2036
    %v2569 = vunpack.c.h.b16 %v2036
    %v2570 = vunpack.c.l.b16 %v2037
    %v2571 = vunpack.c.h.b16 %v2037
    %v2572 = vunpack.c.l.b16 %v2038
    %v2573 = vunpack.c.h.b16 %v2038
    %v2574 = vunpack.c.l.b16 %v2039
    %v2575 = vunpack.c.h.b16 %v2039
    %v2576 = vunpack.c.l.b16 %v2040
    %v2577 = vunpack.c.h.b16 %v2040
    %v2578 = vunpack.c.l.b16 %v2041
    %v2579 = vunpack.c.h.b16 %v2041
    %v2580 = vunpack.c.l.b16 %v2042
    %v2581 = vunpack.c.h.b16 %v2042
    %v2582 = vunpack.c.l.b16 %v2043
    %v2583 = vunpack.c.h.b16 %v2043
    %v2584 = vunpack.c.l.b16 %v2044
    %v2585 = vunpack.c.h.b16 %v2044
    %v2586 = vunpack.c.l.b16 %v2045
    %v2587 = vunpack.c.h.b16 %v2045
    %v2588 = vunpack.c.l.b16 %v2046
    %v2589 = vunpack.c.h.b16 %v2046
    %v2590 = vunpack.c.l.b16 %v2047
    %v2591 = vunpack.c.h.b16 %v2047
    %v2592 = vunpack.c.l.b16 %v2048
    %v2593 = vunpack.c.h.b16 %v2048
    %v2594 = vunpack.c.l.b16 %v2049
    %v2595 = vunpack.c.h.b16 %v2049
    %v2596 = vunpack.c.l.b16 %v2050
    %v2597 = vunpack.c.h.b16 %v2050
    %v2598 = vunpack.c.l.b16 %v2051
    %v2599 = vunpack.c.h.b16 %v2051
    %v2600 = vunpack.c.l.b16 %v2052
    %v2601 = vunpack.c.h.b16 %v2052
    %v2602 = vunpack.c.l.b16 %v2053
    %v2603 = vunpack.c.h.b16 %v2053
    %v2604 = vunpack.c.l.b16 %v2054
    %v2605 = vunpack.c.h.b16 %v2054
    %v2606 = vunpack.c.l.b16 %v2055
    %v2607 = vunpack.c.h.b16 %v2055
    %v2608 = vunpack.c.l.b16 %v2056
    %v2609 = vunpack.c.h.b16 %v2056
    %v2610 = vunpack.c.l.b16 %v2057
    %v2611 = vunpack.c.h.b16 %v2057
    %v2612 = vunpack.c.l.b16 %v2058
    %v2613 = vunpack.c.h.b16 %v2058
    %v2614 = vunpack.c.l.b16 %v2059
    %v2615 = vunpack.c.h.b16 %v2059
    %v2616 = vpack.c.b16 %v2526, %v2520
    %v2617 = vpack.c.b16 %v2527, %v2521
    %v2618 = vpack.c.b16 %v2528, %v2522
    %v2619 = vpack.c.b16 %v2529, %v2523
    %v2620 = vpack.c.b16 %v2530, %v2524
    %v2621 = vpack.c.b16 %v2531, %v2525
    %v2622 = vpack.c.b16 %v2538, %v2532
    %v2623 = vpack.c.b16 %v2539, %v2533
    %v2624 = vpack.c.b16 %v2540, %v2534
    %v2625 = vpack.c.b16 %v2541, %v2535
    %v2626 = vpack.c.b16 %v2542, %v2536
    %v2627 = vpack.c.b16 %v2543, %v2537
    %v2628 = vpack.c.b16 %v2550, %v2544
    %v2629 = vpack.c.b16 %v2551, %v2545
    %v2630 = vpack.c.b16 %v2552, %v2546
    %v2631 = vpack.c.b16 %v2553, %v2547
    %v2632 = vpack.c.b16 %v2554, %v2548
    %v2633 = vpack.c.b16 %v2555, %v2549
    %v2634 = vpack.c.b16 %v2562, %v2556
    %v2635 = vpack.c.b16 %v2563, %v2557
    %v2636 = vpack.c.b16 %v2564, %v2558
    %v2637 = vpack.c.b16 %v2565, %v2559
    %v2638 = vpack.c.b16 %v2566, %v2560
    %v2639 = vpack.c.b16 %v2567, %v2561
    %v2640 = vpack.c.b16 %v2574, %v2568
    %v2641 = vpack.c.b16 %v2575, %v2569
    %v2642 = vpack.c.b16 %v2576, %v2570
    %v2643 = vpack.c.b16 %v2577, %v2571
    %v2644 = vpack.c.b16 %v2578, %v2572
    %v2645 = vpack.c.b16 %v2579, %v2573
    %v2646 = vpack.c.b16 %v2586, %v2580
    %v2647 = vpack.c.b16 %v2587, %v2581
    %v2648 = vpack.c.b16 %v2588, %v2582
    %v2649 = vpack.c.b16 %v2589, %v2583
    %v2650 = vpack.c.b16 %v2590, %v2584
    %v2651 = vpack.c.b16 %v2591, %v2585
    %v2652 = vpack.c.b16 %v2598, %v2592
    %v2653 = vpack.c.b16 %v2599, %v2593
    %v2654 = vpack.c.b16 %v2600, %v2594
    %v2655 = vpack.c.b16 %v2601, %v2595
    %v2656 = vpack.c.b16 %v2602, %v2596
    %v2657 = vpack.c.b16 %v2603, %v2597
    %v2658 = vpack.c.b16 %v2610, %v2604
    %v2659 = vpack.c.b16 %v2611, %v2605
    %v2660 = vpack.c.b16 %v2612, %v2606
    %v2661 = vpack.c.b16 %v2613, %v2607
    %v2662 = vpack.c.b16 %v2614, %v2608
    %v2663 = vpack.c.b16 %v2615, %v2609
    %2712 = vmatprep.subr.bf16.mxu0 %v2617
    %2713 = vmatpush1.bf16.msra.mxu0 %v2616
    %2714 = vmatprep.subr.bf16.mxu0 %v2623
    %2715 = vmatpush1.bf16.msra.mxu0 %v2622
    %2716 = vmatprep.subr.bf16.mxu0 %v2629
    %2717 = vmatpush1.bf16.msra.mxu0 %v2628
    %2718 = vmatprep.subr.bf16.mxu0 %v2635
    %2719 = vmatpush1.bf16.msra.mxu0 %v2634
    %2720 = vmatprep.subr.bf16.mxu0 %v2641
    %2721 = vmatpush1.bf16.msra.mxu0 %v2640
    %2722 = vmatprep.subr.bf16.mxu0 %v2647
    %2723 = vmatpush1.bf16.msra.mxu0 %v2646
    %2724 = vmatprep.subr.bf16.mxu0 %v2653
    %2725 = vmatpush1.bf16.msra.mxu0 %v2652
    %2726 = vmatprep.subr.bf16.mxu0 %v2659
    %2727 = vmatpush1.bf16.msra.mxu0 %v2658
    %2728 = vmatprep.subr.bf16.mxu0 0
    %2729 = vmatpush1.bf16.msra.mxu0 0
    %2730 = vmatprep.subr.bf16.mxu0 0
    %2731 = vmatpush1.bf16.msra.mxu0 0
    %2732 = vmatprep.subr.bf16.mxu0 0
    %2733 = vmatpush1.bf16.msra.mxu0 0
    %2734 = vmatprep.subr.bf16.mxu0 0
    %2735 = vmatpush1.bf16.msra.mxu0 0
    %2736 = vmatprep.subr.bf16.mxu0 0
    %2737 = vmatpush1.bf16.msra.mxu0 0
    %2738 = vmatprep.subr.bf16.mxu0 0
    %2739 = vmatpush1.bf16.msra.mxu0 0
    %2740 = vmatprep.subr.bf16.mxu0 0
    %2741 = vmatpush1.bf16.msra.mxu0 0
    %2742 = vmatprep.subr.bf16.mxu0 0
    %2743 = vmatpush1.bf16.msra.mxu0 0
    %2744 = vmatprep.mubr.bf16.mxu0 0
    %2745 = vmatmul.mubr.bf16.gmra.mrb[0].mxu0 %v2011
    %v2746 = vpop.f32.mrb[0].mxu0
    %v2747 = vadd.f32 %v2384, %v2746
    %v2748 = vpop.f32.mrb[0].mxu0
    %v2749 = vadd.f32 %v2386, %v2748
    %v2750 = vpop.f32.mrb[0].mxu0
    %v2751 = vpop.f32.mrb[0].mxu0
    %2752 = vdwg.mxu0
    %2753 = vmatprep.subr.bf16.mxu0 %v2619
    %2754 = vmatpush1.bf16.msra.mxu0 %v2618
    %2755 = vmatprep.subr.bf16.mxu0 %v2625
    %2756 = vmatpush1.bf16.msra.mxu0 %v2624
    %2757 = vmatprep.subr.bf16.mxu0 %v2631
    %2758 = vmatpush1.bf16.msra.mxu0 %v2630
    %2759 = vmatprep.subr.bf16.mxu0 %v2637
    %2760 = vmatpush1.bf16.msra.mxu0 %v2636
    %2761 = vmatprep.subr.bf16.mxu0 %v2643
    %2762 = vmatpush1.bf16.msra.mxu0 %v2642
    %2763 = vmatprep.subr.bf16.mxu0 %v2649
    %2764 = vmatpush1.bf16.msra.mxu0 %v2648
    %2765 = vmatprep.subr.bf16.mxu0 %v2655
    %2766 = vmatpush1.bf16.msra.mxu0 %v2654
    %2767 = vmatprep.subr.bf16.mxu0 %v2661
    %2768 = vmatpush1.bf16.msra.mxu0 %v2660
    %2769 = vmatprep.subr.bf16.mxu0 0
    %2770 = vmatpush1.bf16.msra.mxu0 0
    %2771 = vmatprep.subr.bf16.mxu0 0
    %2772 = vmatpush1.bf16.msra.mxu0 0
    %2773 = vmatprep.subr.bf16.mxu0 0
    %2774 = vmatpush1.bf16.msra.mxu0 0
    %2775 = vmatprep.subr.bf16.mxu0 0
    %2776 = vmatpush1.bf16.msra.mxu0 0
    %2777 = vmatprep.subr.bf16.mxu0 0
    %2778 = vmatpush1.bf16.msra.mxu0 0
    %2779 = vmatprep.subr.bf16.mxu0 0
    %2780 = vmatpush1.bf16.msra.mxu0 0
    %2781 = vmatprep.subr.bf16.mxu0 0
    %2782 = vmatpush1.bf16.msra.mxu0 0
    %2783 = vmatprep.subr.bf16.mxu0 0
    %2784 = vmatpush1.bf16.msra.mxu0 0
    %2785 = vmatprep.mubr.bf16.mxu0 0
    %2786 = vmatmul.mubr.bf16.gmra.mrb[0].mxu0 %v2011
    %v2787 = vpop.f32.mrb[0].mxu0
    %v2788 = vadd.f32 %v2425, %v2787
    %v2789 = vpop.f32.mrb[0].mxu0
    %v2790 = vadd.f32 %v2427, %v2789
    %v2791 = vpop.f32.mrb[0].mxu0
    %v2792 = vpop.f32.mrb[0].mxu0
    %2793 = vdwg.mxu0
    %2794 = vmatprep.subr.bf16.mxu0 %v2621
    %2795 = vmatpush1.bf16.msra.mxu0 %v2620
    %2796 = vmatprep.subr.bf16.mxu0 %v2627
    %2797 = vmatpush1.bf16.msra.mxu0 %v2626
    %2798 = vmatprep.subr.bf16.mxu0 %v2633
    %2799 = vmatpush1.bf16.msra.mxu0 %v2632
    %2800 = vmatprep.subr.bf16.mxu0 %v2639
    %2801 = vmatpush1.bf16.msra.mxu0 %v2638
    %2802 = vmatprep.subr.bf16.mxu0 %v2645
    %2803 = vmatpush1.bf16.msra.mxu0 %v2644
    %2804 = vmatprep.subr.bf16.mxu0 %v2651
    %2805 = vmatpush1.bf16.msra.mxu0 %v2650
    %2806 = vmatprep.subr.bf16.mxu0 %v2657
    %2807 = vmatpush1.bf16.msra.mxu0 %v2656
    %2808 = vmatprep.subr.bf16.mxu0 %v2663
    %2809 = vmatpush1.bf16.msra.mxu0 %v2662
    %2810 = vmatprep.subr.bf16.mxu0 0
    %2811 = vmatpush1.bf16.msra.mxu0 0
    %2812 = vmatprep.subr.bf16.mxu0 0
    %2813 = vmatpush1.bf16.msra.mxu0 0
    %2814 = vmatprep.subr.bf16.mxu0 0
    %2815 = vmatpush1.bf16.msra.mxu0 0
    %2816 = vmatprep.subr.bf16.mxu0 0
    %2817 = vmatpush1.bf16.msra.mxu0 0
    %2818 = vmatprep.subr.bf16.mxu0 0
    %2819 = vmatpush1.bf16.msra.mxu0 0
    %2820 = vmatprep.subr.bf16.mxu0 0
    %2821 = vmatpush1.bf16.msra.mxu0 0
    %2822 = vmatprep.subr.bf16.mxu0 0
    %2823 = vmatpush1.bf16.msra.mxu0 0
    %2824 = vmatprep.subr.bf16.mxu0 0
    %2825 = vmatpush1.bf16.msra.mxu0 0
    %2826 = vmatprep.mubr.bf16.mxu0 0
    %2827 = vmatmul.mubr.bf16.gmra.mrb[0].mxu0 %v2011
    %v2828 = vpop.f32.mrb[0].mxu0
    %v2829 = vadd.f32 %v2466, %v2828
    %v2830 = vpop.f32.mrb[0].mxu0
    %v2831 = vadd.f32 %v2468, %v2830
    %v2832 = vpop.f32.mrb[0].mxu0
    %v2833 = vpop.f32.mrb[0].mxu0
    %2834 = vdwg.mxu0
    %v2835 = vld [vmem:[#allocation10] sm:$0x3f]
    %v2837 = vlaneseq
    %v2838 = vshrl.u32 %v2837, 7
    %v2839 = vsub.s32 0, %v2838
    %v2840 = vrot.slane %v2835, %v2839
    %v2841 = vlaneseq
    %v2842 = vshrl.u32 %v2841, 7
    %v2843 = vsub.s32 1, %v2842
    %v2844 = vrot.slane %v2835, %v2843
    %v2845 = vlaneseq
    %v2846 = vshrl.u32 %v2845, 7
    %v2847 = vsub.s32 2, %v2846
    %v2848 = vrot.slane %v2835, %v2847
    %v2849 = vlaneseq
    %v2850 = vshrl.u32 %v2849, 7
    %v2851 = vsub.s32 3, %v2850
    %v2852 = vrot.slane %v2835, %v2851
    %v2853 = vlaneseq
    %v2854 = vshrl.u32 %v2853, 7
    %v2855 = vsub.s32 4, %v2854
    %v2856 = vrot.slane %v2835, %v2855
    %v2857 = vlaneseq
    %v2858 = vshrl.u32 %v2857, 7
    %v2859 = vsub.s32 5, %v2858
    %v2860 = vrot.slane %v2835, %v2859
    %v2867 = vadd.f32 %v2747, %v2840
    %v2868 = vadd.f32 %v2749, %v2844
    %v2869 = vadd.f32 %v2788, %v2848
    %v2870 = vadd.f32 %v2790, %v2852
    %v2871 = vadd.f32 %v2829, %v2856
    %v2872 = vadd.f32 %v2831, %v2860
    %v2873 = vxor.u32 %v2867, 2147483648
    %v2874 = vxor.u32 %v2868, 2147483648
    %v2875 = vmul.f32 %v2873, 1.442695
    %v2876 = vpow.pop %v2875
    %v2877 = vmul.f32 %v2874, 1.442695
    %v2878 = vpow.pop %v2877
    %v2879 = vadd.f32 %v2876, 1.0
    %v2880 = vadd.f32 %v2878, 1.0
    %v2881 = vrcp.pop %v2879
    %v2882 = vmul.f32 1.0, %v2881
    %v2883 = vrcp.pop %v2880
    %v2884 = vmul.f32 1.0, %v2883
    %v2885 = vtanh.pop %v2869
    %v2886 = vtanh.pop %v2870
    %v2887 = vxor.u32 %v2871, 2147483648
    %v2888 = vxor.u32 %v2872, 2147483648
    %v2889 = vmul.f32 %v2887, 1.442695
    %v2890 = vpow.pop %v2889
    %v2891 = vmul.f32 %v2888, 1.442695
    %v2892 = vpow.pop %v2891
    %v2893 = vadd.f32 %v2890, 1.0
    %v2894 = vadd.f32 %v2892, 1.0
    %v2895 = vrcp.pop %v2893
    %v2896 = vmul.f32 1.0, %v2895
    %v2897 = vrcp.pop %v2894
    %v2898 = vmul.f32 1.0, %v2897
    %v2899 = vmul.f32 %v2882, %v2885
    %v2900 = vmul.f32 %v2884, %v2886
    %v2901 = vtanh.pop %v2899
    %v2902 = vtanh.pop %v2900
    %v2903 = vmul.f32 %v2896, %v2901
    %v2904 = vmul.f32 %v2898, %v2902
    %v2905 = vpack.c.bf16 %v2903, %v2903
    %v2906 = vpack.c.bf16 %v2904, %v2904
    %v2907 = vld [vmem:[%s13] sm:$0xff]
    %v2908 = vld [vmem:[%s13 + $0x8] sm:$0xff]
    %v2909 = vld [vmem:[%s13 + $0x10] sm:$0xff]
    %v2910 = vld [vmem:[%s13 + $0x18] sm:$0xff]
    %v2911 = vld [vmem:[%s13 + $0x20] sm:$0xff]
    %v2912 = vld [vmem:[%s13 + $0x28] sm:$0xff]
    %v2913 = vld [vmem:[%s13 + $0x30] sm:$0xff]
    %v2914 = vld [vmem:[%s13 + $0x38] sm:$0xff]
    %v2915 = vld [vmem:[%s13 + $0x40] sm:$0xff]
    %v2916 = vld [vmem:[%s13 + $0x48] sm:$0xff]
    %v2917 = vld [vmem:[%s13 + $0x50] sm:$0xff]
    %v2918 = vld [vmem:[%s13 + $0x58] sm:$0xff]
    %v2919 = vld [vmem:[%s13 + $0x60] sm:$0xff]
    %v2920 = vld [vmem:[%s13 + $0x68] sm:$0xff]
    %v2921 = vld [vmem:[%s13 + $0x70] sm:$0xff]
    %v2922 = vld [vmem:[%s13 + $0x78] sm:$0xff]
    %v2923 = vld [vmem:[%s13 + $0x80] sm:$0xff]
    %v2924 = vld [vmem:[%s13 + $0x88] sm:$0xff]
    %v2925 = vld [vmem:[%s13 + $0x90] sm:$0xff]
    %v2926 = vld [vmem:[%s13 + $0x98] sm:$0xff]
    %v2927 = vld [vmem:[%s13 + $0xa0] sm:$0xff]
    %v2928 = vld [vmem:[%s13 + $0xa8] sm:$0xff]
    %v2929 = vld [vmem:[%s13 + $0xb0] sm:$0xff]
    %v2930 = vld [vmem:[%s13 + $0xb8] sm:$0xff]
    %v2931 = vld [vmem:[%s13 + $0xc0] sm:$0xff]
    %v2932 = vld [vmem:[%s13 + $0xc8] sm:$0xff]
    %v2933 = vld [vmem:[%s13 + $0xd0] sm:$0xff]
    %v2934 = vld [vmem:[%s13 + $0xd8] sm:$0xff]
    %v2935 = vld [vmem:[%s13 + $0xe0] sm:$0xff]
    %v2936 = vld [vmem:[%s13 + $0xe8] sm:$0xff]
    %v2937 = vld [vmem:[%s13 + $0xf0] sm:$0xff]
    %v2938 = vld [vmem:[%s13 + $0xf8] sm:$0xff]
    %v2939 = vld [vmem:[%s13 + $0x100] sm:$0xff]
    %v2940 = vld [vmem:[%s13 + $0x108] sm:$0xff]
    %v2941 = vld [vmem:[%s13 + $0x110] sm:$0xff]
    %v2942 = vld [vmem:[%s13 + $0x118] sm:$0xff]
    %v2943 = vld [vmem:[%s13 + $0x120] sm:$0xff]
    %v2944 = vld [vmem:[%s13 + $0x128] sm:$0xff]
    %v2945 = vld [vmem:[%s13 + $0x130] sm:$0xff]
    %v2946 = vld [vmem:[%s13 + $0x138] sm:$0xff]
    %v2947 = vld [vmem:[%s13 + $0x140] sm:$0xff]
    %v2948 = vld [vmem:[%s13 + $0x148] sm:$0xff]
    %v2949 = vld [vmem:[%s13 + $0x150] sm:$0xff]
    %v2950 = vld [vmem:[%s13 + $0x158] sm:$0xff]
    %v2951 = vld [vmem:[%s13 + $0x160] sm:$0xff]
    %v2952 = vld [vmem:[%s13 + $0x168] sm:$0xff]
    %v2953 = vld [vmem:[%s13 + $0x170] sm:$0xff]
    %v2954 = vld [vmem:[%s13 + $0x178] sm:$0xff]
    %v2955 = vld [vmem:[%s13 + $0x180] sm:$0xff]
    %v2956 = vld [vmem:[%s13 + $0x188] sm:$0xff]
    %v2957 = vld [vmem:[%s13 + $0x190] sm:$0xff]
    %v2958 = vld [vmem:[%s13 + $0x198] sm:$0xff]
    %v2959 = vld [vmem:[%s13 + $0x1a0] sm:$0xff]
    %v2960 = vld [vmem:[%s13 + $0x1a8] sm:$0xff]
    %v2961 = vld [vmem:[%s13 + $0x1b0] sm:$0xff]
    %v2962 = vld [vmem:[%s13 + $0x1b8] sm:$0xff]
    %v2963 = vld [vmem:[%s13 + $0x1c0] sm:$0xff]
    %v2964 = vld [vmem:[%s13 + $0x1c8] sm:$0xff]
    %v2965 = vld [vmem:[%s13 + $0x1d0] sm:$0xff]
    %v2966 = vld [vmem:[%s13 + $0x1d8] sm:$0xff]
    %v2967 = vld [vmem:[%s13 + $0x1e0] sm:$0xff]
    %v2968 = vld [vmem:[%s13 + $0x1e8] sm:$0xff]
    %v2969 = vld [vmem:[%s13 + $0x1f0] sm:$0xff]
    %v2970 = vld [vmem:[%s13 + $0x1f8] sm:$0xff]
    %v2971 = vld [vmem:[%s13 + $0x200] sm:$0xff]
    %v2972 = vld [vmem:[%s13 + $0x208] sm:$0xff]
    %v2973 = vld [vmem:[%s13 + $0x210] sm:$0xff]
    %v2974 = vld [vmem:[%s13 + $0x218] sm:$0xff]
    %v2975 = vld [vmem:[%s13 + $0x220] sm:$0xff]
    %v2976 = vld [vmem:[%s13 + $0x228] sm:$0xff]
    %v2977 = vld [vmem:[%s13 + $0x230] sm:$0xff]
    %v2978 = vld [vmem:[%s13 + $0x238] sm:$0xff]
    %v2979 = vld [vmem:[%s13 + $0x240] sm:$0xff]
    %v2980 = vld [vmem:[%s13 + $0x248] sm:$0xff]
    %v2981 = vld [vmem:[%s13 + $0x250] sm:$0xff]
    %v2982 = vld [vmem:[%s13 + $0x258] sm:$0xff]
    %v2983 = vld [vmem:[%s13 + $0x260] sm:$0xff]
    %v2984 = vld [vmem:[%s13 + $0x268] sm:$0xff]
    %v2985 = vld [vmem:[%s13 + $0x270] sm:$0xff]
    %v2986 = vld [vmem:[%s13 + $0x278] sm:$0xff]
    %v2987 = vld [vmem:[%s13 + $0x280] sm:$0xff]
    %v2988 = vld [vmem:[%s13 + $0x288] sm:$0xff]
    %v2989 = vld [vmem:[%s13 + $0x290] sm:$0xff]
    %v2990 = vld [vmem:[%s13 + $0x298] sm:$0xff]
    %v2991 = vld [vmem:[%s13 + $0x2a0] sm:$0xff]
    %v2992 = vld [vmem:[%s13 + $0x2a8] sm:$0xff]
    %v2993 = vld [vmem:[%s13 + $0x2b0] sm:$0xff]
    %v2994 = vld [vmem:[%s13 + $0x2b8] sm:$0xff]
    %v2995 = vld [vmem:[%s13 + $0x2c0] sm:$0xff]
    %v2996 = vld [vmem:[%s13 + $0x2c8] sm:$0xff]
    %v2997 = vld [vmem:[%s13 + $0x2d0] sm:$0xff]
    %v2998 = vld [vmem:[%s13 + $0x2d8] sm:$0xff]
    %v2999 = vld [vmem:[%s13 + $0x2e0] sm:$0xff]
    %v3000 = vld [vmem:[%s13 + $0x2e8] sm:$0xff]
    %v3001 = vld [vmem:[%s13 + $0x2f0] sm:$0xff]
    %v3002 = vld [vmem:[%s13 + $0x2f8] sm:$0xff]
    %v3003 = vld [vmem:[%s13 + $0x300] sm:$0xff]
    %v3004 = vld [vmem:[%s13 + $0x308] sm:$0xff]
    %v3005 = vld [vmem:[%s13 + $0x310] sm:$0xff]
    %v3006 = vld [vmem:[%s13 + $0x318] sm:$0xff]
    %v3007 = vld [vmem:[%s13 + $0x320] sm:$0xff]
    %v3008 = vld [vmem:[%s13 + $0x328] sm:$0xff]
    %v3009 = vld [vmem:[%s13 + $0x330] sm:$0xff]
    %v3010 = vld [vmem:[%s13 + $0x338] sm:$0xff]
    %v3011 = vld [vmem:[%s13 + $0x340] sm:$0xff]
    %v3012 = vld [vmem:[%s13 + $0x348] sm:$0xff]
    %v3013 = vld [vmem:[%s13 + $0x350] sm:$0xff]
    %v3014 = vld [vmem:[%s13 + $0x358] sm:$0xff]
    %v3015 = vld [vmem:[%s13 + $0x360] sm:$0xff]
    %v3016 = vld [vmem:[%s13 + $0x368] sm:$0xff]
    %v3017 = vld [vmem:[%s13 + $0x370] sm:$0xff]
    %v3018 = vld [vmem:[%s13 + $0x378] sm:$0xff]
    %v3019 = vld [vmem:[%s13 + $0x380] sm:$0xff]
    %v3020 = vld [vmem:[%s13 + $0x388] sm:$0xff]
    %v3021 = vld [vmem:[%s13 + $0x390] sm:$0xff]
    %v3022 = vld [vmem:[%s13 + $0x398] sm:$0xff]
    %v3023 = vld [vmem:[%s13 + $0x3a0] sm:$0xff]
    %v3024 = vld [vmem:[%s13 + $0x3a8] sm:$0xff]
    %v3025 = vld [vmem:[%s13 + $0x3b0] sm:$0xff]
    %v3026 = vld [vmem:[%s13 + $0x3b8] sm:$0xff]
    %v3027 = vld [vmem:[%s13 + $0x3c0] sm:$0xff]
    %v3028 = vld [vmem:[%s13 + $0x3c8] sm:$0xff]
    %v3029 = vld [vmem:[%s13 + $0x3d0] sm:$0xff]
    %v3030 = vld [vmem:[%s13 + $0x3d8] sm:$0xff]
    %v3031 = vld [vmem:[%s13 + $0x3e0] sm:$0xff]
    %v3032 = vld [vmem:[%s13 + $0x3e8] sm:$0xff]
    %v3033 = vld [vmem:[%s13 + $0x3f0] sm:$0xff]
    %v3034 = vld [vmem:[%s13 + $0x3f8] sm:$0xff]
    %v3035 = vld [vmem:[%s13 + $0x400] sm:$0xff]
    %v3036 = vld [vmem:[%s13 + $0x408] sm:$0xff]
    %v3037 = vld [vmem:[%s13 + $0x410] sm:$0xff]
    %v3038 = vld [vmem:[%s13 + $0x418] sm:$0xff]
    %v3039 = vld [vmem:[%s13 + $0x420] sm:$0xff]
    %v3040 = vld [vmem:[%s13 + $0x428] sm:$0xff]
    %v3041 = vld [vmem:[%s13 + $0x430] sm:$0xff]
    %v3042 = vld [vmem:[%s13 + $0x438] sm:$0xff]
    %v3043 = vld [vmem:[%s13 + $0x440] sm:$0xff]
    %v3044 = vld [vmem:[%s13 + $0x448] sm:$0xff]
    %v3045 = vld [vmem:[%s13 + $0x450] sm:$0xff]
    %v3046 = vld [vmem:[%s13 + $0x458] sm:$0xff]
    %v3047 = vld [vmem:[%s13 + $0x460] sm:$0xff]
    %v3048 = vld [vmem:[%s13 + $0x468] sm:$0xff]
    %v3049 = vld [vmem:[%s13 + $0x470] sm:$0xff]
    %v3050 = vld [vmem:[%s13 + $0x478] sm:$0xff]
    %v3051 = vld [vmem:[%s13 + $0x480] sm:$0xff]
    %v3052 = vld [vmem:[%s13 + $0x488] sm:$0xff]
    %v3053 = vld [vmem:[%s13 + $0x490] sm:$0xff]
    %v3054 = vld [vmem:[%s13 + $0x498] sm:$0xff]
    %v3055 = vld [vmem:[%s13 + $0x4a0] sm:$0xff]
    %v3056 = vld [vmem:[%s13 + $0x4a8] sm:$0xff]
    %v3057 = vld [vmem:[%s13 + $0x4b0] sm:$0xff]
    %v3058 = vld [vmem:[%s13 + $0x4b8] sm:$0xff]
    %v3059 = vld [vmem:[%s13 + $0x4c0] sm:$0xff]
    %v3060 = vld [vmem:[%s13 + $0x4c8] sm:$0xff]
    %v3061 = vld [vmem:[%s13 + $0x4d0] sm:$0xff]
    %v3062 = vld [vmem:[%s13 + $0x4d8] sm:$0xff]
    %v3063 = vld [vmem:[%s13 + $0x4e0] sm:$0xff]
    %v3064 = vld [vmem:[%s13 + $0x4e8] sm:$0xff]
    %v3065 = vld [vmem:[%s13 + $0x4f0] sm:$0xff]
    %v3066 = vld [vmem:[%s13 + $0x4f8] sm:$0xff]
    %v3067 = vld [vmem:[%s13 + $0x500] sm:$0xff]
    %v3068 = vld [vmem:[%s13 + $0x508] sm:$0xff]
    %v3069 = vld [vmem:[%s13 + $0x510] sm:$0xff]
    %v3070 = vld [vmem:[%s13 + $0x518] sm:$0xff]
    %v3071 = vld [vmem:[%s13 + $0x520] sm:$0xff]
    %v3072 = vld [vmem:[%s13 + $0x528] sm:$0xff]
    %v3073 = vld [vmem:[%s13 + $0x530] sm:$0xff]
    %v3074 = vld [vmem:[%s13 + $0x538] sm:$0xff]
    %v3075 = vld [vmem:[%s13 + $0x540] sm:$0xff]
    %v3076 = vld [vmem:[%s13 + $0x548] sm:$0xff]
    %v3077 = vld [vmem:[%s13 + $0x550] sm:$0xff]
    %v3078 = vld [vmem:[%s13 + $0x558] sm:$0xff]
    %v3079 = vld [vmem:[%s13 + $0x560] sm:$0xff]
    %v3080 = vld [vmem:[%s13 + $0x568] sm:$0xff]
    %v3081 = vld [vmem:[%s13 + $0x570] sm:$0xff]
    %v3082 = vld [vmem:[%s13 + $0x578] sm:$0xff]
    %v3083 = vld [vmem:[%s13 + $0x580] sm:$0xff]
    %v3084 = vld [vmem:[%s13 + $0x588] sm:$0xff]
    %v3085 = vld [vmem:[%s13 + $0x590] sm:$0xff]
    %v3086 = vld [vmem:[%s13 + $0x598] sm:$0xff]
    %v3087 = vld [vmem:[%s13 + $0x5a0] sm:$0xff]
    %v3088 = vld [vmem:[%s13 + $0x5a8] sm:$0xff]
    %v3089 = vld [vmem:[%s13 + $0x5b0] sm:$0xff]
    %v3090 = vld [vmem:[%s13 + $0x5b8] sm:$0xff]
    %v3091 = vld [vmem:[%s13 + $0x5c0] sm:$0xff]
    %v3092 = vld [vmem:[%s13 + $0x5c8] sm:$0xff]
    %v3093 = vld [vmem:[%s13 + $0x5d0] sm:$0xff]
    %v3094 = vld [vmem:[%s13 + $0x5d8] sm:$0xff]
    %v3095 = vld [vmem:[%s13 + $0x5e0] sm:$0xff]
    %v3096 = vld [vmem:[%s13 + $0x5e8] sm:$0xff]
    %v3097 = vld [vmem:[%s13 + $0x5f0] sm:$0xff]
    %v3098 = vld [vmem:[%s13 + $0x5f8] sm:$0xff]
    %v3099 = vld [vmem:[%s14] sm:$0xff]
    %v3100 = vld [vmem:[%s14 + $0x8] sm:$0xf]
    %v3103 = vlaneseq
    %v3104 = vshrl.u32 %v3103, 7
    %v3105 = vsub.s32 0, %v3104
    %v3106 = vrot.slane %v3099, %v3105
    %v3107 = vlaneseq
    %v3108 = vshrl.u32 %v3107, 7
    %v3109 = vsub.s32 1, %v3108
    %v3110 = vrot.slane %v3099, %v3109
    %v3111 = vlaneseq
    %v3112 = vshrl.u32 %v3111, 7
    %v3113 = vsub.s32 2, %v3112
    %v3114 = vrot.slane %v3099, %v3113
    %v3115 = vlaneseq
    %v3116 = vshrl.u32 %v3115, 7
    %v3117 = vsub.s32 3, %v3116
    %v3118 = vrot.slane %v3099, %v3117
    %v3119 = vlaneseq
    %v3120 = vshrl.u32 %v3119, 7
    %v3121 = vsub.s32 4, %v3120
    %v3122 = vrot.slane %v3099, %v3121
    %v3123 = vlaneseq
    %v3124 = vshrl.u32 %v3123, 7
    %v3125 = vsub.s32 5, %v3124
    %v3126 = vrot.slane %v3099, %v3125
    %v3127 = vlaneseq
    %v3128 = vshrl.u32 %v3127, 7
    %v3129 = vsub.s32 6, %v3128
    %v3130 = vrot.slane %v3099, %v3129
    %v3131 = vlaneseq
    %v3132 = vshrl.u32 %v3131, 7
    %v3133 = vsub.s32 7, %v3132
    %v3134 = vrot.slane %v3099, %v3133
    %v3135 = vlaneseq
    %v3136 = vshrl.u32 %v3135, 7
    %v3137 = vsub.s32 0, %v3136
    %v3138 = vrot.slane %v3100, %v3137
    %v3139 = vlaneseq
    %v3140 = vshrl.u32 %v3139, 7
    %v3141 = vsub.s32 1, %v3140
    %v3142 = vrot.slane %v3100, %v3141
    %v3143 = vlaneseq
    %v3144 = vshrl.u32 %v3143, 7
    %v3145 = vsub.s32 2, %v3144
    %v3146 = vrot.slane %v3100, %v3145
    %v3147 = vlaneseq
    %v3148 = vshrl.u32 %v3147, 7
    %v3149 = vsub.s32 3, %v3148
    %v3150 = vrot.slane %v3100, %v3149
    %v3355 = vunpack.c.l.b16 %v2907
    %v3356 = vunpack.c.h.b16 %v2907
    %v3357 = vunpack.c.l.b16 %v2908
    %v3358 = vunpack.c.h.b16 %v2908
    %v3359 = vunpack.c.l.b16 %v2909
    %v3360 = vunpack.c.h.b16 %v2909
    %v3361 = vunpack.c.l.b16 %v2910
    %v3362 = vunpack.c.h.b16 %v2910
    %v3363 = vunpack.c.l.b16 %v2911
    %v3364 = vunpack.c.h.b16 %v2911
    %v3365 = vunpack.c.l.b16 %v2912
    %v3366 = vunpack.c.h.b16 %v2912
    %v3367 = vunpack.c.l.b16 %v2913
    %v3368 = vunpack.c.h.b16 %v2913
    %v3369 = vunpack.c.l.b16 %v2914
    %v3370 = vunpack.c.h.b16 %v2914
    %v3371 = vunpack.c.l.b16 %v2915
    %v3372 = vunpack.c.h.b16 %v2915
    %v3373 = vunpack.c.l.b16 %v2916
    %v3374 = vunpack.c.h.b16 %v2916
    %v3375 = vunpack.c.l.b16 %v2917
    %v3376 = vunpack.c.h.b16 %v2917
    %v3377 = vunpack.c.l.b16 %v2918
    %v3378 = vunpack.c.h.b16 %v2918
    %v3379 = vunpack.c.l.b16 %v2919
    %v3380 = vunpack.c.h.b16 %v2919
    %v3381 = vunpack.c.l.b16 %v2920
    %v3382 = vunpack.c.h.b16 %v2920
    %v3383 = vunpack.c.l.b16 %v2921
    %v3384 = vunpack.c.h.b16 %v2921
    %v3385 = vunpack.c.l.b16 %v2922
    %v3386 = vunpack.c.h.b16 %v2922
    %v3387 = vunpack.c.l.b16 %v2923
    %v3388 = vunpack.c.h.b16 %v2923
    %v3389 = vunpack.c.l.b16 %v2924
    %v3390 = vunpack.c.h.b16 %v2924
    %v3391 = vunpack.c.l.b16 %v2925
    %v3392 = vunpack.c.h.b16 %v2925
    %v3393 = vunpack.c.l.b16 %v2926
    %v3394 = vunpack.c.h.b16 %v2926
    %v3395 = vunpack.c.l.b16 %v2927
    %v3396 = vunpack.c.h.b16 %v2927
    %v3397 = vunpack.c.l.b16 %v2928
    %v3398 = vunpack.c.h.b16 %v2928
    %v3399 = vunpack.c.l.b16 %v2929
    %v3400 = vunpack.c.h.b16 %v2929
    %v3401 = vunpack.c.l.b16 %v2930
    %v3402 = vunpack.c.h.b16 %v2930
    %v3403 = vunpack.c.l.b16 %v2931
    %v3404 = vunpack.c.h.b16 %v2931
    %v3405 = vunpack.c.l.b16 %v2932
    %v3406 = vunpack.c.h.b16 %v2932
    %v3407 = vunpack.c.l.b16 %v2933
    %v3408 = vunpack.c.h.b16 %v2933
    %v3409 = vunpack.c.l.b16 %v2934
    %v3410 = vunpack.c.h.b16 %v2934
    %v3411 = vunpack.c.l.b16 %v2935
    %v3412 = vunpack.c.h.b16 %v2935
    %v3413 = vunpack.c.l.b16 %v2936
    %v3414 = vunpack.c.h.b16 %v2936
    %v3415 = vunpack.c.l.b16 %v2937
    %v3416 = vunpack.c.h.b16 %v2937
    %v3417 = vunpack.c.l.b16 %v2938
    %v3418 = vunpack.c.h.b16 %v2938
    %v3419 = vunpack.c.l.b16 %v2939
    %v3420 = vunpack.c.h.b16 %v2939
    %v3421 = vunpack.c.l.b16 %v2940
    %v3422 = vunpack.c.h.b16 %v2940
    %v3423 = vunpack.c.l.b16 %v2941
    %v3424 = vunpack.c.h.b16 %v2941
    %v3425 = vunpack.c.l.b16 %v2942
    %v3426 = vunpack.c.h.b16 %v2942
    %v3427 = vunpack.c.l.b16 %v2943
    %v3428 = vunpack.c.h.b16 %v2943
    %v3429 = vunpack.c.l.b16 %v2944
    %v3430 = vunpack.c.h.b16 %v2944
    %v3431 = vunpack.c.l.b16 %v2945
    %v3432 = vunpack.c.h.b16 %v2945
    %v3433 = vunpack.c.l.b16 %v2946
    %v3434 = vunpack.c.h.b16 %v2946
    %v3435 = vunpack.c.l.b16 %v2947
    %v3436 = vunpack.c.h.b16 %v2947
    %v3437 = vunpack.c.l.b16 %v2948
    %v3438 = vunpack.c.h.b16 %v2948
    %v3439 = vunpack.c.l.b16 %v2949
    %v3440 = vunpack.c.h.b16 %v2949
    %v3441 = vunpack.c.l.b16 %v2950
    %v3442 = vunpack.c.h.b16 %v2950
    %v3443 = vunpack.c.l.b16 %v2951
    %v3444 = vunpack.c.h.b16 %v2951
    %v3445 = vunpack.c.l.b16 %v2952
    %v3446 = vunpack.c.h.b16 %v2952
    %v3447 = vunpack.c.l.b16 %v2953
    %v3448 = vunpack.c.h.b16 %v2953
    %v3449 = vunpack.c.l.b16 %v2954
    %v3450 = vunpack.c.h.b16 %v2954
    %v3451 = vunpack.c.l.b16 %v2955
    %v3452 = vunpack.c.h.b16 %v2955
    %v3453 = vunpack.c.l.b16 %v2956
    %v3454 = vunpack.c.h.b16 %v2956
    %v3455 = vunpack.c.l.b16 %v2957
    %v3456 = vunpack.c.h.b16 %v2957
    %v3457 = vunpack.c.l.b16 %v2958
    %v3458 = vunpack.c.h.b16 %v2958
    %v3459 = vunpack.c.l.b16 %v2959
    %v3460 = vunpack.c.h.b16 %v2959
    %v3461 = vunpack.c.l.b16 %v2960
    %v3462 = vunpack.c.h.b16 %v2960
    %v3463 = vunpack.c.l.b16 %v2961
    %v3464 = vunpack.c.h.b16 %v2961
    %v3465 = vunpack.c.l.b16 %v2962
    %v3466 = vunpack.c.h.b16 %v2962
    %v3467 = vunpack.c.l.b16 %v2963
    %v3468 = vunpack.c.h.b16 %v2963
    %v3469 = vunpack.c.l.b16 %v2964
    %v3470 = vunpack.c.h.b16 %v2964
    %v3471 = vunpack.c.l.b16 %v2965
    %v3472 = vunpack.c.h.b16 %v2965
    %v3473 = vunpack.c.l.b16 %v2966
    %v3474 = vunpack.c.h.b16 %v2966
    %v3475 = vunpack.c.l.b16 %v2967
    %v3476 = vunpack.c.h.b16 %v2967
    %v3477 = vunpack.c.l.b16 %v2968
    %v3478 = vunpack.c.h.b16 %v2968
    %v3479 = vunpack.c.l.b16 %v2969
    %v3480 = vunpack.c.h.b16 %v2969
    %v3481 = vunpack.c.l.b16 %v2970
    %v3482 = vunpack.c.h.b16 %v2970
    %v3483 = vunpack.c.l.b16 %v2971
    %v3484 = vunpack.c.h.b16 %v2971
    %v3485 = vunpack.c.l.b16 %v2972
    %v3486 = vunpack.c.h.b16 %v2972
    %v3487 = vunpack.c.l.b16 %v2973
    %v3488 = vunpack.c.h.b16 %v2973
    %v3489 = vunpack.c.l.b16 %v2974
    %v3490 = vunpack.c.h.b16 %v2974
    %v3491 = vunpack.c.l.b16 %v2975
    %v3492 = vunpack.c.h.b16 %v2975
    %v3493 = vunpack.c.l.b16 %v2976
    %v3494 = vunpack.c.h.b16 %v2976
    %v3495 = vunpack.c.l.b16 %v2977
    %v3496 = vunpack.c.h.b16 %v2977
    %v3497 = vunpack.c.l.b16 %v2978
    %v3498 = vunpack.c.h.b16 %v2978
    %v3499 = vunpack.c.l.b16 %v2979
    %v3500 = vunpack.c.h.b16 %v2979
    %v3501 = vunpack.c.l.b16 %v2980
    %v3502 = vunpack.c.h.b16 %v2980
    %v3503 = vunpack.c.l.b16 %v2981
    %v3504 = vunpack.c.h.b16 %v2981
    %v3505 = vunpack.c.l.b16 %v2982
    %v3506 = vunpack.c.h.b16 %v2982
    %v3507 = vunpack.c.l.b16 %v2983
    %v3508 = vunpack.c.h.b16 %v2983
    %v3509 = vunpack.c.l.b16 %v2984
    %v3510 = vunpack.c.h.b16 %v2984
    %v3511 = vunpack.c.l.b16 %v2985
    %v3512 = vunpack.c.h.b16 %v2985
    %v3513 = vunpack.c.l.b16 %v2986
    %v3514 = vunpack.c.h.b16 %v2986
    %v3515 = vunpack.c.l.b16 %v2987
    %v3516 = vunpack.c.h.b16 %v2987
    %v3517 = vunpack.c.l.b16 %v2988
    %v3518 = vunpack.c.h.b16 %v2988
    %v3519 = vunpack.c.l.b16 %v2989
    %v3520 = vunpack.c.h.b16 %v2989
    %v3521 = vunpack.c.l.b16 %v2990
    %v3522 = vunpack.c.h.b16 %v2990
    %v3523 = vunpack.c.l.b16 %v2991
    %v3524 = vunpack.c.h.b16 %v2991
    %v3525 = vunpack.c.l.b16 %v2992
    %v3526 = vunpack.c.h.b16 %v2992
    %v3527 = vunpack.c.l.b16 %v2993
    %v3528 = vunpack.c.h.b16 %v2993
    %v3529 = vunpack.c.l.b16 %v2994
    %v3530 = vunpack.c.h.b16 %v2994
    %v3531 = vunpack.c.l.b16 %v2995
    %v3532 = vunpack.c.h.b16 %v2995
    %v3533 = vunpack.c.l.b16 %v2996
    %v3534 = vunpack.c.h.b16 %v2996
    %v3535 = vunpack.c.l.b16 %v2997
    %v3536 = vunpack.c.h.b16 %v2997
    %v3537 = vunpack.c.l.b16 %v2998
    %v3538 = vunpack.c.h.b16 %v2998
    %v3539 = vunpack.c.l.b16 %v2999
    %v3540 = vunpack.c.h.b16 %v2999
    %v3541 = vunpack.c.l.b16 %v3000
    %v3542 = vunpack.c.h.b16 %v3000
    %v3543 = vunpack.c.l.b16 %v3001
    %v3544 = vunpack.c.h.b16 %v3001
    %v3545 = vunpack.c.l.b16 %v3002
    %v3546 = vunpack.c.h.b16 %v3002
    %v3547 = vunpack.c.l.b16 %v3003
    %v3548 = vunpack.c.h.b16 %v3003
    %v3549 = vunpack.c.l.b16 %v3004
    %v3550 = vunpack.c.h.b16 %v3004
    %v3551 = vunpack.c.l.b16 %v3005
    %v3552 = vunpack.c.h.b16 %v3005
    %v3553 = vunpack.c.l.b16 %v3006
    %v3554 = vunpack.c.h.b16 %v3006
    %v3555 = vunpack.c.l.b16 %v3007
    %v3556 = vunpack.c.h.b16 %v3007
    %v3557 = vunpack.c.l.b16 %v3008
    %v3558 = vunpack.c.h.b16 %v3008
    %v3559 = vunpack.c.l.b16 %v3009
    %v3560 = vunpack.c.h.b16 %v3009
    %v3561 = vunpack.c.l.b16 %v3010
    %v3562 = vunpack.c.h.b16 %v3010
    %v3563 = vunpack.c.l.b16 %v3011
    %v3564 = vunpack.c.h.b16 %v3011
    %v3565 = vunpack.c.l.b16 %v3012
    %v3566 = vunpack.c.h.b16 %v3012
    %v3567 = vunpack.c.l.b16 %v3013
    %v3568 = vunpack.c.h.b16 %v3013
    %v3569 = vunpack.c.l.b16 %v3014
    %v3570 = vunpack.c.h.b16 %v3014
    %v3571 = vunpack.c.l.b16 %v3015
    %v3572 = vunpack.c.h.b16 %v3015
    %v3573 = vunpack.c.l.b16 %v3016
    %v3574 = vunpack.c.h.b16 %v3016
    %v3575 = vunpack.c.l.b16 %v3017
    %v3576 = vunpack.c.h.b16 %v3017
    %v3577 = vunpack.c.l.b16 %v3018
    %v3578 = vunpack.c.h.b16 %v3018
    %v3579 = vunpack.c.l.b16 %v3019
    %v3580 = vunpack.c.h.b16 %v3019
    %v3581 = vunpack.c.l.b16 %v3020
    %v3582 = vunpack.c.h.b16 %v3020
    %v3583 = vunpack.c.l.b16 %v3021
    %v3584 = vunpack.c.h.b16 %v3021
    %v3585 = vunpack.c.l.b16 %v3022
    %v3586 = vunpack.c.h.b16 %v3022
    %v3587 = vunpack.c.l.b16 %v3023
    %v3588 = vunpack.c.h.b16 %v3023
    %v3589 = vunpack.c.l.b16 %v3024
    %v3590 = vunpack.c.h.b16 %v3024
    %v3591 = vunpack.c.l.b16 %v3025
    %v3592 = vunpack.c.h.b16 %v3025
    %v3593 = vunpack.c.l.b16 %v3026
    %v3594 = vunpack.c.h.b16 %v3026
    %v3595 = vunpack.c.l.b16 %v3027
    %v3596 = vunpack.c.h.b16 %v3027
    %v3597 = vunpack.c.l.b16 %v3028
    %v3598 = vunpack.c.h.b16 %v3028
    %v3599 = vunpack.c.l.b16 %v3029
    %v3600 = vunpack.c.h.b16 %v3029
    %v3601 = vunpack.c.l.b16 %v3030
    %v3602 = vunpack.c.h.b16 %v3030
    %v3603 = vunpack.c.l.b16 %v3031
    %v3604 = vunpack.c.h.b16 %v3031
    %v3605 = vunpack.c.l.b16 %v3032
    %v3606 = vunpack.c.h.b16 %v3032
    %v3607 = vunpack.c.l.b16 %v3033
    %v3608 = vunpack.c.h.b16 %v3033
    %v3609 = vunpack.c.l.b16 %v3034
    %v3610 = vunpack.c.h.b16 %v3034
    %v3611 = vunpack.c.l.b16 %v3035
    %v3612 = vunpack.c.h.b16 %v3035
    %v3613 = vunpack.c.l.b16 %v3036
    %v3614 = vunpack.c.h.b16 %v3036
    %v3615 = vunpack.c.l.b16 %v3037
    %v3616 = vunpack.c.h.b16 %v3037
    %v3617 = vunpack.c.l.b16 %v3038
    %v3618 = vunpack.c.h.b16 %v3038
    %v3619 = vunpack.c.l.b16 %v3039
    %v3620 = vunpack.c.h.b16 %v3039
    %v3621 = vunpack.c.l.b16 %v3040
    %v3622 = vunpack.c.h.b16 %v3040
    %v3623 = vunpack.c.l.b16 %v3041
    %v3624 = vunpack.c.h.b16 %v3041
    %v3625 = vunpack.c.l.b16 %v3042
    %v3626 = vunpack.c.h.b16 %v3042
    %v3627 = vunpack.c.l.b16 %v3043
    %v3628 = vunpack.c.h.b16 %v3043
    %v3629 = vunpack.c.l.b16 %v3044
    %v3630 = vunpack.c.h.b16 %v3044
    %v3631 = vunpack.c.l.b16 %v3045
    %v3632 = vunpack.c.h.b16 %v3045
    %v3633 = vunpack.c.l.b16 %v3046
    %v3634 = vunpack.c.h.b16 %v3046
    %v3635 = vunpack.c.l.b16 %v3047
    %v3636 = vunpack.c.h.b16 %v3047
    %v3637 = vunpack.c.l.b16 %v3048
    %v3638 = vunpack.c.h.b16 %v3048
    %v3639 = vunpack.c.l.b16 %v3049
    %v3640 = vunpack.c.h.b16 %v3049
    %v3641 = vunpack.c.l.b16 %v3050
    %v3642 = vunpack.c.h.b16 %v3050
    %v3643 = vunpack.c.l.b16 %v3051
    %v3644 = vunpack.c.h.b16 %v3051
    %v3645 = vunpack.c.l.b16 %v3052
    %v3646 = vunpack.c.h.b16 %v3052
    %v3647 = vunpack.c.l.b16 %v3053
    %v3648 = vunpack.c.h.b16 %v3053
    %v3649 = vunpack.c.l.b16 %v3054
    %v3650 = vunpack.c.h.b16 %v3054
    %v3651 = vunpack.c.l.b16 %v3055
    %v3652 = vunpack.c.h.b16 %v3055
    %v3653 = vunpack.c.l.b16 %v3056
    %v3654 = vunpack.c.h.b16 %v3056
    %v3655 = vunpack.c.l.b16 %v3057
    %v3656 = vunpack.c.h.b16 %v3057
    %v3657 = vunpack.c.l.b16 %v3058
    %v3658 = vunpack.c.h.b16 %v3058
    %v3659 = vunpack.c.l.b16 %v3059
    %v3660 = vunpack.c.h.b16 %v3059
    %v3661 = vunpack.c.l.b16 %v3060
    %v3662 = vunpack.c.h.b16 %v3060
    %v3663 = vunpack.c.l.b16 %v3061
    %v3664 = vunpack.c.h.b16 %v3061
    %v3665 = vunpack.c.l.b16 %v3062
    %v3666 = vunpack.c.h.b16 %v3062
    %v3667 = vunpack.c.l.b16 %v3063
    %v3668 = vunpack.c.h.b16 %v3063
    %v3669 = vunpack.c.l.b16 %v3064
    %v3670 = vunpack.c.h.b16 %v3064
    %v3671 = vunpack.c.l.b16 %v3065
    %v3672 = vunpack.c.h.b16 %v3065
    %v3673 = vunpack.c.l.b16 %v3066
    %v3674 = vunpack.c.h.b16 %v3066
    %v3675 = vunpack.c.l.b16 %v3067
    %v3676 = vunpack.c.h.b16 %v3067
    %v3677 = vunpack.c.l.b16 %v3068
    %v3678 = vunpack.c.h.b16 %v3068
    %v3679 = vunpack.c.l.b16 %v3069
    %v3680 = vunpack.c.h.b16 %v3069
    %v3681 = vunpack.c.l.b16 %v3070
    %v3682 = vunpack.c.h.b16 %v3070
    %v3683 = vunpack.c.l.b16 %v3071
    %v3684 = vunpack.c.h.b16 %v3071
    %v3685 = vunpack.c.l.b16 %v3072
    %v3686 = vunpack.c.h.b16 %v3072
    %v3687 = vunpack.c.l.b16 %v3073
    %v3688 = vunpack.c.h.b16 %v3073
    %v3689 = vunpack.c.l.b16 %v3074
    %v3690 = vunpack.c.h.b16 %v3074
    %v3691 = vunpack.c.l.b16 %v3075
    %v3692 = vunpack.c.h.b16 %v3075
    %v3693 = vunpack.c.l.b16 %v3076
    %v3694 = vunpack.c.h.b16 %v3076
    %v3695 = vunpack.c.l.b16 %v3077
    %v3696 = vunpack.c.h.b16 %v3077
    %v3697 = vunpack.c.l.b16 %v3078
    %v3698 = vunpack.c.h.b16 %v3078
    %v3699 = vunpack.c.l.b16 %v3079
    %v3700 = vunpack.c.h.b16 %v3079
    %v3701 = vunpack.c.l.b16 %v3080
    %v3702 = vunpack.c.h.b16 %v3080
    %v3703 = vunpack.c.l.b16 %v3081
    %v3704 = vunpack.c.h.b16 %v3081
    %v3705 = vunpack.c.l.b16 %v3082
    %v3706 = vunpack.c.h.b16 %v3082
    %v3707 = vunpack.c.l.b16 %v3083
    %v3708 = vunpack.c.h.b16 %v3083
    %v3709 = vunpack.c.l.b16 %v3084
    %v3710 = vunpack.c.h.b16 %v3084
    %v3711 = vunpack.c.l.b16 %v3085
    %v3712 = vunpack.c.h.b16 %v3085
    %v3713 = vunpack.c.l.b16 %v3086
    %v3714 = vunpack.c.h.b16 %v3086
    %v3715 = vunpack.c.l.b16 %v3087
    %v3716 = vunpack.c.h.b16 %v3087
    %v3717 = vunpack.c.l.b16 %v3088
    %v3718 = vunpack.c.h.b16 %v3088
    %v3719 = vunpack.c.l.b16 %v3089
    %v3720 = vunpack.c.h.b16 %v3089
    %v3721 = vunpack.c.l.b16 %v3090
    %v3722 = vunpack.c.h.b16 %v3090
    %v3723 = vunpack.c.l.b16 %v3091
    %v3724 = vunpack.c.h.b16 %v3091
    %v3725 = vunpack.c.l.b16 %v3092
    %v3726 = vunpack.c.h.b16 %v3092
    %v3727 = vunpack.c.l.b16 %v3093
    %v3728 = vunpack.c.h.b16 %v3093
    %v3729 = vunpack.c.l.b16 %v3094
    %v3730 = vunpack.c.h.b16 %v3094
    %v3731 = vunpack.c.l.b16 %v3095
    %v3732 = vunpack.c.h.b16 %v3095
    %v3733 = vunpack.c.l.b16 %v3096
    %v3734 = vunpack.c.h.b16 %v3096
    %v3735 = vunpack.c.l.b16 %v3097
    %v3736 = vunpack.c.h.b16 %v3097
    %v3737 = vunpack.c.l.b16 %v3098
    %v3738 = vunpack.c.h.b16 %v3098
    %v3739 = vpack.c.b16 %v3367, %v3355
    %v3740 = vpack.c.b16 %v3368, %v3356
    %v3741 = vpack.c.b16 %v3369, %v3357
    %v3742 = vpack.c.b16 %v3370, %v3358
    %v3743 = vpack.c.b16 %v3371, %v3359
    %v3744 = vpack.c.b16 %v3372, %v3360
    %v3745 = vpack.c.b16 %v3373, %v3361
    %v3746 = vpack.c.b16 %v3374, %v3362
    %v3747 = vpack.c.b16 %v3375, %v3363
    %v3748 = vpack.c.b16 %v3376, %v3364
    %v3749 = vpack.c.b16 %v3377, %v3365
    %v3750 = vpack.c.b16 %v3378, %v3366
    %v3751 = vpack.c.b16 %v3391, %v3379
    %v3752 = vpack.c.b16 %v3392, %v3380
    %v3753 = vpack.c.b16 %v3393, %v3381
    %v3754 = vpack.c.b16 %v3394, %v3382
    %v3755 = vpack.c.b16 %v3395, %v3383
    %v3756 = vpack.c.b16 %v3396, %v3384
    %v3757 = vpack.c.b16 %v3397, %v3385
    %v3758 = vpack.c.b16 %v3398, %v3386
    %v3759 = vpack.c.b16 %v3399, %v3387
    %v3760 = vpack.c.b16 %v3400, %v3388
    %v3761 = vpack.c.b16 %v3401, %v3389
    %v3762 = vpack.c.b16 %v3402, %v3390
    %v3763 = vpack.c.b16 %v3415, %v3403
    %v3764 = vpack.c.b16 %v3416, %v3404
    %v3765 = vpack.c.b16 %v3417, %v3405
    %v3766 = vpack.c.b16 %v3418, %v3406
    %v3767 = vpack.c.b16 %v3419, %v3407
    %v3768 = vpack.c.b16 %v3420, %v3408
    %v3769 = vpack.c.b16 %v3421, %v3409
    %v3770 = vpack.c.b16 %v3422, %v3410
    %v3771 = vpack.c.b16 %v3423, %v3411
    %v3772 = vpack.c.b16 %v3424, %v3412
    %v3773 = vpack.c.b16 %v3425, %v3413
    %v3774 = vpack.c.b16 %v3426, %v3414
    %v3775 = vpack.c.b16 %v3439, %v3427
    %v3776 = vpack.c.b16 %v3440, %v3428
    %v3777 = vpack.c.b16 %v3441, %v3429
    %v3778 = vpack.c.b16 %v3442, %v3430
    %v3779 = vpack.c.b16 %v3443, %v3431
    %v3780 = vpack.c.b16 %v3444, %v3432
    %v3781 = vpack.c.b16 %v3445, %v3433
    %v3782 = vpack.c.b16 %v3446, %v3434
    %v3783 = vpack.c.b16 %v3447, %v3435
    %v3784 = vpack.c.b16 %v3448, %v3436
    %v3785 = vpack.c.b16 %v3449, %v3437
    %v3786 = vpack.c.b16 %v3450, %v3438
    %v3787 = vpack.c.b16 %v3463, %v3451
    %v3788 = vpack.c.b16 %v3464, %v3452
    %v3789 = vpack.c.b16 %v3465, %v3453
    %v3790 = vpack.c.b16 %v3466, %v3454
    %v3791 = vpack.c.b16 %v3467, %v3455
    %v3792 = vpack.c.b16 %v3468, %v3456
    %v3793 = vpack.c.b16 %v3469, %v3457
    %v3794 = vpack.c.b16 %v3470, %v3458
    %v3795 = vpack.c.b16 %v3471, %v3459
    %v3796 = vpack.c.b16 %v3472, %v3460
    %v3797 = vpack.c.b16 %v3473, %v3461
    %v3798 = vpack.c.b16 %v3474, %v3462
    %v3799 = vpack.c.b16 %v3487, %v3475
    %v3800 = vpack.c.b16 %v3488, %v3476
    %v3801 = vpack.c.b16 %v3489, %v3477
    %v3802 = vpack.c.b16 %v3490, %v3478
    %v3803 = vpack.c.b16 %v3491, %v3479
    %v3804 = vpack.c.b16 %v3492, %v3480
    %v3805 = vpack.c.b16 %v3493, %v3481
    %v3806 = vpack.c.b16 %v3494, %v3482
    %v3807 = vpack.c.b16 %v3495, %v3483
    %v3808 = vpack.c.b16 %v3496, %v3484
    %v3809 = vpack.c.b16 %v3497, %v3485
    %v3810 = vpack.c.b16 %v3498, %v3486
    %v3811 = vpack.c.b16 %v3511, %v3499
    %v3812 = vpack.c.b16 %v3512, %v3500
    %v3813 = vpack.c.b16 %v3513, %v3501
    %v3814 = vpack.c.b16 %v3514, %v3502
    %v3815 = vpack.c.b16 %v3515, %v3503
    %v3816 = vpack.c.b16 %v3516, %v3504
    %v3817 = vpack.c.b16 %v3517, %v3505
    %v3818 = vpack.c.b16 %v3518, %v3506
    %v3819 = vpack.c.b16 %v3519, %v3507
    %v3820 = vpack.c.b16 %v3520, %v3508
    %v3821 = vpack.c.b16 %v3521, %v3509
    %v3822 = vpack.c.b16 %v3522, %v3510
    %v3823 = vpack.c.b16 %v3535, %v3523
    %v3824 = vpack.c.b16 %v3536, %v3524
    %v3825 = vpack.c.b16 %v3537, %v3525
    %v3826 = vpack.c.b16 %v3538, %v3526
    %v3827 = vpack.c.b16 %v3539, %v3527
    %v3828 = vpack.c.b16 %v3540, %v3528
    %v3829 = vpack.c.b16 %v3541, %v3529
    %v3830 = vpack.c.b16 %v3542, %v3530
    %v3831 = vpack.c.b16 %v3543, %v3531
    %v3832 = vpack.c.b16 %v3544, %v3532
    %v3833 = vpack.c.b16 %v3545, %v3533
    %v3834 = vpack.c.b16 %v3546, %v3534
    %v3835 = vpack.c.b16 %v3559, %v3547
    %v3836 = vpack.c.b16 %v3560, %v3548
    %v3837 = vpack.c.b16 %v3561, %v3549
    %v3838 = vpack.c.b16 %v3562, %v3550
    %v3839 = vpack.c.b16 %v3563, %v3551
    %v3840 = vpack.c.b16 %v3564, %v3552
    %v3841 = vpack.c.b16 %v3565, %v3553
    %v3842 = vpack.c.b16 %v3566, %v3554
    %v3843 = vpack.c.b16 %v3567, %v3555
    %v3844 = vpack.c.b16 %v3568, %v3556
    %v3845 = vpack.c.b16 %v3569, %v3557
    %v3846 = vpack.c.b16 %v3570, %v3558
    %v3847 = vpack.c.b16 %v3583, %v3571
    %v3848 = vpack.c.b16 %v3584, %v3572
    %v3849 = vpack.c.b16 %v3585, %v3573
    %v3850 = vpack.c.b16 %v3586, %v3574
    %v3851 = vpack.c.b16 %v3587, %v3575
    %v3852 = vpack.c.b16 %v3588, %v3576
    %v3853 = vpack.c.b16 %v3589, %v3577
    %v3854 = vpack.c.b16 %v3590, %v3578
    %v3855 = vpack.c.b16 %v3591, %v3579
    %v3856 = vpack.c.b16 %v3592, %v3580
    %v3857 = vpack.c.b16 %v3593, %v3581
    %v3858 = vpack.c.b16 %v3594, %v3582
    %v3859 = vpack.c.b16 %v3607, %v3595
    %v3860 = vpack.c.b16 %v3608, %v3596
    %v3861 = vpack.c.b16 %v3609, %v3597
    %v3862 = vpack.c.b16 %v3610, %v3598
    %v3863 = vpack.c.b16 %v3611, %v3599
    %v3864 = vpack.c.b16 %v3612, %v3600
    %v3865 = vpack.c.b16 %v3613, %v3601
    %v3866 = vpack.c.b16 %v3614, %v3602
    %v3867 = vpack.c.b16 %v3615, %v3603
    %v3868 = vpack.c.b16 %v3616, %v3604
    %v3869 = vpack.c.b16 %v3617, %v3605
    %v3870 = vpack.c.b16 %v3618, %v3606
    %v3871 = vpack.c.b16 %v3631, %v3619
    %v3872 = vpack.c.b16 %v3632, %v3620
    %v3873 = vpack.c.b16 %v3633, %v3621
    %v3874 = vpack.c.b16 %v3634, %v3622
    %v3875 = vpack.c.b16 %v3635, %v3623
    %v3876 = vpack.c.b16 %v3636, %v3624
    %v3877 = vpack.c.b16 %v3637, %v3625
    %v3878 = vpack.c.b16 %v3638, %v3626
    %v3879 = vpack.c.b16 %v3639, %v3627
    %v3880 = vpack.c.b16 %v3640, %v3628
    %v3881 = vpack.c.b16 %v3641, %v3629
    %v3882 = vpack.c.b16 %v3642, %v3630
    %v3883 = vpack.c.b16 %v3655, %v3643
    %v3884 = vpack.c.b16 %v3656, %v3644
    %v3885 = vpack.c.b16 %v3657, %v3645
    %v3886 = vpack.c.b16 %v3658, %v3646
    %v3887 = vpack.c.b16 %v3659, %v3647
    %v3888 = vpack.c.b16 %v3660, %v3648
    %v3889 = vpack.c.b16 %v3661, %v3649
    %v3890 = vpack.c.b16 %v3662, %v3650
    %v3891 = vpack.c.b16 %v3663, %v3651
    %v3892 = vpack.c.b16 %v3664, %v3652
    %v3893 = vpack.c.b16 %v3665, %v3653
    %v3894 = vpack.c.b16 %v3666, %v3654
    %v3895 = vpack.c.b16 %v3679, %v3667
    %v3896 = vpack.c.b16 %v3680, %v3668
    %v3897 = vpack.c.b16 %v3681, %v3669
    %v3898 = vpack.c.b16 %v3682, %v3670
    %v3899 = vpack.c.b16 %v3683, %v3671
    %v3900 = vpack.c.b16 %v3684, %v3672
    %v3901 = vpack.c.b16 %v3685, %v3673
    %v3902 = vpack.c.b16 %v3686, %v3674
    %v3903 = vpack.c.b16 %v3687, %v3675
    %v3904 = vpack.c.b16 %v3688, %v3676
    %v3905 = vpack.c.b16 %v3689, %v3677
    %v3906 = vpack.c.b16 %v3690, %v3678
    %v3907 = vpack.c.b16 %v3703, %v3691
    %v3908 = vpack.c.b16 %v3704, %v3692
    %v3909 = vpack.c.b16 %v3705, %v3693
    %v3910 = vpack.c.b16 %v3706, %v3694
    %v3911 = vpack.c.b16 %v3707, %v3695
    %v3912 = vpack.c.b16 %v3708, %v3696
    %v3913 = vpack.c.b16 %v3709, %v3697
    %v3914 = vpack.c.b16 %v3710, %v3698
    %v3915 = vpack.c.b16 %v3711, %v3699
    %v3916 = vpack.c.b16 %v3712, %v3700
    %v3917 = vpack.c.b16 %v3713, %v3701
    %v3918 = vpack.c.b16 %v3714, %v3702
    %v3919 = vpack.c.b16 %v3727, %v3715
    %v3920 = vpack.c.b16 %v3728, %v3716
    %v3921 = vpack.c.b16 %v3729, %v3717
    %v3922 = vpack.c.b16 %v3730, %v3718
    %v3923 = vpack.c.b16 %v3731, %v3719
    %v3924 = vpack.c.b16 %v3732, %v3720
    %v3925 = vpack.c.b16 %v3733, %v3721
    %v3926 = vpack.c.b16 %v3734, %v3722
    %v3927 = vpack.c.b16 %v3735, %v3723
    %v3928 = vpack.c.b16 %v3736, %v3724
    %v3929 = vpack.c.b16 %v3737, %v3725
    %v3930 = vpack.c.b16 %v3738, %v3726
    %4123 = vmatprep.subr.bf16.mxu0 %v3740
    %4124 = vmatpush1.bf16.msra.mxu0 %v3739
    %4125 = vmatprep.subr.bf16.mxu0 %v3752
    %4126 = vmatpush1.bf16.msra.mxu0 %v3751
    %4127 = vmatprep.subr.bf16.mxu0 %v3764
    %4128 = vmatpush1.bf16.msra.mxu0 %v3763
    %4129 = vmatprep.subr.bf16.mxu0 %v3776
    %4130 = vmatpush1.bf16.msra.mxu0 %v3775
    %4131 = vmatprep.subr.bf16.mxu0 %v3788
    %4132 = vmatpush1.bf16.msra.mxu0 %v3787
    %4133 = vmatprep.subr.bf16.mxu0 %v3800
    %4134 = vmatpush1.bf16.msra.mxu0 %v3799
    %4135 = vmatprep.subr.bf16.mxu0 %v3812
    %4136 = vmatpush1.bf16.msra.mxu0 %v3811
    %4137 = vmatprep.subr.bf16.mxu0 %v3824
    %4138 = vmatpush1.bf16.msra.mxu0 %v3823
    %4139 = vmatprep.subr.bf16.mxu0 %v3836
    %4140 = vmatpush1.bf16.msra.mxu0 %v3835
    %4141 = vmatprep.subr.bf16.mxu0 %v3848
    %4142 = vmatpush1.bf16.msra.mxu0 %v3847
    %4143 = vmatprep.subr.bf16.mxu0 %v3860
    %4144 = vmatpush1.bf16.msra.mxu0 %v3859
    %4145 = vmatprep.subr.bf16.mxu0 %v3872
    %4146 = vmatpush1.bf16.msra.mxu0 %v3871
    %4147 = vmatprep.subr.bf16.mxu0 %v3884
    %4148 = vmatpush1.bf16.msra.mxu0 %v3883
    %4149 = vmatprep.subr.bf16.mxu0 %v3896
    %4150 = vmatpush1.bf16.msra.mxu0 %v3895
    %4151 = vmatprep.subr.bf16.mxu0 %v3908
    %4152 = vmatpush1.bf16.msra.mxu0 %v3907
    %4153 = vmatprep.subr.bf16.mxu0 %v3920
    %4154 = vmatpush1.bf16.msra.mxu0 %v3919
    %4155 = vmatprep.mubr.bf16.mxu0 %v2906
    %4156 = vmatmul.mubr.bf16.gmra.mrb[0].mxu0 %v2905
    %v4157 = vpop.f32.mrb[0].mxu0
    %v4158 = vadd.f32 %v3106, %v4157
    %v4159 = vpop.f32.mrb[0].mxu0
    %v4160 = vadd.f32 %v3110, %v4159
    %v4161 = vpop.f32.mrb[0].mxu0
    %v4162 = vpop.f32.mrb[0].mxu0
    %4163 = vdwg.mxu0
    %4164 = vmatprep.subr.bf16.mxu0 %v3742
    %4165 = vmatpush1.bf16.msra.mxu0 %v3741
    %4166 = vmatprep.subr.bf16.mxu0 %v3754
    %4167 = vmatpush1.bf16.msra.mxu0 %v3753
    %4168 = vmatprep.subr.bf16.mxu0 %v3766
    %4169 = vmatpush1.bf16.msra.mxu0 %v3765
    %4170 = vmatprep.subr.bf16.mxu0 %v3778
    %4171 = vmatpush1.bf16.msra.mxu0 %v3777
    %4172 = vmatprep.subr.bf16.mxu0 %v3790
    %4173 = vmatpush1.bf16.msra.mxu0 %v3789
    %4174 = vmatprep.subr.bf16.mxu0 %v3802
    %4175 = vmatpush1.bf16.msra.mxu0 %v3801
    %4176 = vmatprep.subr.bf16.mxu0 %v3814
    %4177 = vmatpush1.bf16.msra.mxu0 %v3813
    %4178 = vmatprep.subr.bf16.mxu0 %v3826
    %4179 = vmatpush1.bf16.msra.mxu0 %v3825
    %4180 = vmatprep.subr.bf16.mxu0 %v3838
    %4181 = vmatpush1.bf16.msra.mxu0 %v3837
    %4182 = vmatprep.subr.bf16.mxu0 %v3850
    %4183 = vmatpush1.bf16.msra.mxu0 %v3849
    %4184 = vmatprep.subr.bf16.mxu0 %v3862
    %4185 = vmatpush1.bf16.msra.mxu0 %v3861
    %4186 = vmatprep.subr.bf16.mxu0 %v3874
    %4187 = vmatpush1.bf16.msra.mxu0 %v3873
    %4188 = vmatprep.subr.bf16.mxu0 %v3886
    %4189 = vmatpush1.bf16.msra.mxu0 %v3885
    %4190 = vmatprep.subr.bf16.mxu0 %v3898
    %4191 = vmatpush1.bf16.msra.mxu0 %v3897
    %4192 = vmatprep.subr.bf16.mxu0 %v3910
    %4193 = vmatpush1.bf16.msra.mxu0 %v3909
    %4194 = vmatprep.subr.bf16.mxu0 %v3922
    %4195 = vmatpush1.bf16.msra.mxu0 %v3921
    %4196 = vmatprep.mubr.bf16.mxu0 %v2906
    %4197 = vmatmul.mubr.bf16.gmra.mrb[0].mxu0 %v2905
    %v4198 = vpop.f32.mrb[0].mxu0
    %v4199 = vadd.f32 %v3114, %v4198
    %v4200 = vpop.f32.mrb[0].mxu0
    %v4201 = vadd.f32 %v3118, %v4200
    %v4202 = vpop.f32.mrb[0].mxu0
    %v4203 = vpop.f32.mrb[0].mxu0
    %4204 = vdwg.mxu0
    %4205 = vmatprep.subr.bf16.mxu0 %v3744
    %4206 = vmatpush1.bf16.msra.mxu0 %v3743
    %4207 = vmatprep.subr.bf16.mxu0 %v3756
    %4208 = vmatpush1.bf16.msra.mxu0 %v3755
    %4209 = vmatprep.subr.bf16.mxu0 %v3768
    %4210 = vmatpush1.bf16.msra.mxu0 %v3767
    %4211 = vmatprep.subr.bf16.mxu0 %v3780
    %4212 = vmatpush1.bf16.msra.mxu0 %v3779
    %4213 = vmatprep.subr.bf16.mxu0 %v3792
    %4214 = vmatpush1.bf16.msra.mxu0 %v3791
    %4215 = vmatprep.subr.bf16.mxu0 %v3804
    %4216 = vmatpush1.bf16.msra.mxu0 %v3803
    %4217 = vmatprep.subr.bf16.mxu0 %v3816
    %4218 = vmatpush1.bf16.msra.mxu0 %v3815
    %4219 = vmatprep.subr.bf16.mxu0 %v3828
    %4220 = vmatpush1.bf16.msra.mxu0 %v3827
    %4221 = vmatprep.subr.bf16.mxu0 %v3840
    %4222 = vmatpush1.bf16.msra.mxu0 %v3839
    %4223 = vmatprep.subr.bf16.mxu0 %v3852
    %4224 = vmatpush1.bf16.msra.mxu0 %v3851
    %4225 = vmatprep.subr.bf16.mxu0 %v3864
    %4226 = vmatpush1.bf16.msra.mxu0 %v3863
    %4227 = vmatprep.subr.bf16.mxu0 %v3876
    %4228 = vmatpush1.bf16.msra.mxu0 %v3875
    %4229 = vmatprep.subr.bf16.mxu0 %v3888
    %4230 = vmatpush1.bf16.msra.mxu0 %v3887
    %4231 = vmatprep.subr.bf16.mxu0 %v3900
    %4232 = vmatpush1.bf16.msra.mxu0 %v3899
    %4233 = vmatprep.subr.bf16.mxu0 %v3912
    %4234 = vmatpush1.bf16.msra.mxu0 %v3911
    %4235 = vmatprep.subr.bf16.mxu0 %v3924
    %4236 = vmatpush1.bf16.msra.mxu0 %v3923
    %4237 = vmatprep.mubr.bf16.mxu0 %v2906
    %4238 = vmatmul.mubr.bf16.gmra.mrb[0].mxu0 %v2905
    %v4239 = vpop.f32.mrb[0].mxu0
    %v4240 = vadd.f32 %v3122, %v4239
    %v4241 = vpop.f32.mrb[0].mxu0
    %v4242 = vadd.f32 %v3126, %v4241
    %v4243 = vpop.f32.mrb[0].mxu0
    %v4244 = vpop.f32.mrb[0].mxu0
    %4245 = vdwg.mxu0
    %4246 = vmatprep.subr.bf16.mxu0 %v3746
    %4247 = vmatpush1.bf16.msra.mxu0 %v3745
    %4248 = vmatprep.subr.bf16.mxu0 %v3758
    %4249 = vmatpush1.bf16.msra.mxu0 %v3757
    %4250 = vmatprep.subr.bf16.mxu0 %v3770
    %4251 = vmatpush1.bf16.msra.mxu0 %v3769
    %4252 = vmatprep.subr.bf16.mxu0 %v3782
    %4253 = vmatpush1.bf16.msra.mxu0 %v3781
    %4254 = vmatprep.subr.bf16.mxu0 %v3794
    %4255 = vmatpush1.bf16.msra.mxu0 %v3793
    %4256 = vmatprep.subr.bf16.mxu0 %v3806
    %4257 = vmatpush1.bf16.msra.mxu0 %v3805
    %4258 = vmatprep.subr.bf16.mxu0 %v3818
    %4259 = vmatpush1.bf16.msra.mxu0 %v3817
    %4260 = vmatprep.subr.bf16.mxu0 %v3830
    %4261 = vmatpush1.bf16.msra.mxu0 %v3829
    %4262 = vmatprep.subr.bf16.mxu0 %v3842
    %4263 = vmatpush1.bf16.msra.mxu0 %v3841
    %4264 = vmatprep.subr.bf16.mxu0 %v3854
    %4265 = vmatpush1.bf16.msra.mxu0 %v3853
    %4266 = vmatprep.subr.bf16.mxu0 %v3866
    %4267 = vmatpush1.bf16.msra.mxu0 %v3865
    %4268 = vmatprep.subr.bf16.mxu0 %v3878
    %4269 = vmatpush1.bf16.msra.mxu0 %v3877
    %4270 = vmatprep.subr.bf16.mxu0 %v3890
    %4271 = vmatpush1.bf16.msra.mxu0 %v3889
    %4272 = vmatprep.subr.bf16.mxu0 %v3902
    %4273 = vmatpush1.bf16.msra.mxu0 %v3901
    %4274 = vmatprep.subr.bf16.mxu0 %v3914
    %4275 = vmatpush1.bf16.msra.mxu0 %v3913
    %4276 = vmatprep.subr.bf16.mxu0 %v3926
    %4277 = vmatpush1.bf16.msra.mxu0 %v3925
    %4278 = vmatprep.mubr.bf16.mxu0 %v2906
    %4279 = vmatmul.mubr.bf16.gmra.mrb[0].mxu0 %v2905
    %v4280 = vpop.f32.mrb[0].mxu0
    %v4281 = vadd.f32 %v3130, %v4280
    %v4282 = vpop.f32.mrb[0].mxu0
    %v4283 = vadd.f32 %v3134, %v4282
    %v4284 = vpop.f32.mrb[0].mxu0
    %v4285 = vpop.f32.mrb[0].mxu0
    %4286 = vdwg.mxu0
    %4287 = vmatprep.subr.bf16.mxu0 %v3748
    %4288 = vmatpush1.bf16.msra.mxu0 %v3747
    %4289 = vmatprep.subr.bf16.mxu0 %v3760
    %4290 = vmatpush1.bf16.msra.mxu0 %v3759
    %4291 = vmatprep.subr.bf16.mxu0 %v3772
    %4292 = vmatpush1.bf16.msra.mxu0 %v3771
    %4293 = vmatprep.subr.bf16.mxu0 %v3784
    %4294 = vmatpush1.bf16.msra.mxu0 %v3783
    %4295 = vmatprep.subr.bf16.mxu0 %v3796
    %4296 = vmatpush1.bf16.msra.mxu0 %v3795
    %4297 = vmatprep.subr.bf16.mxu0 %v3808
    %4298 = vmatpush1.bf16.msra.mxu0 %v3807
    %4299 = vmatprep.subr.bf16.mxu0 %v3820
    %4300 = vmatpush1.bf16.msra.mxu0 %v3819
    %4301 = vmatprep.subr.bf16.mxu0 %v3832
    %4302 = vmatpush1.bf16.msra.mxu0 %v3831
    %4303 = vmatprep.subr.bf16.mxu0 %v3844
    %4304 = vmatpush1.bf16.msra.mxu0 %v3843
    %4305 = vmatprep.subr.bf16.mxu0 %v3856
    %4306 = vmatpush1.bf16.msra.mxu0 %v3855
    %4307 = vmatprep.subr.bf16.mxu0 %v3868
    %4308 = vmatpush1.bf16.msra.mxu0 %v3867
    %4309 = vmatprep.subr.bf16.mxu0 %v3880
    %4310 = vmatpush1.bf16.msra.mxu0 %v3879
    %4311 = vmatprep.subr.bf16.mxu0 %v3892
    %4312 = vmatpush1.bf16.msra.mxu0 %v3891
    %4313 = vmatprep.subr.bf16.mxu0 %v3904
    %4314 = vmatpush1.bf16.msra.mxu0 %v3903
    %4315 = vmatprep.subr.bf16.mxu0 %v3916
    %4316 = vmatpush1.bf16.msra.mxu0 %v3915
    %4317 = vmatprep.subr.bf16.mxu0 %v3928
    %4318 = vmatpush1.bf16.msra.mxu0 %v3927
    %4319 = vmatprep.mubr.bf16.mxu0 %v2906
    %4320 = vmatmul.mubr.bf16.gmra.mrb[0].mxu0 %v2905
    %v4321 = vpop.f32.mrb[0].mxu0
    %v4322 = vadd.f32 %v3138, %v4321
    %v4323 = vpop.f32.mrb[0].mxu0
    %v4324 = vadd.f32 %v3142, %v4323
    %v4325 = vpop.f32.mrb[0].mxu0
    %v4326 = vpop.f32.mrb[0].mxu0
    %4327 = vdwg.mxu0
    %4328 = vmatprep.subr.bf16.mxu0 %v3750
    %4329 = vmatpush1.bf16.msra.mxu0 %v3749
    %4330 = vmatprep.subr.bf16.mxu0 %v3762
    %4331 = vmatpush1.bf16.msra.mxu0 %v3761
    %4332 = vmatprep.subr.bf16.mxu0 %v3774
    %4333 = vmatpush1.bf16.msra.mxu0 %v3773
    %4334 = vmatprep.subr.bf16.mxu0 %v3786
    %4335 = vmatpush1.bf16.msra.mxu0 %v3785
    %4336 = vmatprep.subr.bf16.mxu0 %v3798
    %4337 = vmatpush1.bf16.msra.mxu0 %v3797
    %4338 = vmatprep.subr.bf16.mxu0 %v3810
    %4339 = vmatpush1.bf16.msra.mxu0 %v3809
    %4340 = vmatprep.subr.bf16.mxu0 %v3822
    %4341 = vmatpush1.bf16.msra.mxu0 %v3821
    %4342 = vmatprep.subr.bf16.mxu0 %v3834
    %4343 = vmatpush1.bf16.msra.mxu0 %v3833
    %4344 = vmatprep.subr.bf16.mxu0 %v3846
    %4345 = vmatpush1.bf16.msra.mxu0 %v3845
    %4346 = vmatprep.subr.bf16.mxu0 %v3858
    %4347 = vmatpush1.bf16.msra.mxu0 %v3857
    %4348 = vmatprep.subr.bf16.mxu0 %v3870
    %4349 = vmatpush1.bf16.msra.mxu0 %v3869
    %4350 = vmatprep.subr.bf16.mxu0 %v3882
    %4351 = vmatpush1.bf16.msra.mxu0 %v3881
    %4352 = vmatprep.subr.bf16.mxu0 %v3894
    %4353 = vmatpush1.bf16.msra.mxu0 %v3893
    %4354 = vmatprep.subr.bf16.mxu0 %v3906
    %4355 = vmatpush1.bf16.msra.mxu0 %v3905
    %4356 = vmatprep.subr.bf16.mxu0 %v3918
    %4357 = vmatpush1.bf16.msra.mxu0 %v3917
    %4358 = vmatprep.subr.bf16.mxu0 %v3930
    %4359 = vmatpush1.bf16.msra.mxu0 %v3929
    %4360 = vmatprep.mubr.bf16.mxu0 %v2906
    %4361 = vmatmul.mubr.bf16.gmra.mrb[0].mxu0 %v2905
    %v4362 = vpop.f32.mrb[0].mxu0
    %v4363 = vadd.f32 %v3146, %v4362
    %v4364 = vpop.f32.mrb[0].mxu0
    %v4365 = vadd.f32 %v3150, %v4364
    %v4366 = vpop.f32.mrb[0].mxu0
    %v4367 = vpop.f32.mrb[0].mxu0
    %4368 = vdwg.mxu0
    %v4369 = vxor.u32 %v4158, 2147483648
    %v4370 = vxor.u32 %v4160, 2147483648
    %v4371 = vxor.u32 %v4199, 2147483648
    %v4372 = vxor.u32 %v4201, 2147483648
    %v4373 = vmul.f32 %v4369, 1.442695
    %v4374 = vpow.pop %v4373
    %v4375 = vmul.f32 %v4370, 1.442695
    %v4376 = vpow.pop %v4375
    %v4377 = vmul.f32 %v4371, 1.442695
    %v4378 = vpow.pop %v4377
    %v4379 = vmul.f32 %v4372, 1.442695
    %v4380 = vpow.pop %v4379
    %v4381 = vadd.f32 %v4374, 1.0
    %v4382 = vadd.f32 %v4376, 1.0
    %v4383 = vadd.f32 %v4378, 1.0
    %v4384 = vadd.f32 %v4380, 1.0
    %v4385 = vrcp.pop %v4381
    %v4386 = vmul.f32 1.0, %v4385
    %v4387 = vrcp.pop %v4382
    %v4388 = vmul.f32 1.0, %v4387
    %v4389 = vrcp.pop %v4383
    %v4390 = vmul.f32 1.0, %v4389
    %v4391 = vrcp.pop %v4384
    %v4392 = vmul.f32 1.0, %v4391
    %v4393 = vtanh.pop %v4240
    %v4394 = vtanh.pop %v4242
    %v4395 = vtanh.pop %v4281
    %v4396 = vtanh.pop %v4283
    %v4397 = vxor.u32 %v4322, 2147483648
    %v4398 = vxor.u32 %v4324, 2147483648
    %v4399 = vxor.u32 %v4363, 2147483648
    %v4400 = vxor.u32 %v4365, 2147483648
    %v4401 = vmul.f32 %v4397, 1.442695
    %v4402 = vpow.pop %v4401
    %v4403 = vmul.f32 %v4398, 1.442695
    %v4404 = vpow.pop %v4403
    %v4405 = vmul.f32 %v4399, 1.442695
    %v4406 = vpow.pop %v4405
    %v4407 = vmul.f32 %v4400, 1.442695
    %v4408 = vpow.pop %v4407
    %v4409 = vadd.f32 %v4402, 1.0
    %v4410 = vadd.f32 %v4404, 1.0
    %v4411 = vadd.f32 %v4406, 1.0
    %v4412 = vadd.f32 %v4408, 1.0
    %v4413 = vrcp.pop %v4409
    %v4414 = vmul.f32 1.0, %v4413
    %v4415 = vrcp.pop %v4410
    %v4416 = vmul.f32 1.0, %v4415
    %v4417 = vrcp.pop %v4411
    %v4418 = vmul.f32 1.0, %v4417
    %v4419 = vrcp.pop %v4412
    %v4420 = vmul.f32 1.0, %v4419
    %v4421 = vmul.f32 %v4386, %v4393
    %v4422 = vmul.f32 %v4388, %v4394
    %v4423 = vmul.f32 %v4390, %v4395
    %v4424 = vmul.f32 %v4392, %v4396
    %v4425 = vtanh.pop %v4421
    %v4426 = vtanh.pop %v4422
    %v4427 = vtanh.pop %v4423
    %v4428 = vtanh.pop %v4424
    %v4429 = vmul.f32 %v4414, %v4425
    %v4430 = vmul.f32 %v4416, %v4426
    %v4431 = vmul.f32 %v4418, %v4427
    %v4432 = vmul.f32 %v4420, %v4428
    %v4433 = vpack.c.bf16 %v4429, %v4429
    %v4434 = vpack.c.bf16 %v4430, %v4430
    %v4435 = vpack.c.bf16 %v4431, %v4431
    %v4436 = vpack.c.bf16 %v4432, %v4432
    %v4437 = vld [vmem:[%s15] sm:$0xff]
    %v4438 = vld [vmem:[%s15 + $0x8] sm:$0xff]
    %v4439 = vld [vmem:[%s15 + $0x10] sm:$0xff]
    %v4440 = vld [vmem:[%s15 + $0x18] sm:$0xff]
    %v4441 = vld [vmem:[%s15 + $0x20] sm:$0xff]
    %v4442 = vld [vmem:[%s15 + $0x28] sm:$0xff]
    %v4443 = vld [vmem:[%s15 + $0x30] sm:$0xff]
    %v4444 = vld [vmem:[%s15 + $0x38] sm:$0xff]
    %v4445 = vld [vmem:[%s15 + $0x40] sm:$0xff]
    %v4446 = vld [vmem:[%s15 + $0x48] sm:$0xff]
    %v4447 = vld [vmem:[%s15 + $0x50] sm:$0xff]
    %v4448 = vld [vmem:[%s15 + $0x58] sm:$0xff]
    %v4449 = vld [vmem:[%s15 + $0x60] sm:$0xff]
    %v4450 = vld [vmem:[%s15 + $0x68] sm:$0xff]
    %v4451 = vld [vmem:[%s15 + $0x70] sm:$0xff]
    %v4452 = vld [vmem:[%s15 + $0x78] sm:$0xff]
    %v4453 = vld [vmem:[%s15 + $0x80] sm:$0xff]
    %v4454 = vld [vmem:[%s15 + $0x88] sm:$0xff]
    %v4455 = vld [vmem:[%s15 + $0x90] sm:$0xff]
    %v4456 = vld [vmem:[%s15 + $0x98] sm:$0xff]
    %v4457 = vld [vmem:[%s15 + $0xa0] sm:$0xff]
    %v4458 = vld [vmem:[%s15 + $0xa8] sm:$0xff]
    %v4459 = vld [vmem:[%s15 + $0xb0] sm:$0xff]
    %v4460 = vld [vmem:[%s15 + $0xb8] sm:$0xff]
    %v4461 = vld [vmem:[%s15 + $0xc0] sm:$0xff]
    %v4462 = vld [vmem:[%s15 + $0xc8] sm:$0xff]
    %v4463 = vld [vmem:[%s15 + $0xd0] sm:$0xff]
    %v4464 = vld [vmem:[%s15 + $0xd8] sm:$0xff]
    %v4465 = vld [vmem:[%s15 + $0xe0] sm:$0xff]
    %v4466 = vld [vmem:[%s15 + $0xe8] sm:$0xff]
    %v4467 = vld [vmem:[%s15 + $0xf0] sm:$0xff]
    %v4468 = vld [vmem:[%s15 + $0xf8] sm:$0xff]
    %v4469 = vld [vmem:[%s15 + $0x100] sm:$0xff]
    %v4470 = vld [vmem:[%s15 + $0x108] sm:$0xff]
    %v4471 = vld [vmem:[%s15 + $0x110] sm:$0xff]
    %v4472 = vld [vmem:[%s15 + $0x118] sm:$0xff]
    %v4473 = vld [vmem:[%s15 + $0x120] sm:$0xff]
    %v4474 = vld [vmem:[%s15 + $0x128] sm:$0xff]
    %v4475 = vld [vmem:[%s15 + $0x130] sm:$0xff]
    %v4476 = vld [vmem:[%s15 + $0x138] sm:$0xff]
    %v4477 = vld [vmem:[%s15 + $0x140] sm:$0xff]
    %v4478 = vld [vmem:[%s15 + $0x148] sm:$0xff]
    %v4479 = vld [vmem:[%s15 + $0x150] sm:$0xff]
    %v4480 = vld [vmem:[%s15 + $0x158] sm:$0xff]
    %v4481 = vld [vmem:[%s15 + $0x160] sm:$0xff]
    %v4482 = vld [vmem:[%s15 + $0x168] sm:$0xff]
    %v4483 = vld [vmem:[%s15 + $0x170] sm:$0xff]
    %v4484 = vld [vmem:[%s15 + $0x178] sm:$0xff]
    %v4485 = vld [vmem:[%s15 + $0x180] sm:$0xff]
    %v4486 = vld [vmem:[%s15 + $0x188] sm:$0xff]
    %v4487 = vld [vmem:[%s15 + $0x190] sm:$0xff]
    %v4488 = vld [vmem:[%s15 + $0x198] sm:$0xff]
    %v4489 = vld [vmem:[%s15 + $0x1a0] sm:$0xff]
    %v4490 = vld [vmem:[%s15 + $0x1a8] sm:$0xff]
    %v4491 = vld [vmem:[%s15 + $0x1b0] sm:$0xff]
    %v4492 = vld [vmem:[%s15 + $0x1b8] sm:$0xff]
    %v4493 = vld [vmem:[%s15 + $0x1c0] sm:$0xff]
    %v4494 = vld [vmem:[%s15 + $0x1c8] sm:$0xff]
    %v4495 = vld [vmem:[%s15 + $0x1d0] sm:$0xff]
    %v4496 = vld [vmem:[%s15 + $0x1d8] sm:$0xff]
    %v4497 = vld [vmem:[%s15 + $0x1e0] sm:$0xff]
    %v4498 = vld [vmem:[%s15 + $0x1e8] sm:$0xff]
    %v4499 = vld [vmem:[%s15 + $0x1f0] sm:$0xff]
    %v4500 = vld [vmem:[%s15 + $0x1f8] sm:$0xff]
    %v4501 = vld [vmem:[%s15 + $0x200] sm:$0xff]
    %v4502 = vld [vmem:[%s15 + $0x208] sm:$0xff]
    %v4503 = vld [vmem:[%s15 + $0x210] sm:$0xff]
    %v4504 = vld [vmem:[%s15 + $0x218] sm:$0xff]
    %v4505 = vld [vmem:[%s15 + $0x220] sm:$0xff]
    %v4506 = vld [vmem:[%s15 + $0x228] sm:$0xff]
    %v4507 = vld [vmem:[%s15 + $0x230] sm:$0xff]
    %v4508 = vld [vmem:[%s15 + $0x238] sm:$0xff]
    %v4509 = vld [vmem:[%s15 + $0x240] sm:$0xff]
    %v4510 = vld [vmem:[%s15 + $0x248] sm:$0xff]
    %v4511 = vld [vmem:[%s15 + $0x250] sm:$0xff]
    %v4512 = vld [vmem:[%s15 + $0x258] sm:$0xff]
    %v4513 = vld [vmem:[%s15 + $0x260] sm:$0xff]
    %v4514 = vld [vmem:[%s15 + $0x268] sm:$0xff]
    %v4515 = vld [vmem:[%s15 + $0x270] sm:$0xff]
    %v4516 = vld [vmem:[%s15 + $0x278] sm:$0xff]
    %v4517 = vld [vmem:[%s15 + $0x280] sm:$0xff]
    %v4518 = vld [vmem:[%s15 + $0x288] sm:$0xff]
    %v4519 = vld [vmem:[%s15 + $0x290] sm:$0xff]
    %v4520 = vld [vmem:[%s15 + $0x298] sm:$0xff]
    %v4521 = vld [vmem:[%s15 + $0x2a0] sm:$0xff]
    %v4522 = vld [vmem:[%s15 + $0x2a8] sm:$0xff]
    %v4523 = vld [vmem:[%s15 + $0x2b0] sm:$0xff]
    %v4524 = vld [vmem:[%s15 + $0x2b8] sm:$0xff]
    %v4525 = vld [vmem:[%s15 + $0x2c0] sm:$0xff]
    %v4526 = vld [vmem:[%s15 + $0x2c8] sm:$0xff]
    %v4527 = vld [vmem:[%s15 + $0x2d0] sm:$0xff]
    %v4528 = vld [vmem:[%s15 + $0x2d8] sm:$0xff]
    %v4529 = vld [vmem:[%s15 + $0x2e0] sm:$0xff]
    %v4530 = vld [vmem:[%s15 + $0x2e8] sm:$0xff]
    %v4531 = vld [vmem:[%s15 + $0x2f0] sm:$0xff]
    %v4532 = vld [vmem:[%s15 + $0x2f8] sm:$0xff]
    %v4533 = vld [vmem:[%s15 + $0x300] sm:$0xff]
    %v4534 = vld [vmem:[%s15 + $0x308] sm:$0xff]
    %v4535 = vld [vmem:[%s15 + $0x310] sm:$0xff]
    %v4536 = vld [vmem:[%s15 + $0x318] sm:$0xff]
    %v4537 = vld [vmem:[%s15 + $0x320] sm:$0xff]
    %v4538 = vld [vmem:[%s15 + $0x328] sm:$0xff]
    %v4539 = vld [vmem:[%s15 + $0x330] sm:$0xff]
    %v4540 = vld [vmem:[%s15 + $0x338] sm:$0xff]
    %v4541 = vld [vmem:[%s15 + $0x340] sm:$0xff]
    %v4542 = vld [vmem:[%s15 + $0x348] sm:$0xff]
    %v4543 = vld [vmem:[%s15 + $0x350] sm:$0xff]
    %v4544 = vld [vmem:[%s15 + $0x358] sm:$0xff]
    %v4545 = vld [vmem:[%s15 + $0x360] sm:$0xff]
    %v4546 = vld [vmem:[%s15 + $0x368] sm:$0xff]
    %v4547 = vld [vmem:[%s15 + $0x370] sm:$0xff]
    %v4548 = vld [vmem:[%s15 + $0x378] sm:$0xff]
    %v4549 = vld [vmem:[%s15 + $0x380] sm:$0xff]
    %v4550 = vld [vmem:[%s15 + $0x388] sm:$0xff]
    %v4551 = vld [vmem:[%s15 + $0x390] sm:$0xff]
    %v4552 = vld [vmem:[%s15 + $0x398] sm:$0xff]
    %v4553 = vld [vmem:[%s15 + $0x3a0] sm:$0xff]
    %v4554 = vld [vmem:[%s15 + $0x3a8] sm:$0xff]
    %v4555 = vld [vmem:[%s15 + $0x3b0] sm:$0xff]
    %v4556 = vld [vmem:[%s15 + $0x3b8] sm:$0xff]
    %v4557 = vld [vmem:[%s15 + $0x3c0] sm:$0xff]
    %v4558 = vld [vmem:[%s15 + $0x3c8] sm:$0xff]
    %v4559 = vld [vmem:[%s15 + $0x3d0] sm:$0xff]
    %v4560 = vld [vmem:[%s15 + $0x3d8] sm:$0xff]
    %v4561 = vld [vmem:[%s15 + $0x3e0] sm:$0xff]
    %v4562 = vld [vmem:[%s15 + $0x3e8] sm:$0xff]
    %v4563 = vld [vmem:[%s15 + $0x3f0] sm:$0xff]
    %v4564 = vld [vmem:[%s15 + $0x3f8] sm:$0xff]
    %v4565 = vld [vmem:[#allocation11] sm:$0xf]
    %v4567 = vlaneseq
    %v4568 = vshrl.u32 %v4567, 7
    %v4569 = vsub.s32 0, %v4568
    %v4570 = vrot.slane %v4565, %v4569
    %v4571 = vlaneseq
    %v4572 = vshrl.u32 %v4571, 7
    %v4573 = vsub.s32 1, %v4572
    %v4574 = vrot.slane %v4565, %v4573
    %v4575 = vlaneseq
    %v4576 = vshrl.u32 %v4575, 7
    %v4577 = vsub.s32 2, %v4576
    %v4578 = vrot.slane %v4565, %v4577
    %v4579 = vlaneseq
    %v4580 = vshrl.u32 %v4579, 7
    %v4581 = vsub.s32 3, %v4580
    %v4582 = vrot.slane %v4565, %v4581
    %v4715 = vunpack.c.l.b16 %v4437
    %v4716 = vunpack.c.h.b16 %v4437
    %v4717 = vunpack.c.l.b16 %v4438
    %v4718 = vunpack.c.h.b16 %v4438
    %v4719 = vunpack.c.l.b16 %v4439
    %v4720 = vunpack.c.h.b16 %v4439
    %v4721 = vunpack.c.l.b16 %v4440
    %v4722 = vunpack.c.h.b16 %v4440
    %v4723 = vunpack.c.l.b16 %v4441
    %v4724 = vunpack.c.h.b16 %v4441
    %v4725 = vunpack.c.l.b16 %v4442
    %v4726 = vunpack.c.h.b16 %v4442
    %v4727 = vunpack.c.l.b16 %v4443
    %v4728 = vunpack.c.h.b16 %v4443
    %v4729 = vunpack.c.l.b16 %v4444
    %v4730 = vunpack.c.h.b16 %v4444
    %v4731 = vunpack.c.l.b16 %v4445
    %v4732 = vunpack.c.h.b16 %v4445
    %v4733 = vunpack.c.l.b16 %v4446
    %v4734 = vunpack.c.h.b16 %v4446
    %v4735 = vunpack.c.l.b16 %v4447
    %v4736 = vunpack.c.h.b16 %v4447
    %v4737 = vunpack.c.l.b16 %v4448
    %v4738 = vunpack.c.h.b16 %v4448
    %v4739 = vunpack.c.l.b16 %v4449
    %v4740 = vunpack.c.h.b16 %v4449
    %v4741 = vunpack.c.l.b16 %v4450
    %v4742 = vunpack.c.h.b16 %v4450
    %v4743 = vunpack.c.l.b16 %v4451
    %v4744 = vunpack.c.h.b16 %v4451
    %v4745 = vunpack.c.l.b16 %v4452
    %v4746 = vunpack.c.h.b16 %v4452
    %v4747 = vunpack.c.l.b16 %v4453
    %v4748 = vunpack.c.h.b16 %v4453
    %v4749 = vunpack.c.l.b16 %v4454
    %v4750 = vunpack.c.h.b16 %v4454
    %v4751 = vunpack.c.l.b16 %v4455
    %v4752 = vunpack.c.h.b16 %v4455
    %v4753 = vunpack.c.l.b16 %v4456
    %v4754 = vunpack.c.h.b16 %v4456
    %v4755 = vunpack.c.l.b16 %v4457
    %v4756 = vunpack.c.h.b16 %v4457
    %v4757 = vunpack.c.l.b16 %v4458
    %v4758 = vunpack.c.h.b16 %v4458
    %v4759 = vunpack.c.l.b16 %v4459
    %v4760 = vunpack.c.h.b16 %v4459
    %v4761 = vunpack.c.l.b16 %v4460
    %v4762 = vunpack.c.h.b16 %v4460
    %v4763 = vunpack.c.l.b16 %v4461
    %v4764 = vunpack.c.h.b16 %v4461
    %v4765 = vunpack.c.l.b16 %v4462
    %v4766 = vunpack.c.h.b16 %v4462
    %v4767 = vunpack.c.l.b16 %v4463
    %v4768 = vunpack.c.h.b16 %v4463
    %v4769 = vunpack.c.l.b16 %v4464
    %v4770 = vunpack.c.h.b16 %v4464
    %v4771 = vunpack.c.l.b16 %v4465
    %v4772 = vunpack.c.h.b16 %v4465
    %v4773 = vunpack.c.l.b16 %v4466
    %v4774 = vunpack.c.h.b16 %v4466
    %v4775 = vunpack.c.l.b16 %v4467
    %v4776 = vunpack.c.h.b16 %v4467
    %v4777 = vunpack.c.l.b16 %v4468
    %v4778 = vunpack.c.h.b16 %v4468
    %v4779 = vunpack.c.l.b16 %v4469
    %v4780 = vunpack.c.h.b16 %v4469
    %v4781 = vunpack.c.l.b16 %v4470
    %v4782 = vunpack.c.h.b16 %v4470
    %v4783 = vunpack.c.l.b16 %v4471
    %v4784 = vunpack.c.h.b16 %v4471
    %v4785 = vunpack.c.l.b16 %v4472
    %v4786 = vunpack.c.h.b16 %v4472
    %v4787 = vunpack.c.l.b16 %v4473
    %v4788 = vunpack.c.h.b16 %v4473
    %v4789 = vunpack.c.l.b16 %v4474
    %v4790 = vunpack.c.h.b16 %v4474
    %v4791 = vunpack.c.l.b16 %v4475
    %v4792 = vunpack.c.h.b16 %v4475
    %v4793 = vunpack.c.l.b16 %v4476
    %v4794 = vunpack.c.h.b16 %v4476
    %v4795 = vunpack.c.l.b16 %v4477
    %v4796 = vunpack.c.h.b16 %v4477
    %v4797 = vunpack.c.l.b16 %v4478
    %v4798 = vunpack.c.h.b16 %v4478
    %v4799 = vunpack.c.l.b16 %v4479
    %v4800 = vunpack.c.h.b16 %v4479
    %v4801 = vunpack.c.l.b16 %v4480
    %v4802 = vunpack.c.h.b16 %v4480
    %v4803 = vunpack.c.l.b16 %v4481
    %v4804 = vunpack.c.h.b16 %v4481
    %v4805 = vunpack.c.l.b16 %v4482
    %v4806 = vunpack.c.h.b16 %v4482
    %v4807 = vunpack.c.l.b16 %v4483
    %v4808 = vunpack.c.h.b16 %v4483
    %v4809 = vunpack.c.l.b16 %v4484
    %v4810 = vunpack.c.h.b16 %v4484
    %v4811 = vunpack.c.l.b16 %v4485
    %v4812 = vunpack.c.h.b16 %v4485
    %v4813 = vunpack.c.l.b16 %v4486
    %v4814 = vunpack.c.h.b16 %v4486
    %v4815 = vunpack.c.l.b16 %v4487
    %v4816 = vunpack.c.h.b16 %v4487
    %v4817 = vunpack.c.l.b16 %v4488
    %v4818 = vunpack.c.h.b16 %v4488
    %v4819 = vunpack.c.l.b16 %v4489
    %v4820 = vunpack.c.h.b16 %v4489
    %v4821 = vunpack.c.l.b16 %v4490
    %v4822 = vunpack.c.h.b16 %v4490
    %v4823 = vunpack.c.l.b16 %v4491
    %v4824 = vunpack.c.h.b16 %v4491
    %v4825 = vunpack.c.l.b16 %v4492
    %v4826 = vunpack.c.h.b16 %v4492
    %v4827 = vunpack.c.l.b16 %v4493
    %v4828 = vunpack.c.h.b16 %v4493
    %v4829 = vunpack.c.l.b16 %v4494
    %v4830 = vunpack.c.h.b16 %v4494
    %v4831 = vunpack.c.l.b16 %v4495
    %v4832 = vunpack.c.h.b16 %v4495
    %v4833 = vunpack.c.l.b16 %v4496
    %v4834 = vunpack.c.h.b16 %v4496
    %v4835 = vunpack.c.l.b16 %v4497
    %v4836 = vunpack.c.h.b16 %v4497
    %v4837 = vunpack.c.l.b16 %v4498
    %v4838 = vunpack.c.h.b16 %v4498
    %v4839 = vunpack.c.l.b16 %v4499
    %v4840 = vunpack.c.h.b16 %v4499
    %v4841 = vunpack.c.l.b16 %v4500
    %v4842 = vunpack.c.h.b16 %v4500
    %v4843 = vunpack.c.l.b16 %v4501
    %v4844 = vunpack.c.h.b16 %v4501
    %v4845 = vunpack.c.l.b16 %v4502
    %v4846 = vunpack.c.h.b16 %v4502
    %v4847 = vunpack.c.l.b16 %v4503
    %v4848 = vunpack.c.h.b16 %v4503
    %v4849 = vunpack.c.l.b16 %v4504
    %v4850 = vunpack.c.h.b16 %v4504
    %v4851 = vunpack.c.l.b16 %v4505
    %v4852 = vunpack.c.h.b16 %v4505
    %v4853 = vunpack.c.l.b16 %v4506
    %v4854 = vunpack.c.h.b16 %v4506
    %v4855 = vunpack.c.l.b16 %v4507
    %v4856 = vunpack.c.h.b16 %v4507
    %v4857 = vunpack.c.l.b16 %v4508
    %v4858 = vunpack.c.h.b16 %v4508
    %v4859 = vunpack.c.l.b16 %v4509
    %v4860 = vunpack.c.h.b16 %v4509
    %v4861 = vunpack.c.l.b16 %v4510
    %v4862 = vunpack.c.h.b16 %v4510
    %v4863 = vunpack.c.l.b16 %v4511
    %v4864 = vunpack.c.h.b16 %v4511
    %v4865 = vunpack.c.l.b16 %v4512
    %v4866 = vunpack.c.h.b16 %v4512
    %v4867 = vunpack.c.l.b16 %v4513
    %v4868 = vunpack.c.h.b16 %v4513
    %v4869 = vunpack.c.l.b16 %v4514
    %v4870 = vunpack.c.h.b16 %v4514
    %v4871 = vunpack.c.l.b16 %v4515
    %v4872 = vunpack.c.h.b16 %v4515
    %v4873 = vunpack.c.l.b16 %v4516
    %v4874 = vunpack.c.h.b16 %v4516
    %v4875 = vunpack.c.l.b16 %v4517
    %v4876 = vunpack.c.h.b16 %v4517
    %v4877 = vunpack.c.l.b16 %v4518
    %v4878 = vunpack.c.h.b16 %v4518
    %v4879 = vunpack.c.l.b16 %v4519
    %v4880 = vunpack.c.h.b16 %v4519
    %v4881 = vunpack.c.l.b16 %v4520
    %v4882 = vunpack.c.h.b16 %v4520
    %v4883 = vunpack.c.l.b16 %v4521
    %v4884 = vunpack.c.h.b16 %v4521
    %v4885 = vunpack.c.l.b16 %v4522
    %v4886 = vunpack.c.h.b16 %v4522
    %v4887 = vunpack.c.l.b16 %v4523
    %v4888 = vunpack.c.h.b16 %v4523
    %v4889 = vunpack.c.l.b16 %v4524
    %v4890 = vunpack.c.h.b16 %v4524
    %v4891 = vunpack.c.l.b16 %v4525
    %v4892 = vunpack.c.h.b16 %v4525
    %v4893 = vunpack.c.l.b16 %v4526
    %v4894 = vunpack.c.h.b16 %v4526
    %v4895 = vunpack.c.l.b16 %v4527
    %v4896 = vunpack.c.h.b16 %v4527
    %v4897 = vunpack.c.l.b16 %v4528
    %v4898 = vunpack.c.h.b16 %v4528
    %v4899 = vunpack.c.l.b16 %v4529
    %v4900 = vunpack.c.h.b16 %v4529
    %v4901 = vunpack.c.l.b16 %v4530
    %v4902 = vunpack.c.h.b16 %v4530
    %v4903 = vunpack.c.l.b16 %v4531
    %v4904 = vunpack.c.h.b16 %v4531
    %v4905 = vunpack.c.l.b16 %v4532
    %v4906 = vunpack.c.h.b16 %v4532
    %v4907 = vunpack.c.l.b16 %v4533
    %v4908 = vunpack.c.h.b16 %v4533
    %v4909 = vunpack.c.l.b16 %v4534
    %v4910 = vunpack.c.h.b16 %v4534
    %v4911 = vunpack.c.l.b16 %v4535
    %v4912 = vunpack.c.h.b16 %v4535
    %v4913 = vunpack.c.l.b16 %v4536
    %v4914 = vunpack.c.h.b16 %v4536
    %v4915 = vunpack.c.l.b16 %v4537
    %v4916 = vunpack.c.h.b16 %v4537
    %v4917 = vunpack.c.l.b16 %v4538
    %v4918 = vunpack.c.h.b16 %v4538
    %v4919 = vunpack.c.l.b16 %v4539
    %v4920 = vunpack.c.h.b16 %v4539
    %v4921 = vunpack.c.l.b16 %v4540
    %v4922 = vunpack.c.h.b16 %v4540
    %v4923 = vunpack.c.l.b16 %v4541
    %v4924 = vunpack.c.h.b16 %v4541
    %v4925 = vunpack.c.l.b16 %v4542
    %v4926 = vunpack.c.h.b16 %v4542
    %v4927 = vunpack.c.l.b16 %v4543
    %v4928 = vunpack.c.h.b16 %v4543
    %v4929 = vunpack.c.l.b16 %v4544
    %v4930 = vunpack.c.h.b16 %v4544
    %v4931 = vunpack.c.l.b16 %v4545
    %v4932 = vunpack.c.h.b16 %v4545
    %v4933 = vunpack.c.l.b16 %v4546
    %v4934 = vunpack.c.h.b16 %v4546
    %v4935 = vunpack.c.l.b16 %v4547
    %v4936 = vunpack.c.h.b16 %v4547
    %v4937 = vunpack.c.l.b16 %v4548
    %v4938 = vunpack.c.h.b16 %v4548
    %v4939 = vunpack.c.l.b16 %v4549
    %v4940 = vunpack.c.h.b16 %v4549
    %v4941 = vunpack.c.l.b16 %v4550
    %v4942 = vunpack.c.h.b16 %v4550
    %v4943 = vunpack.c.l.b16 %v4551
    %v4944 = vunpack.c.h.b16 %v4551
    %v4945 = vunpack.c.l.b16 %v4552
    %v4946 = vunpack.c.h.b16 %v4552
    %v4947 = vunpack.c.l.b16 %v4553
    %v4948 = vunpack.c.h.b16 %v4553
    %v4949 = vunpack.c.l.b16 %v4554
    %v4950 = vunpack.c.h.b16 %v4554
    %v4951 = vunpack.c.l.b16 %v4555
    %v4952 = vunpack.c.h.b16 %v4555
    %v4953 = vunpack.c.l.b16 %v4556
    %v4954 = vunpack.c.h.b16 %v4556
    %v4955 = vunpack.c.l.b16 %v4557
    %v4956 = vunpack.c.h.b16 %v4557
    %v4957 = vunpack.c.l.b16 %v4558
    %v4958 = vunpack.c.h.b16 %v4558
    %v4959 = vunpack.c.l.b16 %v4559
    %v4960 = vunpack.c.h.b16 %v4559
    %v4961 = vunpack.c.l.b16 %v4560
    %v4962 = vunpack.c.h.b16 %v4560
    %v4963 = vunpack.c.l.b16 %v4561
    %v4964 = vunpack.c.h.b16 %v4561
    %v4965 = vunpack.c.l.b16 %v4562
    %v4966 = vunpack.c.h.b16 %v4562
    %v4967 = vunpack.c.l.b16 %v4563
    %v4968 = vunpack.c.h.b16 %v4563
    %v4969 = vunpack.c.l.b16 %v4564
    %v4970 = vunpack.c.h.b16 %v4564
    %v4971 = vpack.c.b16 %v4719, %v4715
    %v4972 = vpack.c.b16 %v4720, %v4716
    %v4973 = vpack.c.b16 %v4721, %v4717
    %v4974 = vpack.c.b16 %v4722, %v4718
    %v4975 = vpack.c.b16 %v4727, %v4723
    %v4976 = vpack.c.b16 %v4728, %v4724
    %v4977 = vpack.c.b16 %v4729, %v4725
    %v4978 = vpack.c.b16 %v4730, %v4726
    %v4979 = vpack.c.b16 %v4735, %v4731
    %v4980 = vpack.c.b16 %v4736, %v4732
    %v4981 = vpack.c.b16 %v4737, %v4733
    %v4982 = vpack.c.b16 %v4738, %v4734
    %v4983 = vpack.c.b16 %v4743, %v4739
    %v4984 = vpack.c.b16 %v4744, %v4740
    %v4985 = vpack.c.b16 %v4745, %v4741
    %v4986 = vpack.c.b16 %v4746, %v4742
    %v4987 = vpack.c.b16 %v4751, %v4747
    %v4988 = vpack.c.b16 %v4752, %v4748
    %v4989 = vpack.c.b16 %v4753, %v4749
    %v4990 = vpack.c.b16 %v4754, %v4750
    %v4991 = vpack.c.b16 %v4759, %v4755
    %v4992 = vpack.c.b16 %v4760, %v4756
    %v4993 = vpack.c.b16 %v4761, %v4757
    %v4994 = vpack.c.b16 %v4762, %v4758
    %v4995 = vpack.c.b16 %v4767, %v4763
    %v4996 = vpack.c.b16 %v4768, %v4764
    %v4997 = vpack.c.b16 %v4769, %v4765
    %v4998 = vpack.c.b16 %v4770, %v4766
    %v4999 = vpack.c.b16 %v4775, %v4771
    %v5000 = vpack.c.b16 %v4776, %v4772
    %v5001 = vpack.c.b16 %v4777, %v4773
    %v5002 = vpack.c.b16 %v4778, %v4774
    %v5003 = vpack.c.b16 %v4783, %v4779
    %v5004 = vpack.c.b16 %v4784, %v4780
    %v5005 = vpack.c.b16 %v4785, %v4781
    %v5006 = vpack.c.b16 %v4786, %v4782
    %v5007 = vpack.c.b16 %v4791, %v4787
    %v5008 = vpack.c.b16 %v4792, %v4788
    %v5009 = vpack.c.b16 %v4793, %v4789
    %v5010 = vpack.c.b16 %v4794, %v4790
    %v5011 = vpack.c.b16 %v4799, %v4795
    %v5012 = vpack.c.b16 %v4800, %v4796
    %v5013 = vpack.c.b16 %v4801, %v4797
    %v5014 = vpack.c.b16 %v4802, %v4798
    %v5015 = vpack.c.b16 %v4807, %v4803
    %v5016 = vpack.c.b16 %v4808, %v4804
    %v5017 = vpack.c.b16 %v4809, %v4805
    %v5018 = vpack.c.b16 %v4810, %v4806
    %v5019 = vpack.c.b16 %v4815, %v4811
    %v5020 = vpack.c.b16 %v4816, %v4812
    %v5021 = vpack.c.b16 %v4817, %v4813
    %v5022 = vpack.c.b16 %v4818, %v4814
    %v5023 = vpack.c.b16 %v4823, %v4819
    %v5024 = vpack.c.b16 %v4824, %v4820
    %v5025 = vpack.c.b16 %v4825, %v4821
    %v5026 = vpack.c.b16 %v4826, %v4822
    %v5027 = vpack.c.b16 %v4831, %v4827
    %v5028 = vpack.c.b16 %v4832, %v4828
    %v5029 = vpack.c.b16 %v4833, %v4829
    %v5030 = vpack.c.b16 %v4834, %v4830
    %v5031 = vpack.c.b16 %v4839, %v4835
    %v5032 = vpack.c.b16 %v4840, %v4836
    %v5033 = vpack.c.b16 %v4841, %v4837
    %v5034 = vpack.c.b16 %v4842, %v4838
    %v5035 = vpack.c.b16 %v4847, %v4843
    %v5036 = vpack.c.b16 %v4848, %v4844
    %v5037 = vpack.c.b16 %v4849, %v4845
    %v5038 = vpack.c.b16 %v4850, %v4846
    %v5039 = vpack.c.b16 %v4855, %v4851
    %v5040 = vpack.c.b16 %v4856, %v4852
    %v5041 = vpack.c.b16 %v4857, %v4853
    %v5042 = vpack.c.b16 %v4858, %v4854
    %v5043 = vpack.c.b16 %v4863, %v4859
    %v5044 = vpack.c.b16 %v4864, %v4860
    %v5045 = vpack.c.b16 %v4865, %v4861
    %v5046 = vpack.c.b16 %v4866, %v4862
    %v5047 = vpack.c.b16 %v4871, %v4867
    %v5048 = vpack.c.b16 %v4872, %v4868
    %v5049 = vpack.c.b16 %v4873, %v4869
    %v5050 = vpack.c.b16 %v4874, %v4870
    %v5051 = vpack.c.b16 %v4879, %v4875
    %v5052 = vpack.c.b16 %v4880, %v4876
    %v5053 = vpack.c.b16 %v4881, %v4877
    %v5054 = vpack.c.b16 %v4882, %v4878
    %v5055 = vpack.c.b16 %v4887, %v4883
    %v5056 = vpack.c.b16 %v4888, %v4884
    %v5057 = vpack.c.b16 %v4889, %v4885
    %v5058 = vpack.c.b16 %v4890, %v4886
    %v5059 = vpack.c.b16 %v4895, %v4891
    %v5060 = vpack.c.b16 %v4896, %v4892
    %v5061 = vpack.c.b16 %v4897, %v4893
    %v5062 = vpack.c.b16 %v4898, %v4894
    %v5063 = vpack.c.b16 %v4903, %v4899
    %v5064 = vpack.c.b16 %v4904, %v4900
    %v5065 = vpack.c.b16 %v4905, %v4901
    %v5066 = vpack.c.b16 %v4906, %v4902
    %v5067 = vpack.c.b16 %v4911, %v4907
    %v5068 = vpack.c.b16 %v4912, %v4908
    %v5069 = vpack.c.b16 %v4913, %v4909
    %v5070 = vpack.c.b16 %v4914, %v4910
    %v5071 = vpack.c.b16 %v4919, %v4915
    %v5072 = vpack.c.b16 %v4920, %v4916
    %v5073 = vpack.c.b16 %v4921, %v4917
    %v5074 = vpack.c.b16 %v4922, %v4918
    %v5075 = vpack.c.b16 %v4927, %v4923
    %v5076 = vpack.c.b16 %v4928, %v4924
    %v5077 = vpack.c.b16 %v4929, %v4925
    %v5078 = vpack.c.b16 %v4930, %v4926
    %v5079 = vpack.c.b16 %v4935, %v4931
    %v5080 = vpack.c.b16 %v4936, %v4932
    %v5081 = vpack.c.b16 %v4937, %v4933
    %v5082 = vpack.c.b16 %v4938, %v4934
    %v5083 = vpack.c.b16 %v4943, %v4939
    %v5084 = vpack.c.b16 %v4944, %v4940
    %v5085 = vpack.c.b16 %v4945, %v4941
    %v5086 = vpack.c.b16 %v4946, %v4942
    %v5087 = vpack.c.b16 %v4951, %v4947
    %v5088 = vpack.c.b16 %v4952, %v4948
    %v5089 = vpack.c.b16 %v4953, %v4949
    %v5090 = vpack.c.b16 %v4954, %v4950
    %v5091 = vpack.c.b16 %v4959, %v4955
    %v5092 = vpack.c.b16 %v4960, %v4956
    %v5093 = vpack.c.b16 %v4961, %v4957
    %v5094 = vpack.c.b16 %v4962, %v4958
    %v5095 = vpack.c.b16 %v4967, %v4963
    %v5096 = vpack.c.b16 %v4968, %v4964
    %v5097 = vpack.c.b16 %v4969, %v4965
    %v5098 = vpack.c.b16 %v4970, %v4966
    %5227 = vmatprep.subr.bf16.mxu0 %v4972
    %5228 = vmatpush1.bf16.msra.mxu0 %v4971
    %5229 = vmatprep.subr.bf16.mxu0 %v4976
    %5230 = vmatpush1.bf16.msra.mxu0 %v4975
    %5231 = vmatprep.subr.bf16.mxu0 %v4980
    %5232 = vmatpush1.bf16.msra.mxu0 %v4979
    %5233 = vmatprep.subr.bf16.mxu0 %v4984
    %5234 = vmatpush1.bf16.msra.mxu0 %v4983
    %5235 = vmatprep.subr.bf16.mxu0 %v4988
    %5236 = vmatpush1.bf16.msra.mxu0 %v4987
    %5237 = vmatprep.subr.bf16.mxu0 %v4992
    %5238 = vmatpush1.bf16.msra.mxu0 %v4991
    %5239 = vmatprep.subr.bf16.mxu0 %v4996
    %5240 = vmatpush1.bf16.msra.mxu0 %v4995
    %5241 = vmatprep.subr.bf16.mxu0 %v5000
    %5242 = vmatpush1.bf16.msra.mxu0 %v4999
    %5243 = vmatprep.subr.bf16.mxu0 %v5004
    %5244 = vmatpush1.bf16.msra.mxu0 %v5003
    %5245 = vmatprep.subr.bf16.mxu0 %v5008
    %5246 = vmatpush1.bf16.msra.mxu0 %v5007
    %5247 = vmatprep.subr.bf16.mxu0 %v5012
    %5248 = vmatpush1.bf16.msra.mxu0 %v5011
    %5249 = vmatprep.subr.bf16.mxu0 %v5016
    %5250 = vmatpush1.bf16.msra.mxu0 %v5015
    %5251 = vmatprep.subr.bf16.mxu0 %v5020
    %5252 = vmatpush1.bf16.msra.mxu0 %v5019
    %5253 = vmatprep.subr.bf16.mxu0 %v5024
    %5254 = vmatpush1.bf16.msra.mxu0 %v5023
    %5255 = vmatprep.subr.bf16.mxu0 %v5028
    %5256 = vmatpush1.bf16.msra.mxu0 %v5027
    %5257 = vmatprep.subr.bf16.mxu0 %v5032
    %5258 = vmatpush1.bf16.msra.mxu0 %v5031
    %5259 = vmatprep.mubr.bf16.mxu0 %v4434
    %5260 = vmatmul.mubr.bf16.gmra.mrb[0].mxu0 %v4433
    %v5261 = vpop.f32.mrb[0].mxu0
    %v5262 = vadd.f32 %v4570, %v5261
    %v5263 = vpop.f32.mrb[0].mxu0
    %v5264 = vadd.f32 %v4574, %v5263
    %v5265 = vpop.f32.mrb[0].mxu0
    %v5266 = vpop.f32.mrb[0].mxu0
    %5267 = vdwg.mxu0
    %5268 = vmatprep.subr.bf16.mxu0 %v5036
    %5269 = vmatpush1.bf16.msra.mxu0 %v5035
    %5270 = vmatprep.subr.bf16.mxu0 %v5040
    %5271 = vmatpush1.bf16.msra.mxu0 %v5039
    %5272 = vmatprep.subr.bf16.mxu0 %v5044
    %5273 = vmatpush1.bf16.msra.mxu0 %v5043
    %5274 = vmatprep.subr.bf16.mxu0 %v5048
    %5275 = vmatpush1.bf16.msra.mxu0 %v5047
    %5276 = vmatprep.subr.bf16.mxu0 %v5052
    %5277 = vmatpush1.bf16.msra.mxu0 %v5051
    %5278 = vmatprep.subr.bf16.mxu0 %v5056
    %5279 = vmatpush1.bf16.msra.mxu0 %v5055
    %5280 = vmatprep.subr.bf16.mxu0 %v5060
    %5281 = vmatpush1.bf16.msra.mxu0 %v5059
    %5282 = vmatprep.subr.bf16.mxu0 %v5064
    %5283 = vmatpush1.bf16.msra.mxu0 %v5063
    %5284 = vmatprep.subr.bf16.mxu0 %v5068
    %5285 = vmatpush1.bf16.msra.mxu0 %v5067
    %5286 = vmatprep.subr.bf16.mxu0 %v5072
    %5287 = vmatpush1.bf16.msra.mxu0 %v5071
    %5288 = vmatprep.subr.bf16.mxu0 %v5076
    %5289 = vmatpush1.bf16.msra.mxu0 %v5075
    %5290 = vmatprep.subr.bf16.mxu0 %v5080
    %5291 = vmatpush1.bf16.msra.mxu0 %v5079
    %5292 = vmatprep.subr.bf16.mxu0 %v5084
    %5293 = vmatpush1.bf16.msra.mxu0 %v5083
    %5294 = vmatprep.subr.bf16.mxu0 %v5088
    %5295 = vmatpush1.bf16.msra.mxu0 %v5087
    %5296 = vmatprep.subr.bf16.mxu0 %v5092
    %5297 = vmatpush1.bf16.msra.mxu0 %v5091
    %5298 = vmatprep.subr.bf16.mxu0 %v5096
    %5299 = vmatpush1.bf16.msra.mxu0 %v5095
    %5300 = vmatprep.mubr.bf16.mxu0 %v4436
    %5301 = vmatmul.mubr.bf16.gmra.mrb[0].mxu0 %v4435
    %v5302 = vpop.f32.mrb[0].mxu0
    %v5303 = vadd.f32 %v5262, %v5302
    %v5304 = vpop.f32.mrb[0].mxu0
    %v5305 = vadd.f32 %v5264, %v5304
    %v5306 = vpop.f32.mrb[0].mxu0
    %v5307 = vpop.f32.mrb[0].mxu0
    %5308 = vdwg.mxu0
    %5309 = vmatprep.subr.bf16.mxu0 %v4974
    %5310 = vmatpush1.bf16.msra.mxu0 %v4973
    %5311 = vmatprep.subr.bf16.mxu0 %v4978
    %5312 = vmatpush1.bf16.msra.mxu0 %v4977
    %5313 = vmatprep.subr.bf16.mxu0 %v4982
    %5314 = vmatpush1.bf16.msra.mxu0 %v4981
    %5315 = vmatprep.subr.bf16.mxu0 %v4986
    %5316 = vmatpush1.bf16.msra.mxu0 %v4985
    %5317 = vmatprep.subr.bf16.mxu0 %v4990
    %5318 = vmatpush1.bf16.msra.mxu0 %v4989
    %5319 = vmatprep.subr.bf16.mxu0 %v4994
    %5320 = vmatpush1.bf16.msra.mxu0 %v4993
    %5321 = vmatprep.subr.bf16.mxu0 %v4998
    %5322 = vmatpush1.bf16.msra.mxu0 %v4997
    %5323 = vmatprep.subr.bf16.mxu0 %v5002
    %5324 = vmatpush1.bf16.msra.mxu0 %v5001
    %5325 = vmatprep.subr.bf16.mxu0 %v5006
    %5326 = vmatpush1.bf16.msra.mxu0 %v5005
    %5327 = vmatprep.subr.bf16.mxu0 %v5010
    %5328 = vmatpush1.bf16.msra.mxu0 %v5009
    %5329 = vmatprep.subr.bf16.mxu0 %v5014
    %5330 = vmatpush1.bf16.msra.mxu0 %v5013
    %5331 = vmatprep.subr.bf16.mxu0 %v5018
    %5332 = vmatpush1.bf16.msra.mxu0 %v5017
    %5333 = vmatprep.subr.bf16.mxu0 %v5022
    %5334 = vmatpush1.bf16.msra.mxu0 %v5021
    %5335 = vmatprep.subr.bf16.mxu0 %v5026
    %5336 = vmatpush1.bf16.msra.mxu0 %v5025
    %5337 = vmatprep.subr.bf16.mxu0 %v5030
    %5338 = vmatpush1.bf16.msra.mxu0 %v5029
    %5339 = vmatprep.subr.bf16.mxu0 %v5034
    %5340 = vmatpush1.bf16.msra.mxu0 %v5033
    %5341 = vmatprep.mubr.bf16.mxu0 %v4434
    %5342 = vmatmul.mubr.bf16.gmra.mrb[0].mxu0 %v4433
    %v5343 = vpop.f32.mrb[0].mxu0
    %v5344 = vadd.f32 %v4578, %v5343
    %v5345 = vpop.f32.mrb[0].mxu0
    %v5346 = vadd.f32 %v4582, %v5345
    %v5347 = vpop.f32.mrb[0].mxu0
    %v5348 = vpop.f32.mrb[0].mxu0
    %5349 = vdwg.mxu0
    %5350 = vmatprep.subr.bf16.mxu0 %v5038
    %5351 = vmatpush1.bf16.msra.mxu0 %v5037
    %5352 = vmatprep.subr.bf16.mxu0 %v5042
    %5353 = vmatpush1.bf16.msra.mxu0 %v5041
    %5354 = vmatprep.subr.bf16.mxu0 %v5046
    %5355 = vmatpush1.bf16.msra.mxu0 %v5045
    %5356 = vmatprep.subr.bf16.mxu0 %v5050
    %5357 = vmatpush1.bf16.msra.mxu0 %v5049
    %5358 = vmatprep.subr.bf16.mxu0 %v5054
    %5359 = vmatpush1.bf16.msra.mxu0 %v5053
    %5360 = vmatprep.subr.bf16.mxu0 %v5058
    %5361 = vmatpush1.bf16.msra.mxu0 %v5057
    %5362 = vmatprep.subr.bf16.mxu0 %v5062
    %5363 = vmatpush1.bf16.msra.mxu0 %v5061
    %5364 = vmatprep.subr.bf16.mxu0 %v5066
    %5365 = vmatpush1.bf16.msra.mxu0 %v5065
    %5366 = vmatprep.subr.bf16.mxu0 %v5070
    %5367 = vmatpush1.bf16.msra.mxu0 %v5069
    %5368 = vmatprep.subr.bf16.mxu0 %v5074
    %5369 = vmatpush1.bf16.msra.mxu0 %v5073
    %5370 = vmatprep.subr.bf16.mxu0 %v5078
    %5371 = vmatpush1.bf16.msra.mxu0 %v5077
    %5372 = vmatprep.subr.bf16.mxu0 %v5082
    %5373 = vmatpush1.bf16.msra.mxu0 %v5081
    %5374 = vmatprep.subr.bf16.mxu0 %v5086
    %5375 = vmatpush1.bf16.msra.mxu0 %v5085
    %5376 = vmatprep.subr.bf16.mxu0 %v5090
    %5377 = vmatpush1.bf16.msra.mxu0 %v5089
    %5378 = vmatprep.subr.bf16.mxu0 %v5094
    %5379 = vmatpush1.bf16.msra.mxu0 %v5093
    %5380 = vmatprep.subr.bf16.mxu0 %v5098
    %5381 = vmatpush1.bf16.msra.mxu0 %v5097
    %5382 = vmatprep.mubr.bf16.mxu0 %v4436
    %5383 = vmatmul.mubr.bf16.gmra.mrb[0].mxu0 %v4435
    %v5384 = vpop.f32.mrb[0].mxu0
    %v5385 = vadd.f32 %v5344, %v5384
    %v5386 = vpop.f32.mrb[0].mxu0
    %v5387 = vadd.f32 %v5346, %v5386
    %v5388 = vpop.f32.mrb[0].mxu0
    %v5389 = vpop.f32.mrb[0].mxu0
    %5390 = vdwg.mxu0
    %v5391 = vmax.f32 %v5303, 0.0
    %v5392 = vmax.f32 %v5305, 0.0
    %v5393 = vmax.f32 %v5385, 0.0
    %v5394 = vmax.f32 %v5387, 0.0
    %v5395 = vpack.c.bf16 %v5391, %v5391
    %v5396 = vpack.c.bf16 %v5392, %v5392
    %v5397 = vpack.c.bf16 %v5393, %v5393
    %v5398 = vpack.c.bf16 %v5394, %v5394
    %v5399 = vld [vmem:[%s17] sm:$0xf]
    %v5400 = vld [vmem:[%s17 + $0x4] sm:$0xf]
    %v5401 = vld [vmem:[%s17 + $0x8] sm:$0xf]
    %v5402 = vld [vmem:[%s17 + $0xc] sm:$0xf]
    %v5403 = vld [vmem:[%s17 + $0x10] sm:$0xf]
    %v5404 = vld [vmem:[%s17 + $0x14] sm:$0xf]
    %v5405 = vld [vmem:[%s17 + $0x18] sm:$0xf]
    %v5406 = vld [vmem:[%s17 + $0x1c] sm:$0xf]
    %v5407 = vld [vmem:[%s17 + $0x20] sm:$0xf]
    %v5408 = vld [vmem:[%s17 + $0x24] sm:$0xf]
    %v5409 = vld [vmem:[%s17 + $0x28] sm:$0xf]
    %v5410 = vld [vmem:[%s17 + $0x2c] sm:$0xf]
    %v5411 = vld [vmem:[%s17 + $0x30] sm:$0xf]
    %v5412 = vld [vmem:[%s17 + $0x34] sm:$0xf]
    %v5413 = vld [vmem:[%s17 + $0x38] sm:$0xf]
    %v5414 = vld [vmem:[%s17 + $0x3c] sm:$0xf]
    %v5415 = vld [vmem:[%s17 + $0x40] sm:$0xf]
    %v5416 = vld [vmem:[%s17 + $0x44] sm:$0xf]
    %v5417 = vld [vmem:[%s17 + $0x48] sm:$0xf]
    %v5418 = vld [vmem:[%s17 + $0x4c] sm:$0xf]
    %v5419 = vld [vmem:[%s17 + $0x50] sm:$0xf]
    %v5420 = vld [vmem:[%s17 + $0x54] sm:$0xf]
    %v5421 = vld [vmem:[%s17 + $0x58] sm:$0xf]
    %v5422 = vld [vmem:[%s17 + $0x5c] sm:$0xf]
    %v5423 = vld [vmem:[%s17 + $0x60] sm:$0xf]
    %v5424 = vld [vmem:[%s17 + $0x64] sm:$0xf]
    %v5425 = vld [vmem:[%s17 + $0x68] sm:$0xf]
    %v5426 = vld [vmem:[%s17 + $0x6c] sm:$0xf]
    %v5427 = vld [vmem:[%s17 + $0x70] sm:$0xf]
    %v5428 = vld [vmem:[%s17 + $0x74] sm:$0xf]
    %v5429 = vld [vmem:[%s17 + $0x78] sm:$0xf]
    %v5430 = vld [vmem:[%s17 + $0x7c] sm:$0xf]
    %v5431 = vld [vmem:[%s17 + $0x80] sm:$0xf]
    %v5432 = vld [vmem:[%s17 + $0x84] sm:$0xf]
    %v5433 = vld [vmem:[%s17 + $0x88] sm:$0xf]
    %v5434 = vld [vmem:[%s17 + $0x8c] sm:$0xf]
    %v5435 = vld [vmem:[%s17 + $0x90] sm:$0xf]
    %v5436 = vld [vmem:[%s17 + $0x94] sm:$0xf]
    %v5437 = vld [vmem:[%s17 + $0x98] sm:$0xf]
    %v5438 = vld [vmem:[%s17 + $0x9c] sm:$0xf]
    %v5439 = vld [vmem:[%s17 + $0xa0] sm:$0xf]
    %v5440 = vld [vmem:[%s17 + $0xa4] sm:$0xf]
    %v5441 = vld [vmem:[%s17 + $0xa8] sm:$0xf]
    %v5442 = vld [vmem:[%s17 + $0xac] sm:$0xf]
    %v5443 = vld [vmem:[%s17 + $0xb0] sm:$0xf]
    %v5444 = vld [vmem:[%s17 + $0xb4] sm:$0xf]
    %v5445 = vld [vmem:[%s17 + $0xb8] sm:$0xf]
    %v5446 = vld [vmem:[%s17 + $0xbc] sm:$0xf]
    %v5447 = vld [vmem:[%s17 + $0xc0] sm:$0xf]
    %v5448 = vld [vmem:[%s17 + $0xc4] sm:$0xf]
    %v5449 = vld [vmem:[%s17 + $0xc8] sm:$0xf]
    %v5450 = vld [vmem:[%s17 + $0xcc] sm:$0xf]
    %v5451 = vld [vmem:[%s17 + $0xd0] sm:$0xf]
    %v5452 = vld [vmem:[%s17 + $0xd4] sm:$0xf]
    %v5453 = vld [vmem:[%s17 + $0xd8] sm:$0xf]
    %v5454 = vld [vmem:[%s17 + $0xdc] sm:$0xf]
    %v5455 = vld [vmem:[%s17 + $0xe0] sm:$0xf]
    %v5456 = vld [vmem:[%s17 + $0xe4] sm:$0xf]
    %v5457 = vld [vmem:[%s17 + $0xe8] sm:$0xf]
    %v5458 = vld [vmem:[%s17 + $0xec] sm:$0xf]
    %v5459 = vld [vmem:[%s17 + $0xf0] sm:$0xf]
    %v5460 = vld [vmem:[%s17 + $0xf4] sm:$0xf]
    %v5461 = vld [vmem:[%s17 + $0xf8] sm:$0xf]
    %v5462 = vld [vmem:[%s17 + $0xfc] sm:$0xf]
    %v5463 = vld [vmem:[#allocation13] sm:$0x1]
    %v5465 = vlaneseq
    %v5466 = vshrl.u32 %v5465, 7
    %v5467 = vsub.s32 0, %v5466
    %v5468 = vrot.slane %v5463, %v5467
    %v5534 = vunpack.c.l.b16 %v5399
    %v5535 = vunpack.c.l.b16 %v5400
    %v5536 = vunpack.c.l.b16 %v5401
    %v5537 = vunpack.c.l.b16 %v5402
    %v5538 = vunpack.c.l.b16 %v5403
    %v5539 = vunpack.c.l.b16 %v5404
    %v5540 = vunpack.c.l.b16 %v5405
    %v5541 = vunpack.c.l.b16 %v5406
    %v5542 = vunpack.c.l.b16 %v5407
    %v5543 = vunpack.c.l.b16 %v5408
    %v5544 = vunpack.c.l.b16 %v5409
    %v5545 = vunpack.c.l.b16 %v5410
    %v5546 = vunpack.c.l.b16 %v5411
    %v5547 = vunpack.c.l.b16 %v5412
    %v5548 = vunpack.c.l.b16 %v5413
    %v5549 = vunpack.c.l.b16 %v5414
    %v5550 = vunpack.c.l.b16 %v5415
    %v5551 = vunpack.c.l.b16 %v5416
    %v5552 = vunpack.c.l.b16 %v5417
    %v5553 = vunpack.c.l.b16 %v5418
    %v5554 = vunpack.c.l.b16 %v5419
    %v5555 = vunpack.c.l.b16 %v5420
    %v5556 = vunpack.c.l.b16 %v5421
    %v5557 = vunpack.c.l.b16 %v5422
    %v5558 = vunpack.c.l.b16 %v5423
    %v5559 = vunpack.c.l.b16 %v5424
    %v5560 = vunpack.c.l.b16 %v5425
    %v5561 = vunpack.c.l.b16 %v5426
    %v5562 = vunpack.c.l.b16 %v5427
    %v5563 = vunpack.c.l.b16 %v5428
    %v5564 = vunpack.c.l.b16 %v5429
    %v5565 = vunpack.c.l.b16 %v5430
    %v5566 = vunpack.c.l.b16 %v5431
    %v5567 = vunpack.c.l.b16 %v5432
    %v5568 = vunpack.c.l.b16 %v5433
    %v5569 = vunpack.c.l.b16 %v5434
    %v5570 = vunpack.c.l.b16 %v5435
    %v5571 = vunpack.c.l.b16 %v5436
    %v5572 = vunpack.c.l.b16 %v5437
    %v5573 = vunpack.c.l.b16 %v5438
    %v5574 = vunpack.c.l.b16 %v5439
    %v5575 = vunpack.c.l.b16 %v5440
    %v5576 = vunpack.c.l.b16 %v5441
    %v5577 = vunpack.c.l.b16 %v5442
    %v5578 = vunpack.c.l.b16 %v5443
    %v5579 = vunpack.c.l.b16 %v5444
    %v5580 = vunpack.c.l.b16 %v5445
    %v5581 = vunpack.c.l.b16 %v5446
    %v5582 = vunpack.c.l.b16 %v5447
    %v5583 = vunpack.c.l.b16 %v5448
    %v5584 = vunpack.c.l.b16 %v5449
    %v5585 = vunpack.c.l.b16 %v5450
    %v5586 = vunpack.c.l.b16 %v5451
    %v5587 = vunpack.c.l.b16 %v5452
    %v5588 = vunpack.c.l.b16 %v5453
    %v5589 = vunpack.c.l.b16 %v5454
    %v5590 = vunpack.c.l.b16 %v5455
    %v5591 = vunpack.c.l.b16 %v5456
    %v5592 = vunpack.c.l.b16 %v5457
    %v5593 = vunpack.c.l.b16 %v5458
    %v5594 = vunpack.c.l.b16 %v5459
    %v5595 = vunpack.c.l.b16 %v5460
    %v5596 = vunpack.c.l.b16 %v5461
    %v5597 = vunpack.c.l.b16 %v5462
    %v5598 = vpack.c.b16 %v5535, %v5534
    %v5599 = vpack.c.b16 %v5537, %v5536
    %v5600 = vpack.c.b16 %v5539, %v5538
    %v5601 = vpack.c.b16 %v5541, %v5540
    %v5602 = vpack.c.b16 %v5543, %v5542
    %v5603 = vpack.c.b16 %v5545, %v5544
    %v5604 = vpack.c.b16 %v5547, %v5546
    %v5605 = vpack.c.b16 %v5549, %v5548
    %v5606 = vpack.c.b16 %v5551, %v5550
    %v5607 = vpack.c.b16 %v5553, %v5552
    %v5608 = vpack.c.b16 %v5555, %v5554
    %v5609 = vpack.c.b16 %v5557, %v5556
    %v5610 = vpack.c.b16 %v5559, %v5558
    %v5611 = vpack.c.b16 %v5561, %v5560
    %v5612 = vpack.c.b16 %v5563, %v5562
    %v5613 = vpack.c.b16 %v5565, %v5564
    %v5614 = vpack.c.b16 %v5567, %v5566
    %v5615 = vpack.c.b16 %v5569, %v5568
    %v5616 = vpack.c.b16 %v5571, %v5570
    %v5617 = vpack.c.b16 %v5573, %v5572
    %v5618 = vpack.c.b16 %v5575, %v5574
    %v5619 = vpack.c.b16 %v5577, %v5576
    %v5620 = vpack.c.b16 %v5579, %v5578
    %v5621 = vpack.c.b16 %v5581, %v5580
    %v5622 = vpack.c.b16 %v5583, %v5582
    %v5623 = vpack.c.b16 %v5585, %v5584
    %v5624 = vpack.c.b16 %v5587, %v5586
    %v5625 = vpack.c.b16 %v5589, %v5588
    %v5626 = vpack.c.b16 %v5591, %v5590
    %v5627 = vpack.c.b16 %v5593, %v5592
    %v5628 = vpack.c.b16 %v5595, %v5594
    %v5629 = vpack.c.b16 %v5597, %v5596
    %5662 = vmatprep.subr.bf16.mxu0 0
    %5663 = vmatpush1.bf16.msra.mxu0 %v5598
    %5664 = vmatprep.subr.bf16.mxu0 0
    %5665 = vmatpush1.bf16.msra.mxu0 %v5599
    %5666 = vmatprep.subr.bf16.mxu0 0
    %5667 = vmatpush1.bf16.msra.mxu0 %v5600
    %5668 = vmatprep.subr.bf16.mxu0 0
    %5669 = vmatpush1.bf16.msra.mxu0 %v5601
    %5670 = vmatprep.subr.bf16.mxu0 0
    %5671 = vmatpush1.bf16.msra.mxu0 %v5602
    %5672 = vmatprep.subr.bf16.mxu0 0
    %5673 = vmatpush1.bf16.msra.mxu0 %v5603
    %5674 = vmatprep.subr.bf16.mxu0 0
    %5675 = vmatpush1.bf16.msra.mxu0 %v5604
    %5676 = vmatprep.subr.bf16.mxu0 0
    %5677 = vmatpush1.bf16.msra.mxu0 %v5605
    %5678 = vmatprep.subr.bf16.mxu0 0
    %5679 = vmatpush1.bf16.msra.mxu0 %v5606
    %5680 = vmatprep.subr.bf16.mxu0 0
    %5681 = vmatpush1.bf16.msra.mxu0 %v5607
    %5682 = vmatprep.subr.bf16.mxu0 0
    %5683 = vmatpush1.bf16.msra.mxu0 %v5608
    %5684 = vmatprep.subr.bf16.mxu0 0
    %5685 = vmatpush1.bf16.msra.mxu0 %v5609
    %5686 = vmatprep.subr.bf16.mxu0 0
    %5687 = vmatpush1.bf16.msra.mxu0 %v5610
    %5688 = vmatprep.subr.bf16.mxu0 0
    %5689 = vmatpush1.bf16.msra.mxu0 %v5611
    %5690 = vmatprep.subr.bf16.mxu0 0
    %5691 = vmatpush1.bf16.msra.mxu0 %v5612
    %5692 = vmatprep.subr.bf16.mxu0 0
    %5693 = vmatpush1.bf16.msra.mxu0 %v5613
    %5694 = vmatprep.mubr.bf16.mxu0 %v5396
    %5695 = vmatmul.mubr.bf16.gmra.mrb[0].mxu0 %v5395
    %v5696 = vpop.f32.mrb[0].mxu0
    %v5697 = vadd.f32 %v5468, %v5696
    %v5698 = vpop.f32.mrb[0].mxu0
    %v5699 = vpop.f32.mrb[0].mxu0
    %v5700 = vpop.f32.mrb[0].mxu0
    %5701 = vdwg.mxu0
    %5702 = vmatprep.subr.bf16.mxu0 0
    %5703 = vmatpush1.bf16.msra.mxu0 %v5614
    %5704 = vmatprep.subr.bf16.mxu0 0
    %5705 = vmatpush1.bf16.msra.mxu0 %v5615
    %5706 = vmatprep.subr.bf16.mxu0 0
    %5707 = vmatpush1.bf16.msra.mxu0 %v5616
    %5708 = vmatprep.subr.bf16.mxu0 0
    %5709 = vmatpush1.bf16.msra.mxu0 %v5617
    %5710 = vmatprep.subr.bf16.mxu0 0
    %5711 = vmatpush1.bf16.msra.mxu0 %v5618
    %5712 = vmatprep.subr.bf16.mxu0 0
    %5713 = vmatpush1.bf16.msra.mxu0 %v5619
    %5714 = vmatprep.subr.bf16.mxu0 0
    %5715 = vmatpush1.bf16.msra.mxu0 %v5620
    %5716 = vmatprep.subr.bf16.mxu0 0
    %5717 = vmatpush1.bf16.msra.mxu0 %v5621
    %5718 = vmatprep.subr.bf16.mxu0 0
    %5719 = vmatpush1.bf16.msra.mxu0 %v5622
    %5720 = vmatprep.subr.bf16.mxu0 0
    %5721 = vmatpush1.bf16.msra.mxu0 %v5623
    %5722 = vmatprep.subr.bf16.mxu0 0
    %5723 = vmatpush1.bf16.msra.mxu0 %v5624
    %5724 = vmatprep.subr.bf16.mxu0 0
    %5725 = vmatpush1.bf16.msra.mxu0 %v5625
    %5726 = vmatprep.subr.bf16.mxu0 0
    %5727 = vmatpush1.bf16.msra.mxu0 %v5626
    %5728 = vmatprep.subr.bf16.mxu0 0
    %5729 = vmatpush1.bf16.msra.mxu0 %v5627
    %5730 = vmatprep.subr.bf16.mxu0 0
    %5731 = vmatpush1.bf16.msra.mxu0 %v5628
    %5732 = vmatprep.subr.bf16.mxu0 0
    %5733 = vmatpush1.bf16.msra.mxu0 %v5629
    %5734 = vmatprep.mubr.bf16.mxu0 %v5398
    %5735 = vmatmul.mubr.bf16.gmra.mrb[0].mxu0 %v5397
    %v5736 = vpop.f32.mrb[0].mxu0
    %v5737 = vadd.f32 %v5697, %v5736
    %v5738 = vpop.f32.mrb[0].mxu0
    %v5739 = vpop.f32.mrb[0].mxu0
    %v5740 = vpop.f32.mrb[0].mxu0
    %5741 = vdwg.mxu0
    %vm5742 = vcmask 25600
    %5743 = vst.msk [vmem:[#allocation14] sm:$0x3] %vm5742, %v5737
    // Predicated region
    $region106: #{state_detection_forward.3} parent=1 // pred_check
      _
    $region107: #{state_detection_forward.3} parent=1 // pred_check_branch
      %5745 = sbr.rel (0) target = $region109
    $region108: #{state_detection_forward.3} parent=1 // pred_region
      %s5747 = ssub.s32 32, 32
      %5748 = vsyncadd [#allocation4], %s5747
      %s5750 = sshll.u32 [#allocation14], 4
      %s5751 = int_to_ptr.vmem [resolvable:$true] %s5750
      %5753 = dma.vmem_to_hbm [thread:$0]  %s5751, 32, %s19, [#allocation4]
    $region109: #{state_detection_forward.3} parent=1 // pred_fallthru
      _
    // Predicated region
    $region110: #{state_detection_forward.3} parent=1 // pred_check
      _
    $region111: #{state_detection_forward.3} parent=1 // pred_check_branch
      %5755 = sbr.rel (0) target = $region113
    $region112: #{state_detection_forward.3} parent=1 // pred_region
      %5756 = dma.done [#allocation4], 32
    $region113: #{state_detection_forward.3} parent=1 // pred_fallthru
      _
    %5757 = vsyncpa [#allocation3], 1
    %5758 = vsyncpa [#allocation6], 1
    %5759 = vsyncpa [#allocation9], 1
    %5760 = vsyncpa [#allocation12], 1
    %5761 = vsyncpa [#allocation4], 1

</llo_original>
